<compile_context>
chip_gen: v7x
topology: tpu7x:2x2x1
jax: 0.10.0
libtpu: 0.0.40
codegen_flags: <defaults>
</compile_context>

<pallas_src>
import functools

import numpy as np
import jax
import jax.numpy as jnp
from jax import lax
from jax.experimental import pallas as pl
from jax.experimental.pallas import tpu as pltpu


# -----------------------------------------------------------------------------
# The single fused Pallas kernel
# -----------------------------------------------------------------------------
def _model1_fused_kernel(*refs, cfg, n_images, final_rows):
    """refs = [x2d] + 5 per conv stage (m_ky0, m_ky1, m_ky2, scale, bias)
            + [fc_w, fc_b] + [out] + one VMEM scratch per stage."""
    n_layers = len(cfg)
    assert len(refs) == 1 + 5 * n_layers + 2 + 1 + n_layers
    x_ref = refs[0]
    larg = refs[1:1 + 5 * n_layers]
    fc_w_ref = refs[1 + 5 * n_layers]
    fc_b_ref = refs[2 + 5 * n_layers]
    out_ref = refs[3 + 5 * n_layers]
    scratch = refs[4 + 5 * n_layers:]

    # Zero the activation scratches whose conv H-padding rows must be zero
    # (the last stage has no padding rows and every data row gets written).
    for li, c in enumerate(cfg):
        if c["pad_out"] > 0:
            scratch[li][...] = jnp.zeros_like(scratch[li])

    src = x_ref  # (N*(H_in+2), W_in*C_in), zero H-pad rows already present.
    for li, c in enumerate(cfg):
        hp_in, hout = c["hp_in"], c["hout"]
        hp_out, pad_out = c["hp_out"], c["pad_out"]
        stride, dil = c["stride"], c["dil"]
        m0 = larg[5 * li + 0][...]
        m1 = larg[5 * li + 1][...]
        m2 = larg[5 * li + 2][...]
        scale = larg[5 * li + 3][...]
        bias = larg[5 * li + 4][...]
        dst = scratch[li]

        # One matmul per kernel row ky covering ALL images at once: result row
        # (n*hp_in + h*stride) is output row h of image n; rows straddling two
        # images are simply never stored.
        rows = hout if stride == 1 else stride * (hout - 1) + 1
        span = (n_images - 1) * hp_in + rows
        acc = jnp.dot(src[0 * dil:0 * dil + span, :], m0,
                      preferred_element_type=jnp.float32)
        acc = acc + jnp.dot(src[1 * dil:1 * dil + span, :], m1,
                            preferred_element_type=jnp.float32)
        acc = acc + jnp.dot(src[2 * dil:2 * dil + span, :], m2,
                            preferred_element_type=jnp.float32)
        y = jnp.maximum(acc, 0.0) * scale + bias      # Conv -> ReLU -> BN(eval)

        for n in range(n_images):
            dst_base = n * hp_out + pad_out
            src_base = n * hp_in
            if stride == 1:
                dst[dst_base:dst_base + hout, :] = y[src_base:src_base + hout, :]
            else:
                # Gather the stride-th rows in the value domain, then ONE
                # contiguous store per image (instead of hout masked stores).
                sel = jnp.concatenate(
                    [y[src_base + stride * h:src_base + stride * h + 1, :]
                     for h in range(hout)], axis=0)
                dst[dst_base:dst_base + hout, :] = sel
        src = dst

    # GAP + collapsed Linear(64->128->256->10) + log_softmax, whole batch at once.
    fc_w = fc_w_ref[...]   # (W_f*C_f, 10), 1/(H_f*W_f) mean folded in
    fc_b = fc_b_ref[...]   # (1, 10)
    pooled = jnp.concatenate(
        [jnp.sum(src[n * final_rows:(n + 1) * final_rows, :], axis=0, keepdims=True)
         for n in range(n_images)], axis=0)                   # (N, W_f*C_f)
    logits = jnp.dot(pooled, fc_w, preferred_element_type=jnp.float32) + fc_b
    mx = jnp.max(logits, axis=-1, keepdims=True)
    e = jnp.exp(logits - mx)
    lse = jnp.log(jnp.sum(e, axis=-1, keepdims=True))
    out_ref[...] = logits - mx - lse


# -----------------------------------------------------------------------------
# Host-side parameter re-layout
# -----------------------------------------------------------------------------
_LAYER_DEFS = (
    # (conv weight key, bn key, stride, dilation)
    ("c1_1", "bn1_1", 1, 1),
    ("c1_2", "bn1_2", 1, 1),
    ("c1_3", "bn1_3", 1, 2),
    ("c2_1", "bn2_1", 1, 1),
    ("c2_2", "bn2_2", 1, 1),
    ("c2_3", "bn2_3", 2, 1),
    ("c3_1", "bn3_1", 1, 1),
    ("c3_2", "bn3_2", 1, 1),
    ("c3_3", "bn3_3", 2, 1),
    ("dwpw", "bn4_1", 1, 1),   # depthwise 3x3 + pointwise 1x1 fused into one stage
    ("c4_2", "bn4_2", 1, 1),
    ("c4_3", "bn4_3", 1, 1),
)


def _to_np(a):
    return np.asarray(jax.device_get(a), np.float32)


def _toeplitz_mats(w_tap, w_in, w_out, stride, dil, pad):
    """Fold kx taps / W zero-padding / W stride into 3 (W_in*Cin, W_out*Cout) matrices."""
    cin, cout = w_tap.shape[2], w_tap.shape[3]
    mats = []
    for ky in range(3):
        m = np.zeros((w_in * cin, w_out * cout), np.float32)
        for kx in range(3):
            for wo in range(w_out):
                wi = wo * stride + kx * dil - pad
                if 0 <= wi < w_in:
                    m[wi * cin:(wi + 1) * cin, wo * cout:(wo + 1) * cout] += w_tap[ky, kx]
        mats.append(m)
    return mats


def build_fused_params(p, n_images, h_in, w_in, c_in):
    cfg, arrays = [], []
    h, w = h_in, w_in
    n_layers = len(_LAYER_DEFS)
    for li, (wkey, bnkey, stride, dil) in enumerate(_LAYER_DEFS):
        if wkey == "dwpw":
            wdw = _to_np(p["c4_dw"])                 # (32, 1, 3, 3)
            wpw = _to_np(p["c4_pw"])                 # (64, 32, 1, 1)
            # compose depthwise + pointwise: tap[ky,kx,ci,co] = dw[ci,ky,kx] * pw[co,ci]
            w_tap = np.einsum("iyx,oi->yxio", wdw[:, 0], wpw[:, :, 0, 0])
        else:
            w_tap = np.transpose(_to_np(p[wkey]), (2, 3, 1, 0))   # (ky, kx, Cin, Cout)
        cout = w_tap.shape[3]
        h_out = (h + 2 - 2 * dil - 1) // stride + 1
        w_out = (w + 2 - 2 * dil - 1) // stride + 1
        mats = _toeplitz_mats(w_tap.astype(np.float32), w, w_out, stride, dil, pad=1)
        scale, bias = (_to_np(a) for a in p[bnkey])
        pad_next = 0 if li == n_layers - 1 else 1
        cfg.append(dict(hp_in=h + 2, hout=h_out, hp_out=h_out + 2 * pad_next,
                        pad_out=pad_next, stride=stride, dil=dil,
                        wc_out=w_out * cout))
        arrays.extend(jnp.asarray(m) for m in mats)
        arrays.append(jnp.asarray(np.tile(scale, w_out).reshape(1, -1)))
        arrays.append(jnp.asarray(np.tile(bias, w_out).reshape(1, -1)))
        h, w = h_out, w_out

    # Collapse the three activation-free Linear layers and fold in the GAP mean.
    w1, b1 = (_to_np(a) for a in p["fc1"])
    w2, b2 = (_to_np(a) for a in p["fc2"])
    w3, b3 = (_to_np(a) for a in p["fc3"])
    wc = w1.T @ w2.T @ w3.T                          # (64, 10)
    bc = b1 @ w2.T @ w3.T + b2 @ w3.T + b3           # (10,)
    fc_w = np.tile(wc, (w, 1)) / float(h * w)        # (W_f*C_f, 10)
    arrays.append(jnp.asarray(fc_w.astype(np.float32)))
    arrays.append(jnp.asarray(bc.reshape(1, -1).astype(np.float32)))

    scratch = [pltpu.VMEM((n_images * c_["hp_out"], c_["wc_out"]), jnp.float32)
               for c_ in cfg]
    return cfg, arrays, scratch, h, int(bc.shape[0])


# -----------------------------------------------------------------------------
# Forward (single pallas_call)
# -----------------------------------------------------------------------------
def model1_forward_pallas(x_nhwc, p):
    n, h_in, w_in, c_in = x_nhwc.shape
    cfg, arrays, scratch, final_rows, n_classes = build_fused_params(
        p, n, h_in, w_in, c_in)
    # Input as a lane-dense (N*(H+2), W*C) slab with zero H-pad rows
    # (W padding lives inside the Toeplitz weight matrices).
    x2d = jnp.pad(x_nhwc, ((0, 0), (1, 1), (0, 0), (0, 0))).reshape(
        n * (h_in + 2), w_in * c_in).astype(jnp.float32)
    kernel = functools.partial(_model1_fused_kernel, cfg=cfg, n_images=n,
                               final_rows=final_rows)
    return pl.pallas_call(
        kernel,
        out_shape=jax.ShapeDtypeStruct((n, n_classes), jnp.float32),
        scratch_shapes=scratch,
        compiler_params=pltpu.CompilerParams(vmem_limit_bytes=32 * 1024 * 1024),
    )(x2d, *arrays)


# -----------------------------------------------------------------------------
# Pure-JAX reference (for correctness check)
# -----------------------------------------------------------------------------
def _ref_conv(x, w, stride=1, dilation=1, padding=1, groups=1):
    return lax.conv_general_dilated(
        x, w, window_strides=(stride, stride),
        padding=((padding, padding), (padding, padding)),
        rhs_dilation=(dilation, dilation),
        dimension_numbers=("NHWC", "OIHW", "NHWC"),
        feature_group_count=groups)


def model1_forward_ref(x, p):
    def cbr(x, w, sb, stride=1, dilation=1, padding=1, groups=1):
        s, b = sb
        y = _ref_conv(x, w, stride, dilation, padding, groups)
        return jnp.maximum(y, 0.0) * s + b

    x = cbr(x, p["c1_1"], p["bn1_1"])
    x = cbr(x, p["c1_2"], p["bn1_2"])
    x = cbr(x, p["c1_3"], p["bn1_3"], dilation=2)
    x = cbr(x, p["c2_1"], p["bn2_1"])
    x = cbr(x, p["c2_2"], p["bn2_2"])
    x = cbr(x, p["c2_3"], p["bn2_3"], stride=2)
    x = cbr(x, p["c3_1"], p["bn3_1"])
    x = cbr(x, p["c3_2"], p["bn3_2"])
    x = cbr(x, p["c3_3"], p["bn3_3"], stride=2)
    x = _ref_conv(x, p["c4_dw"], padding=1, groups=x.shape[-1])
    x = cbr(x, p["c4_pw"], p["bn4_1"], padding=0)
    x = cbr(x, p["c4_2"], p["bn4_2"])
    x = cbr(x, p["c4_3"], p["bn4_3"])
    g = jnp.mean(x, axis=(1, 2))
    w1, b1 = p["fc1"]
    w2, b2 = p["fc2"]
    w3, b3 = p["fc3"]
    h = g @ w1.T + b1
    h = h @ w2.T + b2
    h = h @ w3.T + b3
    return jax.nn.log_softmax(h, axis=1)


# -----------------------------------------------------------------------------
# Deterministic parameter init (shapes from Model1.__init__; eval-mode BN folded)
# -----------------------------------------------------------------------------
def init_params(key):
    keys = iter(jax.random.split(key, 80))

    def conv_w(cout, cin, k=3):
        fan_in = cin * k * k
        return jax.random.normal(next(keys), (cout, cin, k, k), jnp.float32) / jnp.sqrt(
            float(fan_in))

    def bn_sb(c):
        g = 1.0 + 0.1 * jax.random.normal(next(keys), (c,), jnp.float32)
        b = 0.1 * jax.random.normal(next(keys), (c,), jnp.float32)
        m = 0.1 * jax.random.normal(next(keys), (c,), jnp.float32)
        v = 1.0 + 0.1 * jax.random.uniform(next(keys), (c,), jnp.float32)
        scale = g * lax.rsqrt(v + 1e-5)
        bias = b - m * scale
        return (scale, bias)

    def lin(cout, cin):
        w = jax.random.normal(next(keys), (cout, cin), jnp.float32) / jnp.sqrt(float(cin))
        b = 0.01 * jax.random.normal(next(keys), (cout,), jnp.float32)
        return (w, b)

    p = {}
    p["c1_1"], p["bn1_1"] = conv_w(8, 3), bn_sb(8)
    p["c1_2"], p["bn1_2"] = conv_w(8, 8), bn_sb(8)
    p["c1_3"], p["bn1_3"] = conv_w(8, 8), bn_sb(8)           # dilation=2
    p["c2_1"], p["bn2_1"] = conv_w(16, 8), bn_sb(16)
    p["c2_2"], p["bn2_2"] = conv_w(16, 16), bn_sb(16)
    p["c2_3"], p["bn2_3"] = conv_w(16, 16), bn_sb(16)        # stride=2
    p["c3_1"], p["bn3_1"] = conv_w(32, 16), bn_sb(32)
    p["c3_2"], p["bn3_2"] = conv_w(32, 32), bn_sb(32)
    p["c3_3"], p["bn3_3"] = conv_w(32, 32), bn_sb(32)        # stride=2
    p["c4_dw"] = conv_w(32, 1)                               # depthwise, groups=32
    p["c4_pw"], p["bn4_1"] = conv_w(64, 32, k=1), bn_sb(64)  # 1x1 pointwise
    p["c4_2"], p["bn4_2"] = conv_w(64, 64), bn_sb(64)
    p["c4_3"], p["bn4_3"] = conv_w(64, 64), bn_sb(64)
    p["fc1"] = lin(128, 64)
    p["fc2"] = lin(256, 128)
    p["fc3"] = lin(10, 256)
    # Dropout(p=0.01) layers are identity in eval mode (no params).
    return p


# -----------------------------------------------------------------------------
if __name__ == "__main__":
    key = jax.random.PRNGKey(0)
    kx, kp = jax.random.split(key)

    # PyTorch-convention NCHW input: batch=2, C=3, 16x16 spatial.
    x_nchw = jax.random.normal(kx, (2, 3, 16, 16), jnp.float32)
    x_nhwc = jnp.transpose(x_nchw, (0, 2, 3, 1))
    params = init_params(kp)

    out = model1_forward_pallas(x_nhwc, params)
    out = jax.block_until_ready(out)

    ref = model1_forward_ref(x_nhwc, params)
    ref = jax.block_until_ready(ref)

    assert out.shape == (2, 10), out.shape
    max_diff = float(jnp.max(jnp.abs(out - ref)))
    prob_err = float(jnp.max(jnp.abs(jnp.sum(jnp.exp(out), axis=1) - 1.0)))
    assert max_diff < 5e-2, f"mismatch vs reference: {max_diff}"
    assert prob_err < 1e-3, f"log_softmax not normalized: {prob_err}"

    print("KERNEL_OK")
</pallas_src>

<mosaic_0001>
module attributes {stable_mosaic.version = 11 : i64} {
  func.func @_model1_fused_kernel(%arg0: memref<36x48xf32, #tpu.memory_space<vmem>>, %arg1: memref<48x128xf32, #tpu.memory_space<vmem>>, %arg2: memref<48x128xf32, #tpu.memory_space<vmem>>, %arg3: memref<48x128xf32, #tpu.memory_space<vmem>>, %arg4: memref<1x128xf32, #tpu.memory_space<vmem>>, %arg5: memref<1x128xf32, #tpu.memory_space<vmem>>, %arg6: memref<128x128xf32, #tpu.memory_space<vmem>>, %arg7: memref<128x128xf32, #tpu.memory_space<vmem>>, %arg8: memref<128x128xf32, #tpu.memory_space<vmem>>, %arg9: memref<1x128xf32, #tpu.memory_space<vmem>>, %arg10: memref<1x128xf32, #tpu.memory_space<vmem>>, %arg11: memref<128x112xf32, #tpu.memory_space<vmem>>, %arg12: memref<128x112xf32, #tpu.memory_space<vmem>>, %arg13: memref<128x112xf32, #tpu.memory_space<vmem>>, %arg14: memref<1x112xf32, #tpu.memory_space<vmem>>, %arg15: memref<1x112xf32, #tpu.memory_space<vmem>>, %arg16: memref<112x224xf32, #tpu.memory_space<vmem>>, %arg17: memref<112x224xf32, #tpu.memory_space<vmem>>, %arg18: memref<112x224xf32, #tpu.memory_space<vmem>>, %arg19: memref<1x224xf32, #tpu.memory_space<vmem>>, %arg20: memref<1x224xf32, #tpu.memory_space<vmem>>, %arg21: memref<224x224xf32, #tpu.memory_space<vmem>>, %arg22: memref<224x224xf32, #tpu.memory_space<vmem>>, %arg23: memref<224x224xf32, #tpu.memory_space<vmem>>, %arg24: memref<1x224xf32, #tpu.memory_space<vmem>>, %arg25: memref<1x224xf32, #tpu.memory_space<vmem>>, %arg26: memref<224x112xf32, #tpu.memory_space<vmem>>, %arg27: memref<224x112xf32, #tpu.memory_space<vmem>>, %arg28: memref<224x112xf32, #tpu.memory_space<vmem>>, %arg29: memref<1x112xf32, #tpu.memory_space<vmem>>, %arg30: memref<1x112xf32, #tpu.memory_space<vmem>>, %arg31: memref<112x224xf32, #tpu.memory_space<vmem>>, %arg32: memref<112x224xf32, #tpu.memory_space<vmem>>, %arg33: memref<112x224xf32, #tpu.memory_space<vmem>>, %arg34: memref<1x224xf32, #tpu.memory_space<vmem>>, %arg35: memref<1x224xf32, #tpu.memory_space<vmem>>, %arg36: memref<224x224xf32, #tpu.memory_space<vmem>>, %arg37: memref<224x224xf32, #tpu.memory_space<vmem>>, %arg38: memref<224x224xf32, #tpu.memory_space<vmem>>, %arg39: memref<1x224xf32, #tpu.memory_space<vmem>>, %arg40: memref<1x224xf32, #tpu.memory_space<vmem>>, %arg41: memref<224x128xf32, #tpu.memory_space<vmem>>, %arg42: memref<224x128xf32, #tpu.memory_space<vmem>>, %arg43: memref<224x128xf32, #tpu.memory_space<vmem>>, %arg44: memref<1x128xf32, #tpu.memory_space<vmem>>, %arg45: memref<1x128xf32, #tpu.memory_space<vmem>>, %arg46: memref<128x256xf32, #tpu.memory_space<vmem>>, %arg47: memref<128x256xf32, #tpu.memory_space<vmem>>, %arg48: memref<128x256xf32, #tpu.memory_space<vmem>>, %arg49: memref<1x256xf32, #tpu.memory_space<vmem>>, %arg50: memref<1x256xf32, #tpu.memory_space<vmem>>, %arg51: memref<256x256xf32, #tpu.memory_space<vmem>>, %arg52: memref<256x256xf32, #tpu.memory_space<vmem>>, %arg53: memref<256x256xf32, #tpu.memory_space<vmem>>, %arg54: memref<1x256xf32, #tpu.memory_space<vmem>>, %arg55: memref<1x256xf32, #tpu.memory_space<vmem>>, %arg56: memref<256x256xf32, #tpu.memory_space<vmem>>, %arg57: memref<256x256xf32, #tpu.memory_space<vmem>>, %arg58: memref<256x256xf32, #tpu.memory_space<vmem>>, %arg59: memref<1x256xf32, #tpu.memory_space<vmem>>, %arg60: memref<1x256xf32, #tpu.memory_space<vmem>>, %arg61: memref<256x10xf32, #tpu.memory_space<vmem>>, %arg62: memref<1x10xf32, #tpu.memory_space<vmem>>, %arg63: memref<2x10xf32, #tpu.memory_space<vmem>>, %arg64: memref<36x128xf32, #tpu.memory_space<vmem>>, %arg65: memref<36x128xf32, #tpu.memory_space<vmem>>, %arg66: memref<32x112xf32, #tpu.memory_space<vmem>>, %arg67: memref<32x224xf32, #tpu.memory_space<vmem>>, %arg68: memref<32x224xf32, #tpu.memory_space<vmem>>, %arg69: memref<18x112xf32, #tpu.memory_space<vmem>>, %arg70: memref<18x224xf32, #tpu.memory_space<vmem>>, %arg71: memref<18x224xf32, #tpu.memory_space<vmem>>, %arg72: memref<12x128xf32, #tpu.memory_space<vmem>>, %arg73: memref<12x256xf32, #tpu.memory_space<vmem>>, %arg74: memref<12x256xf32, #tpu.memory_space<vmem>>, %arg75: memref<8x256xf32, #tpu.memory_space<vmem>>) attributes {dimension_semantics = [], scalar_prefetch = 0 : i64, scratch_operands = 12 : i64, tpu.core_type = #tpu.core_type<tc>} {
    %cst = arith.constant 0.000000e+00 : f32
    %0 = vector.broadcast %cst : f32 to vector<36x128xf32>
    %c0 = arith.constant 0 : index
    %c0_0 = arith.constant 0 : index
    %1 = vector.load %arg64[%c0, %c0_0] : memref<36x128xf32, #tpu.memory_space<vmem>>, vector<36x128xf32>
    tpu.vector_store %arg64[%c0, %c0_0], %0 {strides = array<i32>} : memref<36x128xf32, #tpu.memory_space<vmem>>, vector<36x128xf32>,
    %cst_1 = arith.constant 0.000000e+00 : f32
    %2 = vector.broadcast %cst_1 : f32 to vector<36x128xf32>
    %c0_2 = arith.constant 0 : index
    %c0_3 = arith.constant 0 : index
    %3 = vector.load %arg65[%c0_2, %c0_3] : memref<36x128xf32, #tpu.memory_space<vmem>>, vector<36x128xf32>
    tpu.vector_store %arg65[%c0_2, %c0_3], %2 {strides = array<i32>} : memref<36x128xf32, #tpu.memory_space<vmem>>, vector<36x128xf32>,
    %cst_4 = arith.constant 0.000000e+00 : f32
    %4 = vector.broadcast %cst_4 : f32 to vector<32x112xf32>
    %c0_5 = arith.constant 0 : index
    %c0_6 = arith.constant 0 : index
    %5 = vector.load %arg66[%c0_5, %c0_6] : memref<32x112xf32, #tpu.memory_space<vmem>>, vector<32x112xf32>
    tpu.vector_store %arg66[%c0_5, %c0_6], %4 {strides = array<i32>} : memref<32x112xf32, #tpu.memory_space<vmem>>, vector<32x112xf32>,
    %cst_7 = arith.constant 0.000000e+00 : f32
    %6 = vector.broadcast %cst_7 : f32 to vector<32x224xf32>
    %c0_8 = arith.constant 0 : index
    %c0_9 = arith.constant 0 : index
    %7 = vector.load %arg67[%c0_8, %c0_9] : memref<32x224xf32, #tpu.memory_space<vmem>>, vector<32x224xf32>
    tpu.vector_store %arg67[%c0_8, %c0_9], %6 {strides = array<i32>} : memref<32x224xf32, #tpu.memory_space<vmem>>, vector<32x224xf32>,
    %cst_10 = arith.constant 0.000000e+00 : f32
    %8 = vector.broadcast %cst_10 : f32 to vector<32x224xf32>
    %c0_11 = arith.constant 0 : index
    %c0_12 = arith.constant 0 : index
    %9 = vector.load %arg68[%c0_11, %c0_12] : memref<32x224xf32, #tpu.memory_space<vmem>>, vector<32x224xf32>
    tpu.vector_store %arg68[%c0_11, %c0_12], %8 {strides = array<i32>} : memref<32x224xf32, #tpu.memory_space<vmem>>, vector<32x224xf32>,
    %cst_13 = arith.constant 0.000000e+00 : f32
    %10 = vector.broadcast %cst_13 : f32 to vector<18x112xf32>
    %c0_14 = arith.constant 0 : index
    %c0_15 = arith.constant 0 : index
    %11 = vector.load %arg69[%c0_14, %c0_15] : memref<18x112xf32, #tpu.memory_space<vmem>>, vector<18x112xf32>
    tpu.vector_store %arg69[%c0_14, %c0_15], %10 {strides = array<i32>} : memref<18x112xf32, #tpu.memory_space<vmem>>, vector<18x112xf32>,
    %cst_16 = arith.constant 0.000000e+00 : f32
    %12 = vector.broadcast %cst_16 : f32 to vector<18x224xf32>
    %c0_17 = arith.constant 0 : index
    %c0_18 = arith.constant 0 : index
    %13 = vector.load %arg70[%c0_17, %c0_18] : memref<18x224xf32, #tpu.memory_space<vmem>>, vector<18x224xf32>
    tpu.vector_store %arg70[%c0_17, %c0_18], %12 {strides = array<i32>} : memref<18x224xf32, #tpu.memory_space<vmem>>, vector<18x224xf32>,
    %cst_19 = arith.constant 0.000000e+00 : f32
    %14 = vector.broadcast %cst_19 : f32 to vector<18x224xf32>
    %c0_20 = arith.constant 0 : index
    %c0_21 = arith.constant 0 : index
    %15 = vector.load %arg71[%c0_20, %c0_21] : memref<18x224xf32, #tpu.memory_space<vmem>>, vector<18x224xf32>
    tpu.vector_store %arg71[%c0_20, %c0_21], %14 {strides = array<i32>} : memref<18x224xf32, #tpu.memory_space<vmem>>, vector<18x224xf32>,
    %cst_22 = arith.constant 0.000000e+00 : f32
    %16 = vector.broadcast %cst_22 : f32 to vector<12x128xf32>
    %c0_23 = arith.constant 0 : index
    %c0_24 = arith.constant 0 : index
    %17 = vector.load %arg72[%c0_23, %c0_24] : memref<12x128xf32, #tpu.memory_space<vmem>>, vector<12x128xf32>
    tpu.vector_store %arg72[%c0_23, %c0_24], %16 {strides = array<i32>} : memref<12x128xf32, #tpu.memory_space<vmem>>, vector<12x128xf32>,
    %cst_25 = arith.constant 0.000000e+00 : f32
    %18 = vector.broadcast %cst_25 : f32 to vector<12x256xf32>
    %c0_26 = arith.constant 0 : index
    %c0_27 = arith.constant 0 : index
    %19 = vector.load %arg73[%c0_26, %c0_27] : memref<12x256xf32, #tpu.memory_space<vmem>>, vector<12x256xf32>
    tpu.vector_store %arg73[%c0_26, %c0_27], %18 {strides = array<i32>} : memref<12x256xf32, #tpu.memory_space<vmem>>, vector<12x256xf32>,
    %cst_28 = arith.constant 0.000000e+00 : f32
    %20 = vector.broadcast %cst_28 : f32 to vector<12x256xf32>
    %c0_29 = arith.constant 0 : index
    %c0_30 = arith.constant 0 : index
    %21 = vector.load %arg74[%c0_29, %c0_30] : memref<12x256xf32, #tpu.memory_space<vmem>>, vector<12x256xf32>
    tpu.vector_store %arg74[%c0_29, %c0_30], %20 {strides = array<i32>} : memref<12x256xf32, #tpu.memory_space<vmem>>, vector<12x256xf32>,
    %c0_31 = arith.constant 0 : index
    %c0_32 = arith.constant 0 : index
    %22 = vector.load %arg1[%c0_31, %c0_32] : memref<48x128xf32, #tpu.memory_space<vmem>>, vector<48x128xf32>
    %c0_33 = arith.constant 0 : index
    %c0_34 = arith.constant 0 : index
    %23 = vector.load %arg2[%c0_33, %c0_34] : memref<48x128xf32, #tpu.memory_space<vmem>>, vector<48x128xf32>
    %c0_35 = arith.constant 0 : index
    %c0_36 = arith.constant 0 : index
    %24 = vector.load %arg3[%c0_35, %c0_36] : memref<48x128xf32, #tpu.memory_space<vmem>>, vector<48x128xf32>
    %c0_37 = arith.constant 0 : index
    %c0_38 = arith.constant 0 : index
    %25 = vector.load %arg4[%c0_37, %c0_38] : memref<1x128xf32, #tpu.memory_space<vmem>>, vector<1x128xf32>
    %c0_39 = arith.constant 0 : index
    %c0_40 = arith.constant 0 : index
    %26 = vector.load %arg5[%c0_39, %c0_40] : memref<1x128xf32, #tpu.memory_space<vmem>>, vector<1x128xf32>
    %c0_41 = arith.constant 0 : index
    %c0_42 = arith.constant 0 : index
    %27 = vector.load %arg0[%c0_41, %c0_42] : memref<36x48xf32, #tpu.memory_space<vmem>>, vector<34x48xf32>
    %cst_43 = arith.constant dense<0.000000e+00> : vector<34x128xf32>
    %28 = tpu.matmul %27, %22, %cst_43 {dimension_numbers = #tpu.dot_dimension_numbers<[1], [0], [0], [1], [0, 0, 1, 1], [], []>} : vector<34x48xf32>, vector<48x128xf32>, vector<34x128xf32> -> vector<34x128xf32>
    %c1 = arith.constant 1 : index
    %c0_44 = arith.constant 0 : index
    %29 = vector.load %arg0[%c1, %c0_44] : memref<36x48xf32, #tpu.memory_space<vmem>>, vector<34x48xf32>
    %cst_45 = arith.constant dense<0.000000e+00> : vector<34x128xf32>
    %30 = tpu.matmul %29, %23, %cst_45 {dimension_numbers = #tpu.dot_dimension_numbers<[1], [0], [0], [1], [0, 0, 1, 1], [], []>} : vector<34x48xf32>, vector<48x128xf32>, vector<34x128xf32> -> vector<34x128xf32>
    %31 = arith.addf %28, %30 : vector<34x128xf32>
    %c2 = arith.constant 2 : index
    %c0_46 = arith.constant 0 : index
    %32 = vector.load %arg0[%c2, %c0_46] : memref<36x48xf32, #tpu.memory_space<vmem>>, vector<34x48xf32>
    %cst_47 = arith.constant dense<0.000000e+00> : vector<34x128xf32>
    %33 = tpu.matmul %32, %24, %cst_47 {dimension_numbers = #tpu.dot_dimension_numbers<[1], [0], [0], [1], [0, 0, 1, 1], [], []>} : vector<34x48xf32>, vector<48x128xf32>, vector<34x128xf32> -> vector<34x128xf32>
    %34 = arith.addf %31, %33 : vector<34x128xf32>
    %cst_48 = arith.constant 0.000000e+00 : f32
    %35 = vector.broadcast %cst_48 : f32 to vector<34x128xf32>
    %36 = arith.maximumf %34, %35 : vector<34x128xf32>
    %37 = vector.broadcast %25 : vector<1x128xf32> to vector<34x128xf32>
    %38 = arith.mulf %36, %37 : vector<34x128xf32>
    %39 = vector.broadcast %26 : vector<1x128xf32> to vector<34x128xf32>
    %40 = arith.addf %38, %39 : vector<34x128xf32>
    %41 = vector.extract_strided_slice %40 {offsets = [0, 0], sizes = [16, 128], strides = [1, 1]} : vector<34x128xf32> to vector<16x128xf32>
    %c1_49 = arith.constant 1 : index
    %c0_50 = arith.constant 0 : index
    %42 = vector.load %arg64[%c1_49, %c0_50] : memref<36x128xf32, #tpu.memory_space<vmem>>, vector<16x128xf32>
    tpu.vector_store %arg64[%c1_49, %c0_50], %41 {strides = array<i32>} : memref<36x128xf32, #tpu.memory_space<vmem>>, vector<16x128xf32>,
    %43 = vector.extract_strided_slice %40 {offsets = [18, 0], sizes = [16, 128], strides = [1, 1]} : vector<34x128xf32> to vector<16x128xf32>
    %c19 = arith.constant 19 : index
    %c0_51 = arith.constant 0 : index
    %44 = vector.load %arg64[%c19, %c0_51] : memref<36x128xf32, #tpu.memory_space<vmem>>, vector<16x128xf32>
    tpu.vector_store %arg64[%c19, %c0_51], %43 {strides = array<i32>} : memref<36x128xf32, #tpu.memory_space<vmem>>, vector<16x128xf32>,
    %c0_52 = arith.constant 0 : index
    %c0_53 = arith.constant 0 : index
    %45 = vector.load %arg6[%c0_52, %c0_53] : memref<128x128xf32, #tpu.memory_space<vmem>>, vector<128x128xf32>
    %c0_54 = arith.constant 0 : index
    %c0_55 = arith.constant 0 : index
    %46 = vector.load %arg7[%c0_54, %c0_55] : memref<128x128xf32, #tpu.memory_space<vmem>>, vector<128x128xf32>
    %c0_56 = arith.constant 0 : index
    %c0_57 = arith.constant 0 : index
    %47 = vector.load %arg8[%c0_56, %c0_57] : memref<128x128xf32, #tpu.memory_space<vmem>>, vector<128x128xf32>
    %c0_58 = arith.constant 0 : index
    %c0_59 = arith.constant 0 : index
    %48 = vector.load %arg9[%c0_58, %c0_59] : memref<1x128xf32, #tpu.memory_space<vmem>>, vector<1x128xf32>
    %c0_60 = arith.constant 0 : index
    %c0_61 = arith.constant 0 : index
    %49 = vector.load %arg10[%c0_60, %c0_61] : memref<1x128xf32, #tpu.memory_space<vmem>>, vector<1x128xf32>
    %c0_62 = arith.constant 0 : index
    %c0_63 = arith.constant 0 : index
    %50 = vector.load %arg64[%c0_62, %c0_63] : memref<36x128xf32, #tpu.memory_space<vmem>>, vector<34x128xf32>
    %cst_64 = arith.constant dense<0.000000e+00> : vector<34x128xf32>
    %51 = tpu.matmul %50, %45, %cst_64 {dimension_numbers = #tpu.dot_dimension_numbers<[1], [0], [0], [1], [0, 0, 1, 1], [], []>} : vector<34x128xf32>, vector<128x128xf32>, vector<34x128xf32> -> vector<34x128xf32>
    %c1_65 = arith.constant 1 : index
    %c0_66 = arith.constant 0 : index
    %52 = vector.load %arg64[%c1_65, %c0_66] : memref<36x128xf32, #tpu.memory_space<vmem>>, vector<34x128xf32>
    %cst_67 = arith.constant dense<0.000000e+00> : vector<34x128xf32>
    %53 = tpu.matmul %52, %46, %cst_67 {dimension_numbers = #tpu.dot_dimension_numbers<[1], [0], [0], [1], [0, 0, 1, 1], [], []>} : vector<34x128xf32>, vector<128x128xf32>, vector<34x128xf32> -> vector<34x128xf32>
    %54 = arith.addf %51, %53 : vector<34x128xf32>
    %c2_68 = arith.constant 2 : index
    %c0_69 = arith.constant 0 : index
    %55 = vector.load %arg64[%c2_68, %c0_69] : memref<36x128xf32, #tpu.memory_space<vmem>>, vector<34x128xf32>
    %cst_70 = arith.constant dense<0.000000e+00> : vector<34x128xf32>
    %56 = tpu.matmul %55, %47, %cst_70 {dimension_numbers = #tpu.dot_dimension_numbers<[1], [0], [0], [1], [0, 0, 1, 1], [], []>} : vector<34x128xf32>, vector<128x128xf32>, vector<34x128xf32> -> vector<34x128xf32>
    %57 = arith.addf %54, %56 : vector<34x128xf32>
    %cst_71 = arith.constant 0.000000e+00 : f32
    %58 = vector.broadcast %cst_71 : f32 to vector<34x128xf32>
    %59 = arith.maximumf %57, %58 : vector<34x128xf32>
    %60 = vector.broadcast %48 : vector<1x128xf32> to vector<34x128xf32>
    %61 = arith.mulf %59, %60 : vector<34x128xf32>
    %62 = vector.broadcast %49 : vector<1x128xf32> to vector<34x128xf32>
    %63 = arith.addf %61, %62 : vector<34x128xf32>
    %64 = vector.extract_strided_slice %63 {offsets = [0, 0], sizes = [16, 128], strides = [1, 1]} : vector<34x128xf32> to vector<16x128xf32>
    %c1_72 = arith.constant 1 : index
    %c0_73 = arith.constant 0 : index
    %65 = vector.load %arg65[%c1_72, %c0_73] : memref<36x128xf32, #tpu.memory_space<vmem>>, vector<16x128xf32>
    tpu.vector_store %arg65[%c1_72, %c0_73], %64 {strides = array<i32>} : memref<36x128xf32, #tpu.memory_space<vmem>>, vector<16x128xf32>,
    %66 = vector.extract_strided_slice %63 {offsets = [18, 0], sizes = [16, 128], strides = [1, 1]} : vector<34x128xf32> to vector<16x128xf32>
    %c19_74 = arith.constant 19 : index
    %c0_75 = arith.constant 0 : index
    %67 = vector.load %arg65[%c19_74, %c0_75] : memref<36x128xf32, #tpu.memory_space<vmem>>, vector<16x128xf32>
    tpu.vector_store %arg65[%c19_74, %c0_75], %66 {strides = array<i32>} : memref<36x128xf32, #tpu.memory_space<vmem>>, vector<16x128xf32>,
    %c0_76 = arith.constant 0 : index
    %c0_77 = arith.constant 0 : index
    %68 = vector.load %arg11[%c0_76, %c0_77] : memref<128x112xf32, #tpu.memory_space<vmem>>, vector<128x112xf32>
    %c0_78 = arith.constant 0 : index
    %c0_79 = arith.constant 0 : index
    %69 = vector.load %arg12[%c0_78, %c0_79] : memref<128x112xf32, #tpu.memory_space<vmem>>, vector<128x112xf32>
    %c0_80 = arith.constant 0 : index
    %c0_81 = arith.constant 0 : index
    %70 = vector.load %arg13[%c0_80, %c0_81] : memref<128x112xf32, #tpu.memory_space<vmem>>, vector<128x112xf32>
    %c0_82 = arith.constant 0 : index
    %c0_83 = arith.constant 0 : index
    %71 = vector.load %arg14[%c0_82, %c0_83] : memref<1x112xf32, #tpu.memory_space<vmem>>, vector<1x112xf32>
    %c0_84 = arith.constant 0 : index
    %c0_85 = arith.constant 0 : index
    %72 = vector.load %arg15[%c0_84, %c0_85] : memref<1x112xf32, #tpu.memory_space<vmem>>, vector<1x112xf32>
    %c0_86 = arith.constant 0 : index
    %c0_87 = arith.constant 0 : index
    %73 = vector.load %arg65[%c0_86, %c0_87] : memref<36x128xf32, #tpu.memory_space<vmem>>, vector<32x128xf32>
    %cst_88 = arith.constant dense<0.000000e+00> : vector<32x112xf32>
    %74 = tpu.matmul %73, %68, %cst_88 {dimension_numbers = #tpu.dot_dimension_numbers<[1], [0], [0], [1], [0, 0, 1, 1], [], []>} : vector<32x128xf32>, vector<128x112xf32>, vector<32x112xf32> -> vector<32x112xf32>
    %c2_89 = arith.constant 2 : index
    %c0_90 = arith.constant 0 : index
    %75 = vector.load %arg65[%c2_89, %c0_90] : memref<36x128xf32, #tpu.memory_space<vmem>>, vector<32x128xf32>
    %cst_91 = arith.constant dense<0.000000e+00> : vector<32x112xf32>
    %76 = tpu.matmul %75, %69, %cst_91 {dimension_numbers = #tpu.dot_dimension_numbers<[1], [0], [0], [1], [0, 0, 1, 1], [], []>} : vector<32x128xf32>, vector<128x112xf32>, vector<32x112xf32> -> vector<32x112xf32>
    %77 = arith.addf %74, %76 : vector<32x112xf32>
    %c4 = arith.constant 4 : index
    %c0_92 = arith.constant 0 : index
    %78 = vector.load %arg65[%c4, %c0_92] : memref<36x128xf32, #tpu.memory_space<vmem>>, vector<32x128xf32>
    %cst_93 = arith.constant dense<0.000000e+00> : vector<32x112xf32>
    %79 = tpu.matmul %78, %70, %cst_93 {dimension_numbers = #tpu.dot_dimension_numbers<[1], [0], [0], [1], [0, 0, 1, 1], [], []>} : vector<32x128xf32>, vector<128x112xf32>, vector<32x112xf32> -> vector<32x112xf32>
    %80 = arith.addf %77, %79 : vector<32x112xf32>
    %cst_94 = arith.constant 0.000000e+00 : f32
    %81 = vector.broadcast %cst_94 : f32 to vector<32x112xf32>
    %82 = arith.maximumf %80, %81 : vector<32x112xf32>
    %83 = vector.broadcast %71 : vector<1x112xf32> to vector<32x112xf32>
    %84 = arith.mulf %82, %83 : vector<32x112xf32>
    %85 = vector.broadcast %72 : vector<1x112xf32> to vector<32x112xf32>
    %86 = arith.addf %84, %85 : vector<32x112xf32>
    %87 = vector.extract_strided_slice %86 {offsets = [0, 0], sizes = [14, 112], strides = [1, 1]} : vector<32x112xf32> to vector<14x112xf32>
    %c1_95 = arith.constant 1 : index
    %c0_96 = arith.constant 0 : index
    %88 = vector.load %arg66[%c1_95, %c0_96] : memref<32x112xf32, #tpu.memory_space<vmem>>, vector<14x112xf32>
    tpu.vector_store %arg66[%c1_95, %c0_96], %87 {strides = array<i32>} : memref<32x112xf32, #tpu.memory_space<vmem>>, vector<14x112xf32>,
    %89 = vector.extract_strided_slice %86 {offsets = [18, 0], sizes = [14, 112], strides = [1, 1]} : vector<32x112xf32> to vector<14x112xf32>
    %c17 = arith.constant 17 : index
    %c0_97 = arith.constant 0 : index
    %90 = vector.load %arg66[%c17, %c0_97] : memref<32x112xf32, #tpu.memory_space<vmem>>, vector<14x112xf32>
    tpu.vector_store %arg66[%c17, %c0_97], %89 {strides = array<i32>} : memref<32x112xf32, #tpu.memory_space<vmem>>, vector<14x112xf32>,
    %c0_98 = arith.constant 0 : index
    %c0_99 = arith.constant 0 : index
    %91 = vector.load %arg16[%c0_98, %c0_99] : memref<112x224xf32, #tpu.memory_space<vmem>>, vector<112x224xf32>
    %c0_100 = arith.constant 0 : index
    %c0_101 = arith.constant 0 : index
    %92 = vector.load %arg17[%c0_100, %c0_101] : memref<112x224xf32, #tpu.memory_space<vmem>>, vector<112x224xf32>
    %c0_102 = arith.constant 0 : index
    %c0_103 = arith.constant 0 : index
    %93 = vector.load %arg18[%c0_102, %c0_103] : memref<112x224xf32, #tpu.memory_space<vmem>>, vector<112x224xf32>
    %c0_104 = arith.constant 0 : index
    %c0_105 = arith.constant 0 : index
    %94 = vector.load %arg19[%c0_104, %c0_105] : memref<1x224xf32, #tpu.memory_space<vmem>>, vector<1x224xf32>
    %c0_106 = arith.constant 0 : index
    %c0_107 = arith.constant 0 : index
    %95 = vector.load %arg20[%c0_106, %c0_107] : memref<1x224xf32, #tpu.memory_space<vmem>>, vector<1x224xf32>
    %c0_108 = arith.constant 0 : index
    %c0_109 = arith.constant 0 : index
    %96 = vector.load %arg66[%c0_108, %c0_109] : memref<32x112xf32, #tpu.memory_space<vmem>>, vector<30x112xf32>
    %cst_110 = arith.constant dense<0.000000e+00> : vector<30x224xf32>
    %97 = tpu.matmul %96, %91, %cst_110 {dimension_numbers = #tpu.dot_dimension_numbers<[1], [0], [0], [1], [0, 0, 1, 1], [], []>} : vector<30x112xf32>, vector<112x224xf32>, vector<30x224xf32> -> vector<30x224xf32>
    %c1_111 = arith.constant 1 : index
    %c0_112 = arith.constant 0 : index
    %98 = vector.load %arg66[%c1_111, %c0_112] : memref<32x112xf32, #tpu.memory_space<vmem>>, vector<30x112xf32>
    %cst_113 = arith.constant dense<0.000000e+00> : vector<30x224xf32>
    %99 = tpu.matmul %98, %92, %cst_113 {dimension_numbers = #tpu.dot_dimension_numbers<[1], [0], [0], [1], [0, 0, 1, 1], [], []>} : vector<30x112xf32>, vector<112x224xf32>, vector<30x224xf32> -> vector<30x224xf32>
    %100 = arith.addf %97, %99 : vector<30x224xf32>
    %c2_114 = arith.constant 2 : index
    %c0_115 = arith.constant 0 : index
    %101 = vector.load %arg66[%c2_114, %c0_115] : memref<32x112xf32, #tpu.memory_space<vmem>>, vector<30x112xf32>
    %cst_116 = arith.constant dense<0.000000e+00> : vector<30x224xf32>
    %102 = tpu.matmul %101, %93, %cst_116 {dimension_numbers = #tpu.dot_dimension_numbers<[1], [0], [0], [1], [0, 0, 1, 1], [], []>} : vector<30x112xf32>, vector<112x224xf32>, vector<30x224xf32> -> vector<30x224xf32>
    %103 = arith.addf %100, %102 : vector<30x224xf32>
    %cst_117 = arith.constant 0.000000e+00 : f32
    %104 = vector.broadcast %cst_117 : f32 to vector<30x224xf32>
    %105 = arith.maximumf %103, %104 : vector<30x224xf32>
    %106 = vector.broadcast %94 : vector<1x224xf32> to vector<30x224xf32>
    %107 = arith.mulf %105, %106 : vector<30x224xf32>
    %108 = vector.broadcast %95 : vector<1x224xf32> to vector<30x224xf32>
    %109 = arith.addf %107, %108 : vector<30x224xf32>
    %110 = vector.extract_strided_slice %109 {offsets = [0, 0], sizes = [14, 224], strides = [1, 1]} : vector<30x224xf32> to vector<14x224xf32>
    %c1_118 = arith.constant 1 : index
    %c0_119 = arith.constant 0 : index
    %111 = vector.load %arg67[%c1_118, %c0_119] : memref<32x224xf32, #tpu.memory_space<vmem>>, vector<14x224xf32>
    tpu.vector_store %arg67[%c1_118, %c0_119], %110 {strides = array<i32>} : memref<32x224xf32, #tpu.memory_space<vmem>>, vector<14x224xf32>,
    %112 = vector.extract_strided_slice %109 {offsets = [16, 0], sizes = [14, 224], strides = [1, 1]} : vector<30x224xf32> to vector<14x224xf32>
    %c17_120 = arith.constant 17 : index
    %c0_121 = arith.constant 0 : index
    %113 = vector.load %arg67[%c17_120, %c0_121] : memref<32x224xf32, #tpu.memory_space<vmem>>, vector<14x224xf32>
    tpu.vector_store %arg67[%c17_120, %c0_121], %112 {strides = array<i32>} : memref<32x224xf32, #tpu.memory_space<vmem>>, vector<14x224xf32>,
    %c0_122 = arith.constant 0 : index
    %c0_123 = arith.constant 0 : index
    %114 = vector.load %arg21[%c0_122, %c0_123] : memref<224x224xf32, #tpu.memory_space<vmem>>, vector<224x224xf32>
    %c0_124 = arith.constant 0 : index
    %c0_125 = arith.constant 0 : index
    %115 = vector.load %arg22[%c0_124, %c0_125] : memref<224x224xf32, #tpu.memory_space<vmem>>, vector<224x224xf32>
    %c0_126 = arith.constant 0 : index
    %c0_127 = arith.constant 0 : index
    %116 = vector.load %arg23[%c0_126, %c0_127] : memref<224x224xf32, #tpu.memory_space<vmem>>, vector<224x224xf32>
    %c0_128 = arith.constant 0 : index
    %c0_129 = arith.constant 0 : index
    %117 = vector.load %arg24[%c0_128, %c0_129] : memref<1x224xf32, #tpu.memory_space<vmem>>, vector<1x224xf32>
    %c0_130 = arith.constant 0 : index
    %c0_131 = arith.constant 0 : index
    %118 = vector.load %arg25[%c0_130, %c0_131] : memref<1x224xf32, #tpu.memory_space<vmem>>, vector<1x224xf32>
    %c0_132 = arith.constant 0 : index
    %c0_133 = arith.constant 0 : index
    %119 = vector.load %arg67[%c0_132, %c0_133] : memref<32x224xf32, #tpu.memory_space<vmem>>, vector<30x224xf32>
    %cst_134 = arith.constant dense<0.000000e+00> : vector<30x224xf32>
    %120 = tpu.matmul %119, %114, %cst_134 {dimension_numbers = #tpu.dot_dimension_numbers<[1], [0], [0], [1], [0, 0, 1, 1], [], []>} : vector<30x224xf32>, vector<224x224xf32>, vector<30x224xf32> -> vector<30x224xf32>
    %c1_135 = arith.constant 1 : index
    %c0_136 = arith.constant 0 : index
    %121 = vector.load %arg67[%c1_135, %c0_136] : memref<32x224xf32, #tpu.memory_space<vmem>>, vector<30x224xf32>
    %cst_137 = arith.constant dense<0.000000e+00> : vector<30x224xf32>
    %122 = tpu.matmul %121, %115, %cst_137 {dimension_numbers = #tpu.dot_dimension_numbers<[1], [0], [0], [1], [0, 0, 1, 1], [], []>} : vector<30x224xf32>, vector<224x224xf32>, vector<30x224xf32> -> vector<30x224xf32>
    %123 = arith.addf %120, %122 : vector<30x224xf32>
    %c2_138 = arith.constant 2 : index
    %c0_139 = arith.constant 0 : index
    %124 = vector.load %arg67[%c2_138, %c0_139] : memref<32x224xf32, #tpu.memory_space<vmem>>, vector<30x224xf32>
    %cst_140 = arith.constant dense<0.000000e+00> : vector<30x224xf32>
    %125 = tpu.matmul %124, %116, %cst_140 {dimension_numbers = #tpu.dot_dimension_numbers<[1], [0], [0], [1], [0, 0, 1, 1], [], []>} : vector<30x224xf32>, vector<224x224xf32>, vector<30x224xf32> -> vector<30x224xf32>
    %126 = arith.addf %123, %125 : vector<30x224xf32>
    %cst_141 = arith.constant 0.000000e+00 : f32
    %127 = vector.broadcast %cst_141 : f32 to vector<30x224xf32>
    %128 = arith.maximumf %126, %127 : vector<30x224xf32>
    %129 = vector.broadcast %117 : vector<1x224xf32> to vector<30x224xf32>
    %130 = arith.mulf %128, %129 : vector<30x224xf32>
    %131 = vector.broadcast %118 : vector<1x224xf32> to vector<30x224xf32>
    %132 = arith.addf %130, %131 : vector<30x224xf32>
    %133 = vector.extract_strided_slice %132 {offsets = [0, 0], sizes = [14, 224], strides = [1, 1]} : vector<30x224xf32> to vector<14x224xf32>
    %c1_142 = arith.constant 1 : index
    %c0_143 = arith.constant 0 : index
    %134 = vector.load %arg68[%c1_142, %c0_143] : memref<32x224xf32, #tpu.memory_space<vmem>>, vector<14x224xf32>
    tpu.vector_store %arg68[%c1_142, %c0_143], %133 {strides = array<i32>} : memref<32x224xf32, #tpu.memory_space<vmem>>, vector<14x224xf32>,
    %135 = vector.extract_strided_slice %132 {offsets = [16, 0], sizes = [14, 224], strides = [1, 1]} : vector<30x224xf32> to vector<14x224xf32>
    %c17_144 = arith.constant 17 : index
    %c0_145 = arith.constant 0 : index
    %136 = vector.load %arg68[%c17_144, %c0_145] : memref<32x224xf32, #tpu.memory_space<vmem>>, vector<14x224xf32>
    tpu.vector_store %arg68[%c17_144, %c0_145], %135 {strides = array<i32>} : memref<32x224xf32, #tpu.memory_space<vmem>>, vector<14x224xf32>,
    %c0_146 = arith.constant 0 : index
    %c0_147 = arith.constant 0 : index
    %137 = vector.load %arg26[%c0_146, %c0_147] : memref<224x112xf32, #tpu.memory_space<vmem>>, vector<224x112xf32>
    %c0_148 = arith.constant 0 : index
    %c0_149 = arith.constant 0 : index
    %138 = vector.load %arg27[%c0_148, %c0_149] : memref<224x112xf32, #tpu.memory_space<vmem>>, vector<224x112xf32>
    %c0_150 = arith.constant 0 : index
    %c0_151 = arith.constant 0 : index
    %139 = vector.load %arg28[%c0_150, %c0_151] : memref<224x112xf32, #tpu.memory_space<vmem>>, vector<224x112xf32>
    %c0_152 = arith.constant 0 : index
    %c0_153 = arith.constant 0 : index
    %140 = vector.load %arg29[%c0_152, %c0_153] : memref<1x112xf32, #tpu.memory_space<vmem>>, vector<1x112xf32>
    %c0_154 = arith.constant 0 : index
    %c0_155 = arith.constant 0 : index
    %141 = vector.load %arg30[%c0_154, %c0_155] : memref<1x112xf32, #tpu.memory_space<vmem>>, vector<1x112xf32>
    %c0_156 = arith.constant 0 : index
    %c0_157 = arith.constant 0 : index
    %142 = vector.load %arg68[%c0_156, %c0_157] : memref<32x224xf32, #tpu.memory_space<vmem>>, vector<29x224xf32>
    %cst_158 = arith.constant dense<0.000000e+00> : vector<29x112xf32>
    %143 = tpu.matmul %142, %137, %cst_158 {dimension_numbers = #tpu.dot_dimension_numbers<[1], [0], [0], [1], [0, 0, 1, 1], [], []>} : vector<29x224xf32>, vector<224x112xf32>, vector<29x112xf32> -> vector<29x112xf32>
    %c1_159 = arith.constant 1 : index
    %c0_160 = arith.constant 0 : index
    %144 = vector.load %arg68[%c1_159, %c0_160] : memref<32x224xf32, #tpu.memory_space<vmem>>, vector<29x224xf32>
    %cst_161 = arith.constant dense<0.000000e+00> : vector<29x112xf32>
    %145 = tpu.matmul %144, %138, %cst_161 {dimension_numbers = #tpu.dot_dimension_numbers<[1], [0], [0], [1], [0, 0, 1, 1], [], []>} : vector<29x224xf32>, vector<224x112xf32>, vector<29x112xf32> -> vector<29x112xf32>
    %146 = arith.addf %143, %145 : vector<29x112xf32>
    %c2_162 = arith.constant 2 : index
    %c0_163 = arith.constant 0 : index
    %147 = vector.load %arg68[%c2_162, %c0_163] : memref<32x224xf32, #tpu.memory_space<vmem>>, vector<29x224xf32>
    %cst_164 = arith.constant dense<0.000000e+00> : vector<29x112xf32>
    %148 = tpu.matmul %147, %139, %cst_164 {dimension_numbers = #tpu.dot_dimension_numbers<[1], [0], [0], [1], [0, 0, 1, 1], [], []>} : vector<29x224xf32>, vector<224x112xf32>, vector<29x112xf32> -> vector<29x112xf32>
    %149 = arith.addf %146, %148 : vector<29x112xf32>
    %cst_165 = arith.constant 0.000000e+00 : f32
    %150 = vector.broadcast %cst_165 : f32 to vector<29x112xf32>
    %151 = arith.maximumf %149, %150 : vector<29x112xf32>
    %152 = vector.broadcast %140 : vector<1x112xf32> to vector<29x112xf32>
    %153 = arith.mulf %151, %152 : vector<29x112xf32>
    %154 = vector.broadcast %141 : vector<1x112xf32> to vector<29x112xf32>
    %155 = arith.addf %153, %154 : vector<29x112xf32>
    %156 = vector.extract_strided_slice %155 {offsets = [0, 0], sizes = [1, 112], strides = [1, 1]} : vector<29x112xf32> to vector<1x112xf32>
    %157 = vector.extract_strided_slice %155 {offsets = [2, 0], sizes = [1, 112], strides = [1, 1]} : vector<29x112xf32> to vector<1x112xf32>
    %158 = vector.extract_strided_slice %155 {offsets = [4, 0], sizes = [1, 112], strides = [1, 1]} : vector<29x112xf32> to vector<1x112xf32>
    %159 = vector.extract_strided_slice %155 {offsets = [6, 0], sizes = [1, 112], strides = [1, 1]} : vector<29x112xf32> to vector<1x112xf32>
    %160 = vector.extract_strided_slice %155 {offsets = [8, 0], sizes = [1, 112], strides = [1, 1]} : vector<29x112xf32> to vector<1x112xf32>
    %161 = vector.extract_strided_slice %155 {offsets = [10, 0], sizes = [1, 112], strides = [1, 1]} : vector<29x112xf32> to vector<1x112xf32>
    %162 = vector.extract_strided_slice %155 {offsets = [12, 0], sizes = [1, 112], strides = [1, 1]} : vector<29x112xf32> to vector<1x112xf32>
    %163 = tpu.concatenate %156, %157, %158, %159, %160, %161, %162 in 0 : vector<1x112xf32>, vector<1x112xf32>, vector<1x112xf32>, vector<1x112xf32>, vector<1x112xf32>, vector<1x112xf32>, vector<1x112xf32> -> vector<7x112xf32>
    %c1_166 = arith.constant 1 : index
    %c0_167 = arith.constant 0 : index
    %164 = vector.load %arg69[%c1_166, %c0_167] : memref<18x112xf32, #tpu.memory_space<vmem>>, vector<7x112xf32>
    tpu.vector_store %arg69[%c1_166, %c0_167], %163 {strides = array<i32>} : memref<18x112xf32, #tpu.memory_space<vmem>>, vector<7x112xf32>,
    %165 = vector.extract_strided_slice %155 {offsets = [16, 0], sizes = [1, 112], strides = [1, 1]} : vector<29x112xf32> to vector<1x112xf32>
    %166 = vector.extract_strided_slice %155 {offsets = [18, 0], sizes = [1, 112], strides = [1, 1]} : vector<29x112xf32> to vector<1x112xf32>
    %167 = vector.extract_strided_slice %155 {offsets = [20, 0], sizes = [1, 112], strides = [1, 1]} : vector<29x112xf32> to vector<1x112xf32>
    %168 = vector.extract_strided_slice %155 {offsets = [22, 0], sizes = [1, 112], strides = [1, 1]} : vector<29x112xf32> to vector<1x112xf32>
    %169 = vector.extract_strided_slice %155 {offsets = [24, 0], sizes = [1, 112], strides = [1, 1]} : vector<29x112xf32> to vector<1x112xf32>
    %170 = vector.extract_strided_slice %155 {offsets = [26, 0], sizes = [1, 112], strides = [1, 1]} : vector<29x112xf32> to vector<1x112xf32>
    %171 = vector.extract_strided_slice %155 {offsets = [28, 0], sizes = [1, 112], strides = [1, 1]} : vector<29x112xf32> to vector<1x112xf32>
    %172 = tpu.concatenate %165, %166, %167, %168, %169, %170, %171 in 0 : vector<1x112xf32>, vector<1x112xf32>, vector<1x112xf32>, vector<1x112xf32>, vector<1x112xf32>, vector<1x112xf32>, vector<1x112xf32> -> vector<7x112xf32>
    %c10 = arith.constant 10 : index
    %c0_168 = arith.constant 0 : index
    %173 = vector.load %arg69[%c10, %c0_168] : memref<18x112xf32, #tpu.memory_space<vmem>>, vector<7x112xf32>
    tpu.vector_store %arg69[%c10, %c0_168], %172 {strides = array<i32>} : memref<18x112xf32, #tpu.memory_space<vmem>>, vector<7x112xf32>,
    %c0_169 = arith.constant 0 : index
    %c0_170 = arith.constant 0 : index
    %174 = vector.load %arg31[%c0_169, %c0_170] : memref<112x224xf32, #tpu.memory_space<vmem>>, vector<112x224xf32>
    %c0_171 = arith.constant 0 : index
    %c0_172 = arith.constant 0 : index
    %175 = vector.load %arg32[%c0_171, %c0_172] : memref<112x224xf32, #tpu.memory_space<vmem>>, vector<112x224xf32>
    %c0_173 = arith.constant 0 : index
    %c0_174 = arith.constant 0 : index
    %176 = vector.load %arg33[%c0_173, %c0_174] : memref<112x224xf32, #tpu.memory_space<vmem>>, vector<112x224xf32>
    %c0_175 = arith.constant 0 : index
    %c0_176 = arith.constant 0 : index
    %177 = vector.load %arg34[%c0_175, %c0_176] : memref<1x224xf32, #tpu.memory_space<vmem>>, vector<1x224xf32>
    %c0_177 = arith.constant 0 : index
    %c0_178 = arith.constant 0 : index
    %178 = vector.load %arg35[%c0_177, %c0_178] : memref<1x224xf32, #tpu.memory_space<vmem>>, vector<1x224xf32>
    %c0_179 = arith.constant 0 : index
    %c0_180 = arith.constant 0 : index
    %179 = vector.load %arg69[%c0_179, %c0_180] : memref<18x112xf32, #tpu.memory_space<vmem>>, vector<16x112xf32>
    %cst_181 = arith.constant dense<0.000000e+00> : vector<16x224xf32>
    %180 = tpu.matmul %179, %174, %cst_181 {dimension_numbers = #tpu.dot_dimension_numbers<[1], [0], [0], [1], [0, 0, 1, 1], [], []>} : vector<16x112xf32>, vector<112x224xf32>, vector<16x224xf32> -> vector<16x224xf32>
    %c1_182 = arith.constant 1 : index
    %c0_183 = arith.constant 0 : index
    %181 = vector.load %arg69[%c1_182, %c0_183] : memref<18x112xf32, #tpu.memory_space<vmem>>, vector<16x112xf32>
    %cst_184 = arith.constant dense<0.000000e+00> : vector<16x224xf32>
    %182 = tpu.matmul %181, %175, %cst_184 {dimension_numbers = #tpu.dot_dimension_numbers<[1], [0], [0], [1], [0, 0, 1, 1], [], []>} : vector<16x112xf32>, vector<112x224xf32>, vector<16x224xf32> -> vector<16x224xf32>
    %183 = arith.addf %180, %182 : vector<16x224xf32>
    %c2_185 = arith.constant 2 : index
    %c0_186 = arith.constant 0 : index
    %184 = vector.load %arg69[%c2_185, %c0_186] : memref<18x112xf32, #tpu.memory_space<vmem>>, vector<16x112xf32>
    %cst_187 = arith.constant dense<0.000000e+00> : vector<16x224xf32>
    %185 = tpu.matmul %184, %176, %cst_187 {dimension_numbers = #tpu.dot_dimension_numbers<[1], [0], [0], [1], [0, 0, 1, 1], [], []>} : vector<16x112xf32>, vector<112x224xf32>, vector<16x224xf32> -> vector<16x224xf32>
    %186 = arith.addf %183, %185 : vector<16x224xf32>
    %cst_188 = arith.constant 0.000000e+00 : f32
    %187 = vector.broadcast %cst_188 : f32 to vector<16x224xf32>
    %188 = arith.maximumf %186, %187 : vector<16x224xf32>
    %189 = vector.broadcast %177 : vector<1x224xf32> to vector<16x224xf32>
    %190 = arith.mulf %188, %189 : vector<16x224xf32>
    %191 = vector.broadcast %178 : vector<1x224xf32> to vector<16x224xf32>
    %192 = arith.addf %190, %191 : vector<16x224xf32>
    %193 = vector.extract_strided_slice %192 {offsets = [0, 0], sizes = [7, 224], strides = [1, 1]} : vector<16x224xf32> to vector<7x224xf32>
    %c1_189 = arith.constant 1 : index
    %c0_190 = arith.constant 0 : index
    %194 = vector.load %arg70[%c1_189, %c0_190] : memref<18x224xf32, #tpu.memory_space<vmem>>, vector<7x224xf32>
    tpu.vector_store %arg70[%c1_189, %c0_190], %193 {strides = array<i32>} : memref<18x224xf32, #tpu.memory_space<vmem>>, vector<7x224xf32>,
    %195 = vector.extract_strided_slice %192 {offsets = [9, 0], sizes = [7, 224], strides = [1, 1]} : vector<16x224xf32> to vector<7x224xf32>
    %c10_191 = arith.constant 10 : index
    %c0_192 = arith.constant 0 : index
    %196 = vector.load %arg70[%c10_191, %c0_192] : memref<18x224xf32, #tpu.memory_space<vmem>>, vector<7x224xf32>
    tpu.vector_store %arg70[%c10_191, %c0_192], %195 {strides = array<i32>} : memref<18x224xf32, #tpu.memory_space<vmem>>, vector<7x224xf32>,
    %c0_193 = arith.constant 0 : index
    %c0_194 = arith.constant 0 : index
    %197 = vector.load %arg36[%c0_193, %c0_194] : memref<224x224xf32, #tpu.memory_space<vmem>>, vector<224x224xf32>
    %c0_195 = arith.constant 0 : index
    %c0_196 = arith.constant 0 : index
    %198 = vector.load %arg37[%c0_195, %c0_196] : memref<224x224xf32, #tpu.memory_space<vmem>>, vector<224x224xf32>
    %c0_197 = arith.constant 0 : index
    %c0_198 = arith.constant 0 : index
    %199 = vector.load %arg38[%c0_197, %c0_198] : memref<224x224xf32, #tpu.memory_space<vmem>>, vector<224x224xf32>
    %c0_199 = arith.constant 0 : index
    %c0_200 = arith.constant 0 : index
    %200 = vector.load %arg39[%c0_199, %c0_200] : memref<1x224xf32, #tpu.memory_space<vmem>>, vector<1x224xf32>
    %c0_201 = arith.constant 0 : index
    %c0_202 = arith.constant 0 : index
    %201 = vector.load %arg40[%c0_201, %c0_202] : memref<1x224xf32, #tpu.memory_space<vmem>>, vector<1x224xf32>
    %c0_203 = arith.constant 0 : index
    %c0_204 = arith.constant 0 : index
    %202 = vector.load %arg70[%c0_203, %c0_204] : memref<18x224xf32, #tpu.memory_space<vmem>>, vector<16x224xf32>
    %cst_205 = arith.constant dense<0.000000e+00> : vector<16x224xf32>
    %203 = tpu.matmul %202, %197, %cst_205 {dimension_numbers = #tpu.dot_dimension_numbers<[1], [0], [0], [1], [0, 0, 1, 1], [], []>} : vector<16x224xf32>, vector<224x224xf32>, vector<16x224xf32> -> vector<16x224xf32>
    %c1_206 = arith.constant 1 : index
    %c0_207 = arith.constant 0 : index
    %204 = vector.load %arg70[%c1_206, %c0_207] : memref<18x224xf32, #tpu.memory_space<vmem>>, vector<16x224xf32>
    %cst_208 = arith.constant dense<0.000000e+00> : vector<16x224xf32>
    %205 = tpu.matmul %204, %198, %cst_208 {dimension_numbers = #tpu.dot_dimension_numbers<[1], [0], [0], [1], [0, 0, 1, 1], [], []>} : vector<16x224xf32>, vector<224x224xf32>, vector<16x224xf32> -> vector<16x224xf32>
    %206 = arith.addf %203, %205 : vector<16x224xf32>
    %c2_209 = arith.constant 2 : index
    %c0_210 = arith.constant 0 : index
    %207 = vector.load %arg70[%c2_209, %c0_210] : memref<18x224xf32, #tpu.memory_space<vmem>>, vector<16x224xf32>
    %cst_211 = arith.constant dense<0.000000e+00> : vector<16x224xf32>
    %208 = tpu.matmul %207, %199, %cst_211 {dimension_numbers = #tpu.dot_dimension_numbers<[1], [0], [0], [1], [0, 0, 1, 1], [], []>} : vector<16x224xf32>, vector<224x224xf32>, vector<16x224xf32> -> vector<16x224xf32>
    %209 = arith.addf %206, %208 : vector<16x224xf32>
    %cst_212 = arith.constant 0.000000e+00 : f32
    %210 = vector.broadcast %cst_212 : f32 to vector<16x224xf32>
    %211 = arith.maximumf %209, %210 : vector<16x224xf32>
    %212 = vector.broadcast %200 : vector<1x224xf32> to vector<16x224xf32>
    %213 = arith.mulf %211, %212 : vector<16x224xf32>
    %214 = vector.broadcast %201 : vector<1x224xf32> to vector<16x224xf32>
    %215 = arith.addf %213, %214 : vector<16x224xf32>
    %216 = vector.extract_strided_slice %215 {offsets = [0, 0], sizes = [7, 224], strides = [1, 1]} : vector<16x224xf32> to vector<7x224xf32>
    %c1_213 = arith.constant 1 : index
    %c0_214 = arith.constant 0 : index
    %217 = vector.load %arg71[%c1_213, %c0_214] : memref<18x224xf32, #tpu.memory_space<vmem>>, vector<7x224xf32>
    tpu.vector_store %arg71[%c1_213, %c0_214], %216 {strides = array<i32>} : memref<18x224xf32, #tpu.memory_space<vmem>>, vector<7x224xf32>,
    %218 = vector.extract_strided_slice %215 {offsets = [9, 0], sizes = [7, 224], strides = [1, 1]} : vector<16x224xf32> to vector<7x224xf32>
    %c10_215 = arith.constant 10 : index
    %c0_216 = arith.constant 0 : index
    %219 = vector.load %arg71[%c10_215, %c0_216] : memref<18x224xf32, #tpu.memory_space<vmem>>, vector<7x224xf32>
    tpu.vector_store %arg71[%c10_215, %c0_216], %218 {strides = array<i32>} : memref<18x224xf32, #tpu.memory_space<vmem>>, vector<7x224xf32>,
    %c0_217 = arith.constant 0 : index
    %c0_218 = arith.constant 0 : index
    %220 = vector.load %arg41[%c0_217, %c0_218] : memref<224x128xf32, #tpu.memory_space<vmem>>, vector<224x128xf32>
    %c0_219 = arith.constant 0 : index
    %c0_220 = arith.constant 0 : index
    %221 = vector.load %arg42[%c0_219, %c0_220] : memref<224x128xf32, #tpu.memory_space<vmem>>, vector<224x128xf32>
    %c0_221 = arith.constant 0 : index
    %c0_222 = arith.constant 0 : index
    %222 = vector.load %arg43[%c0_221, %c0_222] : memref<224x128xf32, #tpu.memory_space<vmem>>, vector<224x128xf32>
    %c0_223 = arith.constant 0 : index
    %c0_224 = arith.constant 0 : index
    %223 = vector.load %arg44[%c0_223, %c0_224] : memref<1x128xf32, #tpu.memory_space<vmem>>, vector<1x128xf32>
    %c0_225 = arith.constant 0 : index
    %c0_226 = arith.constant 0 : index
    %224 = vector.load %arg45[%c0_225, %c0_226] : memref<1x128xf32, #tpu.memory_space<vmem>>, vector<1x128xf32>
    %c0_227 = arith.constant 0 : index
    %c0_228 = arith.constant 0 : index
    %225 = vector.load %arg71[%c0_227, %c0_228] : memref<18x224xf32, #tpu.memory_space<vmem>>, vector<16x224xf32>
    %cst_229 = arith.constant dense<0.000000e+00> : vector<16x128xf32>
    %226 = tpu.matmul %225, %220, %cst_229 {dimension_numbers = #tpu.dot_dimension_numbers<[1], [0], [0], [1], [0, 0, 1, 1], [], []>} : vector<16x224xf32>, vector<224x128xf32>, vector<16x128xf32> -> vector<16x128xf32>
    %c1_230 = arith.constant 1 : index
    %c0_231 = arith.constant 0 : index
    %227 = vector.load %arg71[%c1_230, %c0_231] : memref<18x224xf32, #tpu.memory_space<vmem>>, vector<16x224xf32>
    %cst_232 = arith.constant dense<0.000000e+00> : vector<16x128xf32>
    %228 = tpu.matmul %227, %221, %cst_232 {dimension_numbers = #tpu.dot_dimension_numbers<[1], [0], [0], [1], [0, 0, 1, 1], [], []>} : vector<16x224xf32>, vector<224x128xf32>, vector<16x128xf32> -> vector<16x128xf32>
    %229 = arith.addf %226, %228 : vector<16x128xf32>
    %c2_233 = arith.constant 2 : index
    %c0_234 = arith.constant 0 : index
    %230 = vector.load %arg71[%c2_233, %c0_234] : memref<18x224xf32, #tpu.memory_space<vmem>>, vector<16x224xf32>
    %cst_235 = arith.constant dense<0.000000e+00> : vector<16x128xf32>
    %231 = tpu.matmul %230, %222, %cst_235 {dimension_numbers = #tpu.dot_dimension_numbers<[1], [0], [0], [1], [0, 0, 1, 1], [], []>} : vector<16x224xf32>, vector<224x128xf32>, vector<16x128xf32> -> vector<16x128xf32>
    %232 = arith.addf %229, %231 : vector<16x128xf32>
    %cst_236 = arith.constant 0.000000e+00 : f32
    %233 = vector.broadcast %cst_236 : f32 to vector<16x128xf32>
    %234 = arith.maximumf %232, %233 : vector<16x128xf32>
    %235 = vector.broadcast %223 : vector<1x128xf32> to vector<16x128xf32>
    %236 = arith.mulf %234, %235 : vector<16x128xf32>
    %237 = vector.broadcast %224 : vector<1x128xf32> to vector<16x128xf32>
    %238 = arith.addf %236, %237 : vector<16x128xf32>
    %239 = vector.extract_strided_slice %238 {offsets = [0, 0], sizes = [1, 128], strides = [1, 1]} : vector<16x128xf32> to vector<1x128xf32>
    %240 = vector.extract_strided_slice %238 {offsets = [2, 0], sizes = [1, 128], strides = [1, 1]} : vector<16x128xf32> to vector<1x128xf32>
    %241 = vector.extract_strided_slice %238 {offsets = [4, 0], sizes = [1, 128], strides = [1, 1]} : vector<16x128xf32> to vector<1x128xf32>
    %242 = vector.extract_strided_slice %238 {offsets = [6, 0], sizes = [1, 128], strides = [1, 1]} : vector<16x128xf32> to vector<1x128xf32>
    %243 = tpu.concatenate %239, %240, %241, %242 in 0 : vector<1x128xf32>, vector<1x128xf32>, vector<1x128xf32>, vector<1x128xf32> -> vector<4x128xf32>
    %c1_237 = arith.constant 1 : index
    %c0_238 = arith.constant 0 : index
    %244 = vector.load %arg72[%c1_237, %c0_238] : memref<12x128xf32, #tpu.memory_space<vmem>>, vector<4x128xf32>
    tpu.vector_store %arg72[%c1_237, %c0_238], %243 {strides = array<i32>} : memref<12x128xf32, #tpu.memory_space<vmem>>, vector<4x128xf32>,
    %245 = vector.extract_strided_slice %238 {offsets = [9, 0], sizes = [1, 128], strides = [1, 1]} : vector<16x128xf32> to vector<1x128xf32>
    %246 = vector.extract_strided_slice %238 {offsets = [11, 0], sizes = [1, 128], strides = [1, 1]} : vector<16x128xf32> to vector<1x128xf32>
    %247 = vector.extract_strided_slice %238 {offsets = [13, 0], sizes = [1, 128], strides = [1, 1]} : vector<16x128xf32> to vector<1x128xf32>
    %248 = vector.extract_strided_slice %238 {offsets = [15, 0], sizes = [1, 128], strides = [1, 1]} : vector<16x128xf32> to vector<1x128xf32>
    %249 = tpu.concatenate %245, %246, %247, %248 in 0 : vector<1x128xf32>, vector<1x128xf32>, vector<1x128xf32>, vector<1x128xf32> -> vector<4x128xf32>
    %c7 = arith.constant 7 : index
    %c0_239 = arith.constant 0 : index
    %250 = vector.load %arg72[%c7, %c0_239] : memref<12x128xf32, #tpu.memory_space<vmem>>, vector<4x128xf32>
    tpu.vector_store %arg72[%c7, %c0_239], %249 {strides = array<i32>} : memref<12x128xf32, #tpu.memory_space<vmem>>, vector<4x128xf32>,
    %c0_240 = arith.constant 0 : index
    %c0_241 = arith.constant 0 : index
    %251 = vector.load %arg46[%c0_240, %c0_241] : memref<128x256xf32, #tpu.memory_space<vmem>>, vector<128x256xf32>
    %c0_242 = arith.constant 0 : index
    %c0_243 = arith.constant 0 : index
    %252 = vector.load %arg47[%c0_242, %c0_243] : memref<128x256xf32, #tpu.memory_space<vmem>>, vector<128x256xf32>
    %c0_244 = arith.constant 0 : index
    %c0_245 = arith.constant 0 : index
    %253 = vector.load %arg48[%c0_244, %c0_245] : memref<128x256xf32, #tpu.memory_space<vmem>>, vector<128x256xf32>
    %c0_246 = arith.constant 0 : index
    %c0_247 = arith.constant 0 : index
    %254 = vector.load %arg49[%c0_246, %c0_247] : memref<1x256xf32, #tpu.memory_space<vmem>>, vector<1x256xf32>
    %c0_248 = arith.constant 0 : index
    %c0_249 = arith.constant 0 : index
    %255 = vector.load %arg50[%c0_248, %c0_249] : memref<1x256xf32, #tpu.memory_space<vmem>>, vector<1x256xf32>
    %c0_250 = arith.constant 0 : index
    %c0_251 = arith.constant 0 : index
    %256 = vector.load %arg72[%c0_250, %c0_251] : memref<12x128xf32, #tpu.memory_space<vmem>>, vector<10x128xf32>
    %cst_252 = arith.constant dense<0.000000e+00> : vector<10x256xf32>
    %257 = tpu.matmul %256, %251, %cst_252 {dimension_numbers = #tpu.dot_dimension_numbers<[1], [0], [0], [1], [0, 0, 1, 1], [], []>} : vector<10x128xf32>, vector<128x256xf32>, vector<10x256xf32> -> vector<10x256xf32>
    %c1_253 = arith.constant 1 : index
    %c0_254 = arith.constant 0 : index
    %258 = vector.load %arg72[%c1_253, %c0_254] : memref<12x128xf32, #tpu.memory_space<vmem>>, vector<10x128xf32>
    %cst_255 = arith.constant dense<0.000000e+00> : vector<10x256xf32>
    %259 = tpu.matmul %258, %252, %cst_255 {dimension_numbers = #tpu.dot_dimension_numbers<[1], [0], [0], [1], [0, 0, 1, 1], [], []>} : vector<10x128xf32>, vector<128x256xf32>, vector<10x256xf32> -> vector<10x256xf32>
    %260 = arith.addf %257, %259 : vector<10x256xf32>
    %c2_256 = arith.constant 2 : index
    %c0_257 = arith.constant 0 : index
    %261 = vector.load %arg72[%c2_256, %c0_257] : memref<12x128xf32, #tpu.memory_space<vmem>>, vector<10x128xf32>
    %cst_258 = arith.constant dense<0.000000e+00> : vector<10x256xf32>
    %262 = tpu.matmul %261, %253, %cst_258 {dimension_numbers = #tpu.dot_dimension_numbers<[1], [0], [0], [1], [0, 0, 1, 1], [], []>} : vector<10x128xf32>, vector<128x256xf32>, vector<10x256xf32> -> vector<10x256xf32>
    %263 = arith.addf %260, %262 : vector<10x256xf32>
    %cst_259 = arith.constant 0.000000e+00 : f32
    %264 = vector.broadcast %cst_259 : f32 to vector<10x256xf32>
    %265 = arith.maximumf %263, %264 : vector<10x256xf32>
    %266 = vector.broadcast %254 : vector<1x256xf32> to vector<10x256xf32>
    %267 = arith.mulf %265, %266 : vector<10x256xf32>
    %268 = vector.broadcast %255 : vector<1x256xf32> to vector<10x256xf32>
    %269 = arith.addf %267, %268 : vector<10x256xf32>
    %270 = vector.extract_strided_slice %269 {offsets = [0, 0], sizes = [4, 256], strides = [1, 1]} : vector<10x256xf32> to vector<4x256xf32>
    %c1_260 = arith.constant 1 : index
    %c0_261 = arith.constant 0 : index
    %271 = vector.load %arg73[%c1_260, %c0_261] : memref<12x256xf32, #tpu.memory_space<vmem>>, vector<4x256xf32>
    tpu.vector_store %arg73[%c1_260, %c0_261], %270 {strides = array<i32>} : memref<12x256xf32, #tpu.memory_space<vmem>>, vector<4x256xf32>,
    %272 = vector.extract_strided_slice %269 {offsets = [6, 0], sizes = [4, 256], strides = [1, 1]} : vector<10x256xf32> to vector<4x256xf32>
    %c7_262 = arith.constant 7 : index
    %c0_263 = arith.constant 0 : index
    %273 = vector.load %arg73[%c7_262, %c0_263] : memref<12x256xf32, #tpu.memory_space<vmem>>, vector<4x256xf32>
    tpu.vector_store %arg73[%c7_262, %c0_263], %272 {strides = array<i32>} : memref<12x256xf32, #tpu.memory_space<vmem>>, vector<4x256xf32>,
    %c0_264 = arith.constant 0 : index
    %c0_265 = arith.constant 0 : index
    %274 = vector.load %arg51[%c0_264, %c0_265] : memref<256x256xf32, #tpu.memory_space<vmem>>, vector<256x256xf32>
    %c0_266 = arith.constant 0 : index
    %c0_267 = arith.constant 0 : index
    %275 = vector.load %arg52[%c0_266, %c0_267] : memref<256x256xf32, #tpu.memory_space<vmem>>, vector<256x256xf32>
    %c0_268 = arith.constant 0 : index
    %c0_269 = arith.constant 0 : index
    %276 = vector.load %arg53[%c0_268, %c0_269] : memref<256x256xf32, #tpu.memory_space<vmem>>, vector<256x256xf32>
    %c0_270 = arith.constant 0 : index
    %c0_271 = arith.constant 0 : index
    %277 = vector.load %arg54[%c0_270, %c0_271] : memref<1x256xf32, #tpu.memory_space<vmem>>, vector<1x256xf32>
    %c0_272 = arith.constant 0 : index
    %c0_273 = arith.constant 0 : index
    %278 = vector.load %arg55[%c0_272, %c0_273] : memref<1x256xf32, #tpu.memory_space<vmem>>, vector<1x256xf32>
    %c0_274 = arith.constant 0 : index
    %c0_275 = arith.constant 0 : index
    %279 = vector.load %arg73[%c0_274, %c0_275] : memref<12x256xf32, #tpu.memory_space<vmem>>, vector<10x256xf32>
    %cst_276 = arith.constant dense<0.000000e+00> : vector<10x256xf32>
    %280 = tpu.matmul %279, %274, %cst_276 {dimension_numbers = #tpu.dot_dimension_numbers<[1], [0], [0], [1], [0, 0, 1, 1], [], []>} : vector<10x256xf32>, vector<256x256xf32>, vector<10x256xf32> -> vector<10x256xf32>
    %c1_277 = arith.constant 1 : index
    %c0_278 = arith.constant 0 : index
    %281 = vector.load %arg73[%c1_277, %c0_278] : memref<12x256xf32, #tpu.memory_space<vmem>>, vector<10x256xf32>
    %cst_279 = arith.constant dense<0.000000e+00> : vector<10x256xf32>
    %282 = tpu.matmul %281, %275, %cst_279 {dimension_numbers = #tpu.dot_dimension_numbers<[1], [0], [0], [1], [0, 0, 1, 1], [], []>} : vector<10x256xf32>, vector<256x256xf32>, vector<10x256xf32> -> vector<10x256xf32>
    %283 = arith.addf %280, %282 : vector<10x256xf32>
    %c2_280 = arith.constant 2 : index
    %c0_281 = arith.constant 0 : index
    %284 = vector.load %arg73[%c2_280, %c0_281] : memref<12x256xf32, #tpu.memory_space<vmem>>, vector<10x256xf32>
    %cst_282 = arith.constant dense<0.000000e+00> : vector<10x256xf32>
    %285 = tpu.matmul %284, %276, %cst_282 {dimension_numbers = #tpu.dot_dimension_numbers<[1], [0], [0], [1], [0, 0, 1, 1], [], []>} : vector<10x256xf32>, vector<256x256xf32>, vector<10x256xf32> -> vector<10x256xf32>
    %286 = arith.addf %283, %285 : vector<10x256xf32>
    %cst_283 = arith.constant 0.000000e+00 : f32
    %287 = vector.broadcast %cst_283 : f32 to vector<10x256xf32>
    %288 = arith.maximumf %286, %287 : vector<10x256xf32>
    %289 = vector.broadcast %277 : vector<1x256xf32> to vector<10x256xf32>
    %290 = arith.mulf %288, %289 : vector<10x256xf32>
    %291 = vector.broadcast %278 : vector<1x256xf32> to vector<10x256xf32>
    %292 = arith.addf %290, %291 : vector<10x256xf32>
    %293 = vector.extract_strided_slice %292 {offsets = [0, 0], sizes = [4, 256], strides = [1, 1]} : vector<10x256xf32> to vector<4x256xf32>
    %c1_284 = arith.constant 1 : index
    %c0_285 = arith.constant 0 : index
    %294 = vector.load %arg74[%c1_284, %c0_285] : memref<12x256xf32, #tpu.memory_space<vmem>>, vector<4x256xf32>
    tpu.vector_store %arg74[%c1_284, %c0_285], %293 {strides = array<i32>} : memref<12x256xf32, #tpu.memory_space<vmem>>, vector<4x256xf32>,
    %295 = vector.extract_strided_slice %292 {offsets = [6, 0], sizes = [4, 256], strides = [1, 1]} : vector<10x256xf32> to vector<4x256xf32>
    %c7_286 = arith.constant 7 : index
    %c0_287 = arith.constant 0 : index
    %296 = vector.load %arg74[%c7_286, %c0_287] : memref<12x256xf32, #tpu.memory_space<vmem>>, vector<4x256xf32>
    tpu.vector_store %arg74[%c7_286, %c0_287], %295 {strides = array<i32>} : memref<12x256xf32, #tpu.memory_space<vmem>>, vector<4x256xf32>,
    %c0_288 = arith.constant 0 : index
    %c0_289 = arith.constant 0 : index
    %297 = vector.load %arg56[%c0_288, %c0_289] : memref<256x256xf32, #tpu.memory_space<vmem>>, vector<256x256xf32>
    %c0_290 = arith.constant 0 : index
    %c0_291 = arith.constant 0 : index
    %298 = vector.load %arg57[%c0_290, %c0_291] : memref<256x256xf32, #tpu.memory_space<vmem>>, vector<256x256xf32>
    %c0_292 = arith.constant 0 : index
    %c0_293 = arith.constant 0 : index
    %299 = vector.load %arg58[%c0_292, %c0_293] : memref<256x256xf32, #tpu.memory_space<vmem>>, vector<256x256xf32>
    %c0_294 = arith.constant 0 : index
    %c0_295 = arith.constant 0 : index
    %300 = vector.load %arg59[%c0_294, %c0_295] : memref<1x256xf32, #tpu.memory_space<vmem>>, vector<1x256xf32>
    %c0_296 = arith.constant 0 : index
    %c0_297 = arith.constant 0 : index
    %301 = vector.load %arg60[%c0_296, %c0_297] : memref<1x256xf32, #tpu.memory_space<vmem>>, vector<1x256xf32>
    %c0_298 = arith.constant 0 : index
    %c0_299 = arith.constant 0 : index
    %302 = vector.load %arg74[%c0_298, %c0_299] : memref<12x256xf32, #tpu.memory_space<vmem>>, vector<10x256xf32>
    %cst_300 = arith.constant dense<0.000000e+00> : vector<10x256xf32>
    %303 = tpu.matmul %302, %297, %cst_300 {dimension_numbers = #tpu.dot_dimension_numbers<[1], [0], [0], [1], [0, 0, 1, 1], [], []>} : vector<10x256xf32>, vector<256x256xf32>, vector<10x256xf32> -> vector<10x256xf32>
    %c1_301 = arith.constant 1 : index
    %c0_302 = arith.constant 0 : index
    %304 = vector.load %arg74[%c1_301, %c0_302] : memref<12x256xf32, #tpu.memory_space<vmem>>, vector<10x256xf32>
    %cst_303 = arith.constant dense<0.000000e+00> : vector<10x256xf32>
    %305 = tpu.matmul %304, %298, %cst_303 {dimension_numbers = #tpu.dot_dimension_numbers<[1], [0], [0], [1], [0, 0, 1, 1], [], []>} : vector<10x256xf32>, vector<256x256xf32>, vector<10x256xf32> -> vector<10x256xf32>
    %306 = arith.addf %303, %305 : vector<10x256xf32>
    %c2_304 = arith.constant 2 : index
    %c0_305 = arith.constant 0 : index
    %307 = vector.load %arg74[%c2_304, %c0_305] : memref<12x256xf32, #tpu.memory_space<vmem>>, vector<10x256xf32>
    %cst_306 = arith.constant dense<0.000000e+00> : vector<10x256xf32>
    %308 = tpu.matmul %307, %299, %cst_306 {dimension_numbers = #tpu.dot_dimension_numbers<[1], [0], [0], [1], [0, 0, 1, 1], [], []>} : vector<10x256xf32>, vector<256x256xf32>, vector<10x256xf32> -> vector<10x256xf32>
    %309 = arith.addf %306, %308 : vector<10x256xf32>
    %cst_307 = arith.constant 0.000000e+00 : f32
    %310 = vector.broadcast %cst_307 : f32 to vector<10x256xf32>
    %311 = arith.maximumf %309, %310 : vector<10x256xf32>
    %312 = vector.broadcast %300 : vector<1x256xf32> to vector<10x256xf32>
    %313 = arith.mulf %311, %312 : vector<10x256xf32>
    %314 = vector.broadcast %301 : vector<1x256xf32> to vector<10x256xf32>
    %315 = arith.addf %313, %314 : vector<10x256xf32>
    %316 = vector.extract_strided_slice %315 {offsets = [0, 0], sizes = [4, 256], strides = [1, 1]} : vector<10x256xf32> to vector<4x256xf32>
    %c0_308 = arith.constant 0 : index
    %c0_309 = arith.constant 0 : index
    %317 = vector.load %arg75[%c0_308, %c0_309] : memref<8x256xf32, #tpu.memory_space<vmem>>, vector<4x256xf32>
    tpu.vector_store %arg75[%c0_308, %c0_309], %316 {strides = array<i32>} : memref<8x256xf32, #tpu.memory_space<vmem>>, vector<4x256xf32>,
    %318 = vector.extract_strided_slice %315 {offsets = [6, 0], sizes = [4, 256], strides = [1, 1]} : vector<10x256xf32> to vector<4x256xf32>
    %c4_310 = arith.constant 4 : index
    %c0_311 = arith.constant 0 : index
    %319 = vector.load %arg75[%c4_310, %c0_311] : memref<8x256xf32, #tpu.memory_space<vmem>>, vector<4x256xf32>
    tpu.vector_store %arg75[%c4_310, %c0_311], %318 {strides = array<i32>} : memref<8x256xf32, #tpu.memory_space<vmem>>, vector<4x256xf32>,
    %c0_312 = arith.constant 0 : index
    %c0_313 = arith.constant 0 : index
    %320 = vector.load %arg61[%c0_312, %c0_313] : memref<256x10xf32, #tpu.memory_space<vmem>>, vector<256x10xf32>
    %c0_314 = arith.constant 0 : index
    %c0_315 = arith.constant 0 : index
    %321 = vector.load %arg62[%c0_314, %c0_315] : memref<1x10xf32, #tpu.memory_space<vmem>>, vector<1x10xf32>
    %c0_316 = arith.constant 0 : index
    %c0_317 = arith.constant 0 : index
    %322 = vector.load %arg75[%c0_316, %c0_317] : memref<8x256xf32, #tpu.memory_space<vmem>>, vector<4x256xf32>
    %cst_318 = arith.constant dense<0.000000e+00> : vector<256xf32>
    %323 = vector.multi_reduction <add>, %322, %cst_318 [0] : vector<4x256xf32> to vector<256xf32>
    %324 = vector.shape_cast %323 : vector<256xf32> to vector<1x256xf32>
    %c4_319 = arith.constant 4 : index
    %c0_320 = arith.constant 0 : index
    %325 = vector.load %arg75[%c4_319, %c0_320] : memref<8x256xf32, #tpu.memory_space<vmem>>, vector<4x256xf32>
    %cst_321 = arith.constant dense<0.000000e+00> : vector<256xf32>
    %326 = vector.multi_reduction <add>, %325, %cst_321 [0] : vector<4x256xf32> to vector<256xf32>
    %327 = vector.shape_cast %326 : vector<256xf32> to vector<1x256xf32>
    %328 = tpu.concatenate %324, %327 in 0 : vector<1x256xf32>, vector<1x256xf32> -> vector<2x256xf32>
    %cst_322 = arith.constant dense<0.000000e+00> : vector<2x10xf32>
    %329 = tpu.matmul %328, %320, %cst_322 {dimension_numbers = #tpu.dot_dimension_numbers<[1], [0], [0], [1], [0, 0, 1, 1], [], []>} : vector<2x256xf32>, vector<256x10xf32>, vector<2x10xf32> -> vector<2x10xf32>
    %330 = vector.broadcast %321 : vector<1x10xf32> to vector<2x10xf32>
    %331 = arith.addf %329, %330 : vector<2x10xf32>
    %cst_323 = arith.constant dense<0xFF800000> : vector<2xf32>
    %332 = vector.multi_reduction <maximumf>, %331, %cst_323 [1] : vector<2x10xf32> to vector<2xf32>
    %333 = vector.shape_cast %332 : vector<2xf32> to vector<2x1xf32>
    %334 = vector.broadcast %333 : vector<2x1xf32> to vector<2x10xf32>
    %335 = arith.subf %331, %334 : vector<2x10xf32>
    %336 = math.exp %335 : vector<2x10xf32>
    %cst_324 = arith.constant dense<0.000000e+00> : vector<2xf32>
    %337 = vector.multi_reduction <add>, %336, %cst_324 [1] : vector<2x10xf32> to vector<2xf32>
    %338 = vector.shape_cast %337 : vector<2xf32> to vector<2x1xf32>
    %339 = math.log %338 : vector<2x1xf32>
    %340 = vector.broadcast %333 : vector<2x1xf32> to vector<2x10xf32>
    %341 = arith.subf %331, %340 : vector<2x10xf32>
    %342 = vector.broadcast %339 : vector<2x1xf32> to vector<2x10xf32>
    %343 = arith.subf %341, %342 : vector<2x10xf32>
    %c0_325 = arith.constant 0 : index
    %c0_326 = arith.constant 0 : index
    %344 = vector.load %arg63[%c0_325, %c0_326] : memref<2x10xf32, #tpu.memory_space<vmem>>, vector<2x10xf32>
    tpu.vector_store %arg63[%c0_325, %c0_326], %343 {strides = array<i32>} : memref<2x10xf32, #tpu.memory_space<vmem>>, vector<2x10xf32>,
    return
  }
}

</mosaic_0001>

<llo_original>
// kernel: tpu_custom_call.1
$region0: #{tpu_custom_call.1}
  #allocation0 [shape = 'u32[]', space=smem, size = 0x4, offset = 0x4, fixed_abs, tag = 'smem constant byte address 0x4 - core index']
  #allocation1 [shape = 'u32[144,128]{1,0:T(1,128)}', space=vmem, size = 0x12000, scoped, tag = 'internal scratch']
  #allocation2 [shape = 'f32[36,128]{1,0:T(8,128)}', space=vmem, size = 0x5000, scoped, tag = 'scratch operand']
  #allocation3 [shape = 'f32[36,128]{1,0:T(8,128)}', space=vmem, size = 0x5000, scoped, tag = 'scratch operand']
  #allocation4 [shape = 'f32[32,112]{1,0:T(8,128)}', space=vmem, size = 0x4000, scoped, tag = 'scratch operand']
  #allocation5 [shape = 'f32[32,224]{1,0:T(8,128)}', space=vmem, size = 0x8000, scoped, tag = 'scratch operand']
  #allocation6 [shape = 'f32[32,224]{1,0:T(8,128)}', space=vmem, size = 0x8000, scoped, tag = 'scratch operand']
  #allocation7 [shape = 'f32[18,112]{1,0:T(8,128)}', space=vmem, size = 0x3000, scoped, tag = 'scratch operand']
  #allocation8 [shape = 'f32[18,224]{1,0:T(8,128)}', space=vmem, size = 0x6000, scoped, tag = 'scratch operand']
  #allocation9 [shape = 'f32[18,224]{1,0:T(8,128)}', space=vmem, size = 0x6000, scoped, tag = 'scratch operand']
  #allocation10 [shape = 'f32[12,128]{1,0:T(8,128)}', space=vmem, size = 0x2000, scoped, tag = 'scratch operand']
  #allocation11 [shape = 'f32[12,256]{1,0:T(8,128)}', space=vmem, size = 0x4000, scoped, tag = 'scratch operand']
  #allocation12 [shape = 'f32[12,256]{1,0:T(8,128)}', space=vmem, size = 0x4000, scoped, tag = 'scratch operand']
  #allocation13 [shape = 'f32[8,256]{1,0:T(8,128)}', space=vmem, size = 0x2000, scoped, tag = 'scratch operand']
  %s0 = inlined_call_operand.smem [shape: u32[64], index: -1, kind: input, shape index: {}]
  %s1 = sld [smem:[%s0]]
  %s2 = scalar_lea.smem %s0, 1
  %s3 = sld [smem:[%s2]]
  %s4 = scalar_lea.smem %s0, 2
  %s5 = sld [smem:[%s4]]
  %s6 = scalar_lea.smem %s0, 3
  %s7 = sld [smem:[%s6]]
  %s8 = scalar_lea.smem %s0, 4
  %s9 = sld [smem:[%s8]]
  %s10 = scalar_lea.smem %s0, 5
  %s11 = sld [smem:[%s10]]
  %s12 = scalar_lea.smem %s0, 6
  %s13 = sld [smem:[%s12]]
  %s14 = scalar_lea.smem %s0, 7
  %s15 = sld [smem:[%s14]]
  %s16 = scalar_lea.smem %s0, 8
  %s17 = sld [smem:[%s16]]
  %s18 = scalar_lea.smem %s0, 9
  %s19 = sld [smem:[%s18]]
  %s20 = scalar_lea.smem %s0, 10
  %s21 = sld [smem:[%s20]]
  %s22 = scalar_lea.smem %s0, 11
  %s23 = sld [smem:[%s22]]
  %s24 = scalar_lea.smem %s0, 12
  %s25 = sld [smem:[%s24]]
  %s26 = scalar_lea.smem %s0, 13
  %s27 = sld [smem:[%s26]]
  %s28 = scalar_lea.smem %s0, 14
  %s29 = sld [smem:[%s28]]
  %s30 = scalar_lea.smem %s0, 15
  %s31 = sld [smem:[%s30]]
  %s32 = scalar_lea.smem %s0, 16
  %s33 = sld [smem:[%s32]]
  %s34 = scalar_lea.smem %s0, 17
  %s35 = sld [smem:[%s34]]
  %s36 = scalar_lea.smem %s0, 18
  %s37 = sld [smem:[%s36]]
  %s38 = scalar_lea.smem %s0, 19
  %s39 = sld [smem:[%s38]]
  %s40 = scalar_lea.smem %s0, 20
  %s41 = sld [smem:[%s40]]
  %s42 = scalar_lea.smem %s0, 21
  %s43 = sld [smem:[%s42]]
  %s44 = scalar_lea.smem %s0, 22
  %s45 = sld [smem:[%s44]]
  %s46 = scalar_lea.smem %s0, 23
  %s47 = sld [smem:[%s46]]
  %s48 = scalar_lea.smem %s0, 24
  %s49 = sld [smem:[%s48]]
  %s50 = scalar_lea.smem %s0, 25
  %s51 = sld [smem:[%s50]]
  %s52 = scalar_lea.smem %s0, 26
  %s53 = sld [smem:[%s52]]
  %s54 = scalar_lea.smem %s0, 27
  %s55 = sld [smem:[%s54]]
  %s56 = scalar_lea.smem %s0, 28
  %s57 = sld [smem:[%s56]]
  %s58 = scalar_lea.smem %s0, 29
  %s59 = sld [smem:[%s58]]
  %s60 = scalar_lea.smem %s0, 30
  %s61 = sld [smem:[%s60]]
  %s62 = scalar_lea.smem %s0, 31
  %s63 = sld [smem:[%s62]]
  %s64 = scalar_lea.smem %s0, 32
  %s65 = sld [smem:[%s64]]
  %s66 = scalar_lea.smem %s0, 33
  %s67 = sld [smem:[%s66]]
  %s68 = scalar_lea.smem %s0, 34
  %s69 = sld [smem:[%s68]]
  %s70 = scalar_lea.smem %s0, 35
  %s71 = sld [smem:[%s70]]
  %s72 = scalar_lea.smem %s0, 36
  %s73 = sld [smem:[%s72]]
  %s74 = scalar_lea.smem %s0, 37
  %s75 = sld [smem:[%s74]]
  %s76 = scalar_lea.smem %s0, 38
  %s77 = sld [smem:[%s76]]
  %s78 = scalar_lea.smem %s0, 39
  %s79 = sld [smem:[%s78]]
  %s80 = scalar_lea.smem %s0, 40
  %s81 = sld [smem:[%s80]]
  %s82 = scalar_lea.smem %s0, 41
  %s83 = sld [smem:[%s82]]
  %s84 = scalar_lea.smem %s0, 42
  %s85 = sld [smem:[%s84]]
  %s86 = scalar_lea.smem %s0, 43
  %s87 = sld [smem:[%s86]]
  %s88 = scalar_lea.smem %s0, 44
  %s89 = sld [smem:[%s88]]
  %s90 = scalar_lea.smem %s0, 45
  %s91 = sld [smem:[%s90]]
  %s92 = scalar_lea.smem %s0, 46
  %s93 = sld [smem:[%s92]]
  %s94 = scalar_lea.smem %s0, 47
  %s95 = sld [smem:[%s94]]
  %s96 = scalar_lea.smem %s0, 48
  %s97 = sld [smem:[%s96]]
  %s98 = scalar_lea.smem %s0, 49
  %s99 = sld [smem:[%s98]]
  %s100 = scalar_lea.smem %s0, 50
  %s101 = sld [smem:[%s100]]
  %s102 = scalar_lea.smem %s0, 51
  %s103 = sld [smem:[%s102]]
  %s104 = scalar_lea.smem %s0, 52
  %s105 = sld [smem:[%s104]]
  %s106 = scalar_lea.smem %s0, 53
  %s107 = sld [smem:[%s106]]
  %s108 = scalar_lea.smem %s0, 54
  %s109 = sld [smem:[%s108]]
  %s110 = scalar_lea.smem %s0, 55
  %s111 = sld [smem:[%s110]]
  %s112 = scalar_lea.smem %s0, 56
  %s113 = sld [smem:[%s112]]
  %s114 = scalar_lea.smem %s0, 57
  %s115 = sld [smem:[%s114]]
  %s116 = scalar_lea.smem %s0, 58
  %s117 = sld [smem:[%s116]]
  %s118 = scalar_lea.smem %s0, 59
  %s119 = sld [smem:[%s118]]
  %s120 = scalar_lea.smem %s0, 60
  %s121 = sld [smem:[%s120]]
  %s122 = scalar_lea.smem %s0, 61
  %s123 = sld [smem:[%s122]]
  %s124 = scalar_lea.smem %s0, 62
  %s125 = sld [smem:[%s124]]
  %s126 = scalar_lea.smem %s0, 63
  %s127 = sld [smem:[%s126]]
  %s128 = sld [smem:[#allocation0]]
  $region414: #{tpu_custom_call.1} parent=0
    _
  %s130 = ssub.s32 1, %s128
  %s131 = scalar_select 0, %s130, %s128
  $region1: #{tpu_custom_call.1} parent=0
    #allocation14 [shape = 'u8[20480]{0}', space=vmem, size = 0x5000, scoped, tag = 'input window, operand 0, single buffered']
    #allocation15 [shape = 's32[1]{0}', space=sflag, size = 0x4, scoped, tag = 'scoped memory for tpu_custom_call.1']
    #allocation16 [shape = 's32[1]{0}', space=sflag, size = 0x4, scoped, tag = 'scoped memory for tpu_custom_call.1']
    #allocation17 [shape = 'u8[24576]{0}', space=vmem, size = 0x6000, scoped, tag = 'input window, operand 1, single buffered']
    #allocation18 [shape = 's32[1]{0}', space=sflag, size = 0x4, scoped, tag = 'scoped memory for tpu_custom_call.1']
    #allocation19 [shape = 'u8[24576]{0}', space=vmem, size = 0x6000, scoped, tag = 'input window, operand 2, single buffered']
    #allocation20 [shape = 'u8[24576]{0}', space=vmem, size = 0x6000, scoped, tag = 'input window, operand 3, single buffered']
    #allocation21 [shape = 's32[1]{0}', space=sflag, size = 0x4, scoped, tag = 'scoped memory for tpu_custom_call.1']
    #allocation22 [shape = 'u8[512]{0}', space=vmem, size = 0x400, scoped, tag = 'input window, operand 4, single buffered']
    #allocation23 [shape = 'u8[512]{0}', space=vmem, size = 0x400, scoped, tag = 'input window, operand 5, single buffered']
    #allocation24 [shape = 's32[1]{0}', space=sflag, size = 0x4, scoped, tag = 'scoped memory for tpu_custom_call.1']
    #allocation25 [shape = 'u8[65536]{0}', space=vmem, size = 0x10000, scoped, tag = 'input window, operand 6, single buffered']
    #allocation26 [shape = 'u8[65536]{0}', space=vmem, size = 0x10000, scoped, tag = 'input window, operand 7, single buffered']
    #allocation27 [shape = 's32[1]{0}', space=sflag, size = 0x4, scoped, tag = 'scoped memory for tpu_custom_call.1']
    #allocation28 [shape = 'u8[65536]{0}', space=vmem, size = 0x10000, scoped, tag = 'input window, operand 8, single buffered']
    #allocation29 [shape = 'u8[512]{0}', space=vmem, size = 0x400, scoped, tag = 'input window, operand 9, single buffered']
    #allocation30 [shape = 's32[1]{0}', space=sflag, size = 0x4, scoped, tag = 'scoped memory for tpu_custom_call.1']
    #allocation31 [shape = 'u8[512]{0}', space=vmem, size = 0x400, scoped, tag = 'input window, operand 10, single buffered']
    #allocation32 [shape = 'u8[512]{0}', space=vmem, size = 0x400, scoped, tag = 'input window, operand 14, single buffered']
    #allocation33 [shape = 's32[1]{0}', space=sflag, size = 0x4, scoped, tag = 'scoped memory for tpu_custom_call.1']
    #allocation34 [shape = 'u8[512]{0}', space=vmem, size = 0x400, scoped, tag = 'input window, operand 15, single buffered']
    #allocation35 [shape = 'u8[114688]{0}', space=vmem, size = 0x1c000, scoped, tag = 'input window, operand 16, single buffered']
    #allocation36 [shape = 's32[1]{0}', space=sflag, size = 0x4, scoped, tag = 'scoped memory for tpu_custom_call.1']
    #allocation37 [shape = 'u8[114688]{0}', space=vmem, size = 0x1c000, scoped, tag = 'input window, operand 17, single buffered']
    #allocation38 [shape = 'u8[114688]{0}', space=vmem, size = 0x1c000, scoped, tag = 'input window, operand 18, single buffered']
    #allocation39 [shape = 's32[1]{0}', space=sflag, size = 0x4, scoped, tag = 'scoped memory for tpu_custom_call.1']
    #allocation40 [shape = 'u8[229376]{0}', space=vmem, size = 0x38000, scoped, tag = 'input window, operand 21, single buffered']
    #allocation41 [shape = 'u8[229376]{0}', space=vmem, size = 0x38000, scoped, tag = 'input window, operand 22, single buffered']
    #allocation42 [shape = 's32[1]{0}', space=sflag, size = 0x4, scoped, tag = 'scoped memory for tpu_custom_call.1']
    #allocation43 [shape = 'u8[229376]{0}', space=vmem, size = 0x38000, scoped, tag = 'input window, operand 23, single buffered']
    #allocation44 [shape = 'u8[114688]{0}', space=vmem, size = 0x1c000, scoped, tag = 'input window, operand 26, single buffered']
    #allocation45 [shape = 's32[1]{0}', space=sflag, size = 0x4, scoped, tag = 'scoped memory for tpu_custom_call.1']
    #allocation46 [shape = 'u8[114688]{0}', space=vmem, size = 0x1c000, scoped, tag = 'input window, operand 27, single buffered']
    #allocation47 [shape = 'u8[114688]{0}', space=vmem, size = 0x1c000, scoped, tag = 'input window, operand 28, single buffered']
    #allocation48 [shape = 's32[1]{0}', space=sflag, size = 0x4, scoped, tag = 'scoped memory for tpu_custom_call.1']
    #allocation49 [shape = 'u8[114688]{0}', space=vmem, size = 0x1c000, scoped, tag = 'input window, operand 31, single buffered']
    #allocation50 [shape = 'u8[114688]{0}', space=vmem, size = 0x1c000, scoped, tag = 'input window, operand 32, single buffered']
    #allocation51 [shape = 's32[1]{0}', space=sflag, size = 0x4, scoped, tag = 'scoped memory for tpu_custom_call.1']
    #allocation52 [shape = 'u8[114688]{0}', space=vmem, size = 0x1c000, scoped, tag = 'input window, operand 33, single buffered']
    #allocation53 [shape = 'u8[229376]{0}', space=vmem, size = 0x38000, scoped, tag = 'input window, operand 36, single buffered']
    #allocation54 [shape = 's32[1]{0}', space=sflag, size = 0x4, scoped, tag = 'scoped memory for tpu_custom_call.1']
    #allocation55 [shape = 'u8[229376]{0}', space=vmem, size = 0x38000, scoped, tag = 'input window, operand 37, single buffered']
    #allocation56 [shape = 'u8[229376]{0}', space=vmem, size = 0x38000, scoped, tag = 'input window, operand 38, single buffered']
    #allocation57 [shape = 's32[1]{0}', space=sflag, size = 0x4, scoped, tag = 'scoped memory for tpu_custom_call.1']
    #allocation58 [shape = 'u8[114688]{0}', space=vmem, size = 0x1c000, scoped, tag = 'input window, operand 41, single buffered']
    #allocation59 [shape = 'u8[114688]{0}', space=vmem, size = 0x1c000, scoped, tag = 'input window, operand 42, single buffered']
    #allocation60 [shape = 's32[1]{0}', space=sflag, size = 0x4, scoped, tag = 'scoped memory for tpu_custom_call.1']
    #allocation61 [shape = 'u8[114688]{0}', space=vmem, size = 0x1c000, scoped, tag = 'input window, operand 43, single buffered']
    #allocation62 [shape = 'u8[131072]{0}', space=vmem, size = 0x20000, scoped, tag = 'input window, operand 46, single buffered']
    #allocation63 [shape = 's32[1]{0}', space=sflag, size = 0x4, scoped, tag = 'scoped memory for tpu_custom_call.1']
    #allocation64 [shape = 'u8[131072]{0}', space=vmem, size = 0x20000, scoped, tag = 'input window, operand 47, single buffered']
    #allocation65 [shape = 'u8[131072]{0}', space=vmem, size = 0x20000, scoped, tag = 'input window, operand 48, single buffered']
    #allocation66 [shape = 's32[1]{0}', space=sflag, size = 0x4, scoped, tag = 'scoped memory for tpu_custom_call.1']
    #allocation67 [shape = 'u8[262144]{0}', space=vmem, size = 0x40000, scoped, tag = 'input window, operand 53, single buffered']
    #allocation68 [shape = 'u8[262144]{0}', space=vmem, size = 0x40000, scoped, tag = 'input window, operand 56, single buffered']
    #allocation69 [shape = 's32[1]{0}', space=sflag, size = 0x4, scoped, tag = 'scoped memory for tpu_custom_call.1']
    #allocation70 [shape = 'u8[262144]{0}', space=vmem, size = 0x40000, scoped, tag = 'input window, operand 57, single buffered']
    #allocation71 [shape = 'u8[262144]{0}', space=vmem, size = 0x40000, scoped, tag = 'input window, operand 58, single buffered']
    #allocation72 [shape = 's32[1]{0}', space=sflag, size = 0x4, scoped, tag = 'scoped memory for tpu_custom_call.1']
    #allocation73 [shape = 'u8[1024]{0}', space=vmem, size = 0x400, scoped, tag = 'output window, operand 0, single buffered']
    %132 = vsyncpa [#allocation15], 0
    %133 = vsyncpa [#allocation18], 0
    %134 = vsyncpa [#allocation21], 0
    %135 = vsyncpa [#allocation24], 0
    %136 = vsyncpa [#allocation27], 0
    %137 = vsyncpa [#allocation30], 0
    %138 = vsyncpa [#allocation33], 0
    %139 = vsyncpa [#allocation36], 0
    %140 = vsyncpa [#allocation39], 0
    %141 = vsyncpa [#allocation42], 0
    %142 = vsyncpa [#allocation45], 0
    %143 = vsyncpa [#allocation48], 0
    %144 = vsyncpa [#allocation51], 0
    %145 = vsyncpa [#allocation54], 0
    %146 = vsyncpa [#allocation57], 0
    %147 = vsyncpa [#allocation60], 0
    %148 = vsyncpa [#allocation63], 0
    %149 = vsyncpa [#allocation66], 0
    %150 = vsyncpa [#allocation69], 0
    %151 = vsyncpa [#allocation72], 0
    %152 = vsyncpa [#allocation16], 0
    // Predicated region
    $region2: #{tpu_custom_call.1} parent=1 // pred_check
      _
    $region3: #{tpu_custom_call.1} parent=1 // pred_check_branch
      %154 = sbr.rel (0) target = $region5
    $region4: #{tpu_custom_call.1} parent=1 // pred_region
      %s156 = ssub.s32 640, 640
      %157 = vsyncadd [#allocation15], %s156
      %s158 = sshll.u32 [#allocation14], 4
      %s159 = int_to_ptr.vmem [resolvable:$true] %s158
      %164 = dma.hbm_to_vmem [thread:$0]  %s1, 640, %s159, [#allocation15], 128, 128, 8
    $region5: #{tpu_custom_call.1} parent=1 // pred_fallthru
      _
    // Predicated region
    $region6: #{tpu_custom_call.1} parent=1 // pred_check
      _
    $region7: #{tpu_custom_call.1} parent=1 // pred_check_branch
      %166 = sbr.rel (0) target = $region9
    $region8: #{tpu_custom_call.1} parent=1 // pred_region
      %s168 = ssub.s32 768, 768
      %169 = vsyncadd [#allocation18], %s168
      %s170 = sshll.u32 [#allocation17], 4
      %s171 = int_to_ptr.vmem [resolvable:$true] %s170
      %176 = dma.hbm_to_vmem [thread:$0]  %s3, 768, %s171, [#allocation18], 128, 128, 8
    $region9: #{tpu_custom_call.1} parent=1 // pred_fallthru
      _
    // Predicated region
    $region10: #{tpu_custom_call.1} parent=1 // pred_check
      _
    $region11: #{tpu_custom_call.1} parent=1 // pred_check_branch
      %178 = sbr.rel (0) target = $region13
    $region12: #{tpu_custom_call.1} parent=1 // pred_region
      %s180 = ssub.s32 768, 768
      %181 = vsyncadd [#allocation18], %s180
      %s182 = sshll.u32 [#allocation19], 4
      %s183 = int_to_ptr.vmem [resolvable:$true] %s182
      %188 = dma.hbm_to_vmem [thread:$0]  %s5, 768, %s183, [#allocation18], 128, 128, 8
    $region13: #{tpu_custom_call.1} parent=1 // pred_fallthru
      _
    // Predicated region
    $region14: #{tpu_custom_call.1} parent=1 // pred_check
      _
    $region15: #{tpu_custom_call.1} parent=1 // pred_check_branch
      %190 = sbr.rel (0) target = $region17
    $region16: #{tpu_custom_call.1} parent=1 // pred_region
      %s192 = ssub.s32 768, 768
      %193 = vsyncadd [#allocation21], %s192
      %s194 = sshll.u32 [#allocation20], 4
      %s195 = int_to_ptr.vmem [resolvable:$true] %s194
      %200 = dma.hbm_to_vmem [thread:$0]  %s7, 768, %s195, [#allocation21], 128, 128, 8
    $region17: #{tpu_custom_call.1} parent=1 // pred_fallthru
      _
    // Predicated region
    $region18: #{tpu_custom_call.1} parent=1 // pred_check
      _
    $region19: #{tpu_custom_call.1} parent=1 // pred_check_branch
      %202 = sbr.rel (0) target = $region21
    $region20: #{tpu_custom_call.1} parent=1 // pred_region
      %s204 = ssub.s32 16, 16
      %205 = vsyncadd [#allocation21], %s204
      %s207 = sshll.u32 [#allocation22], 4
      %s208 = int_to_ptr.vmem [resolvable:$true] %s207
      %210 = dma.hbm_to_vmem [thread:$0]  %s9, 16, %s208, [#allocation21]
    $region21: #{tpu_custom_call.1} parent=1 // pred_fallthru
      _
    // Predicated region
    $region22: #{tpu_custom_call.1} parent=1 // pred_check
      _
    $region23: #{tpu_custom_call.1} parent=1 // pred_check_branch
      %212 = sbr.rel (0) target = $region25
    $region24: #{tpu_custom_call.1} parent=1 // pred_region
      %s214 = ssub.s32 16, 16
      %215 = vsyncadd [#allocation24], %s214
      %s217 = sshll.u32 [#allocation23], 4
      %s218 = int_to_ptr.vmem [resolvable:$true] %s217
      %220 = dma.hbm_to_vmem [thread:$0]  %s11, 16, %s218, [#allocation24]
    $region25: #{tpu_custom_call.1} parent=1 // pred_fallthru
      _
    // Predicated region
    $region26: #{tpu_custom_call.1} parent=1 // pred_check
      _
    $region27: #{tpu_custom_call.1} parent=1 // pred_check_branch
      %222 = sbr.rel (0) target = $region29
    $region28: #{tpu_custom_call.1} parent=1 // pred_region
      %s224 = ssub.s32 2048, 2048
      %225 = vsyncadd [#allocation24], %s224
      %s226 = sshll.u32 [#allocation25], 4
      %s227 = int_to_ptr.vmem [resolvable:$true] %s226
      %232 = dma.hbm_to_vmem [thread:$0]  %s13, 2048, %s227, [#allocation24], 128, 128, 8
    $region29: #{tpu_custom_call.1} parent=1 // pred_fallthru
      _
    // Predicated region
    $region30: #{tpu_custom_call.1} parent=1 // pred_check
      _
    $region31: #{tpu_custom_call.1} parent=1 // pred_check_branch
      %234 = sbr.rel (0) target = $region33
    $region32: #{tpu_custom_call.1} parent=1 // pred_region
      %s236 = ssub.s32 2048, 2048
      %237 = vsyncadd [#allocation27], %s236
      %s238 = sshll.u32 [#allocation26], 4
      %s239 = int_to_ptr.vmem [resolvable:$true] %s238
      %244 = dma.hbm_to_vmem [thread:$0]  %s15, 2048, %s239, [#allocation27], 128, 128, 8
    $region33: #{tpu_custom_call.1} parent=1 // pred_fallthru
      _
    // Predicated region
    $region34: #{tpu_custom_call.1} parent=1 // pred_check
      _
    $region35: #{tpu_custom_call.1} parent=1 // pred_check_branch
      %246 = sbr.rel (0) target = $region37
    $region36: #{tpu_custom_call.1} parent=1 // pred_region
      %s248 = ssub.s32 2048, 2048
      %249 = vsyncadd [#allocation27], %s248
      %s250 = sshll.u32 [#allocation28], 4
      %s251 = int_to_ptr.vmem [resolvable:$true] %s250
      %256 = dma.hbm_to_vmem [thread:$0]  %s17, 2048, %s251, [#allocation27], 128, 128, 8
    $region37: #{tpu_custom_call.1} parent=1 // pred_fallthru
      _
    // Predicated region
    $region38: #{tpu_custom_call.1} parent=1 // pred_check
      _
    $region39: #{tpu_custom_call.1} parent=1 // pred_check_branch
      %258 = sbr.rel (0) target = $region41
    $region40: #{tpu_custom_call.1} parent=1 // pred_region
      %s260 = ssub.s32 16, 16
      %261 = vsyncadd [#allocation30], %s260
      %s263 = sshll.u32 [#allocation29], 4
      %s264 = int_to_ptr.vmem [resolvable:$true] %s263
      %266 = dma.hbm_to_vmem [thread:$0]  %s19, 16, %s264, [#allocation30]
    $region41: #{tpu_custom_call.1} parent=1 // pred_fallthru
      _
    // Predicated region
    $region42: #{tpu_custom_call.1} parent=1 // pred_check
      _
    $region43: #{tpu_custom_call.1} parent=1 // pred_check_branch
      %268 = sbr.rel (0) target = $region45
    $region44: #{tpu_custom_call.1} parent=1 // pred_region
      %s270 = ssub.s32 16, 16
      %271 = vsyncadd [#allocation30], %s270
      %s273 = sshll.u32 [#allocation31], 4
      %s274 = int_to_ptr.vmem [resolvable:$true] %s273
      %276 = dma.hbm_to_vmem [thread:$0]  %s21, 16, %s274, [#allocation30]
    $region45: #{tpu_custom_call.1} parent=1 // pred_fallthru
      _
    // Predicated region
    $region46: #{tpu_custom_call.1} parent=1 // pred_check
      _
    $region47: #{tpu_custom_call.1} parent=1 // pred_check_branch
      %278 = sbr.rel (0) target = $region49
    $region48: #{tpu_custom_call.1} parent=1 // pred_region
      _
    $region49: #{tpu_custom_call.1} parent=1 // pred_fallthru
      _
    // Predicated region
    $region50: #{tpu_custom_call.1} parent=1 // pred_check
      _
    $region51: #{tpu_custom_call.1} parent=1 // pred_check_branch
      %280 = sbr.rel (0) target = $region53
    $region52: #{tpu_custom_call.1} parent=1 // pred_region
      _
    $region53: #{tpu_custom_call.1} parent=1 // pred_fallthru
      _
    // Predicated region
    $region54: #{tpu_custom_call.1} parent=1 // pred_check
      _
    $region55: #{tpu_custom_call.1} parent=1 // pred_check_branch
      %282 = sbr.rel (0) target = $region57
    $region56: #{tpu_custom_call.1} parent=1 // pred_region
      _
    $region57: #{tpu_custom_call.1} parent=1 // pred_fallthru
      _
    // Predicated region
    $region58: #{tpu_custom_call.1} parent=1 // pred_check
      _
    $region59: #{tpu_custom_call.1} parent=1 // pred_check_branch
      %284 = sbr.rel (0) target = $region61
    $region60: #{tpu_custom_call.1} parent=1 // pred_region
      %s286 = ssub.s32 16, 16
      %287 = vsyncadd [#allocation33], %s286
      %s289 = sshll.u32 [#allocation32], 4
      %s290 = int_to_ptr.vmem [resolvable:$true] %s289
      %292 = dma.hbm_to_vmem [thread:$0]  %s29, 16, %s290, [#allocation33]
    $region61: #{tpu_custom_call.1} parent=1 // pred_fallthru
      _
    // Predicated region
    $region62: #{tpu_custom_call.1} parent=1 // pred_check
      _
    $region63: #{tpu_custom_call.1} parent=1 // pred_check_branch
      %294 = sbr.rel (0) target = $region65
    $region64: #{tpu_custom_call.1} parent=1 // pred_region
      %s296 = ssub.s32 16, 16
      %297 = vsyncadd [#allocation33], %s296
      %s299 = sshll.u32 [#allocation34], 4
      %s300 = int_to_ptr.vmem [resolvable:$true] %s299
      %302 = dma.hbm_to_vmem [thread:$0]  %s31, 16, %s300, [#allocation33]
    $region65: #{tpu_custom_call.1} parent=1 // pred_fallthru
      _
    // Predicated region
    $region66: #{tpu_custom_call.1} parent=1 // pred_check
      _
    $region67: #{tpu_custom_call.1} parent=1 // pred_check_branch
      %304 = sbr.rel (0) target = $region69
    $region68: #{tpu_custom_call.1} parent=1 // pred_region
      %s306 = ssub.s32 3584, 3584
      %307 = vsyncadd [#allocation36], %s306
      %s308 = sshll.u32 [#allocation35], 4
      %s309 = int_to_ptr.vmem [resolvable:$true] %s308
      %314 = dma.hbm_to_vmem [thread:$0]  %s33, 3584, %s309, [#allocation36], 256, 256, 16
    $region69: #{tpu_custom_call.1} parent=1 // pred_fallthru
      _
    // Predicated region
    $region70: #{tpu_custom_call.1} parent=1 // pred_check
      _
    $region71: #{tpu_custom_call.1} parent=1 // pred_check_branch
      %316 = sbr.rel (0) target = $region73
    $region72: #{tpu_custom_call.1} parent=1 // pred_region
      %s318 = ssub.s32 3584, 3584
      %319 = vsyncadd [#allocation36], %s318
      %s320 = sshll.u32 [#allocation37], 4
      %s321 = int_to_ptr.vmem [resolvable:$true] %s320
      %326 = dma.hbm_to_vmem [thread:$0]  %s35, 3584, %s321, [#allocation36], 256, 256, 16
    $region73: #{tpu_custom_call.1} parent=1 // pred_fallthru
      _
    // Predicated region
    $region74: #{tpu_custom_call.1} parent=1 // pred_check
      _
    $region75: #{tpu_custom_call.1} parent=1 // pred_check_branch
      %328 = sbr.rel (0) target = $region77
    $region76: #{tpu_custom_call.1} parent=1 // pred_region
      %s330 = ssub.s32 3584, 3584
      %331 = vsyncadd [#allocation39], %s330
      %s332 = sshll.u32 [#allocation38], 4
      %s333 = int_to_ptr.vmem [resolvable:$true] %s332
      %338 = dma.hbm_to_vmem [thread:$0]  %s37, 3584, %s333, [#allocation39], 256, 256, 16
    $region77: #{tpu_custom_call.1} parent=1 // pred_fallthru
      _
    // Predicated region
    $region78: #{tpu_custom_call.1} parent=1 // pred_check
      _
    $region79: #{tpu_custom_call.1} parent=1 // pred_check_branch
      %340 = sbr.rel (0) target = $region81
    $region80: #{tpu_custom_call.1} parent=1 // pred_region
      _
    $region81: #{tpu_custom_call.1} parent=1 // pred_fallthru
      _
    // Predicated region
    $region82: #{tpu_custom_call.1} parent=1 // pred_check
      _
    $region83: #{tpu_custom_call.1} parent=1 // pred_check_branch
      %342 = sbr.rel (0) target = $region85
    $region84: #{tpu_custom_call.1} parent=1 // pred_region
      _
    $region85: #{tpu_custom_call.1} parent=1 // pred_fallthru
      _
    // Predicated region
    $region86: #{tpu_custom_call.1} parent=1 // pred_check
      _
    $region87: #{tpu_custom_call.1} parent=1 // pred_check_branch
      %344 = sbr.rel (0) target = $region89
    $region88: #{tpu_custom_call.1} parent=1 // pred_region
      %s346 = ssub.s32 7168, 7168
      %347 = vsyncadd [#allocation39], %s346
      %s348 = sshll.u32 [#allocation40], 4
      %s349 = int_to_ptr.vmem [resolvable:$true] %s348
      %354 = dma.hbm_to_vmem [thread:$0]  %s43, 7168, %s349, [#allocation39], 256, 256, 16
    $region89: #{tpu_custom_call.1} parent=1 // pred_fallthru
      _
    // Predicated region
    $region90: #{tpu_custom_call.1} parent=1 // pred_check
      _
    $region91: #{tpu_custom_call.1} parent=1 // pred_check_branch
      %356 = sbr.rel (0) target = $region93
    $region92: #{tpu_custom_call.1} parent=1 // pred_region
      %s358 = ssub.s32 7168, 7168
      %359 = vsyncadd [#allocation42], %s358
      %s360 = sshll.u32 [#allocation41], 4
      %s361 = int_to_ptr.vmem [resolvable:$true] %s360
      %366 = dma.hbm_to_vmem [thread:$0]  %s45, 7168, %s361, [#allocation42], 256, 256, 16
    $region93: #{tpu_custom_call.1} parent=1 // pred_fallthru
      _
    // Predicated region
    $region94: #{tpu_custom_call.1} parent=1 // pred_check
      _
    $region95: #{tpu_custom_call.1} parent=1 // pred_check_branch
      %368 = sbr.rel (0) target = $region97
    $region96: #{tpu_custom_call.1} parent=1 // pred_region
      %s370 = ssub.s32 7168, 7168
      %371 = vsyncadd [#allocation42], %s370
      %s372 = sshll.u32 [#allocation43], 4
      %s373 = int_to_ptr.vmem [resolvable:$true] %s372
      %378 = dma.hbm_to_vmem [thread:$0]  %s47, 7168, %s373, [#allocation42], 256, 256, 16
    $region97: #{tpu_custom_call.1} parent=1 // pred_fallthru
      _
    // Predicated region
    $region98: #{tpu_custom_call.1} parent=1 // pred_check
      _
    $region99: #{tpu_custom_call.1} parent=1 // pred_check_branch
      %380 = sbr.rel (0) target = $region101
    $region100: #{tpu_custom_call.1} parent=1 // pred_region
      _
    $region101: #{tpu_custom_call.1} parent=1 // pred_fallthru
      _
    // Predicated region
    $region102: #{tpu_custom_call.1} parent=1 // pred_check
      _
    $region103: #{tpu_custom_call.1} parent=1 // pred_check_branch
      %382 = sbr.rel (0) target = $region105
    $region104: #{tpu_custom_call.1} parent=1 // pred_region
      _
    $region105: #{tpu_custom_call.1} parent=1 // pred_fallthru
      _
    // Predicated region
    $region106: #{tpu_custom_call.1} parent=1 // pred_check
      _
    $region107: #{tpu_custom_call.1} parent=1 // pred_check_branch
      %384 = sbr.rel (0) target = $region109
    $region108: #{tpu_custom_call.1} parent=1 // pred_region
      %s386 = ssub.s32 3584, 3584
      %387 = vsyncadd [#allocation45], %s386
      %s388 = sshll.u32 [#allocation44], 4
      %s389 = int_to_ptr.vmem [resolvable:$true] %s388
      %394 = dma.hbm_to_vmem [thread:$0]  %s53, 3584, %s389, [#allocation45], 128, 128, 8
    $region109: #{tpu_custom_call.1} parent=1 // pred_fallthru
      _
    // Predicated region
    $region110: #{tpu_custom_call.1} parent=1 // pred_check
      _
    $region111: #{tpu_custom_call.1} parent=1 // pred_check_branch
      %396 = sbr.rel (0) target = $region113
    $region112: #{tpu_custom_call.1} parent=1 // pred_region
      %s398 = ssub.s32 3584, 3584
      %399 = vsyncadd [#allocation45], %s398
      %s400 = sshll.u32 [#allocation46], 4
      %s401 = int_to_ptr.vmem [resolvable:$true] %s400
      %406 = dma.hbm_to_vmem [thread:$0]  %s55, 3584, %s401, [#allocation45], 128, 128, 8
    $region113: #{tpu_custom_call.1} parent=1 // pred_fallthru
      _
    // Predicated region
    $region114: #{tpu_custom_call.1} parent=1 // pred_check
      _
    $region115: #{tpu_custom_call.1} parent=1 // pred_check_branch
      %408 = sbr.rel (0) target = $region117
    $region116: #{tpu_custom_call.1} parent=1 // pred_region
      %s410 = ssub.s32 3584, 3584
      %411 = vsyncadd [#allocation48], %s410
      %s412 = sshll.u32 [#allocation47], 4
      %s413 = int_to_ptr.vmem [resolvable:$true] %s412
      %418 = dma.hbm_to_vmem [thread:$0]  %s57, 3584, %s413, [#allocation48], 128, 128, 8
    $region117: #{tpu_custom_call.1} parent=1 // pred_fallthru
      _
    // Predicated region
    $region118: #{tpu_custom_call.1} parent=1 // pred_check
      _
    $region119: #{tpu_custom_call.1} parent=1 // pred_check_branch
      %420 = sbr.rel (0) target = $region121
    $region120: #{tpu_custom_call.1} parent=1 // pred_region
      _
    $region121: #{tpu_custom_call.1} parent=1 // pred_fallthru
      _
    // Predicated region
    $region122: #{tpu_custom_call.1} parent=1 // pred_check
      _
    $region123: #{tpu_custom_call.1} parent=1 // pred_check_branch
      %422 = sbr.rel (0) target = $region125
    $region124: #{tpu_custom_call.1} parent=1 // pred_region
      _
    $region125: #{tpu_custom_call.1} parent=1 // pred_fallthru
      _
    // Predicated region
    $region126: #{tpu_custom_call.1} parent=1 // pred_check
      _
    $region127: #{tpu_custom_call.1} parent=1 // pred_check_branch
      %424 = sbr.rel (0) target = $region129
    $region128: #{tpu_custom_call.1} parent=1 // pred_region
      %s426 = ssub.s32 3584, 3584
      %427 = vsyncadd [#allocation48], %s426
      %s428 = sshll.u32 [#allocation49], 4
      %s429 = int_to_ptr.vmem [resolvable:$true] %s428
      %434 = dma.hbm_to_vmem [thread:$0]  %s63, 3584, %s429, [#allocation48], 256, 256, 16
    $region129: #{tpu_custom_call.1} parent=1 // pred_fallthru
      _
    // Predicated region
    $region130: #{tpu_custom_call.1} parent=1 // pred_check
      _
    $region131: #{tpu_custom_call.1} parent=1 // pred_check_branch
      %436 = sbr.rel (0) target = $region133
    $region132: #{tpu_custom_call.1} parent=1 // pred_region
      %s438 = ssub.s32 3584, 3584
      %439 = vsyncadd [#allocation51], %s438
      %s440 = sshll.u32 [#allocation50], 4
      %s441 = int_to_ptr.vmem [resolvable:$true] %s440
      %446 = dma.hbm_to_vmem [thread:$0]  %s65, 3584, %s441, [#allocation51], 256, 256, 16
    $region133: #{tpu_custom_call.1} parent=1 // pred_fallthru
      _
    // Predicated region
    $region134: #{tpu_custom_call.1} parent=1 // pred_check
      _
    $region135: #{tpu_custom_call.1} parent=1 // pred_check_branch
      %448 = sbr.rel (0) target = $region137
    $region136: #{tpu_custom_call.1} parent=1 // pred_region
      %s450 = ssub.s32 3584, 3584
      %451 = vsyncadd [#allocation51], %s450
      %s452 = sshll.u32 [#allocation52], 4
      %s453 = int_to_ptr.vmem [resolvable:$true] %s452
      %458 = dma.hbm_to_vmem [thread:$0]  %s67, 3584, %s453, [#allocation51], 256, 256, 16
    $region137: #{tpu_custom_call.1} parent=1 // pred_fallthru
      _
    // Predicated region
    $region138: #{tpu_custom_call.1} parent=1 // pred_check
      _
    $region139: #{tpu_custom_call.1} parent=1 // pred_check_branch
      %460 = sbr.rel (0) target = $region141
    $region140: #{tpu_custom_call.1} parent=1 // pred_region
      _
    $region141: #{tpu_custom_call.1} parent=1 // pred_fallthru
      _
    // Predicated region
    $region142: #{tpu_custom_call.1} parent=1 // pred_check
      _
    $region143: #{tpu_custom_call.1} parent=1 // pred_check_branch
      %462 = sbr.rel (0) target = $region145
    $region144: #{tpu_custom_call.1} parent=1 // pred_region
      _
    $region145: #{tpu_custom_call.1} parent=1 // pred_fallthru
      _
    // Predicated region
    $region146: #{tpu_custom_call.1} parent=1 // pred_check
      _
    $region147: #{tpu_custom_call.1} parent=1 // pred_check_branch
      %464 = sbr.rel (0) target = $region149
    $region148: #{tpu_custom_call.1} parent=1 // pred_region
      %s466 = ssub.s32 7168, 7168
      %467 = vsyncadd [#allocation54], %s466
      %s468 = sshll.u32 [#allocation53], 4
      %s469 = int_to_ptr.vmem [resolvable:$true] %s468
      %474 = dma.hbm_to_vmem [thread:$0]  %s73, 7168, %s469, [#allocation54], 256, 256, 16
    $region149: #{tpu_custom_call.1} parent=1 // pred_fallthru
      _
    // Predicated region
    $region150: #{tpu_custom_call.1} parent=1 // pred_check
      _
    $region151: #{tpu_custom_call.1} parent=1 // pred_check_branch
      %476 = sbr.rel (0) target = $region153
    $region152: #{tpu_custom_call.1} parent=1 // pred_region
      %s478 = ssub.s32 7168, 7168
      %479 = vsyncadd [#allocation54], %s478
      %s480 = sshll.u32 [#allocation55], 4
      %s481 = int_to_ptr.vmem [resolvable:$true] %s480
      %486 = dma.hbm_to_vmem [thread:$0]  %s75, 7168, %s481, [#allocation54], 256, 256, 16
    $region153: #{tpu_custom_call.1} parent=1 // pred_fallthru
      _
    // Predicated region
    $region154: #{tpu_custom_call.1} parent=1 // pred_check
      _
    $region155: #{tpu_custom_call.1} parent=1 // pred_check_branch
      %488 = sbr.rel (0) target = $region157
    $region156: #{tpu_custom_call.1} parent=1 // pred_region
      %s490 = ssub.s32 7168, 7168
      %491 = vsyncadd [#allocation57], %s490
      %s492 = sshll.u32 [#allocation56], 4
      %s493 = int_to_ptr.vmem [resolvable:$true] %s492
      %498 = dma.hbm_to_vmem [thread:$0]  %s77, 7168, %s493, [#allocation57], 256, 256, 16
    $region157: #{tpu_custom_call.1} parent=1 // pred_fallthru
      _
    // Predicated region
    $region158: #{tpu_custom_call.1} parent=1 // pred_check
      _
    $region159: #{tpu_custom_call.1} parent=1 // pred_check_branch
      %500 = sbr.rel (0) target = $region161
    $region160: #{tpu_custom_call.1} parent=1 // pred_region
      _
    $region161: #{tpu_custom_call.1} parent=1 // pred_fallthru
      _
    // Predicated region
    $region162: #{tpu_custom_call.1} parent=1 // pred_check
      _
    $region163: #{tpu_custom_call.1} parent=1 // pred_check_branch
      %502 = sbr.rel (0) target = $region165
    $region164: #{tpu_custom_call.1} parent=1 // pred_region
      _
    $region165: #{tpu_custom_call.1} parent=1 // pred_fallthru
      _
    // Predicated region
    $region166: #{tpu_custom_call.1} parent=1 // pred_check
      _
    $region167: #{tpu_custom_call.1} parent=1 // pred_check_branch
      %504 = sbr.rel (0) target = $region169
    $region168: #{tpu_custom_call.1} parent=1 // pred_region
      %s506 = ssub.s32 3584, 3584
      %507 = vsyncadd [#allocation57], %s506
      %s508 = sshll.u32 [#allocation58], 4
      %s509 = int_to_ptr.vmem [resolvable:$true] %s508
      %514 = dma.hbm_to_vmem [thread:$0]  %s83, 3584, %s509, [#allocation57], 128, 128, 8
    $region169: #{tpu_custom_call.1} parent=1 // pred_fallthru
      _
    // Predicated region
    $region170: #{tpu_custom_call.1} parent=1 // pred_check
      _
    $region171: #{tpu_custom_call.1} parent=1 // pred_check_branch
      %516 = sbr.rel (0) target = $region173
    $region172: #{tpu_custom_call.1} parent=1 // pred_region
      %s518 = ssub.s32 3584, 3584
      %519 = vsyncadd [#allocation60], %s518
      %s520 = sshll.u32 [#allocation59], 4
      %s521 = int_to_ptr.vmem [resolvable:$true] %s520
      %526 = dma.hbm_to_vmem [thread:$0]  %s85, 3584, %s521, [#allocation60], 128, 128, 8
    $region173: #{tpu_custom_call.1} parent=1 // pred_fallthru
      _
    // Predicated region
    $region174: #{tpu_custom_call.1} parent=1 // pred_check
      _
    $region175: #{tpu_custom_call.1} parent=1 // pred_check_branch
      %528 = sbr.rel (0) target = $region177
    $region176: #{tpu_custom_call.1} parent=1 // pred_region
      %s530 = ssub.s32 3584, 3584
      %531 = vsyncadd [#allocation60], %s530
      %s532 = sshll.u32 [#allocation61], 4
      %s533 = int_to_ptr.vmem [resolvable:$true] %s532
      %538 = dma.hbm_to_vmem [thread:$0]  %s87, 3584, %s533, [#allocation60], 128, 128, 8
    $region177: #{tpu_custom_call.1} parent=1 // pred_fallthru
      _
    // Predicated region
    $region178: #{tpu_custom_call.1} parent=1 // pred_check
      _
    $region179: #{tpu_custom_call.1} parent=1 // pred_check_branch
      %540 = sbr.rel (0) target = $region181
    $region180: #{tpu_custom_call.1} parent=1 // pred_region
      _
    $region181: #{tpu_custom_call.1} parent=1 // pred_fallthru
      _
    // Predicated region
    $region182: #{tpu_custom_call.1} parent=1 // pred_check
      _
    $region183: #{tpu_custom_call.1} parent=1 // pred_check_branch
      %542 = sbr.rel (0) target = $region185
    $region184: #{tpu_custom_call.1} parent=1 // pred_region
      _
    $region185: #{tpu_custom_call.1} parent=1 // pred_fallthru
      _
    // Predicated region
    $region186: #{tpu_custom_call.1} parent=1 // pred_check
      _
    $region187: #{tpu_custom_call.1} parent=1 // pred_check_branch
      %544 = sbr.rel (0) target = $region189
    $region188: #{tpu_custom_call.1} parent=1 // pred_region
      %s546 = ssub.s32 4096, 4096
      %547 = vsyncadd [#allocation63], %s546
      %s548 = sshll.u32 [#allocation62], 4
      %s549 = int_to_ptr.vmem [resolvable:$true] %s548
      %554 = dma.hbm_to_vmem [thread:$0]  %s93, 4096, %s549, [#allocation63], 256, 256, 16
    $region189: #{tpu_custom_call.1} parent=1 // pred_fallthru
      _
    // Predicated region
    $region190: #{tpu_custom_call.1} parent=1 // pred_check
      _
    $region191: #{tpu_custom_call.1} parent=1 // pred_check_branch
      %556 = sbr.rel (0) target = $region193
    $region192: #{tpu_custom_call.1} parent=1 // pred_region
      %s558 = ssub.s32 4096, 4096
      %559 = vsyncadd [#allocation63], %s558
      %s560 = sshll.u32 [#allocation64], 4
      %s561 = int_to_ptr.vmem [resolvable:$true] %s560
      %566 = dma.hbm_to_vmem [thread:$0]  %s95, 4096, %s561, [#allocation63], 256, 256, 16
    $region193: #{tpu_custom_call.1} parent=1 // pred_fallthru
      _
    // Predicated region
    $region194: #{tpu_custom_call.1} parent=1 // pred_check
      _
    $region195: #{tpu_custom_call.1} parent=1 // pred_check_branch
      %568 = sbr.rel (0) target = $region197
    $region196: #{tpu_custom_call.1} parent=1 // pred_region
      %s570 = ssub.s32 4096, 4096
      %571 = vsyncadd [#allocation66], %s570
      %s572 = sshll.u32 [#allocation65], 4
      %s573 = int_to_ptr.vmem [resolvable:$true] %s572
      %578 = dma.hbm_to_vmem [thread:$0]  %s97, 4096, %s573, [#allocation66], 256, 256, 16
    $region197: #{tpu_custom_call.1} parent=1 // pred_fallthru
      _
    // Predicated region
    $region198: #{tpu_custom_call.1} parent=1 // pred_check
      _
    $region199: #{tpu_custom_call.1} parent=1 // pred_check_branch
      %580 = sbr.rel (0) target = $region201
    $region200: #{tpu_custom_call.1} parent=1 // pred_region
      _
    $region201: #{tpu_custom_call.1} parent=1 // pred_fallthru
      _
    // Predicated region
    $region202: #{tpu_custom_call.1} parent=1 // pred_check
      _
    $region203: #{tpu_custom_call.1} parent=1 // pred_check_branch
      %582 = sbr.rel (0) target = $region205
    $region204: #{tpu_custom_call.1} parent=1 // pred_region
      _
    $region205: #{tpu_custom_call.1} parent=1 // pred_fallthru
      _
    // Predicated region
    $region206: #{tpu_custom_call.1} parent=1 // pred_check
      _
    $region207: #{tpu_custom_call.1} parent=1 // pred_check_branch
      %584 = sbr.rel (0) target = $region209
    $region208: #{tpu_custom_call.1} parent=1 // pred_region
      _
    $region209: #{tpu_custom_call.1} parent=1 // pred_fallthru
      _
    // Predicated region
    $region210: #{tpu_custom_call.1} parent=1 // pred_check
      _
    $region211: #{tpu_custom_call.1} parent=1 // pred_check_branch
      %586 = sbr.rel (0) target = $region213
    $region212: #{tpu_custom_call.1} parent=1 // pred_region
      _
    $region213: #{tpu_custom_call.1} parent=1 // pred_fallthru
      _
    // Predicated region
    $region214: #{tpu_custom_call.1} parent=1 // pred_check
      _
    $region215: #{tpu_custom_call.1} parent=1 // pred_check_branch
      %588 = sbr.rel (0) target = $region217
    $region216: #{tpu_custom_call.1} parent=1 // pred_region
      %s590 = ssub.s32 8192, 8192
      %591 = vsyncadd [#allocation66], %s590
      %s592 = sshll.u32 [#allocation67], 4
      %s593 = int_to_ptr.vmem [resolvable:$true] %s592
      %598 = dma.hbm_to_vmem [thread:$0]  %s107, 8192, %s593, [#allocation66], 256, 256, 16
    $region217: #{tpu_custom_call.1} parent=1 // pred_fallthru
      _
    // Predicated region
    $region218: #{tpu_custom_call.1} parent=1 // pred_check
      _
    $region219: #{tpu_custom_call.1} parent=1 // pred_check_branch
      %600 = sbr.rel (0) target = $region221
    $region220: #{tpu_custom_call.1} parent=1 // pred_region
      _
    $region221: #{tpu_custom_call.1} parent=1 // pred_fallthru
      _
    // Predicated region
    $region222: #{tpu_custom_call.1} parent=1 // pred_check
      _
    $region223: #{tpu_custom_call.1} parent=1 // pred_check_branch
      %602 = sbr.rel (0) target = $region225
    $region224: #{tpu_custom_call.1} parent=1 // pred_region
      _
    $region225: #{tpu_custom_call.1} parent=1 // pred_fallthru
      _
    // Predicated region
    $region226: #{tpu_custom_call.1} parent=1 // pred_check
      _
    $region227: #{tpu_custom_call.1} parent=1 // pred_check_branch
      %604 = sbr.rel (0) target = $region229
    $region228: #{tpu_custom_call.1} parent=1 // pred_region
      %s606 = ssub.s32 8192, 8192
      %607 = vsyncadd [#allocation69], %s606
      %s608 = sshll.u32 [#allocation68], 4
      %s609 = int_to_ptr.vmem [resolvable:$true] %s608
      %614 = dma.hbm_to_vmem [thread:$0]  %s113, 8192, %s609, [#allocation69], 256, 256, 16
    $region229: #{tpu_custom_call.1} parent=1 // pred_fallthru
      _
    // Predicated region
    $region230: #{tpu_custom_call.1} parent=1 // pred_check
      _
    $region231: #{tpu_custom_call.1} parent=1 // pred_check_branch
      %616 = sbr.rel (0) target = $region233
    $region232: #{tpu_custom_call.1} parent=1 // pred_region
      %s618 = ssub.s32 8192, 8192
      %619 = vsyncadd [#allocation69], %s618
      %s620 = sshll.u32 [#allocation70], 4
      %s621 = int_to_ptr.vmem [resolvable:$true] %s620
      %626 = dma.hbm_to_vmem [thread:$0]  %s115, 8192, %s621, [#allocation69], 256, 256, 16
    $region233: #{tpu_custom_call.1} parent=1 // pred_fallthru
      _
    // Predicated region
    $region234: #{tpu_custom_call.1} parent=1 // pred_check
      _
    $region235: #{tpu_custom_call.1} parent=1 // pred_check_branch
      %628 = sbr.rel (0) target = $region237
    $region236: #{tpu_custom_call.1} parent=1 // pred_region
      %s630 = ssub.s32 8192, 8192
      %631 = vsyncadd [#allocation72], %s630
      %s632 = sshll.u32 [#allocation71], 4
      %s633 = int_to_ptr.vmem [resolvable:$true] %s632
      %638 = dma.hbm_to_vmem [thread:$0]  %s117, 8192, %s633, [#allocation72], 256, 256, 16
    $region237: #{tpu_custom_call.1} parent=1 // pred_fallthru
      _
    // Predicated region
    $region238: #{tpu_custom_call.1} parent=1 // pred_check
      _
    $region239: #{tpu_custom_call.1} parent=1 // pred_check_branch
      %640 = sbr.rel (0) target = $region241
    $region240: #{tpu_custom_call.1} parent=1 // pred_region
      _
    $region241: #{tpu_custom_call.1} parent=1 // pred_fallthru
      _
    // Predicated region
    $region242: #{tpu_custom_call.1} parent=1 // pred_check
      _
    $region243: #{tpu_custom_call.1} parent=1 // pred_check_branch
      %642 = sbr.rel (0) target = $region245
    $region244: #{tpu_custom_call.1} parent=1 // pred_region
      _
    $region245: #{tpu_custom_call.1} parent=1 // pred_fallthru
      _
    // Predicated region
    $region246: #{tpu_custom_call.1} parent=1 // pred_check
      _
    $region247: #{tpu_custom_call.1} parent=1 // pred_check_branch
      %644 = sbr.rel (0) target = $region249
    $region248: #{tpu_custom_call.1} parent=1 // pred_region
      _
    $region249: #{tpu_custom_call.1} parent=1 // pred_fallthru
      _
    // Predicated region
    $region250: #{tpu_custom_call.1} parent=1 // pred_check
      _
    $region251: #{tpu_custom_call.1} parent=1 // pred_check_branch
      %646 = sbr.rel (0) target = $region253
    $region252: #{tpu_custom_call.1} parent=1 // pred_region
      _
    $region253: #{tpu_custom_call.1} parent=1 // pred_fallthru
      _
    // Predicated region
    $region254: #{tpu_custom_call.1} parent=1 // pred_check
      _
    $region255: #{tpu_custom_call.1} parent=1 // pred_check_branch
      %648 = sbr.rel (0) target = $region257
    $region256: #{tpu_custom_call.1} parent=1 // pred_region
      %649 = dma.done [#allocation15], 640
    $region257: #{tpu_custom_call.1} parent=1 // pred_fallthru
      _
    // Predicated region
    $region258: #{tpu_custom_call.1} parent=1 // pred_check
      _
    $region259: #{tpu_custom_call.1} parent=1 // pred_check_branch
      %651 = sbr.rel (0) target = $region261
    $region260: #{tpu_custom_call.1} parent=1 // pred_region
      %652 = dma.done [#allocation18], 768
    $region261: #{tpu_custom_call.1} parent=1 // pred_fallthru
      _
    // Predicated region
    $region262: #{tpu_custom_call.1} parent=1 // pred_check
      _
    $region263: #{tpu_custom_call.1} parent=1 // pred_check_branch
      %654 = sbr.rel (0) target = $region265
    $region264: #{tpu_custom_call.1} parent=1 // pred_region
      %655 = dma.done [#allocation18], 768
    $region265: #{tpu_custom_call.1} parent=1 // pred_fallthru
      _
    // Predicated region
    $region266: #{tpu_custom_call.1} parent=1 // pred_check
      _
    $region267: #{tpu_custom_call.1} parent=1 // pred_check_branch
      %657 = sbr.rel (0) target = $region269
    $region268: #{tpu_custom_call.1} parent=1 // pred_region
      %658 = dma.done [#allocation21], 768
    $region269: #{tpu_custom_call.1} parent=1 // pred_fallthru
      _
    // Predicated region
    $region270: #{tpu_custom_call.1} parent=1 // pred_check
      _
    $region271: #{tpu_custom_call.1} parent=1 // pred_check_branch
      %660 = sbr.rel (0) target = $region273
    $region272: #{tpu_custom_call.1} parent=1 // pred_region
      %661 = dma.done [#allocation21], 16
    $region273: #{tpu_custom_call.1} parent=1 // pred_fallthru
      _
    // Predicated region
    $region274: #{tpu_custom_call.1} parent=1 // pred_check
      _
    $region275: #{tpu_custom_call.1} parent=1 // pred_check_branch
      %663 = sbr.rel (0) target = $region277
    $region276: #{tpu_custom_call.1} parent=1 // pred_region
      %664 = dma.done [#allocation24], 16
    $region277: #{tpu_custom_call.1} parent=1 // pred_fallthru
      _
    // Predicated region
    $region278: #{tpu_custom_call.1} parent=1 // pred_check
      _
    $region279: #{tpu_custom_call.1} parent=1 // pred_check_branch
      %666 = sbr.rel (0) target = $region281
    $region280: #{tpu_custom_call.1} parent=1 // pred_region
      %667 = dma.done [#allocation24], 2048
    $region281: #{tpu_custom_call.1} parent=1 // pred_fallthru
      _
    // Predicated region
    $region282: #{tpu_custom_call.1} parent=1 // pred_check
      _
    $region283: #{tpu_custom_call.1} parent=1 // pred_check_branch
      %669 = sbr.rel (0) target = $region285
    $region284: #{tpu_custom_call.1} parent=1 // pred_region
      %670 = dma.done [#allocation27], 2048
    $region285: #{tpu_custom_call.1} parent=1 // pred_fallthru
      _
    // Predicated region
    $region286: #{tpu_custom_call.1} parent=1 // pred_check
      _
    $region287: #{tpu_custom_call.1} parent=1 // pred_check_branch
      %672 = sbr.rel (0) target = $region289
    $region288: #{tpu_custom_call.1} parent=1 // pred_region
      %673 = dma.done [#allocation27], 2048
    $region289: #{tpu_custom_call.1} parent=1 // pred_fallthru
      _
    // Predicated region
    $region290: #{tpu_custom_call.1} parent=1 // pred_check
      _
    $region291: #{tpu_custom_call.1} parent=1 // pred_check_branch
      %675 = sbr.rel (0) target = $region293
    $region292: #{tpu_custom_call.1} parent=1 // pred_region
      %676 = dma.done [#allocation30], 16
    $region293: #{tpu_custom_call.1} parent=1 // pred_fallthru
      _
    // Predicated region
    $region294: #{tpu_custom_call.1} parent=1 // pred_check
      _
    $region295: #{tpu_custom_call.1} parent=1 // pred_check_branch
      %678 = sbr.rel (0) target = $region297
    $region296: #{tpu_custom_call.1} parent=1 // pred_region
      %679 = dma.done [#allocation30], 16
    $region297: #{tpu_custom_call.1} parent=1 // pred_fallthru
      _
    // Predicated region
    $region298: #{tpu_custom_call.1} parent=1 // pred_check
      _
    $region299: #{tpu_custom_call.1} parent=1 // pred_check_branch
      %681 = sbr.rel (0) target = $region301
    $region300: #{tpu_custom_call.1} parent=1 // pred_region
      %682 = dma.done [#allocation33], 16
    $region301: #{tpu_custom_call.1} parent=1 // pred_fallthru
      _
    // Predicated region
    $region302: #{tpu_custom_call.1} parent=1 // pred_check
      _
    $region303: #{tpu_custom_call.1} parent=1 // pred_check_branch
      %684 = sbr.rel (0) target = $region305
    $region304: #{tpu_custom_call.1} parent=1 // pred_region
      %685 = dma.done [#allocation33], 16
    $region305: #{tpu_custom_call.1} parent=1 // pred_fallthru
      _
    // Predicated region
    $region306: #{tpu_custom_call.1} parent=1 // pred_check
      _
    $region307: #{tpu_custom_call.1} parent=1 // pred_check_branch
      %687 = sbr.rel (0) target = $region309
    $region308: #{tpu_custom_call.1} parent=1 // pred_region
      %688 = dma.done [#allocation36], 3584
    $region309: #{tpu_custom_call.1} parent=1 // pred_fallthru
      _
    // Predicated region
    $region310: #{tpu_custom_call.1} parent=1 // pred_check
      _
    $region311: #{tpu_custom_call.1} parent=1 // pred_check_branch
      %690 = sbr.rel (0) target = $region313
    $region312: #{tpu_custom_call.1} parent=1 // pred_region
      %691 = dma.done [#allocation36], 3584
    $region313: #{tpu_custom_call.1} parent=1 // pred_fallthru
      _
    // Predicated region
    $region314: #{tpu_custom_call.1} parent=1 // pred_check
      _
    $region315: #{tpu_custom_call.1} parent=1 // pred_check_branch
      %693 = sbr.rel (0) target = $region317
    $region316: #{tpu_custom_call.1} parent=1 // pred_region
      %694 = dma.done [#allocation39], 3584
    $region317: #{tpu_custom_call.1} parent=1 // pred_fallthru
      _
    // Predicated region
    $region318: #{tpu_custom_call.1} parent=1 // pred_check
      _
    $region319: #{tpu_custom_call.1} parent=1 // pred_check_branch
      %696 = sbr.rel (0) target = $region321
    $region320: #{tpu_custom_call.1} parent=1 // pred_region
      %697 = dma.done [#allocation39], 7168
    $region321: #{tpu_custom_call.1} parent=1 // pred_fallthru
      _
    // Predicated region
    $region322: #{tpu_custom_call.1} parent=1 // pred_check
      _
    $region323: #{tpu_custom_call.1} parent=1 // pred_check_branch
      %699 = sbr.rel (0) target = $region325
    $region324: #{tpu_custom_call.1} parent=1 // pred_region
      %700 = dma.done [#allocation42], 7168
    $region325: #{tpu_custom_call.1} parent=1 // pred_fallthru
      _
    // Predicated region
    $region326: #{tpu_custom_call.1} parent=1 // pred_check
      _
    $region327: #{tpu_custom_call.1} parent=1 // pred_check_branch
      %702 = sbr.rel (0) target = $region329
    $region328: #{tpu_custom_call.1} parent=1 // pred_region
      %703 = dma.done [#allocation42], 7168
    $region329: #{tpu_custom_call.1} parent=1 // pred_fallthru
      _
    // Predicated region
    $region330: #{tpu_custom_call.1} parent=1 // pred_check
      _
    $region331: #{tpu_custom_call.1} parent=1 // pred_check_branch
      %705 = sbr.rel (0) target = $region333
    $region332: #{tpu_custom_call.1} parent=1 // pred_region
      %706 = dma.done [#allocation45], 3584
    $region333: #{tpu_custom_call.1} parent=1 // pred_fallthru
      _
    // Predicated region
    $region334: #{tpu_custom_call.1} parent=1 // pred_check
      _
    $region335: #{tpu_custom_call.1} parent=1 // pred_check_branch
      %708 = sbr.rel (0) target = $region337
    $region336: #{tpu_custom_call.1} parent=1 // pred_region
      %709 = dma.done [#allocation45], 3584
    $region337: #{tpu_custom_call.1} parent=1 // pred_fallthru
      _
    // Predicated region
    $region338: #{tpu_custom_call.1} parent=1 // pred_check
      _
    $region339: #{tpu_custom_call.1} parent=1 // pred_check_branch
      %711 = sbr.rel (0) target = $region341
    $region340: #{tpu_custom_call.1} parent=1 // pred_region
      %712 = dma.done [#allocation48], 3584
    $region341: #{tpu_custom_call.1} parent=1 // pred_fallthru
      _
    // Predicated region
    $region342: #{tpu_custom_call.1} parent=1 // pred_check
      _
    $region343: #{tpu_custom_call.1} parent=1 // pred_check_branch
      %714 = sbr.rel (0) target = $region345
    $region344: #{tpu_custom_call.1} parent=1 // pred_region
      %715 = dma.done [#allocation48], 3584
    $region345: #{tpu_custom_call.1} parent=1 // pred_fallthru
      _
    // Predicated region
    $region346: #{tpu_custom_call.1} parent=1 // pred_check
      _
    $region347: #{tpu_custom_call.1} parent=1 // pred_check_branch
      %717 = sbr.rel (0) target = $region349
    $region348: #{tpu_custom_call.1} parent=1 // pred_region
      %718 = dma.done [#allocation51], 3584
    $region349: #{tpu_custom_call.1} parent=1 // pred_fallthru
      _
    // Predicated region
    $region350: #{tpu_custom_call.1} parent=1 // pred_check
      _
    $region351: #{tpu_custom_call.1} parent=1 // pred_check_branch
      %720 = sbr.rel (0) target = $region353
    $region352: #{tpu_custom_call.1} parent=1 // pred_region
      %721 = dma.done [#allocation51], 3584
    $region353: #{tpu_custom_call.1} parent=1 // pred_fallthru
      _
    // Predicated region
    $region354: #{tpu_custom_call.1} parent=1 // pred_check
      _
    $region355: #{tpu_custom_call.1} parent=1 // pred_check_branch
      %723 = sbr.rel (0) target = $region357
    $region356: #{tpu_custom_call.1} parent=1 // pred_region
      %724 = dma.done [#allocation54], 7168
    $region357: #{tpu_custom_call.1} parent=1 // pred_fallthru
      _
    // Predicated region
    $region358: #{tpu_custom_call.1} parent=1 // pred_check
      _
    $region359: #{tpu_custom_call.1} parent=1 // pred_check_branch
      %726 = sbr.rel (0) target = $region361
    $region360: #{tpu_custom_call.1} parent=1 // pred_region
      %727 = dma.done [#allocation54], 7168
    $region361: #{tpu_custom_call.1} parent=1 // pred_fallthru
      _
    // Predicated region
    $region362: #{tpu_custom_call.1} parent=1 // pred_check
      _
    $region363: #{tpu_custom_call.1} parent=1 // pred_check_branch
      %729 = sbr.rel (0) target = $region365
    $region364: #{tpu_custom_call.1} parent=1 // pred_region
      %730 = dma.done [#allocation57], 7168
    $region365: #{tpu_custom_call.1} parent=1 // pred_fallthru
      _
    // Predicated region
    $region366: #{tpu_custom_call.1} parent=1 // pred_check
      _
    $region367: #{tpu_custom_call.1} parent=1 // pred_check_branch
      %732 = sbr.rel (0) target = $region369
    $region368: #{tpu_custom_call.1} parent=1 // pred_region
      %733 = dma.done [#allocation57], 3584
    $region369: #{tpu_custom_call.1} parent=1 // pred_fallthru
      _
    // Predicated region
    $region370: #{tpu_custom_call.1} parent=1 // pred_check
      _
    $region371: #{tpu_custom_call.1} parent=1 // pred_check_branch
      %735 = sbr.rel (0) target = $region373
    $region372: #{tpu_custom_call.1} parent=1 // pred_region
      %736 = dma.done [#allocation60], 3584
    $region373: #{tpu_custom_call.1} parent=1 // pred_fallthru
      _
    // Predicated region
    $region374: #{tpu_custom_call.1} parent=1 // pred_check
      _
    $region375: #{tpu_custom_call.1} parent=1 // pred_check_branch
      %738 = sbr.rel (0) target = $region377
    $region376: #{tpu_custom_call.1} parent=1 // pred_region
      %739 = dma.done [#allocation60], 3584
    $region377: #{tpu_custom_call.1} parent=1 // pred_fallthru
      _
    // Predicated region
    $region378: #{tpu_custom_call.1} parent=1 // pred_check
      _
    $region379: #{tpu_custom_call.1} parent=1 // pred_check_branch
      %741 = sbr.rel (0) target = $region381
    $region380: #{tpu_custom_call.1} parent=1 // pred_region
      %742 = dma.done [#allocation63], 4096
    $region381: #{tpu_custom_call.1} parent=1 // pred_fallthru
      _
    // Predicated region
    $region382: #{tpu_custom_call.1} parent=1 // pred_check
      _
    $region383: #{tpu_custom_call.1} parent=1 // pred_check_branch
      %744 = sbr.rel (0) target = $region385
    $region384: #{tpu_custom_call.1} parent=1 // pred_region
      %745 = dma.done [#allocation63], 4096
    $region385: #{tpu_custom_call.1} parent=1 // pred_fallthru
      _
    // Predicated region
    $region386: #{tpu_custom_call.1} parent=1 // pred_check
      _
    $region387: #{tpu_custom_call.1} parent=1 // pred_check_branch
      %747 = sbr.rel (0) target = $region389
    $region388: #{tpu_custom_call.1} parent=1 // pred_region
      %748 = dma.done [#allocation66], 4096
    $region389: #{tpu_custom_call.1} parent=1 // pred_fallthru
      _
    // Predicated region
    $region390: #{tpu_custom_call.1} parent=1 // pred_check
      _
    $region391: #{tpu_custom_call.1} parent=1 // pred_check_branch
      %750 = sbr.rel (0) target = $region393
    $region392: #{tpu_custom_call.1} parent=1 // pred_region
      %751 = dma.done [#allocation66], 8192
    $region393: #{tpu_custom_call.1} parent=1 // pred_fallthru
      _
    // Predicated region
    $region394: #{tpu_custom_call.1} parent=1 // pred_check
      _
    $region395: #{tpu_custom_call.1} parent=1 // pred_check_branch
      %753 = sbr.rel (0) target = $region397
    $region396: #{tpu_custom_call.1} parent=1 // pred_region
      %754 = dma.done [#allocation69], 8192
    $region397: #{tpu_custom_call.1} parent=1 // pred_fallthru
      _
    // Predicated region
    $region398: #{tpu_custom_call.1} parent=1 // pred_check
      _
    $region399: #{tpu_custom_call.1} parent=1 // pred_check_branch
      %756 = sbr.rel (0) target = $region401
    $region400: #{tpu_custom_call.1} parent=1 // pred_region
      %757 = dma.done [#allocation69], 8192
    $region401: #{tpu_custom_call.1} parent=1 // pred_fallthru
      _
    // Predicated region
    $region402: #{tpu_custom_call.1} parent=1 // pred_check
      _
    $region403: #{tpu_custom_call.1} parent=1 // pred_check_branch
      %759 = sbr.rel (0) target = $region405
    $region404: #{tpu_custom_call.1} parent=1 // pred_region
      %760 = dma.done [#allocation72], 8192
    $region405: #{tpu_custom_call.1} parent=1 // pred_fallthru
      _
    %761 = vst [vmem:[#allocation2] sm:$0xff] 0.0
    %762 = vst [vmem:[#allocation2 + $0x8] sm:$0xff] 0.0
    %763 = vst [vmem:[#allocation2 + $0x10] sm:$0xff] 0.0
    %764 = vst [vmem:[#allocation2 + $0x18] sm:$0xff] 0.0
    %765 = vst [vmem:[#allocation2 + $0x20] sm:$0xf] 0.0
    %766 = vst [vmem:[#allocation3] sm:$0xff] 0.0
    %767 = vst [vmem:[#allocation3 + $0x8] sm:$0xff] 0.0
    %768 = vst [vmem:[#allocation3 + $0x10] sm:$0xff] 0.0
    %769 = vst [vmem:[#allocation3 + $0x18] sm:$0xff] 0.0
    %770 = vst [vmem:[#allocation3 + $0x20] sm:$0xf] 0.0
    %vm771 = vcmask 916480
    %772 = vst.msk [vmem:[#allocation4] sm:$0xff] %vm771, 0.0
    %773 = vst.msk [vmem:[#allocation4 + $0x8] sm:$0xff] %vm771, 0.0
    %774 = vst.msk [vmem:[#allocation4 + $0x10] sm:$0xff] %vm771, 0.0
    %775 = vst.msk [vmem:[#allocation4 + $0x18] sm:$0xff] %vm771, 0.0
    %776 = vst [vmem:[#allocation5] sm:$0xff] 0.0
    %vm777 = vcmask 785408
    %778 = vst.msk [vmem:[#allocation5 + $0x8] sm:$0xff] %vm777, 0.0
    %779 = vst [vmem:[#allocation5 + $0x10] sm:$0xff] 0.0
    %780 = vst.msk [vmem:[#allocation5 + $0x18] sm:$0xff] %vm777, 0.0
    %781 = vst [vmem:[#allocation5 + $0x20] sm:$0xff] 0.0
    %782 = vst.msk [vmem:[#allocation5 + $0x28] sm:$0xff] %vm777, 0.0
    %783 = vst [vmem:[#allocation5 + $0x30] sm:$0xff] 0.0
    %784 = vst.msk [vmem:[#allocation5 + $0x38] sm:$0xff] %vm777, 0.0
    %785 = vst [vmem:[#allocation6] sm:$0xff] 0.0
    %786 = vst.msk [vmem:[#allocation6 + $0x8] sm:$0xff] %vm777, 0.0
    %787 = vst [vmem:[#allocation6 + $0x10] sm:$0xff] 0.0
    %788 = vst.msk [vmem:[#allocation6 + $0x18] sm:$0xff] %vm777, 0.0
    %789 = vst [vmem:[#allocation6 + $0x20] sm:$0xff] 0.0
    %790 = vst.msk [vmem:[#allocation6 + $0x28] sm:$0xff] %vm777, 0.0
    %791 = vst [vmem:[#allocation6 + $0x30] sm:$0xff] 0.0
    %792 = vst.msk [vmem:[#allocation6 + $0x38] sm:$0xff] %vm777, 0.0
    %793 = vst.msk [vmem:[#allocation7] sm:$0xff] %vm771, 0.0
    %794 = vst.msk [vmem:[#allocation7 + $0x8] sm:$0xff] %vm771, 0.0
    %vm795 = vcmask 910336
    %796 = vst.msk [vmem:[#allocation7 + $0x10] sm:$0x3] %vm795, 0.0
    %797 = vst [vmem:[#allocation8] sm:$0xff] 0.0
    %798 = vst.msk [vmem:[#allocation8 + $0x8] sm:$0xff] %vm777, 0.0
    %799 = vst [vmem:[#allocation8 + $0x10] sm:$0xff] 0.0
    %800 = vst.msk [vmem:[#allocation8 + $0x18] sm:$0xff] %vm777, 0.0
    %801 = vst [vmem:[#allocation8 + $0x20] sm:$0x3] 0.0
    %vm802 = vcmask 779264
    %803 = vst.msk [vmem:[#allocation8 + $0x28] sm:$0x3] %vm802, 0.0
    %804 = vst [vmem:[#allocation9] sm:$0xff] 0.0
    %805 = vst.msk [vmem:[#allocation9 + $0x8] sm:$0xff] %vm777, 0.0
    %806 = vst [vmem:[#allocation9 + $0x10] sm:$0xff] 0.0
    %807 = vst.msk [vmem:[#allocation9 + $0x18] sm:$0xff] %vm777, 0.0
    %808 = vst [vmem:[#allocation9 + $0x20] sm:$0x3] 0.0
    %809 = vst.msk [vmem:[#allocation9 + $0x28] sm:$0x3] %vm802, 0.0
    %810 = vst [vmem:[#allocation10] sm:$0xff] 0.0
    %811 = vst [vmem:[#allocation10 + $0x8] sm:$0xf] 0.0
    %812 = vst [vmem:[#allocation11] sm:$0xff] 0.0
    %813 = vst [vmem:[#allocation11 + $0x8] sm:$0xff] 0.0
    %814 = vst [vmem:[#allocation11 + $0x10] sm:$0xf] 0.0
    %815 = vst [vmem:[#allocation11 + $0x18] sm:$0xf] 0.0
    %816 = vst [vmem:[#allocation12] sm:$0xff] 0.0
    %817 = vst [vmem:[#allocation12 + $0x8] sm:$0xff] 0.0
    %818 = vst [vmem:[#allocation12 + $0x10] sm:$0xf] 0.0
    %819 = vst [vmem:[#allocation12 + $0x18] sm:$0xf] 0.0
    %v820 = vld [vmem:[#allocation17] sm:$0xff]
    %v821 = vld [vmem:[#allocation17 + $0x8] sm:$0xff]
    %v822 = vld [vmem:[#allocation17 + $0x10] sm:$0xff]
    %v823 = vld [vmem:[#allocation17 + $0x18] sm:$0xff]
    %v824 = vld [vmem:[#allocation17 + $0x20] sm:$0xff]
    %v825 = vld [vmem:[#allocation17 + $0x28] sm:$0xff]
    %v826 = vld [vmem:[#allocation19] sm:$0xff]
    %v827 = vld [vmem:[#allocation19 + $0x8] sm:$0xff]
    %v828 = vld [vmem:[#allocation19 + $0x10] sm:$0xff]
    %v829 = vld [vmem:[#allocation19 + $0x18] sm:$0xff]
    %v830 = vld [vmem:[#allocation19 + $0x20] sm:$0xff]
    %v831 = vld [vmem:[#allocation19 + $0x28] sm:$0xff]
    %v832 = vld [vmem:[#allocation20] sm:$0xff]
    %v833 = vld [vmem:[#allocation20 + $0x8] sm:$0xff]
    %v834 = vld [vmem:[#allocation20 + $0x10] sm:$0xff]
    %v835 = vld [vmem:[#allocation20 + $0x18] sm:$0xff]
    %v836 = vld [vmem:[#allocation20 + $0x20] sm:$0xff]
    %v837 = vld [vmem:[#allocation20 + $0x28] sm:$0xff]
    %v838 = vld [vmem:[#allocation22] sm:$0x1]
    %v839 = vld [vmem:[#allocation23] sm:$0x1]
    %v840 = vld [vmem:[#allocation14] sm:$0xff]
    %v841 = vld [vmem:[#allocation14 + $0x8] sm:$0xff]
    %v842 = vld [vmem:[#allocation14 + $0x10] sm:$0xff]
    %v843 = vld [vmem:[#allocation14 + $0x18] sm:$0xff]
    %v844 = vld [vmem:[#allocation14 + $0x20] sm:$0x3]
    %v845 = vld [vmem:[#allocation14 + $0x1] sm:$0xff]
    %v846 = vld [vmem:[#allocation14 + $0x9] sm:$0xff]
    %v847 = vld [vmem:[#allocation14 + $0x11] sm:$0xff]
    %v848 = vld [vmem:[#allocation14 + $0x19] sm:$0xff]
    %v849 = vld [vmem:[#allocation14 + $0x21] sm:$0x3]
    %vm850 = vcmask 392192
    %v852 = vsel %vm850, %v845, 0
    %v855 = vsel %vm850, %v846, 0
    %v858 = vsel %vm850, %v847, 0
    %v861 = vsel %vm850, %v848, 0
    %v864 = vsel %vm850, %v849, 0
    %866 = vmatprep.subr.mxu0 0.0
    %867 = vmatpush1.msra.mxu0 %v826
    %868 = vmatprep.subr.mxu0 0.0
    %869 = vmatpush1.msra.mxu0 %v827
    %870 = vmatprep.subr.mxu0 0.0
    %871 = vmatpush1.msra.mxu0 %v828
    %872 = vmatprep.subr.mxu0 0.0
    %873 = vmatpush1.msra.mxu0 %v829
    %874 = vmatprep.subr.mxu0 0.0
    %875 = vmatpush1.msra.mxu0 %v830
    %876 = vmatprep.subr.mxu0 0.0
    %877 = vmatpush1.msra.mxu0 %v831
    %878 = vmatprep.subr.mxu0 0.0
    %879 = vmatpush1.msra.mxu0 0.0
    %880 = vmatprep.subr.mxu0 0.0
    %881 = vmatpush1.msra.mxu0 0.0
    %882 = vmatprep.subr.mxu0 0.0
    %883 = vmatpush1.msra.mxu0 0.0
    %884 = vmatprep.subr.mxu0 0.0
    %885 = vmatpush1.msra.mxu0 0.0
    %886 = vmatprep.subr.mxu0 0.0
    %887 = vmatpush1.msra.mxu0 0.0
    %888 = vmatprep.subr.mxu0 0.0
    %889 = vmatpush1.msra.mxu0 0.0
    %890 = vmatprep.subr.mxu0 0.0
    %891 = vmatpush1.msra.mxu0 0.0
    %892 = vmatprep.subr.mxu0 0.0
    %893 = vmatpush1.msra.mxu0 0.0
    %894 = vmatprep.subr.mxu0 0.0
    %895 = vmatpush1.msra.mxu0 0.0
    %896 = vmatprep.subr.mxu0 0.0
    %897 = vmatpush1.msra.mxu0 0.0
    %898 = vmatprep.subr.mxu0 0.0
    %899 = vmatpush1.msra.mxu0 0.0
    %900 = vmatprep.subr.mxu0 0.0
    %901 = vmatpush1.msra.mxu0 0.0
    %902 = vmatprep.subr.mxu0 0.0
    %903 = vmatpush1.msra.mxu0 0.0
    %904 = vmatprep.subr.mxu0 0.0
    %905 = vmatpush1.msra.mxu0 0.0
    %906 = vmatprep.subr.mxu0 0.0
    %907 = vmatpush1.msra.mxu0 0.0
    %908 = vmatprep.subr.mxu0 0.0
    %909 = vmatpush1.msra.mxu0 0.0
    %910 = vmatprep.subr.mxu0 0.0
    %911 = vmatpush1.msra.mxu0 0.0
    %912 = vmatprep.subr.mxu0 0.0
    %913 = vmatpush1.msra.mxu0 0.0
    %914 = vmatprep.subr.mxu0 0.0
    %915 = vmatpush1.msra.mxu0 0.0
    %916 = vmatprep.subr.mxu0 0.0
    %917 = vmatpush1.msra.mxu0 0.0
    %918 = vmatprep.subr.mxu0 0.0
    %919 = vmatpush1.msra.mxu0 0.0
    %920 = vmatprep.subr.mxu0 0.0
    %921 = vmatpush1.msra.mxu0 0.0
    %922 = vmatprep.subr.mxu0 0.0
    %923 = vmatpush1.msra.mxu0 0.0
    %924 = vmatprep.subr.mxu0 0.0
    %925 = vmatpush1.msra.mxu0 0.0
    %926 = vmatprep.subr.mxu0 0.0
    %927 = vmatpush1.msra.mxu0 0.0
    %928 = vmatprep.subr.mxu0 0.0
    %929 = vmatpush1.msra.mxu0 0.0
    %930 = vmatprep.mubr.f32.mxu0 0.0
    %931 = vmatmul.mubr.f32.gmra.mrb[0].mxu0 %v852
    %v932 = vpop.f32.mrb[0].mxu0
    %v933 = vadd.f32 0.0, %v932
    %v934 = vpop.f32.mrb[0].mxu0
    %935 = vmatprep.mubr.f32.mxu0 0.0
    %936 = vmatmul.mubr.f32.gmra.mrb[0].mxu0 %v855
    %v937 = vpop.f32.mrb[0].mxu0
    %v938 = vadd.f32 0.0, %v937
    %v939 = vpop.f32.mrb[0].mxu0
    %940 = vmatprep.mubr.f32.mxu0 0.0
    %941 = vmatmul.mubr.f32.gmra.mrb[0].mxu0 %v858
    %v942 = vpop.f32.mrb[0].mxu0
    %v943 = vadd.f32 0.0, %v942
    %v944 = vpop.f32.mrb[0].mxu0
    %945 = vmatprep.mubr.f32.mxu0 0.0
    %946 = vmatmul.mubr.f32.gmra.mrb[0].mxu0 %v861
    %v947 = vpop.f32.mrb[0].mxu0
    %v948 = vadd.f32 0.0, %v947
    %v949 = vpop.f32.mrb[0].mxu0
    %950 = vmatprep.mubr.f32.mxu0 0.0
    %951 = vmatmul.mubr.f32.gmra.mrb[0].mxu0 %v864
    %v952 = vpop.f32.mrb[0].mxu0
    %v953 = vadd.f32 0.0, %v952
    %v954 = vpop.f32.mrb[0].mxu0
    %955 = vdwg.mxu0
    %v957 = vsel %vm850, %v840, 0
    %v960 = vsel %vm850, %v841, 0
    %v963 = vsel %vm850, %v842, 0
    %v966 = vsel %vm850, %v843, 0
    %v969 = vsel %vm850, %v844, 0
    %971 = vmatprep.subr.mxu0 0.0
    %972 = vmatpush1.msra.mxu0 %v820
    %973 = vmatprep.subr.mxu0 0.0
    %974 = vmatpush1.msra.mxu0 %v821
    %975 = vmatprep.subr.mxu0 0.0
    %976 = vmatpush1.msra.mxu0 %v822
    %977 = vmatprep.subr.mxu0 0.0
    %978 = vmatpush1.msra.mxu0 %v823
    %979 = vmatprep.subr.mxu0 0.0
    %980 = vmatpush1.msra.mxu0 %v824
    %981 = vmatprep.subr.mxu0 0.0
    %982 = vmatpush1.msra.mxu0 %v825
    %983 = vmatprep.subr.mxu0 0.0
    %984 = vmatpush1.msra.mxu0 0.0
    %985 = vmatprep.subr.mxu0 0.0
    %986 = vmatpush1.msra.mxu0 0.0
    %987 = vmatprep.subr.mxu0 0.0
    %988 = vmatpush1.msra.mxu0 0.0
    %989 = vmatprep.subr.mxu0 0.0
    %990 = vmatpush1.msra.mxu0 0.0
    %991 = vmatprep.subr.mxu0 0.0
    %992 = vmatpush1.msra.mxu0 0.0
    %993 = vmatprep.subr.mxu0 0.0
    %994 = vmatpush1.msra.mxu0 0.0
    %995 = vmatprep.subr.mxu0 0.0
    %996 = vmatpush1.msra.mxu0 0.0
    %997 = vmatprep.subr.mxu0 0.0
    %998 = vmatpush1.msra.mxu0 0.0
    %999 = vmatprep.subr.mxu0 0.0
    %1000 = vmatpush1.msra.mxu0 0.0
    %1001 = vmatprep.subr.mxu0 0.0
    %1002 = vmatpush1.msra.mxu0 0.0
    %1003 = vmatprep.subr.mxu0 0.0
    %1004 = vmatpush1.msra.mxu0 0.0
    %1005 = vmatprep.subr.mxu0 0.0
    %1006 = vmatpush1.msra.mxu0 0.0
    %1007 = vmatprep.subr.mxu0 0.0
    %1008 = vmatpush1.msra.mxu0 0.0
    %1009 = vmatprep.subr.mxu0 0.0
    %1010 = vmatpush1.msra.mxu0 0.0
    %1011 = vmatprep.subr.mxu0 0.0
    %1012 = vmatpush1.msra.mxu0 0.0
    %1013 = vmatprep.subr.mxu0 0.0
    %1014 = vmatpush1.msra.mxu0 0.0
    %1015 = vmatprep.subr.mxu0 0.0
    %1016 = vmatpush1.msra.mxu0 0.0
    %1017 = vmatprep.subr.mxu0 0.0
    %1018 = vmatpush1.msra.mxu0 0.0
    %1019 = vmatprep.subr.mxu0 0.0
    %1020 = vmatpush1.msra.mxu0 0.0
    %1021 = vmatprep.subr.mxu0 0.0
    %1022 = vmatpush1.msra.mxu0 0.0
    %1023 = vmatprep.subr.mxu0 0.0
    %1024 = vmatpush1.msra.mxu0 0.0
    %1025 = vmatprep.subr.mxu0 0.0
    %1026 = vmatpush1.msra.mxu0 0.0
    %1027 = vmatprep.subr.mxu0 0.0
    %1028 = vmatpush1.msra.mxu0 0.0
    %1029 = vmatprep.subr.mxu0 0.0
    %1030 = vmatpush1.msra.mxu0 0.0
    %1031 = vmatprep.subr.mxu0 0.0
    %1032 = vmatpush1.msra.mxu0 0.0
    %1033 = vmatprep.subr.mxu0 0.0
    %1034 = vmatpush1.msra.mxu0 0.0
    %1035 = vmatprep.mubr.f32.mxu0 0.0
    %1036 = vmatmul.mubr.f32.gmra.mrb[0].mxu0 %v957
    %v1037 = vpop.f32.mrb[0].mxu0
    %v1038 = vadd.f32 %v933, %v1037
    %v1039 = vpop.f32.mrb[0].mxu0
    %1040 = vmatprep.mubr.f32.mxu0 0.0
    %1041 = vmatmul.mubr.f32.gmra.mrb[0].mxu0 %v960
    %v1042 = vpop.f32.mrb[0].mxu0
    %v1043 = vadd.f32 %v938, %v1042
    %v1044 = vpop.f32.mrb[0].mxu0
    %1045 = vmatprep.mubr.f32.mxu0 0.0
    %1046 = vmatmul.mubr.f32.gmra.mrb[0].mxu0 %v963
    %v1047 = vpop.f32.mrb[0].mxu0
    %v1048 = vadd.f32 %v943, %v1047
    %v1049 = vpop.f32.mrb[0].mxu0
    %1050 = vmatprep.mubr.f32.mxu0 0.0
    %1051 = vmatmul.mubr.f32.gmra.mrb[0].mxu0 %v966
    %v1052 = vpop.f32.mrb[0].mxu0
    %v1053 = vadd.f32 %v948, %v1052
    %v1054 = vpop.f32.mrb[0].mxu0
    %1055 = vmatprep.mubr.f32.mxu0 0.0
    %1056 = vmatmul.mubr.f32.gmra.mrb[0].mxu0 %v969
    %v1057 = vpop.f32.mrb[0].mxu0
    %v1058 = vadd.f32 %v953, %v1057
    %v1059 = vpop.f32.mrb[0].mxu0
    %1060 = vdwg.mxu0
    %v1061 = vld [vmem:[#allocation14 + $0x2] sm:$0xff]
    %v1062 = vld [vmem:[#allocation14 + $0xa] sm:$0xff]
    %v1063 = vld [vmem:[#allocation14 + $0x12] sm:$0xff]
    %v1064 = vld [vmem:[#allocation14 + $0x1a] sm:$0xff]
    %v1065 = vld [vmem:[#allocation14 + $0x22] sm:$0x3]
    %v1067 = vsel %vm850, %v1061, 0
    %v1070 = vsel %vm850, %v1062, 0
    %v1073 = vsel %vm850, %v1063, 0
    %v1076 = vsel %vm850, %v1064, 0
    %v1079 = vsel %vm850, %v1065, 0
    %1081 = vmatprep.subr.mxu0 0.0
    %1082 = vmatpush1.msra.mxu0 %v832
    %1083 = vmatprep.subr.mxu0 0.0
    %1084 = vmatpush1.msra.mxu0 %v833
    %1085 = vmatprep.subr.mxu0 0.0
    %1086 = vmatpush1.msra.mxu0 %v834
    %1087 = vmatprep.subr.mxu0 0.0
    %1088 = vmatpush1.msra.mxu0 %v835
    %1089 = vmatprep.subr.mxu0 0.0
    %1090 = vmatpush1.msra.mxu0 %v836
    %1091 = vmatprep.subr.mxu0 0.0
    %1092 = vmatpush1.msra.mxu0 %v837
    %1093 = vmatprep.subr.mxu0 0.0
    %1094 = vmatpush1.msra.mxu0 0.0
    %1095 = vmatprep.subr.mxu0 0.0
    %1096 = vmatpush1.msra.mxu0 0.0
    %1097 = vmatprep.subr.mxu0 0.0
    %1098 = vmatpush1.msra.mxu0 0.0
    %1099 = vmatprep.subr.mxu0 0.0
    %1100 = vmatpush1.msra.mxu0 0.0
    %1101 = vmatprep.subr.mxu0 0.0
    %1102 = vmatpush1.msra.mxu0 0.0
    %1103 = vmatprep.subr.mxu0 0.0
    %1104 = vmatpush1.msra.mxu0 0.0
    %1105 = vmatprep.subr.mxu0 0.0
    %1106 = vmatpush1.msra.mxu0 0.0
    %1107 = vmatprep.subr.mxu0 0.0
    %1108 = vmatpush1.msra.mxu0 0.0
    %1109 = vmatprep.subr.mxu0 0.0
    %1110 = vmatpush1.msra.mxu0 0.0
    %1111 = vmatprep.subr.mxu0 0.0
    %1112 = vmatpush1.msra.mxu0 0.0
    %1113 = vmatprep.subr.mxu0 0.0
    %1114 = vmatpush1.msra.mxu0 0.0
    %1115 = vmatprep.subr.mxu0 0.0
    %1116 = vmatpush1.msra.mxu0 0.0
    %1117 = vmatprep.subr.mxu0 0.0
    %1118 = vmatpush1.msra.mxu0 0.0
    %1119 = vmatprep.subr.mxu0 0.0
    %1120 = vmatpush1.msra.mxu0 0.0
    %1121 = vmatprep.subr.mxu0 0.0
    %1122 = vmatpush1.msra.mxu0 0.0
    %1123 = vmatprep.subr.mxu0 0.0
    %1124 = vmatpush1.msra.mxu0 0.0
    %1125 = vmatprep.subr.mxu0 0.0
    %1126 = vmatpush1.msra.mxu0 0.0
    %1127 = vmatprep.subr.mxu0 0.0
    %1128 = vmatpush1.msra.mxu0 0.0
    %1129 = vmatprep.subr.mxu0 0.0
    %1130 = vmatpush1.msra.mxu0 0.0
    %1131 = vmatprep.subr.mxu0 0.0
    %1132 = vmatpush1.msra.mxu0 0.0
    %1133 = vmatprep.subr.mxu0 0.0
    %1134 = vmatpush1.msra.mxu0 0.0
    %1135 = vmatprep.subr.mxu0 0.0
    %1136 = vmatpush1.msra.mxu0 0.0
    %1137 = vmatprep.subr.mxu0 0.0
    %1138 = vmatpush1.msra.mxu0 0.0
    %1139 = vmatprep.subr.mxu0 0.0
    %1140 = vmatpush1.msra.mxu0 0.0
    %1141 = vmatprep.subr.mxu0 0.0
    %1142 = vmatpush1.msra.mxu0 0.0
    %1143 = vmatprep.subr.mxu0 0.0
    %1144 = vmatpush1.msra.mxu0 0.0
    %1145 = vmatprep.mubr.f32.mxu0 0.0
    %1146 = vmatmul.mubr.f32.gmra.mrb[0].mxu0 %v1067
    %v1147 = vpop.f32.mrb[0].mxu0
    %v1148 = vadd.f32 0.0, %v1147
    %v1149 = vpop.f32.mrb[0].mxu0
    %1150 = vmatprep.mubr.f32.mxu0 0.0
    %1151 = vmatmul.mubr.f32.gmra.mrb[0].mxu0 %v1070
    %v1152 = vpop.f32.mrb[0].mxu0
    %v1153 = vadd.f32 0.0, %v1152
    %v1154 = vpop.f32.mrb[0].mxu0
    %1155 = vmatprep.mubr.f32.mxu0 0.0
    %1156 = vmatmul.mubr.f32.gmra.mrb[0].mxu0 %v1073
    %v1157 = vpop.f32.mrb[0].mxu0
    %v1158 = vadd.f32 0.0, %v1157
    %v1159 = vpop.f32.mrb[0].mxu0
    %1160 = vmatprep.mubr.f32.mxu0 0.0
    %1161 = vmatmul.mubr.f32.gmra.mrb[0].mxu0 %v1076
    %v1162 = vpop.f32.mrb[0].mxu0
    %v1163 = vadd.f32 0.0, %v1162
    %v1164 = vpop.f32.mrb[0].mxu0
    %1165 = vmatprep.mubr.f32.mxu0 0.0
    %1166 = vmatmul.mubr.f32.gmra.mrb[0].mxu0 %v1079
    %v1167 = vpop.f32.mrb[0].mxu0
    %v1168 = vadd.f32 0.0, %v1167
    %v1169 = vpop.f32.mrb[0].mxu0
    %1170 = vdwg.mxu0
    %v1171 = vadd.f32 %v1038, %v1148
    %v1172 = vadd.f32 %v1043, %v1153
    %v1173 = vadd.f32 %v1048, %v1158
    %v1174 = vadd.f32 %v1053, %v1163
    %v1175 = vadd.f32 %v1058, %v1168
    %v1176 = vmax.f32 %v1171, 0.0
    %v1177 = vmax.f32 %v1172, 0.0
    %v1178 = vmax.f32 %v1173, 0.0
    %v1179 = vmax.f32 %v1174, 0.0
    %v1180 = vmax.f32 %v1175, 0.0
    %v1182 = vlaneseq
    %v1183 = vshrl.u32 %v1182, 7
    %v1184 = vsub.s32 0, %v1183
    %v1185 = vrot.slane %v838, %v1184
    %v1187 = vmul.f32 %v1176, %v1185
    %v1188 = vmul.f32 %v1177, %v1185
    %v1189 = vmul.f32 %v1178, %v1185
    %v1190 = vmul.f32 %v1179, %v1185
    %v1191 = vmul.f32 %v1180, %v1185
    %v1193 = vlaneseq
    %v1194 = vshrl.u32 %v1193, 7
    %v1195 = vsub.s32 0, %v1194
    %v1196 = vrot.slane %v839, %v1195
    %v1198 = vadd.f32 %v1187, %v1196
    %v1199 = vadd.f32 %v1188, %v1196
    %v1200 = vadd.f32 %v1189, %v1196
    %v1201 = vadd.f32 %v1190, %v1196
    %v1202 = vadd.f32 %v1191, %v1196
    %1203 = vst [vmem:[#allocation2 + $0x1] sm:$0xff] %v1198
    %1204 = vst [vmem:[#allocation2 + $0x9] sm:$0xff] %v1199
    %1205 = vst [vmem:[#allocation2 + $0x11] sm:$0xfc] %v1200
    %1206 = vst [vmem:[#allocation2 + $0x19] sm:$0xff] %v1201
    %1207 = vst [vmem:[#allocation2 + $0x21] sm:$0x3] %v1202
    %v1208 = vld [vmem:[#allocation25] sm:$0xff]
    %v1209 = vld [vmem:[#allocation25 + $0x8] sm:$0xff]
    %v1210 = vld [vmem:[#allocation25 + $0x10] sm:$0xff]
    %v1211 = vld [vmem:[#allocation25 + $0x18] sm:$0xff]
    %v1212 = vld [vmem:[#allocation25 + $0x20] sm:$0xff]
    %v1213 = vld [vmem:[#allocation25 + $0x28] sm:$0xff]
    %v1214 = vld [vmem:[#allocation25 + $0x30] sm:$0xff]
    %v1215 = vld [vmem:[#allocation25 + $0x38] sm:$0xff]
    %v1216 = vld [vmem:[#allocation25 + $0x40] sm:$0xff]
    %v1217 = vld [vmem:[#allocation25 + $0x48] sm:$0xff]
    %v1218 = vld [vmem:[#allocation25 + $0x50] sm:$0xff]
    %v1219 = vld [vmem:[#allocation25 + $0x58] sm:$0xff]
    %v1220 = vld [vmem:[#allocation25 + $0x60] sm:$0xff]
    %v1221 = vld [vmem:[#allocation25 + $0x68] sm:$0xff]
    %v1222 = vld [vmem:[#allocation25 + $0x70] sm:$0xff]
    %v1223 = vld [vmem:[#allocation25 + $0x78] sm:$0xff]
    %v1224 = vld [vmem:[#allocation26] sm:$0xff]
    %v1225 = vld [vmem:[#allocation26 + $0x8] sm:$0xff]
    %v1226 = vld [vmem:[#allocation26 + $0x10] sm:$0xff]
    %v1227 = vld [vmem:[#allocation26 + $0x18] sm:$0xff]
    %v1228 = vld [vmem:[#allocation26 + $0x20] sm:$0xff]
    %v1229 = vld [vmem:[#allocation26 + $0x28] sm:$0xff]
    %v1230 = vld [vmem:[#allocation26 + $0x30] sm:$0xff]
    %v1231 = vld [vmem:[#allocation26 + $0x38] sm:$0xff]
    %v1232 = vld [vmem:[#allocation26 + $0x40] sm:$0xff]
    %v1233 = vld [vmem:[#allocation26 + $0x48] sm:$0xff]
    %v1234 = vld [vmem:[#allocation26 + $0x50] sm:$0xff]
    %v1235 = vld [vmem:[#allocation26 + $0x58] sm:$0xff]
    %v1236 = vld [vmem:[#allocation26 + $0x60] sm:$0xff]
    %v1237 = vld [vmem:[#allocation26 + $0x68] sm:$0xff]
    %v1238 = vld [vmem:[#allocation26 + $0x70] sm:$0xff]
    %v1239 = vld [vmem:[#allocation26 + $0x78] sm:$0xff]
    %v1240 = vld [vmem:[#allocation28] sm:$0xff]
    %v1241 = vld [vmem:[#allocation28 + $0x8] sm:$0xff]
    %v1242 = vld [vmem:[#allocation28 + $0x10] sm:$0xff]
    %v1243 = vld [vmem:[#allocation28 + $0x18] sm:$0xff]
    %v1244 = vld [vmem:[#allocation28 + $0x20] sm:$0xff]
    %v1245 = vld [vmem:[#allocation28 + $0x28] sm:$0xff]
    %v1246 = vld [vmem:[#allocation28 + $0x30] sm:$0xff]
    %v1247 = vld [vmem:[#allocation28 + $0x38] sm:$0xff]
    %v1248 = vld [vmem:[#allocation28 + $0x40] sm:$0xff]
    %v1249 = vld [vmem:[#allocation28 + $0x48] sm:$0xff]
    %v1250 = vld [vmem:[#allocation28 + $0x50] sm:$0xff]
    %v1251 = vld [vmem:[#allocation28 + $0x58] sm:$0xff]
    %v1252 = vld [vmem:[#allocation28 + $0x60] sm:$0xff]
    %v1253 = vld [vmem:[#allocation28 + $0x68] sm:$0xff]
    %v1254 = vld [vmem:[#allocation28 + $0x70] sm:$0xff]
    %v1255 = vld [vmem:[#allocation28 + $0x78] sm:$0xff]
    %v1256 = vld [vmem:[#allocation29] sm:$0x1]
    %v1257 = vld [vmem:[#allocation31] sm:$0x1]
    %v1258 = vld [vmem:[#allocation2] sm:$0xff]
    %v1259 = vld [vmem:[#allocation2 + $0x8] sm:$0xff]
    %v1260 = vld [vmem:[#allocation2 + $0x10] sm:$0xff]
    %v1261 = vld [vmem:[#allocation2 + $0x18] sm:$0xff]
    %v1262 = vld [vmem:[#allocation2 + $0x20] sm:$0x3]
    %v1263 = vld [vmem:[#allocation2 + $0x1] sm:$0xff]
    %v1264 = vld [vmem:[#allocation2 + $0x9] sm:$0xff]
    %v1265 = vld [vmem:[#allocation2 + $0x11] sm:$0xff]
    %v1266 = vld [vmem:[#allocation2 + $0x19] sm:$0xff]
    %v1267 = vld [vmem:[#allocation2 + $0x21] sm:$0x3]
    %1268 = vmatprep.subr.mxu0 0.0
    %1269 = vmatpush1.msra.mxu0 %v1224
    %1270 = vmatprep.subr.mxu0 0.0
    %1271 = vmatpush1.msra.mxu0 %v1225
    %1272 = vmatprep.subr.mxu0 0.0
    %1273 = vmatpush1.msra.mxu0 %v1226
    %1274 = vmatprep.subr.mxu0 0.0
    %1275 = vmatpush1.msra.mxu0 %v1227
    %1276 = vmatprep.subr.mxu0 0.0
    %1277 = vmatpush1.msra.mxu0 %v1228
    %1278 = vmatprep.subr.mxu0 0.0
    %1279 = vmatpush1.msra.mxu0 %v1229
    %1280 = vmatprep.subr.mxu0 0.0
    %1281 = vmatpush1.msra.mxu0 %v1230
    %1282 = vmatprep.subr.mxu0 0.0
    %1283 = vmatpush1.msra.mxu0 %v1231
    %1284 = vmatprep.subr.mxu0 0.0
    %1285 = vmatpush1.msra.mxu0 %v1232
    %1286 = vmatprep.subr.mxu0 0.0
    %1287 = vmatpush1.msra.mxu0 %v1233
    %1288 = vmatprep.subr.mxu0 0.0
    %1289 = vmatpush1.msra.mxu0 %v1234
    %1290 = vmatprep.subr.mxu0 0.0
    %1291 = vmatpush1.msra.mxu0 %v1235
    %1292 = vmatprep.subr.mxu0 0.0
    %1293 = vmatpush1.msra.mxu0 %v1236
    %1294 = vmatprep.subr.mxu0 0.0
    %1295 = vmatpush1.msra.mxu0 %v1237
    %1296 = vmatprep.subr.mxu0 0.0
    %1297 = vmatpush1.msra.mxu0 %v1238
    %1298 = vmatprep.subr.mxu0 0.0
    %1299 = vmatpush1.msra.mxu0 %v1239
    %1300 = vmatprep.subr.mxu0 0.0
    %1301 = vmatpush1.msra.mxu0 0.0
    %1302 = vmatprep.subr.mxu0 0.0
    %1303 = vmatpush1.msra.mxu0 0.0
    %1304 = vmatprep.subr.mxu0 0.0
    %1305 = vmatpush1.msra.mxu0 0.0
    %1306 = vmatprep.subr.mxu0 0.0
    %1307 = vmatpush1.msra.mxu0 0.0
    %1308 = vmatprep.subr.mxu0 0.0
    %1309 = vmatpush1.msra.mxu0 0.0
    %1310 = vmatprep.subr.mxu0 0.0
    %1311 = vmatpush1.msra.mxu0 0.0
    %1312 = vmatprep.subr.mxu0 0.0
    %1313 = vmatpush1.msra.mxu0 0.0
    %1314 = vmatprep.subr.mxu0 0.0
    %1315 = vmatpush1.msra.mxu0 0.0
    %1316 = vmatprep.subr.mxu0 0.0
    %1317 = vmatpush1.msra.mxu0 0.0
    %1318 = vmatprep.subr.mxu0 0.0
    %1319 = vmatpush1.msra.mxu0 0.0
    %1320 = vmatprep.subr.mxu0 0.0
    %1321 = vmatpush1.msra.mxu0 0.0
    %1322 = vmatprep.subr.mxu0 0.0
    %1323 = vmatpush1.msra.mxu0 0.0
    %1324 = vmatprep.subr.mxu0 0.0
    %1325 = vmatpush1.msra.mxu0 0.0
    %1326 = vmatprep.subr.mxu0 0.0
    %1327 = vmatpush1.msra.mxu0 0.0
    %1328 = vmatprep.subr.mxu0 0.0
    %1329 = vmatpush1.msra.mxu0 0.0
    %1330 = vmatprep.subr.mxu0 0.0
    %1331 = vmatpush1.msra.mxu0 0.0
    %1332 = vmatprep.mubr.f32.mxu0 0.0
    %1333 = vmatmul.mubr.f32.gmra.mrb[0].mxu0 %v1263
    %v1334 = vpop.f32.mrb[0].mxu0
    %v1335 = vadd.f32 0.0, %v1334
    %v1336 = vpop.f32.mrb[0].mxu0
    %1337 = vmatprep.mubr.f32.mxu0 0.0
    %1338 = vmatmul.mubr.f32.gmra.mrb[0].mxu0 %v1264
    %v1339 = vpop.f32.mrb[0].mxu0
    %v1340 = vadd.f32 0.0, %v1339
    %v1341 = vpop.f32.mrb[0].mxu0
    %1342 = vmatprep.mubr.f32.mxu0 0.0
    %1343 = vmatmul.mubr.f32.gmra.mrb[0].mxu0 %v1265
    %v1344 = vpop.f32.mrb[0].mxu0
    %v1345 = vadd.f32 0.0, %v1344
    %v1346 = vpop.f32.mrb[0].mxu0
    %1347 = vmatprep.mubr.f32.mxu0 0.0
    %1348 = vmatmul.mubr.f32.gmra.mrb[0].mxu0 %v1266
    %v1349 = vpop.f32.mrb[0].mxu0
    %v1350 = vadd.f32 0.0, %v1349
    %v1351 = vpop.f32.mrb[0].mxu0
    %1352 = vmatprep.mubr.f32.mxu0 0.0
    %1353 = vmatmul.mubr.f32.gmra.mrb[0].mxu0 %v1267
    %v1354 = vpop.f32.mrb[0].mxu0
    %v1355 = vadd.f32 0.0, %v1354
    %v1356 = vpop.f32.mrb[0].mxu0
    %1357 = vdwg.mxu0
    %1358 = vmatprep.subr.mxu0 0.0
    %1359 = vmatpush1.msra.mxu0 %v1208
    %1360 = vmatprep.subr.mxu0 0.0
    %1361 = vmatpush1.msra.mxu0 %v1209
    %1362 = vmatprep.subr.mxu0 0.0
    %1363 = vmatpush1.msra.mxu0 %v1210
    %1364 = vmatprep.subr.mxu0 0.0
    %1365 = vmatpush1.msra.mxu0 %v1211
    %1366 = vmatprep.subr.mxu0 0.0
    %1367 = vmatpush1.msra.mxu0 %v1212
    %1368 = vmatprep.subr.mxu0 0.0
    %1369 = vmatpush1.msra.mxu0 %v1213
    %1370 = vmatprep.subr.mxu0 0.0
    %1371 = vmatpush1.msra.mxu0 %v1214
    %1372 = vmatprep.subr.mxu0 0.0
    %1373 = vmatpush1.msra.mxu0 %v1215
    %1374 = vmatprep.subr.mxu0 0.0
    %1375 = vmatpush1.msra.mxu0 %v1216
    %1376 = vmatprep.subr.mxu0 0.0
    %1377 = vmatpush1.msra.mxu0 %v1217
    %1378 = vmatprep.subr.mxu0 0.0
    %1379 = vmatpush1.msra.mxu0 %v1218
    %1380 = vmatprep.subr.mxu0 0.0
    %1381 = vmatpush1.msra.mxu0 %v1219
    %1382 = vmatprep.subr.mxu0 0.0
    %1383 = vmatpush1.msra.mxu0 %v1220
    %1384 = vmatprep.subr.mxu0 0.0
    %1385 = vmatpush1.msra.mxu0 %v1221
    %1386 = vmatprep.subr.mxu0 0.0
    %1387 = vmatpush1.msra.mxu0 %v1222
    %1388 = vmatprep.subr.mxu0 0.0
    %1389 = vmatpush1.msra.mxu0 %v1223
    %1390 = vmatprep.subr.mxu0 0.0
    %1391 = vmatpush1.msra.mxu0 0.0
    %1392 = vmatprep.subr.mxu0 0.0
    %1393 = vmatpush1.msra.mxu0 0.0
    %1394 = vmatprep.subr.mxu0 0.0
    %1395 = vmatpush1.msra.mxu0 0.0
    %1396 = vmatprep.subr.mxu0 0.0
    %1397 = vmatpush1.msra.mxu0 0.0
    %1398 = vmatprep.subr.mxu0 0.0
    %1399 = vmatpush1.msra.mxu0 0.0
    %1400 = vmatprep.subr.mxu0 0.0
    %1401 = vmatpush1.msra.mxu0 0.0
    %1402 = vmatprep.subr.mxu0 0.0
    %1403 = vmatpush1.msra.mxu0 0.0
    %1404 = vmatprep.subr.mxu0 0.0
    %1405 = vmatpush1.msra.mxu0 0.0
    %1406 = vmatprep.subr.mxu0 0.0
    %1407 = vmatpush1.msra.mxu0 0.0
    %1408 = vmatprep.subr.mxu0 0.0
    %1409 = vmatpush1.msra.mxu0 0.0
    %1410 = vmatprep.subr.mxu0 0.0
    %1411 = vmatpush1.msra.mxu0 0.0
    %1412 = vmatprep.subr.mxu0 0.0
    %1413 = vmatpush1.msra.mxu0 0.0
    %1414 = vmatprep.subr.mxu0 0.0
    %1415 = vmatpush1.msra.mxu0 0.0
    %1416 = vmatprep.subr.mxu0 0.0
    %1417 = vmatpush1.msra.mxu0 0.0
    %1418 = vmatprep.subr.mxu0 0.0
    %1419 = vmatpush1.msra.mxu0 0.0
    %1420 = vmatprep.subr.mxu0 0.0
    %1421 = vmatpush1.msra.mxu0 0.0
    %1422 = vmatprep.mubr.f32.mxu0 0.0
    %1423 = vmatmul.mubr.f32.gmra.mrb[0].mxu0 %v1258
    %v1424 = vpop.f32.mrb[0].mxu0
    %v1425 = vadd.f32 %v1335, %v1424
    %v1426 = vpop.f32.mrb[0].mxu0
    %1427 = vmatprep.mubr.f32.mxu0 0.0
    %1428 = vmatmul.mubr.f32.gmra.mrb[0].mxu0 %v1259
    %v1429 = vpop.f32.mrb[0].mxu0
    %v1430 = vadd.f32 %v1340, %v1429
    %v1431 = vpop.f32.mrb[0].mxu0
    %1432 = vmatprep.mubr.f32.mxu0 0.0
    %1433 = vmatmul.mubr.f32.gmra.mrb[0].mxu0 %v1260
    %v1434 = vpop.f32.mrb[0].mxu0
    %v1435 = vadd.f32 %v1345, %v1434
    %v1436 = vpop.f32.mrb[0].mxu0
    %1437 = vmatprep.mubr.f32.mxu0 0.0
    %1438 = vmatmul.mubr.f32.gmra.mrb[0].mxu0 %v1261
    %v1439 = vpop.f32.mrb[0].mxu0
    %v1440 = vadd.f32 %v1350, %v1439
    %v1441 = vpop.f32.mrb[0].mxu0
    %1442 = vmatprep.mubr.f32.mxu0 0.0
    %1443 = vmatmul.mubr.f32.gmra.mrb[0].mxu0 %v1262
    %v1444 = vpop.f32.mrb[0].mxu0
    %v1445 = vadd.f32 %v1355, %v1444
    %v1446 = vpop.f32.mrb[0].mxu0
    %1447 = vdwg.mxu0
    %v1448 = vld [vmem:[#allocation2 + $0x2] sm:$0xff]
    %v1449 = vld [vmem:[#allocation2 + $0xa] sm:$0xff]
    %v1450 = vld [vmem:[#allocation2 + $0x12] sm:$0xff]
    %v1451 = vld [vmem:[#allocation2 + $0x1a] sm:$0xff]
    %v1452 = vld [vmem:[#allocation2 + $0x22] sm:$0x3]
    %1453 = vmatprep.subr.mxu0 0.0
    %1454 = vmatpush1.msra.mxu0 %v1240
    %1455 = vmatprep.subr.mxu0 0.0
    %1456 = vmatpush1.msra.mxu0 %v1241
    %1457 = vmatprep.subr.mxu0 0.0
    %1458 = vmatpush1.msra.mxu0 %v1242
    %1459 = vmatprep.subr.mxu0 0.0
    %1460 = vmatpush1.msra.mxu0 %v1243
    %1461 = vmatprep.subr.mxu0 0.0
    %1462 = vmatpush1.msra.mxu0 %v1244
    %1463 = vmatprep.subr.mxu0 0.0
    %1464 = vmatpush1.msra.mxu0 %v1245
    %1465 = vmatprep.subr.mxu0 0.0
    %1466 = vmatpush1.msra.mxu0 %v1246
    %1467 = vmatprep.subr.mxu0 0.0
    %1468 = vmatpush1.msra.mxu0 %v1247
    %1469 = vmatprep.subr.mxu0 0.0
    %1470 = vmatpush1.msra.mxu0 %v1248
    %1471 = vmatprep.subr.mxu0 0.0
    %1472 = vmatpush1.msra.mxu0 %v1249
    %1473 = vmatprep.subr.mxu0 0.0
    %1474 = vmatpush1.msra.mxu0 %v1250
    %1475 = vmatprep.subr.mxu0 0.0
    %1476 = vmatpush1.msra.mxu0 %v1251
    %1477 = vmatprep.subr.mxu0 0.0
    %1478 = vmatpush1.msra.mxu0 %v1252
    %1479 = vmatprep.subr.mxu0 0.0
    %1480 = vmatpush1.msra.mxu0 %v1253
    %1481 = vmatprep.subr.mxu0 0.0
    %1482 = vmatpush1.msra.mxu0 %v1254
    %1483 = vmatprep.subr.mxu0 0.0
    %1484 = vmatpush1.msra.mxu0 %v1255
    %1485 = vmatprep.subr.mxu0 0.0
    %1486 = vmatpush1.msra.mxu0 0.0
    %1487 = vmatprep.subr.mxu0 0.0
    %1488 = vmatpush1.msra.mxu0 0.0
    %1489 = vmatprep.subr.mxu0 0.0
    %1490 = vmatpush1.msra.mxu0 0.0
    %1491 = vmatprep.subr.mxu0 0.0
    %1492 = vmatpush1.msra.mxu0 0.0
    %1493 = vmatprep.subr.mxu0 0.0
    %1494 = vmatpush1.msra.mxu0 0.0
    %1495 = vmatprep.subr.mxu0 0.0
    %1496 = vmatpush1.msra.mxu0 0.0
    %1497 = vmatprep.subr.mxu0 0.0
    %1498 = vmatpush1.msra.mxu0 0.0
    %1499 = vmatprep.subr.mxu0 0.0
    %1500 = vmatpush1.msra.mxu0 0.0
    %1501 = vmatprep.subr.mxu0 0.0
    %1502 = vmatpush1.msra.mxu0 0.0
    %1503 = vmatprep.subr.mxu0 0.0
    %1504 = vmatpush1.msra.mxu0 0.0
    %1505 = vmatprep.subr.mxu0 0.0
    %1506 = vmatpush1.msra.mxu0 0.0
    %1507 = vmatprep.subr.mxu0 0.0
    %1508 = vmatpush1.msra.mxu0 0.0
    %1509 = vmatprep.subr.mxu0 0.0
    %1510 = vmatpush1.msra.mxu0 0.0
    %1511 = vmatprep.subr.mxu0 0.0
    %1512 = vmatpush1.msra.mxu0 0.0
    %1513 = vmatprep.subr.mxu0 0.0
    %1514 = vmatpush1.msra.mxu0 0.0
    %1515 = vmatprep.subr.mxu0 0.0
    %1516 = vmatpush1.msra.mxu0 0.0
    %1517 = vmatprep.mubr.f32.mxu0 0.0
    %1518 = vmatmul.mubr.f32.gmra.mrb[0].mxu0 %v1448
    %v1519 = vpop.f32.mrb[0].mxu0
    %v1520 = vadd.f32 0.0, %v1519
    %v1521 = vpop.f32.mrb[0].mxu0
    %1522 = vmatprep.mubr.f32.mxu0 0.0
    %1523 = vmatmul.mubr.f32.gmra.mrb[0].mxu0 %v1449
    %v1524 = vpop.f32.mrb[0].mxu0
    %v1525 = vadd.f32 0.0, %v1524
    %v1526 = vpop.f32.mrb[0].mxu0
    %1527 = vmatprep.mubr.f32.mxu0 0.0
    %1528 = vmatmul.mubr.f32.gmra.mrb[0].mxu0 %v1450
    %v1529 = vpop.f32.mrb[0].mxu0
    %v1530 = vadd.f32 0.0, %v1529
    %v1531 = vpop.f32.mrb[0].mxu0
    %1532 = vmatprep.mubr.f32.mxu0 0.0
    %1533 = vmatmul.mubr.f32.gmra.mrb[0].mxu0 %v1451
    %v1534 = vpop.f32.mrb[0].mxu0
    %v1535 = vadd.f32 0.0, %v1534
    %v1536 = vpop.f32.mrb[0].mxu0
    %1537 = vmatprep.mubr.f32.mxu0 0.0
    %1538 = vmatmul.mubr.f32.gmra.mrb[0].mxu0 %v1452
    %v1539 = vpop.f32.mrb[0].mxu0
    %v1540 = vadd.f32 0.0, %v1539
    %v1541 = vpop.f32.mrb[0].mxu0
    %1542 = vdwg.mxu0
    %v1543 = vadd.f32 %v1425, %v1520
    %v1544 = vadd.f32 %v1430, %v1525
    %v1545 = vadd.f32 %v1435, %v1530
    %v1546 = vadd.f32 %v1440, %v1535
    %v1547 = vadd.f32 %v1445, %v1540
    %v1548 = vmax.f32 %v1543, 0.0
    %v1549 = vmax.f32 %v1544, 0.0
    %v1550 = vmax.f32 %v1545, 0.0
    %v1551 = vmax.f32 %v1546, 0.0
    %v1552 = vmax.f32 %v1547, 0.0
    %v1554 = vlaneseq
    %v1555 = vshrl.u32 %v1554, 7
    %v1556 = vsub.s32 0, %v1555
    %v1557 = vrot.slane %v1256, %v1556
    %v1559 = vmul.f32 %v1548, %v1557
    %v1560 = vmul.f32 %v1549, %v1557
    %v1561 = vmul.f32 %v1550, %v1557
    %v1562 = vmul.f32 %v1551, %v1557
    %v1563 = vmul.f32 %v1552, %v1557
    %v1565 = vlaneseq
    %v1566 = vshrl.u32 %v1565, 7
    %v1567 = vsub.s32 0, %v1566
    %v1568 = vrot.slane %v1257, %v1567
    %v1570 = vadd.f32 %v1559, %v1568
    %v1571 = vadd.f32 %v1560, %v1568
    %v1572 = vadd.f32 %v1561, %v1568
    %v1573 = vadd.f32 %v1562, %v1568
    %v1574 = vadd.f32 %v1563, %v1568
    %1575 = vst [vmem:[#allocation3 + $0x1] sm:$0xff] %v1570
    %1576 = vst [vmem:[#allocation3 + $0x9] sm:$0xff] %v1571
    %1577 = vst [vmem:[#allocation3 + $0x11] sm:$0xfc] %v1572
    %1578 = vst [vmem:[#allocation3 + $0x19] sm:$0xff] %v1573
    %1579 = vst [vmem:[#allocation3 + $0x21] sm:$0x3] %v1574
    %v1580 = vld [vmem:[%s23] sm:$0xff]
    %v1581 = vld [vmem:[%s23 + $0x8] sm:$0xff]
    %v1582 = vld [vmem:[%s23 + $0x10] sm:$0xff]
    %v1583 = vld [vmem:[%s23 + $0x18] sm:$0xff]
    %v1584 = vld [vmem:[%s23 + $0x20] sm:$0xff]
    %v1585 = vld [vmem:[%s23 + $0x28] sm:$0xff]
    %v1586 = vld [vmem:[%s23 + $0x30] sm:$0xff]
    %v1587 = vld [vmem:[%s23 + $0x38] sm:$0xff]
    %v1588 = vld [vmem:[%s23 + $0x40] sm:$0xff]
    %v1589 = vld [vmem:[%s23 + $0x48] sm:$0xff]
    %v1590 = vld [vmem:[%s23 + $0x50] sm:$0xff]
    %v1591 = vld [vmem:[%s23 + $0x58] sm:$0xff]
    %v1592 = vld [vmem:[%s23 + $0x60] sm:$0xff]
    %v1593 = vld [vmem:[%s23 + $0x68] sm:$0xff]
    %v1594 = vld [vmem:[%s23 + $0x70] sm:$0xff]
    %v1595 = vld [vmem:[%s23 + $0x78] sm:$0xff]
    %v1596 = vld [vmem:[%s25] sm:$0xff]
    %v1597 = vld [vmem:[%s25 + $0x8] sm:$0xff]
    %v1598 = vld [vmem:[%s25 + $0x10] sm:$0xff]
    %v1599 = vld [vmem:[%s25 + $0x18] sm:$0xff]
    %v1600 = vld [vmem:[%s25 + $0x20] sm:$0xff]
    %v1601 = vld [vmem:[%s25 + $0x28] sm:$0xff]
    %v1602 = vld [vmem:[%s25 + $0x30] sm:$0xff]
    %v1603 = vld [vmem:[%s25 + $0x38] sm:$0xff]
    %v1604 = vld [vmem:[%s25 + $0x40] sm:$0xff]
    %v1605 = vld [vmem:[%s25 + $0x48] sm:$0xff]
    %v1606 = vld [vmem:[%s25 + $0x50] sm:$0xff]
    %v1607 = vld [vmem:[%s25 + $0x58] sm:$0xff]
    %v1608 = vld [vmem:[%s25 + $0x60] sm:$0xff]
    %v1609 = vld [vmem:[%s25 + $0x68] sm:$0xff]
    %v1610 = vld [vmem:[%s25 + $0x70] sm:$0xff]
    %v1611 = vld [vmem:[%s25 + $0x78] sm:$0xff]
    %v1612 = vld [vmem:[%s27] sm:$0xff]
    %v1613 = vld [vmem:[%s27 + $0x8] sm:$0xff]
    %v1614 = vld [vmem:[%s27 + $0x10] sm:$0xff]
    %v1615 = vld [vmem:[%s27 + $0x18] sm:$0xff]
    %v1616 = vld [vmem:[%s27 + $0x20] sm:$0xff]
    %v1617 = vld [vmem:[%s27 + $0x28] sm:$0xff]
    %v1618 = vld [vmem:[%s27 + $0x30] sm:$0xff]
    %v1619 = vld [vmem:[%s27 + $0x38] sm:$0xff]
    %v1620 = vld [vmem:[%s27 + $0x40] sm:$0xff]
    %v1621 = vld [vmem:[%s27 + $0x48] sm:$0xff]
    %v1622 = vld [vmem:[%s27 + $0x50] sm:$0xff]
    %v1623 = vld [vmem:[%s27 + $0x58] sm:$0xff]
    %v1624 = vld [vmem:[%s27 + $0x60] sm:$0xff]
    %v1625 = vld [vmem:[%s27 + $0x68] sm:$0xff]
    %v1626 = vld [vmem:[%s27 + $0x70] sm:$0xff]
    %v1627 = vld [vmem:[%s27 + $0x78] sm:$0xff]
    %v1628 = vld [vmem:[#allocation32] sm:$0x1]
    %v1629 = vld [vmem:[#allocation34] sm:$0x1]
    %v1630 = vld [vmem:[#allocation3] sm:$0xff]
    %v1631 = vld [vmem:[#allocation3 + $0x8] sm:$0xff]
    %v1632 = vld [vmem:[#allocation3 + $0x10] sm:$0xff]
    %v1633 = vld [vmem:[#allocation3 + $0x18] sm:$0xff]
    %v1634 = vld [vmem:[#allocation3 + $0x2] sm:$0xff]
    %v1635 = vld [vmem:[#allocation3 + $0xa] sm:$0xff]
    %v1636 = vld [vmem:[#allocation3 + $0x12] sm:$0xff]
    %v1637 = vld [vmem:[#allocation3 + $0x1a] sm:$0xff]
    %1638 = vmatprep.subr.mxu0 0.0
    %1639 = vmatpush1.msra.mxu0 %v1596
    %1640 = vmatprep.subr.mxu0 0.0
    %1641 = vmatpush1.msra.mxu0 %v1597
    %1642 = vmatprep.subr.mxu0 0.0
    %1643 = vmatpush1.msra.mxu0 %v1598
    %1644 = vmatprep.subr.mxu0 0.0
    %1645 = vmatpush1.msra.mxu0 %v1599
    %1646 = vmatprep.subr.mxu0 0.0
    %1647 = vmatpush1.msra.mxu0 %v1600
    %1648 = vmatprep.subr.mxu0 0.0
    %1649 = vmatpush1.msra.mxu0 %v1601
    %1650 = vmatprep.subr.mxu0 0.0
    %1651 = vmatpush1.msra.mxu0 %v1602
    %1652 = vmatprep.subr.mxu0 0.0
    %1653 = vmatpush1.msra.mxu0 %v1603
    %1654 = vmatprep.subr.mxu0 0.0
    %1655 = vmatpush1.msra.mxu0 %v1604
    %1656 = vmatprep.subr.mxu0 0.0
    %1657 = vmatpush1.msra.mxu0 %v1605
    %1658 = vmatprep.subr.mxu0 0.0
    %1659 = vmatpush1.msra.mxu0 %v1606
    %1660 = vmatprep.subr.mxu0 0.0
    %1661 = vmatpush1.msra.mxu0 %v1607
    %1662 = vmatprep.subr.mxu0 0.0
    %1663 = vmatpush1.msra.mxu0 %v1608
    %1664 = vmatprep.subr.mxu0 0.0
    %1665 = vmatpush1.msra.mxu0 %v1609
    %1666 = vmatprep.subr.mxu0 0.0
    %1667 = vmatpush1.msra.mxu0 %v1610
    %1668 = vmatprep.subr.mxu0 0.0
    %1669 = vmatpush1.msra.mxu0 %v1611
    %1670 = vmatprep.subr.mxu0 0.0
    %1671 = vmatpush1.msra.mxu0 0.0
    %1672 = vmatprep.subr.mxu0 0.0
    %1673 = vmatpush1.msra.mxu0 0.0
    %1674 = vmatprep.subr.mxu0 0.0
    %1675 = vmatpush1.msra.mxu0 0.0
    %1676 = vmatprep.subr.mxu0 0.0
    %1677 = vmatpush1.msra.mxu0 0.0
    %1678 = vmatprep.subr.mxu0 0.0
    %1679 = vmatpush1.msra.mxu0 0.0
    %1680 = vmatprep.subr.mxu0 0.0
    %1681 = vmatpush1.msra.mxu0 0.0
    %1682 = vmatprep.subr.mxu0 0.0
    %1683 = vmatpush1.msra.mxu0 0.0
    %1684 = vmatprep.subr.mxu0 0.0
    %1685 = vmatpush1.msra.mxu0 0.0
    %1686 = vmatprep.subr.mxu0 0.0
    %1687 = vmatpush1.msra.mxu0 0.0
    %1688 = vmatprep.subr.mxu0 0.0
    %1689 = vmatpush1.msra.mxu0 0.0
    %1690 = vmatprep.subr.mxu0 0.0
    %1691 = vmatpush1.msra.mxu0 0.0
    %1692 = vmatprep.subr.mxu0 0.0
    %1693 = vmatpush1.msra.mxu0 0.0
    %1694 = vmatprep.subr.mxu0 0.0
    %1695 = vmatpush1.msra.mxu0 0.0
    %1696 = vmatprep.subr.mxu0 0.0
    %1697 = vmatpush1.msra.mxu0 0.0
    %1698 = vmatprep.subr.mxu0 0.0
    %1699 = vmatpush1.msra.mxu0 0.0
    %1700 = vmatprep.subr.mxu0 0.0
    %1701 = vmatpush1.msra.mxu0 0.0
    %1702 = vmatprep.mubr.f32.mxu0 0.0
    %1703 = vmatmul.mubr.f32.gmra.mrb[0].mxu0 %v1634
    %v1704 = vpop.f32.mrb[0].mxu0
    %v1705 = vadd.f32 0.0, %v1704
    %v1706 = vpop.f32.mrb[0].mxu0
    %1707 = vmatprep.mubr.f32.mxu0 0.0
    %1708 = vmatmul.mubr.f32.gmra.mrb[0].mxu0 %v1635
    %v1709 = vpop.f32.mrb[0].mxu0
    %v1710 = vadd.f32 0.0, %v1709
    %v1711 = vpop.f32.mrb[0].mxu0
    %1712 = vmatprep.mubr.f32.mxu0 0.0
    %1713 = vmatmul.mubr.f32.gmra.mrb[0].mxu0 %v1636
    %v1714 = vpop.f32.mrb[0].mxu0
    %v1715 = vadd.f32 0.0, %v1714
    %v1716 = vpop.f32.mrb[0].mxu0
    %1717 = vmatprep.mubr.f32.mxu0 0.0
    %1718 = vmatmul.mubr.f32.gmra.mrb[0].mxu0 %v1637
    %v1719 = vpop.f32.mrb[0].mxu0
    %v1720 = vadd.f32 0.0, %v1719
    %v1721 = vpop.f32.mrb[0].mxu0
    %1722 = vdwg.mxu0
    %1723 = vmatprep.subr.mxu0 0.0
    %1724 = vmatpush1.msra.mxu0 %v1580
    %1725 = vmatprep.subr.mxu0 0.0
    %1726 = vmatpush1.msra.mxu0 %v1581
    %1727 = vmatprep.subr.mxu0 0.0
    %1728 = vmatpush1.msra.mxu0 %v1582
    %1729 = vmatprep.subr.mxu0 0.0
    %1730 = vmatpush1.msra.mxu0 %v1583
    %1731 = vmatprep.subr.mxu0 0.0
    %1732 = vmatpush1.msra.mxu0 %v1584
    %1733 = vmatprep.subr.mxu0 0.0
    %1734 = vmatpush1.msra.mxu0 %v1585
    %1735 = vmatprep.subr.mxu0 0.0
    %1736 = vmatpush1.msra.mxu0 %v1586
    %1737 = vmatprep.subr.mxu0 0.0
    %1738 = vmatpush1.msra.mxu0 %v1587
    %1739 = vmatprep.subr.mxu0 0.0
    %1740 = vmatpush1.msra.mxu0 %v1588
    %1741 = vmatprep.subr.mxu0 0.0
    %1742 = vmatpush1.msra.mxu0 %v1589
    %1743 = vmatprep.subr.mxu0 0.0
    %1744 = vmatpush1.msra.mxu0 %v1590
    %1745 = vmatprep.subr.mxu0 0.0
    %1746 = vmatpush1.msra.mxu0 %v1591
    %1747 = vmatprep.subr.mxu0 0.0
    %1748 = vmatpush1.msra.mxu0 %v1592
    %1749 = vmatprep.subr.mxu0 0.0
    %1750 = vmatpush1.msra.mxu0 %v1593
    %1751 = vmatprep.subr.mxu0 0.0
    %1752 = vmatpush1.msra.mxu0 %v1594
    %1753 = vmatprep.subr.mxu0 0.0
    %1754 = vmatpush1.msra.mxu0 %v1595
    %1755 = vmatprep.subr.mxu0 0.0
    %1756 = vmatpush1.msra.mxu0 0.0
    %1757 = vmatprep.subr.mxu0 0.0
    %1758 = vmatpush1.msra.mxu0 0.0
    %1759 = vmatprep.subr.mxu0 0.0
    %1760 = vmatpush1.msra.mxu0 0.0
    %1761 = vmatprep.subr.mxu0 0.0
    %1762 = vmatpush1.msra.mxu0 0.0
    %1763 = vmatprep.subr.mxu0 0.0
    %1764 = vmatpush1.msra.mxu0 0.0
    %1765 = vmatprep.subr.mxu0 0.0
    %1766 = vmatpush1.msra.mxu0 0.0
    %1767 = vmatprep.subr.mxu0 0.0
    %1768 = vmatpush1.msra.mxu0 0.0
    %1769 = vmatprep.subr.mxu0 0.0
    %1770 = vmatpush1.msra.mxu0 0.0
    %1771 = vmatprep.subr.mxu0 0.0
    %1772 = vmatpush1.msra.mxu0 0.0
    %1773 = vmatprep.subr.mxu0 0.0
    %1774 = vmatpush1.msra.mxu0 0.0
    %1775 = vmatprep.subr.mxu0 0.0
    %1776 = vmatpush1.msra.mxu0 0.0
    %1777 = vmatprep.subr.mxu0 0.0
    %1778 = vmatpush1.msra.mxu0 0.0
    %1779 = vmatprep.subr.mxu0 0.0
    %1780 = vmatpush1.msra.mxu0 0.0
    %1781 = vmatprep.subr.mxu0 0.0
    %1782 = vmatpush1.msra.mxu0 0.0
    %1783 = vmatprep.subr.mxu0 0.0
    %1784 = vmatpush1.msra.mxu0 0.0
    %1785 = vmatprep.subr.mxu0 0.0
    %1786 = vmatpush1.msra.mxu0 0.0
    %1787 = vmatprep.mubr.f32.mxu0 0.0
    %1788 = vmatmul.mubr.f32.gmra.mrb[0].mxu0 %v1630
    %v1789 = vpop.f32.mrb[0].mxu0
    %v1790 = vadd.f32 %v1705, %v1789
    %v1791 = vpop.f32.mrb[0].mxu0
    %1792 = vmatprep.mubr.f32.mxu0 0.0
    %1793 = vmatmul.mubr.f32.gmra.mrb[0].mxu0 %v1631
    %v1794 = vpop.f32.mrb[0].mxu0
    %v1795 = vadd.f32 %v1710, %v1794
    %v1796 = vpop.f32.mrb[0].mxu0
    %1797 = vmatprep.mubr.f32.mxu0 0.0
    %1798 = vmatmul.mubr.f32.gmra.mrb[0].mxu0 %v1632
    %v1799 = vpop.f32.mrb[0].mxu0
    %v1800 = vadd.f32 %v1715, %v1799
    %v1801 = vpop.f32.mrb[0].mxu0
    %1802 = vmatprep.mubr.f32.mxu0 0.0
    %1803 = vmatmul.mubr.f32.gmra.mrb[0].mxu0 %v1633
    %v1804 = vpop.f32.mrb[0].mxu0
    %v1805 = vadd.f32 %v1720, %v1804
    %v1806 = vpop.f32.mrb[0].mxu0
    %1807 = vdwg.mxu0
    %v1808 = vld [vmem:[#allocation3 + $0x4] sm:$0xff]
    %v1809 = vld [vmem:[#allocation3 + $0xc] sm:$0xff]
    %v1810 = vld [vmem:[#allocation3 + $0x14] sm:$0xff]
    %v1811 = vld [vmem:[#allocation3 + $0x1c] sm:$0xff]
    %1812 = vmatprep.subr.mxu0 0.0
    %1813 = vmatpush1.msra.mxu0 %v1612
    %1814 = vmatprep.subr.mxu0 0.0
    %1815 = vmatpush1.msra.mxu0 %v1613
    %1816 = vmatprep.subr.mxu0 0.0
    %1817 = vmatpush1.msra.mxu0 %v1614
    %1818 = vmatprep.subr.mxu0 0.0
    %1819 = vmatpush1.msra.mxu0 %v1615
    %1820 = vmatprep.subr.mxu0 0.0
    %1821 = vmatpush1.msra.mxu0 %v1616
    %1822 = vmatprep.subr.mxu0 0.0
    %1823 = vmatpush1.msra.mxu0 %v1617
    %1824 = vmatprep.subr.mxu0 0.0
    %1825 = vmatpush1.msra.mxu0 %v1618
    %1826 = vmatprep.subr.mxu0 0.0
    %1827 = vmatpush1.msra.mxu0 %v1619
    %1828 = vmatprep.subr.mxu0 0.0
    %1829 = vmatpush1.msra.mxu0 %v1620
    %1830 = vmatprep.subr.mxu0 0.0
    %1831 = vmatpush1.msra.mxu0 %v1621
    %1832 = vmatprep.subr.mxu0 0.0
    %1833 = vmatpush1.msra.mxu0 %v1622
    %1834 = vmatprep.subr.mxu0 0.0
    %1835 = vmatpush1.msra.mxu0 %v1623
    %1836 = vmatprep.subr.mxu0 0.0
    %1837 = vmatpush1.msra.mxu0 %v1624
    %1838 = vmatprep.subr.mxu0 0.0
    %1839 = vmatpush1.msra.mxu0 %v1625
    %1840 = vmatprep.subr.mxu0 0.0
    %1841 = vmatpush1.msra.mxu0 %v1626
    %1842 = vmatprep.subr.mxu0 0.0
    %1843 = vmatpush1.msra.mxu0 %v1627
    %1844 = vmatprep.subr.mxu0 0.0
    %1845 = vmatpush1.msra.mxu0 0.0
    %1846 = vmatprep.subr.mxu0 0.0
    %1847 = vmatpush1.msra.mxu0 0.0
    %1848 = vmatprep.subr.mxu0 0.0
    %1849 = vmatpush1.msra.mxu0 0.0
    %1850 = vmatprep.subr.mxu0 0.0
    %1851 = vmatpush1.msra.mxu0 0.0
    %1852 = vmatprep.subr.mxu0 0.0
    %1853 = vmatpush1.msra.mxu0 0.0
    %1854 = vmatprep.subr.mxu0 0.0
    %1855 = vmatpush1.msra.mxu0 0.0
    %1856 = vmatprep.subr.mxu0 0.0
    %1857 = vmatpush1.msra.mxu0 0.0
    %1858 = vmatprep.subr.mxu0 0.0
    %1859 = vmatpush1.msra.mxu0 0.0
    %1860 = vmatprep.subr.mxu0 0.0
    %1861 = vmatpush1.msra.mxu0 0.0
    %1862 = vmatprep.subr.mxu0 0.0
    %1863 = vmatpush1.msra.mxu0 0.0
    %1864 = vmatprep.subr.mxu0 0.0
    %1865 = vmatpush1.msra.mxu0 0.0
    %1866 = vmatprep.subr.mxu0 0.0
    %1867 = vmatpush1.msra.mxu0 0.0
    %1868 = vmatprep.subr.mxu0 0.0
    %1869 = vmatpush1.msra.mxu0 0.0
    %1870 = vmatprep.subr.mxu0 0.0
    %1871 = vmatpush1.msra.mxu0 0.0
    %1872 = vmatprep.subr.mxu0 0.0
    %1873 = vmatpush1.msra.mxu0 0.0
    %1874 = vmatprep.subr.mxu0 0.0
    %1875 = vmatpush1.msra.mxu0 0.0
    %1876 = vmatprep.mubr.f32.mxu0 0.0
    %1877 = vmatmul.mubr.f32.gmra.mrb[0].mxu0 %v1808
    %v1878 = vpop.f32.mrb[0].mxu0
    %v1879 = vadd.f32 0.0, %v1878
    %v1880 = vpop.f32.mrb[0].mxu0
    %1881 = vmatprep.mubr.f32.mxu0 0.0
    %1882 = vmatmul.mubr.f32.gmra.mrb[0].mxu0 %v1809
    %v1883 = vpop.f32.mrb[0].mxu0
    %v1884 = vadd.f32 0.0, %v1883
    %v1885 = vpop.f32.mrb[0].mxu0
    %1886 = vmatprep.mubr.f32.mxu0 0.0
    %1887 = vmatmul.mubr.f32.gmra.mrb[0].mxu0 %v1810
    %v1888 = vpop.f32.mrb[0].mxu0
    %v1889 = vadd.f32 0.0, %v1888
    %v1890 = vpop.f32.mrb[0].mxu0
    %1891 = vmatprep.mubr.f32.mxu0 0.0
    %1892 = vmatmul.mubr.f32.gmra.mrb[0].mxu0 %v1811
    %v1893 = vpop.f32.mrb[0].mxu0
    %v1894 = vadd.f32 0.0, %v1893
    %v1895 = vpop.f32.mrb[0].mxu0
    %1896 = vdwg.mxu0
    %v1897 = vadd.f32 %v1790, %v1879
    %v1898 = vadd.f32 %v1795, %v1884
    %v1899 = vadd.f32 %v1800, %v1889
    %v1900 = vadd.f32 %v1805, %v1894
    %v1901 = vmax.f32 %v1897, 0.0
    %v1902 = vmax.f32 %v1898, 0.0
    %v1903 = vmax.f32 %v1899, 0.0
    %v1904 = vmax.f32 %v1900, 0.0
    %v1906 = vlaneseq
    %v1907 = vshrl.u32 %v1906, 7
    %v1908 = vsub.s32 0, %v1907
    %v1909 = vrot.slane %v1628, %v1908
    %v1911 = vmul.f32 %v1901, %v1909
    %v1912 = vmul.f32 %v1902, %v1909
    %v1913 = vmul.f32 %v1903, %v1909
    %v1914 = vmul.f32 %v1904, %v1909
    %v1916 = vlaneseq
    %v1917 = vshrl.u32 %v1916, 7
    %v1918 = vsub.s32 0, %v1917
    %v1919 = vrot.slane %v1629, %v1918
    %v1921 = vadd.f32 %v1911, %v1919
    %v1922 = vadd.f32 %v1912, %v1919
    %v1923 = vadd.f32 %v1913, %v1919
    %v1924 = vadd.f32 %v1914, %v1919
    %1925 = vst.msk [vmem:[#allocation4 + $0x1] sm:$0xff] %vm771, %v1921
    %vm1926 = vcmask 914432
    %1927 = vst.msk [vmem:[#allocation4 + $0x9] sm:$0x3f] %vm1926, %v1922
    %vm1928 = vcmask 916482
    %1929 = vst.msk [vmem:[#allocation4 + $0xf] sm:$0xfc] %vm1928, %v1923
    %1930 = vst.msk [vmem:[#allocation4 + $0x17] sm:$0xff] %vm771, %v1924
    %v1931 = vld [vmem:[#allocation35] sm:$0xff]
    %v1932 = vld [vmem:[#allocation35 + $0x8] sm:$0xff]
    %v1933 = vld [vmem:[#allocation35 + $0x10] sm:$0xff]
    %v1934 = vld [vmem:[#allocation35 + $0x18] sm:$0xff]
    %v1935 = vld [vmem:[#allocation35 + $0x20] sm:$0xff]
    %v1936 = vld [vmem:[#allocation35 + $0x28] sm:$0xff]
    %v1937 = vld [vmem:[#allocation35 + $0x30] sm:$0xff]
    %v1938 = vld [vmem:[#allocation35 + $0x38] sm:$0xff]
    %v1939 = vld [vmem:[#allocation35 + $0x40] sm:$0xff]
    %v1940 = vld [vmem:[#allocation35 + $0x48] sm:$0xff]
    %v1941 = vld [vmem:[#allocation35 + $0x50] sm:$0xff]
    %v1942 = vld [vmem:[#allocation35 + $0x58] sm:$0xff]
    %v1943 = vld [vmem:[#allocation35 + $0x60] sm:$0xff]
    %v1944 = vld [vmem:[#allocation35 + $0x68] sm:$0xff]
    %v1945 = vld [vmem:[#allocation35 + $0x70] sm:$0xff]
    %v1946 = vld [vmem:[#allocation35 + $0x78] sm:$0xff]
    %v1947 = vld [vmem:[#allocation35 + $0x80] sm:$0xff]
    %v1948 = vld [vmem:[#allocation35 + $0x88] sm:$0xff]
    %v1949 = vld [vmem:[#allocation35 + $0x90] sm:$0xff]
    %v1950 = vld [vmem:[#allocation35 + $0x98] sm:$0xff]
    %v1951 = vld [vmem:[#allocation35 + $0xa0] sm:$0xff]
    %v1952 = vld [vmem:[#allocation35 + $0xa8] sm:$0xff]
    %v1953 = vld [vmem:[#allocation35 + $0xb0] sm:$0xff]
    %v1954 = vld [vmem:[#allocation35 + $0xb8] sm:$0xff]
    %v1955 = vld [vmem:[#allocation35 + $0xc0] sm:$0xff]
    %v1956 = vld [vmem:[#allocation35 + $0xc8] sm:$0xff]
    %v1957 = vld [vmem:[#allocation35 + $0xd0] sm:$0xff]
    %v1958 = vld [vmem:[#allocation35 + $0xd8] sm:$0xff]
    %v1959 = vld [vmem:[#allocation37] sm:$0xff]
    %v1960 = vld [vmem:[#allocation37 + $0x8] sm:$0xff]
    %v1961 = vld [vmem:[#allocation37 + $0x10] sm:$0xff]
    %v1962 = vld [vmem:[#allocation37 + $0x18] sm:$0xff]
    %v1963 = vld [vmem:[#allocation37 + $0x20] sm:$0xff]
    %v1964 = vld [vmem:[#allocation37 + $0x28] sm:$0xff]
    %v1965 = vld [vmem:[#allocation37 + $0x30] sm:$0xff]
    %v1966 = vld [vmem:[#allocation37 + $0x38] sm:$0xff]
    %v1967 = vld [vmem:[#allocation37 + $0x40] sm:$0xff]
    %v1968 = vld [vmem:[#allocation37 + $0x48] sm:$0xff]
    %v1969 = vld [vmem:[#allocation37 + $0x50] sm:$0xff]
    %v1970 = vld [vmem:[#allocation37 + $0x58] sm:$0xff]
    %v1971 = vld [vmem:[#allocation37 + $0x60] sm:$0xff]
    %v1972 = vld [vmem:[#allocation37 + $0x68] sm:$0xff]
    %v1973 = vld [vmem:[#allocation37 + $0x70] sm:$0xff]
    %v1974 = vld [vmem:[#allocation37 + $0x78] sm:$0xff]
    %v1975 = vld [vmem:[#allocation37 + $0x80] sm:$0xff]
    %v1976 = vld [vmem:[#allocation37 + $0x88] sm:$0xff]
    %v1977 = vld [vmem:[#allocation37 + $0x90] sm:$0xff]
    %v1978 = vld [vmem:[#allocation37 + $0x98] sm:$0xff]
    %v1979 = vld [vmem:[#allocation37 + $0xa0] sm:$0xff]
    %v1980 = vld [vmem:[#allocation37 + $0xa8] sm:$0xff]
    %v1981 = vld [vmem:[#allocation37 + $0xb0] sm:$0xff]
    %v1982 = vld [vmem:[#allocation37 + $0xb8] sm:$0xff]
    %v1983 = vld [vmem:[#allocation37 + $0xc0] sm:$0xff]
    %v1984 = vld [vmem:[#allocation37 + $0xc8] sm:$0xff]
    %v1985 = vld [vmem:[#allocation37 + $0xd0] sm:$0xff]
    %v1986 = vld [vmem:[#allocation37 + $0xd8] sm:$0xff]
    %v1987 = vld [vmem:[#allocation38] sm:$0xff]
    %v1988 = vld [vmem:[#allocation38 + $0x8] sm:$0xff]
    %v1989 = vld [vmem:[#allocation38 + $0x10] sm:$0xff]
    %v1990 = vld [vmem:[#allocation38 + $0x18] sm:$0xff]
    %v1991 = vld [vmem:[#allocation38 + $0x20] sm:$0xff]
    %v1992 = vld [vmem:[#allocation38 + $0x28] sm:$0xff]
    %v1993 = vld [vmem:[#allocation38 + $0x30] sm:$0xff]
    %v1994 = vld [vmem:[#allocation38 + $0x38] sm:$0xff]
    %v1995 = vld [vmem:[#allocation38 + $0x40] sm:$0xff]
    %v1996 = vld [vmem:[#allocation38 + $0x48] sm:$0xff]
    %v1997 = vld [vmem:[#allocation38 + $0x50] sm:$0xff]
    %v1998 = vld [vmem:[#allocation38 + $0x58] sm:$0xff]
    %v1999 = vld [vmem:[#allocation38 + $0x60] sm:$0xff]
    %v2000 = vld [vmem:[#allocation38 + $0x68] sm:$0xff]
    %v2001 = vld [vmem:[#allocation38 + $0x70] sm:$0xff]
    %v2002 = vld [vmem:[#allocation38 + $0x78] sm:$0xff]
    %v2003 = vld [vmem:[#allocation38 + $0x80] sm:$0xff]
    %v2004 = vld [vmem:[#allocation38 + $0x88] sm:$0xff]
    %v2005 = vld [vmem:[#allocation38 + $0x90] sm:$0xff]
    %v2006 = vld [vmem:[#allocation38 + $0x98] sm:$0xff]
    %v2007 = vld [vmem:[#allocation38 + $0xa0] sm:$0xff]
    %v2008 = vld [vmem:[#allocation38 + $0xa8] sm:$0xff]
    %v2009 = vld [vmem:[#allocation38 + $0xb0] sm:$0xff]
    %v2010 = vld [vmem:[#allocation38 + $0xb8] sm:$0xff]
    %v2011 = vld [vmem:[#allocation38 + $0xc0] sm:$0xff]
    %v2012 = vld [vmem:[#allocation38 + $0xc8] sm:$0xff]
    %v2013 = vld [vmem:[#allocation38 + $0xd0] sm:$0xff]
    %v2014 = vld [vmem:[#allocation38 + $0xd8] sm:$0xff]
    %v2015 = vld [vmem:[%s39] sm:$0x3]
    %v2016 = vld [vmem:[%s41] sm:$0x3]
    %v2017 = vld [vmem:[#allocation4] sm:$0xff]
    %v2018 = vld [vmem:[#allocation4 + $0x8] sm:$0xff]
    %v2019 = vld [vmem:[#allocation4 + $0x10] sm:$0xff]
    %v2020 = vld [vmem:[#allocation4 + $0x18] sm:$0x3f]
    %v2021 = vld [vmem:[#allocation4 + $0x1] sm:$0xff]
    %v2022 = vld [vmem:[#allocation4 + $0x9] sm:$0xff]
    %v2023 = vld [vmem:[#allocation4 + $0x11] sm:$0xff]
    %v2024 = vld [vmem:[#allocation4 + $0x19] sm:$0x3f]
    %v2026 = vsel %vm771, %v2021, 0
    %v2029 = vsel %vm771, %v2022, 0
    %v2032 = vsel %vm771, %v2023, 0
    %v2035 = vsel %vm771, %v2024, 0
    %2037 = vmatprep.subr.mxu0 %v1960
    %2038 = vmatpush1.msra.mxu0 %v1959
    %2039 = vmatprep.subr.mxu0 %v1962
    %2040 = vmatpush1.msra.mxu0 %v1961
    %2041 = vmatprep.subr.mxu0 %v1964
    %2042 = vmatpush1.msra.mxu0 %v1963
    %2043 = vmatprep.subr.mxu0 %v1966
    %2044 = vmatpush1.msra.mxu0 %v1965
    %2045 = vmatprep.subr.mxu0 %v1968
    %2046 = vmatpush1.msra.mxu0 %v1967
    %2047 = vmatprep.subr.mxu0 %v1970
    %2048 = vmatpush1.msra.mxu0 %v1969
    %2049 = vmatprep.subr.mxu0 %v1972
    %2050 = vmatpush1.msra.mxu0 %v1971
    %2051 = vmatprep.subr.mxu0 %v1974
    %2052 = vmatpush1.msra.mxu0 %v1973
    %2053 = vmatprep.subr.mxu0 %v1976
    %2054 = vmatpush1.msra.mxu0 %v1975
    %2055 = vmatprep.subr.mxu0 %v1978
    %2056 = vmatpush1.msra.mxu0 %v1977
    %2057 = vmatprep.subr.mxu0 %v1980
    %2058 = vmatpush1.msra.mxu0 %v1979
    %2059 = vmatprep.subr.mxu0 %v1982
    %2060 = vmatpush1.msra.mxu0 %v1981
    %2061 = vmatprep.subr.mxu0 %v1984
    %2062 = vmatpush1.msra.mxu0 %v1983
    %2063 = vmatprep.subr.mxu0 %v1986
    %2064 = vmatpush1.msra.mxu0 %v1985
    %2065 = vmatprep.subr.mxu0 0.0
    %2066 = vmatpush1.msra.mxu0 0.0
    %2067 = vmatprep.subr.mxu0 0.0
    %2068 = vmatpush1.msra.mxu0 0.0
    %2069 = vmatprep.subr.mxu0 0.0
    %2070 = vmatpush1.msra.mxu0 0.0
    %2071 = vmatprep.subr.mxu0 0.0
    %2072 = vmatpush1.msra.mxu0 0.0
    %2073 = vmatprep.subr.mxu0 0.0
    %2074 = vmatpush1.msra.mxu0 0.0
    %2075 = vmatprep.subr.mxu0 0.0
    %2076 = vmatpush1.msra.mxu0 0.0
    %2077 = vmatprep.subr.mxu0 0.0
    %2078 = vmatpush1.msra.mxu0 0.0
    %2079 = vmatprep.subr.mxu0 0.0
    %2080 = vmatpush1.msra.mxu0 0.0
    %2081 = vmatprep.subr.mxu0 0.0
    %2082 = vmatpush1.msra.mxu0 0.0
    %2083 = vmatprep.subr.mxu0 0.0
    %2084 = vmatpush1.msra.mxu0 0.0
    %2085 = vmatprep.subr.mxu0 0.0
    %2086 = vmatpush1.msra.mxu0 0.0
    %2087 = vmatprep.subr.mxu0 0.0
    %2088 = vmatpush1.msra.mxu0 0.0
    %2089 = vmatprep.subr.mxu0 0.0
    %2090 = vmatpush1.msra.mxu0 0.0
    %2091 = vmatprep.subr.mxu0 0.0
    %2092 = vmatpush1.msra.mxu0 0.0
    %2093 = vmatprep.subr.mxu0 0.0
    %2094 = vmatpush1.msra.mxu0 0.0
    %2095 = vmatprep.subr.mxu0 0.0
    %2096 = vmatpush1.msra.mxu0 0.0
    %2097 = vmatprep.subr.mxu0 0.0
    %2098 = vmatpush1.msra.mxu0 0.0
    %2099 = vmatprep.subr.mxu0 0.0
    %2100 = vmatpush1.msra.mxu0 0.0
    %2101 = vmatprep.mubr.f32.mxu0 0.0
    %2102 = vmatmul.mubr.f32.gmra.mrb[0].mxu0 %v2026
    %v2103 = vpop.f32.mrb[0].mxu0
    %v2104 = vadd.f32 0.0, %v2103
    %v2105 = vpop.f32.mrb[0].mxu0
    %v2106 = vadd.f32 0.0, %v2105
    %2107 = vmatprep.mubr.f32.mxu0 0.0
    %2108 = vmatmul.mubr.f32.gmra.mrb[0].mxu0 %v2029
    %v2109 = vpop.f32.mrb[0].mxu0
    %v2110 = vadd.f32 0.0, %v2109
    %v2111 = vpop.f32.mrb[0].mxu0
    %v2112 = vadd.f32 0.0, %v2111
    %2113 = vmatprep.mubr.f32.mxu0 0.0
    %2114 = vmatmul.mubr.f32.gmra.mrb[0].mxu0 %v2032
    %v2115 = vpop.f32.mrb[0].mxu0
    %v2116 = vadd.f32 0.0, %v2115
    %v2117 = vpop.f32.mrb[0].mxu0
    %v2118 = vadd.f32 0.0, %v2117
    %2119 = vmatprep.mubr.f32.mxu0 0.0
    %2120 = vmatmul.mubr.f32.gmra.mrb[0].mxu0 %v2035
    %v2121 = vpop.f32.mrb[0].mxu0
    %v2122 = vadd.f32 0.0, %v2121
    %v2123 = vpop.f32.mrb[0].mxu0
    %v2124 = vadd.f32 0.0, %v2123
    %2125 = vdwg.mxu0
    %v2127 = vsel %vm771, %v2017, 0
    %v2130 = vsel %vm771, %v2018, 0
    %v2133 = vsel %vm771, %v2019, 0
    %v2136 = vsel %vm771, %v2020, 0
    %2138 = vmatprep.subr.mxu0 %v1932
    %2139 = vmatpush1.msra.mxu0 %v1931
    %2140 = vmatprep.subr.mxu0 %v1934
    %2141 = vmatpush1.msra.mxu0 %v1933
    %2142 = vmatprep.subr.mxu0 %v1936
    %2143 = vmatpush1.msra.mxu0 %v1935
    %2144 = vmatprep.subr.mxu0 %v1938
    %2145 = vmatpush1.msra.mxu0 %v1937
    %2146 = vmatprep.subr.mxu0 %v1940
    %2147 = vmatpush1.msra.mxu0 %v1939
    %2148 = vmatprep.subr.mxu0 %v1942
    %2149 = vmatpush1.msra.mxu0 %v1941
    %2150 = vmatprep.subr.mxu0 %v1944
    %2151 = vmatpush1.msra.mxu0 %v1943
    %2152 = vmatprep.subr.mxu0 %v1946
    %2153 = vmatpush1.msra.mxu0 %v1945
    %2154 = vmatprep.subr.mxu0 %v1948
    %2155 = vmatpush1.msra.mxu0 %v1947
    %2156 = vmatprep.subr.mxu0 %v1950
    %2157 = vmatpush1.msra.mxu0 %v1949
    %2158 = vmatprep.subr.mxu0 %v1952
    %2159 = vmatpush1.msra.mxu0 %v1951
    %2160 = vmatprep.subr.mxu0 %v1954
    %2161 = vmatpush1.msra.mxu0 %v1953
    %2162 = vmatprep.subr.mxu0 %v1956
    %2163 = vmatpush1.msra.mxu0 %v1955
    %2164 = vmatprep.subr.mxu0 %v1958
    %2165 = vmatpush1.msra.mxu0 %v1957
    %2166 = vmatprep.subr.mxu0 0.0
    %2167 = vmatpush1.msra.mxu0 0.0
    %2168 = vmatprep.subr.mxu0 0.0
    %2169 = vmatpush1.msra.mxu0 0.0
    %2170 = vmatprep.subr.mxu0 0.0
    %2171 = vmatpush1.msra.mxu0 0.0
    %2172 = vmatprep.subr.mxu0 0.0
    %2173 = vmatpush1.msra.mxu0 0.0
    %2174 = vmatprep.subr.mxu0 0.0
    %2175 = vmatpush1.msra.mxu0 0.0
    %2176 = vmatprep.subr.mxu0 0.0
    %2177 = vmatpush1.msra.mxu0 0.0
    %2178 = vmatprep.subr.mxu0 0.0
    %2179 = vmatpush1.msra.mxu0 0.0
    %2180 = vmatprep.subr.mxu0 0.0
    %2181 = vmatpush1.msra.mxu0 0.0
    %2182 = vmatprep.subr.mxu0 0.0
    %2183 = vmatpush1.msra.mxu0 0.0
    %2184 = vmatprep.subr.mxu0 0.0
    %2185 = vmatpush1.msra.mxu0 0.0
    %2186 = vmatprep.subr.mxu0 0.0
    %2187 = vmatpush1.msra.mxu0 0.0
    %2188 = vmatprep.subr.mxu0 0.0
    %2189 = vmatpush1.msra.mxu0 0.0
    %2190 = vmatprep.subr.mxu0 0.0
    %2191 = vmatpush1.msra.mxu0 0.0
    %2192 = vmatprep.subr.mxu0 0.0
    %2193 = vmatpush1.msra.mxu0 0.0
    %2194 = vmatprep.subr.mxu0 0.0
    %2195 = vmatpush1.msra.mxu0 0.0
    %2196 = vmatprep.subr.mxu0 0.0
    %2197 = vmatpush1.msra.mxu0 0.0
    %2198 = vmatprep.subr.mxu0 0.0
    %2199 = vmatpush1.msra.mxu0 0.0
    %2200 = vmatprep.subr.mxu0 0.0
    %2201 = vmatpush1.msra.mxu0 0.0
    %2202 = vmatprep.mubr.f32.mxu0 0.0
    %2203 = vmatmul.mubr.f32.gmra.mrb[0].mxu0 %v2127
    %v2204 = vpop.f32.mrb[0].mxu0
    %v2205 = vadd.f32 %v2104, %v2204
    %v2206 = vpop.f32.mrb[0].mxu0
    %v2207 = vadd.f32 %v2106, %v2206
    %2208 = vmatprep.mubr.f32.mxu0 0.0
    %2209 = vmatmul.mubr.f32.gmra.mrb[0].mxu0 %v2130
    %v2210 = vpop.f32.mrb[0].mxu0
    %v2211 = vadd.f32 %v2110, %v2210
    %v2212 = vpop.f32.mrb[0].mxu0
    %v2213 = vadd.f32 %v2112, %v2212
    %2214 = vmatprep.mubr.f32.mxu0 0.0
    %2215 = vmatmul.mubr.f32.gmra.mrb[0].mxu0 %v2133
    %v2216 = vpop.f32.mrb[0].mxu0
    %v2217 = vadd.f32 %v2116, %v2216
    %v2218 = vpop.f32.mrb[0].mxu0
    %v2219 = vadd.f32 %v2118, %v2218
    %2220 = vmatprep.mubr.f32.mxu0 0.0
    %2221 = vmatmul.mubr.f32.gmra.mrb[0].mxu0 %v2136
    %v2222 = vpop.f32.mrb[0].mxu0
    %v2223 = vadd.f32 %v2122, %v2222
    %v2224 = vpop.f32.mrb[0].mxu0
    %v2225 = vadd.f32 %v2124, %v2224
    %2226 = vdwg.mxu0
    %v2227 = vld [vmem:[#allocation4 + $0x2] sm:$0xff]
    %v2228 = vld [vmem:[#allocation4 + $0xa] sm:$0xff]
    %v2229 = vld [vmem:[#allocation4 + $0x12] sm:$0xff]
    %v2230 = vld [vmem:[#allocation4 + $0x1a] sm:$0x3f]
    %v2232 = vsel %vm771, %v2227, 0
    %v2235 = vsel %vm771, %v2228, 0
    %v2238 = vsel %vm771, %v2229, 0
    %v2241 = vsel %vm771, %v2230, 0
    %2243 = vmatprep.subr.mxu0 %v1988
    %2244 = vmatpush1.msra.mxu0 %v1987
    %2245 = vmatprep.subr.mxu0 %v1990
    %2246 = vmatpush1.msra.mxu0 %v1989
    %2247 = vmatprep.subr.mxu0 %v1992
    %2248 = vmatpush1.msra.mxu0 %v1991
    %2249 = vmatprep.subr.mxu0 %v1994
    %2250 = vmatpush1.msra.mxu0 %v1993
    %2251 = vmatprep.subr.mxu0 %v1996
    %2252 = vmatpush1.msra.mxu0 %v1995
    %2253 = vmatprep.subr.mxu0 %v1998
    %2254 = vmatpush1.msra.mxu0 %v1997
    %2255 = vmatprep.subr.mxu0 %v2000
    %2256 = vmatpush1.msra.mxu0 %v1999
    %2257 = vmatprep.subr.mxu0 %v2002
    %2258 = vmatpush1.msra.mxu0 %v2001
    %2259 = vmatprep.subr.mxu0 %v2004
    %2260 = vmatpush1.msra.mxu0 %v2003
    %2261 = vmatprep.subr.mxu0 %v2006
    %2262 = vmatpush1.msra.mxu0 %v2005
    %2263 = vmatprep.subr.mxu0 %v2008
    %2264 = vmatpush1.msra.mxu0 %v2007
    %2265 = vmatprep.subr.mxu0 %v2010
    %2266 = vmatpush1.msra.mxu0 %v2009
    %2267 = vmatprep.subr.mxu0 %v2012
    %2268 = vmatpush1.msra.mxu0 %v2011
    %2269 = vmatprep.subr.mxu0 %v2014
    %2270 = vmatpush1.msra.mxu0 %v2013
    %2271 = vmatprep.subr.mxu0 0.0
    %2272 = vmatpush1.msra.mxu0 0.0
    %2273 = vmatprep.subr.mxu0 0.0
    %2274 = vmatpush1.msra.mxu0 0.0
    %2275 = vmatprep.subr.mxu0 0.0
    %2276 = vmatpush1.msra.mxu0 0.0
    %2277 = vmatprep.subr.mxu0 0.0
    %2278 = vmatpush1.msra.mxu0 0.0
    %2279 = vmatprep.subr.mxu0 0.0
    %2280 = vmatpush1.msra.mxu0 0.0
    %2281 = vmatprep.subr.mxu0 0.0
    %2282 = vmatpush1.msra.mxu0 0.0
    %2283 = vmatprep.subr.mxu0 0.0
    %2284 = vmatpush1.msra.mxu0 0.0
    %2285 = vmatprep.subr.mxu0 0.0
    %2286 = vmatpush1.msra.mxu0 0.0
    %2287 = vmatprep.subr.mxu0 0.0
    %2288 = vmatpush1.msra.mxu0 0.0
    %2289 = vmatprep.subr.mxu0 0.0
    %2290 = vmatpush1.msra.mxu0 0.0
    %2291 = vmatprep.subr.mxu0 0.0
    %2292 = vmatpush1.msra.mxu0 0.0
    %2293 = vmatprep.subr.mxu0 0.0
    %2294 = vmatpush1.msra.mxu0 0.0
    %2295 = vmatprep.subr.mxu0 0.0
    %2296 = vmatpush1.msra.mxu0 0.0
    %2297 = vmatprep.subr.mxu0 0.0
    %2298 = vmatpush1.msra.mxu0 0.0
    %2299 = vmatprep.subr.mxu0 0.0
    %2300 = vmatpush1.msra.mxu0 0.0
    %2301 = vmatprep.subr.mxu0 0.0
    %2302 = vmatpush1.msra.mxu0 0.0
    %2303 = vmatprep.subr.mxu0 0.0
    %2304 = vmatpush1.msra.mxu0 0.0
    %2305 = vmatprep.subr.mxu0 0.0
    %2306 = vmatpush1.msra.mxu0 0.0
    %2307 = vmatprep.mubr.f32.mxu0 0.0
    %2308 = vmatmul.mubr.f32.gmra.mrb[0].mxu0 %v2232
    %v2309 = vpop.f32.mrb[0].mxu0
    %v2310 = vadd.f32 0.0, %v2309
    %v2311 = vpop.f32.mrb[0].mxu0
    %v2312 = vadd.f32 0.0, %v2311
    %2313 = vmatprep.mubr.f32.mxu0 0.0
    %2314 = vmatmul.mubr.f32.gmra.mrb[0].mxu0 %v2235
    %v2315 = vpop.f32.mrb[0].mxu0
    %v2316 = vadd.f32 0.0, %v2315
    %v2317 = vpop.f32.mrb[0].mxu0
    %v2318 = vadd.f32 0.0, %v2317
    %2319 = vmatprep.mubr.f32.mxu0 0.0
    %2320 = vmatmul.mubr.f32.gmra.mrb[0].mxu0 %v2238
    %v2321 = vpop.f32.mrb[0].mxu0
    %v2322 = vadd.f32 0.0, %v2321
    %v2323 = vpop.f32.mrb[0].mxu0
    %v2324 = vadd.f32 0.0, %v2323
    %2325 = vmatprep.mubr.f32.mxu0 0.0
    %2326 = vmatmul.mubr.f32.gmra.mrb[0].mxu0 %v2241
    %v2327 = vpop.f32.mrb[0].mxu0
    %v2328 = vadd.f32 0.0, %v2327
    %v2329 = vpop.f32.mrb[0].mxu0
    %v2330 = vadd.f32 0.0, %v2329
    %2331 = vdwg.mxu0
    %v2332 = vadd.f32 %v2205, %v2310
    %v2333 = vadd.f32 %v2207, %v2312
    %v2334 = vadd.f32 %v2211, %v2316
    %v2335 = vadd.f32 %v2213, %v2318
    %v2336 = vadd.f32 %v2217, %v2322
    %v2337 = vadd.f32 %v2219, %v2324
    %v2338 = vadd.f32 %v2223, %v2328
    %v2339 = vadd.f32 %v2225, %v2330
    %v2340 = vmax.f32 %v2332, 0.0
    %v2341 = vmax.f32 %v2333, 0.0
    %v2342 = vmax.f32 %v2334, 0.0
    %v2343 = vmax.f32 %v2335, 0.0
    %v2344 = vmax.f32 %v2336, 0.0
    %v2345 = vmax.f32 %v2337, 0.0
    %v2346 = vmax.f32 %v2338, 0.0
    %v2347 = vmax.f32 %v2339, 0.0
    %v2349 = vlaneseq
    %v2350 = vshrl.u32 %v2349, 7
    %v2351 = vsub.s32 0, %v2350
    %v2352 = vrot.slane %v2015, %v2351
    %v2353 = vlaneseq
    %v2354 = vshrl.u32 %v2353, 7
    %v2355 = vsub.s32 1, %v2354
    %v2356 = vrot.slane %v2015, %v2355
    %v2359 = vmul.f32 %v2340, %v2352
    %v2360 = vmul.f32 %v2341, %v2356
    %v2361 = vmul.f32 %v2342, %v2352
    %v2362 = vmul.f32 %v2343, %v2356
    %v2363 = vmul.f32 %v2344, %v2352
    %v2364 = vmul.f32 %v2345, %v2356
    %v2365 = vmul.f32 %v2346, %v2352
    %v2366 = vmul.f32 %v2347, %v2356
    %v2368 = vlaneseq
    %v2369 = vshrl.u32 %v2368, 7
    %v2370 = vsub.s32 0, %v2369
    %v2371 = vrot.slane %v2016, %v2370
    %v2372 = vlaneseq
    %v2373 = vshrl.u32 %v2372, 7
    %v2374 = vsub.s32 1, %v2373
    %v2375 = vrot.slane %v2016, %v2374
    %v2378 = vadd.f32 %v2359, %v2371
    %v2379 = vadd.f32 %v2360, %v2375
    %v2380 = vadd.f32 %v2361, %v2371
    %v2381 = vadd.f32 %v2362, %v2375
    %v2382 = vadd.f32 %v2363, %v2371
    %v2383 = vadd.f32 %v2364, %v2375
    %v2384 = vadd.f32 %v2365, %v2371
    %v2385 = vadd.f32 %v2366, %v2375
    %vm2390 = vcmask 1040384
    %v2391 = vrot.slane %v2378, 7
    %v2392 = vrot.slane %v2379, 7
    %v2393 = vrot.slane %v2380, 7
    %v2394 = vsel %vm2390, %v2391, %v2393
    %v2395 = vrot.slane %v2381, 7
    %v2396 = vsel %vm2390, %v2392, %v2395
    %2401 = vst [vmem:[#allocation5] sm:$0xfe] %v2391
    %vm2402 = vcmask 785409
    %2403 = vst.msk [vmem:[#allocation5 + $0x8] sm:$0xfe] %vm2402, %v2392
    %2404 = vst [vmem:[#allocation5 + $0x10] sm:$0x7f] %v2394
    %vm2405 = vcmask 784384
    %2406 = vst.msk [vmem:[#allocation5 + $0x18] sm:$0x7f] %vm2405, %v2396
    %v2411 = vrot.slane %v2382, 7
    %v2412 = vrot.slane %v2383, 7
    %v2413 = vrot.slane %v2384, 7
    %v2414 = vsel %vm2390, %v2411, %v2413
    %v2415 = vrot.slane %v2385, 7
    %v2416 = vsel %vm2390, %v2412, %v2415
    %2421 = vst [vmem:[#allocation5 + $0x20] sm:$0xfe] %v2411
    %2422 = vst.msk [vmem:[#allocation5 + $0x28] sm:$0xfe] %vm2402, %v2412
    %2423 = vst [vmem:[#allocation5 + $0x30] sm:$0x7f] %v2414
    %2424 = vst.msk [vmem:[#allocation5 + $0x38] sm:$0x7f] %vm2405, %v2416
    %v2425 = vld [vmem:[#allocation40] sm:$0xff]
    %v2426 = vld [vmem:[#allocation40 + $0x8] sm:$0xff]
    %v2427 = vld [vmem:[#allocation40 + $0x10] sm:$0xff]
    %v2428 = vld [vmem:[#allocation40 + $0x18] sm:$0xff]
    %v2429 = vld [vmem:[#allocation40 + $0x20] sm:$0xff]
    %v2430 = vld [vmem:[#allocation40 + $0x28] sm:$0xff]
    %v2431 = vld [vmem:[#allocation40 + $0x30] sm:$0xff]
    %v2432 = vld [vmem:[#allocation40 + $0x38] sm:$0xff]
    %v2433 = vld [vmem:[#allocation40 + $0x40] sm:$0xff]
    %v2434 = vld [vmem:[#allocation40 + $0x48] sm:$0xff]
    %v2435 = vld [vmem:[#allocation40 + $0x50] sm:$0xff]
    %v2436 = vld [vmem:[#allocation40 + $0x58] sm:$0xff]
    %v2437 = vld [vmem:[#allocation40 + $0x60] sm:$0xff]
    %v2438 = vld [vmem:[#allocation40 + $0x68] sm:$0xff]
    %v2439 = vld [vmem:[#allocation40 + $0x70] sm:$0xff]
    %v2440 = vld [vmem:[#allocation40 + $0x78] sm:$0xff]
    %v2441 = vld [vmem:[#allocation40 + $0x80] sm:$0xff]
    %v2442 = vld [vmem:[#allocation40 + $0x88] sm:$0xff]
    %v2443 = vld [vmem:[#allocation40 + $0x90] sm:$0xff]
    %v2444 = vld [vmem:[#allocation40 + $0x98] sm:$0xff]
    %v2445 = vld [vmem:[#allocation40 + $0xa0] sm:$0xff]
    %v2446 = vld [vmem:[#allocation40 + $0xa8] sm:$0xff]
    %v2447 = vld [vmem:[#allocation40 + $0xb0] sm:$0xff]
    %v2448 = vld [vmem:[#allocation40 + $0xb8] sm:$0xff]
    %v2449 = vld [vmem:[#allocation40 + $0xc0] sm:$0xff]
    %v2450 = vld [vmem:[#allocation40 + $0xc8] sm:$0xff]
    %v2451 = vld [vmem:[#allocation40 + $0xd0] sm:$0xff]
    %v2452 = vld [vmem:[#allocation40 + $0xd8] sm:$0xff]
    %v2453 = vld [vmem:[#allocation40 + $0xe0] sm:$0xff]
    %v2454 = vld [vmem:[#allocation40 + $0xe8] sm:$0xff]
    %v2455 = vld [vmem:[#allocation40 + $0xf0] sm:$0xff]
    %v2456 = vld [vmem:[#allocation40 + $0xf8] sm:$0xff]
    %v2457 = vld [vmem:[#allocation40 + $0x100] sm:$0xff]
    %v2458 = vld [vmem:[#allocation40 + $0x108] sm:$0xff]
    %v2459 = vld [vmem:[#allocation40 + $0x110] sm:$0xff]
    %v2460 = vld [vmem:[#allocation40 + $0x118] sm:$0xff]
    %v2461 = vld [vmem:[#allocation40 + $0x120] sm:$0xff]
    %v2462 = vld [vmem:[#allocation40 + $0x128] sm:$0xff]
    %v2463 = vld [vmem:[#allocation40 + $0x130] sm:$0xff]
    %v2464 = vld [vmem:[#allocation40 + $0x138] sm:$0xff]
    %v2465 = vld [vmem:[#allocation40 + $0x140] sm:$0xff]
    %v2466 = vld [vmem:[#allocation40 + $0x148] sm:$0xff]
    %v2467 = vld [vmem:[#allocation40 + $0x150] sm:$0xff]
    %v2468 = vld [vmem:[#allocation40 + $0x158] sm:$0xff]
    %v2469 = vld [vmem:[#allocation40 + $0x160] sm:$0xff]
    %v2470 = vld [vmem:[#allocation40 + $0x168] sm:$0xff]
    %v2471 = vld [vmem:[#allocation40 + $0x170] sm:$0xff]
    %v2472 = vld [vmem:[#allocation40 + $0x178] sm:$0xff]
    %v2473 = vld [vmem:[#allocation40 + $0x180] sm:$0xff]
    %v2474 = vld [vmem:[#allocation40 + $0x188] sm:$0xff]
    %v2475 = vld [vmem:[#allocation40 + $0x190] sm:$0xff]
    %v2476 = vld [vmem:[#allocation40 + $0x198] sm:$0xff]
    %v2477 = vld [vmem:[#allocation40 + $0x1a0] sm:$0xff]
    %v2478 = vld [vmem:[#allocation40 + $0x1a8] sm:$0xff]
    %v2479 = vld [vmem:[#allocation40 + $0x1b0] sm:$0xff]
    %v2480 = vld [vmem:[#allocation40 + $0x1b8] sm:$0xff]
    %v2481 = vld [vmem:[#allocation41] sm:$0xff]
    %v2482 = vld [vmem:[#allocation41 + $0x8] sm:$0xff]
    %v2483 = vld [vmem:[#allocation41 + $0x10] sm:$0xff]
    %v2484 = vld [vmem:[#allocation41 + $0x18] sm:$0xff]
    %v2485 = vld [vmem:[#allocation41 + $0x20] sm:$0xff]
    %v2486 = vld [vmem:[#allocation41 + $0x28] sm:$0xff]
    %v2487 = vld [vmem:[#allocation41 + $0x30] sm:$0xff]
    %v2488 = vld [vmem:[#allocation41 + $0x38] sm:$0xff]
    %v2489 = vld [vmem:[#allocation41 + $0x40] sm:$0xff]
    %v2490 = vld [vmem:[#allocation41 + $0x48] sm:$0xff]
    %v2491 = vld [vmem:[#allocation41 + $0x50] sm:$0xff]
    %v2492 = vld [vmem:[#allocation41 + $0x58] sm:$0xff]
    %v2493 = vld [vmem:[#allocation41 + $0x60] sm:$0xff]
    %v2494 = vld [vmem:[#allocation41 + $0x68] sm:$0xff]
    %v2495 = vld [vmem:[#allocation41 + $0x70] sm:$0xff]
    %v2496 = vld [vmem:[#allocation41 + $0x78] sm:$0xff]
    %v2497 = vld [vmem:[#allocation41 + $0x80] sm:$0xff]
    %v2498 = vld [vmem:[#allocation41 + $0x88] sm:$0xff]
    %v2499 = vld [vmem:[#allocation41 + $0x90] sm:$0xff]
    %v2500 = vld [vmem:[#allocation41 + $0x98] sm:$0xff]
    %v2501 = vld [vmem:[#allocation41 + $0xa0] sm:$0xff]
    %v2502 = vld [vmem:[#allocation41 + $0xa8] sm:$0xff]
    %v2503 = vld [vmem:[#allocation41 + $0xb0] sm:$0xff]
    %v2504 = vld [vmem:[#allocation41 + $0xb8] sm:$0xff]
    %v2505 = vld [vmem:[#allocation41 + $0xc0] sm:$0xff]
    %v2506 = vld [vmem:[#allocation41 + $0xc8] sm:$0xff]
    %v2507 = vld [vmem:[#allocation41 + $0xd0] sm:$0xff]
    %v2508 = vld [vmem:[#allocation41 + $0xd8] sm:$0xff]
    %v2509 = vld [vmem:[#allocation41 + $0xe0] sm:$0xff]
    %v2510 = vld [vmem:[#allocation41 + $0xe8] sm:$0xff]
    %v2511 = vld [vmem:[#allocation41 + $0xf0] sm:$0xff]
    %v2512 = vld [vmem:[#allocation41 + $0xf8] sm:$0xff]
    %v2513 = vld [vmem:[#allocation41 + $0x100] sm:$0xff]
    %v2514 = vld [vmem:[#allocation41 + $0x108] sm:$0xff]
    %v2515 = vld [vmem:[#allocation41 + $0x110] sm:$0xff]
    %v2516 = vld [vmem:[#allocation41 + $0x118] sm:$0xff]
    %v2517 = vld [vmem:[#allocation41 + $0x120] sm:$0xff]
    %v2518 = vld [vmem:[#allocation41 + $0x128] sm:$0xff]
    %v2519 = vld [vmem:[#allocation41 + $0x130] sm:$0xff]
    %v2520 = vld [vmem:[#allocation41 + $0x138] sm:$0xff]
    %v2521 = vld [vmem:[#allocation41 + $0x140] sm:$0xff]
    %v2522 = vld [vmem:[#allocation41 + $0x148] sm:$0xff]
    %v2523 = vld [vmem:[#allocation41 + $0x150] sm:$0xff]
    %v2524 = vld [vmem:[#allocation41 + $0x158] sm:$0xff]
    %v2525 = vld [vmem:[#allocation41 + $0x160] sm:$0xff]
    %v2526 = vld [vmem:[#allocation41 + $0x168] sm:$0xff]
    %v2527 = vld [vmem:[#allocation41 + $0x170] sm:$0xff]
    %v2528 = vld [vmem:[#allocation41 + $0x178] sm:$0xff]
    %v2529 = vld [vmem:[#allocation41 + $0x180] sm:$0xff]
    %v2530 = vld [vmem:[#allocation41 + $0x188] sm:$0xff]
    %v2531 = vld [vmem:[#allocation41 + $0x190] sm:$0xff]
    %v2532 = vld [vmem:[#allocation41 + $0x198] sm:$0xff]
    %v2533 = vld [vmem:[#allocation41 + $0x1a0] sm:$0xff]
    %v2534 = vld [vmem:[#allocation41 + $0x1a8] sm:$0xff]
    %v2535 = vld [vmem:[#allocation41 + $0x1b0] sm:$0xff]
    %v2536 = vld [vmem:[#allocation41 + $0x1b8] sm:$0xff]
    %v2537 = vld [vmem:[#allocation43] sm:$0xff]
    %v2538 = vld [vmem:[#allocation43 + $0x8] sm:$0xff]
    %v2539 = vld [vmem:[#allocation43 + $0x10] sm:$0xff]
    %v2540 = vld [vmem:[#allocation43 + $0x18] sm:$0xff]
    %v2541 = vld [vmem:[#allocation43 + $0x20] sm:$0xff]
    %v2542 = vld [vmem:[#allocation43 + $0x28] sm:$0xff]
    %v2543 = vld [vmem:[#allocation43 + $0x30] sm:$0xff]
    %v2544 = vld [vmem:[#allocation43 + $0x38] sm:$0xff]
    %v2545 = vld [vmem:[#allocation43 + $0x40] sm:$0xff]
    %v2546 = vld [vmem:[#allocation43 + $0x48] sm:$0xff]
    %v2547 = vld [vmem:[#allocation43 + $0x50] sm:$0xff]
    %v2548 = vld [vmem:[#allocation43 + $0x58] sm:$0xff]
    %v2549 = vld [vmem:[#allocation43 + $0x60] sm:$0xff]
    %v2550 = vld [vmem:[#allocation43 + $0x68] sm:$0xff]
    %v2551 = vld [vmem:[#allocation43 + $0x70] sm:$0xff]
    %v2552 = vld [vmem:[#allocation43 + $0x78] sm:$0xff]
    %v2553 = vld [vmem:[#allocation43 + $0x80] sm:$0xff]
    %v2554 = vld [vmem:[#allocation43 + $0x88] sm:$0xff]
    %v2555 = vld [vmem:[#allocation43 + $0x90] sm:$0xff]
    %v2556 = vld [vmem:[#allocation43 + $0x98] sm:$0xff]
    %v2557 = vld [vmem:[#allocation43 + $0xa0] sm:$0xff]
    %v2558 = vld [vmem:[#allocation43 + $0xa8] sm:$0xff]
    %v2559 = vld [vmem:[#allocation43 + $0xb0] sm:$0xff]
    %v2560 = vld [vmem:[#allocation43 + $0xb8] sm:$0xff]
    %v2561 = vld [vmem:[#allocation43 + $0xc0] sm:$0xff]
    %v2562 = vld [vmem:[#allocation43 + $0xc8] sm:$0xff]
    %v2563 = vld [vmem:[#allocation43 + $0xd0] sm:$0xff]
    %v2564 = vld [vmem:[#allocation43 + $0xd8] sm:$0xff]
    %v2565 = vld [vmem:[#allocation43 + $0xe0] sm:$0xff]
    %v2566 = vld [vmem:[#allocation43 + $0xe8] sm:$0xff]
    %v2567 = vld [vmem:[#allocation43 + $0xf0] sm:$0xff]
    %v2568 = vld [vmem:[#allocation43 + $0xf8] sm:$0xff]
    %v2569 = vld [vmem:[#allocation43 + $0x100] sm:$0xff]
    %v2570 = vld [vmem:[#allocation43 + $0x108] sm:$0xff]
    %v2571 = vld [vmem:[#allocation43 + $0x110] sm:$0xff]
    %v2572 = vld [vmem:[#allocation43 + $0x118] sm:$0xff]
    %v2573 = vld [vmem:[#allocation43 + $0x120] sm:$0xff]
    %v2574 = vld [vmem:[#allocation43 + $0x128] sm:$0xff]
    %v2575 = vld [vmem:[#allocation43 + $0x130] sm:$0xff]
    %v2576 = vld [vmem:[#allocation43 + $0x138] sm:$0xff]
    %v2577 = vld [vmem:[#allocation43 + $0x140] sm:$0xff]
    %v2578 = vld [vmem:[#allocation43 + $0x148] sm:$0xff]
    %v2579 = vld [vmem:[#allocation43 + $0x150] sm:$0xff]
    %v2580 = vld [vmem:[#allocation43 + $0x158] sm:$0xff]
    %v2581 = vld [vmem:[#allocation43 + $0x160] sm:$0xff]
    %v2582 = vld [vmem:[#allocation43 + $0x168] sm:$0xff]
    %v2583 = vld [vmem:[#allocation43 + $0x170] sm:$0xff]
    %v2584 = vld [vmem:[#allocation43 + $0x178] sm:$0xff]
    %v2585 = vld [vmem:[#allocation43 + $0x180] sm:$0xff]
    %v2586 = vld [vmem:[#allocation43 + $0x188] sm:$0xff]
    %v2587 = vld [vmem:[#allocation43 + $0x190] sm:$0xff]
    %v2588 = vld [vmem:[#allocation43 + $0x198] sm:$0xff]
    %v2589 = vld [vmem:[#allocation43 + $0x1a0] sm:$0xff]
    %v2590 = vld [vmem:[#allocation43 + $0x1a8] sm:$0xff]
    %v2591 = vld [vmem:[#allocation43 + $0x1b0] sm:$0xff]
    %v2592 = vld [vmem:[#allocation43 + $0x1b8] sm:$0xff]
    %v2593 = vld [vmem:[%s49] sm:$0x3]
    %v2594 = vld [vmem:[%s51] sm:$0x3]
    %v2595 = vld [vmem:[#allocation5] sm:$0xff]
    %v2596 = vld [vmem:[#allocation5 + $0x8] sm:$0xff]
    %v2597 = vld [vmem:[#allocation5 + $0x10] sm:$0xff]
    %v2598 = vld [vmem:[#allocation5 + $0x18] sm:$0xff]
    %v2599 = vld [vmem:[#allocation5 + $0x20] sm:$0xff]
    %v2600 = vld [vmem:[#allocation5 + $0x28] sm:$0xff]
    %v2601 = vld [vmem:[#allocation5 + $0x30] sm:$0x3f]
    %v2602 = vld [vmem:[#allocation5 + $0x38] sm:$0x3f]
    %v2603 = vld [vmem:[#allocation5] sm:$0xfe]
    %v2604 = vld [vmem:[#allocation5 + $0x8] sm:$0xfe]
    %v2605 = vld [vmem:[#allocation5 + $0x30] sm:$0x7f]
    %v2606 = vld [vmem:[#allocation5 + $0x38] sm:$0x7f]
    %vm2615 = vcmask 1046528
    %v2616 = vrot.slane %v2603, 1
    %v2617 = vrot.slane %v2597, 1
    %v2618 = vsel %vm2615, %v2616, %v2617
    %v2619 = vrot.slane %v2604, 1
    %v2620 = vrot.slane %v2598, 1
    %v2621 = vsel %vm2615, %v2619, %v2620
    %v2622 = vrot.slane %v2599, 1
    %v2623 = vsel %vm2615, %v2617, %v2622
    %v2624 = vrot.slane %v2600, 1
    %v2625 = vsel %vm2615, %v2620, %v2624
    %v2626 = vrot.slane %v2605, 1
    %v2627 = vsel %vm2615, %v2622, %v2626
    %v2628 = vrot.slane %v2606, 1
    %v2629 = vsel %vm2615, %v2624, %v2628
    %v2634 = vsel %vm777, %v2621, 0
    %v2636 = vsel %vm777, %v2625, 0
    %v2638 = vsel %vm777, %v2629, 0
    %v2640 = vsel %vm777, %v2628, 0
    %2642 = vmatprep.subr.mxu0 %v2482
    %2643 = vmatpush1.msra.mxu0 %v2481
    %2644 = vmatprep.subr.mxu0 %v2484
    %2645 = vmatpush1.msra.mxu0 %v2483
    %2646 = vmatprep.subr.mxu0 %v2486
    %2647 = vmatpush1.msra.mxu0 %v2485
    %2648 = vmatprep.subr.mxu0 %v2488
    %2649 = vmatpush1.msra.mxu0 %v2487
    %2650 = vmatprep.subr.mxu0 %v2490
    %2651 = vmatpush1.msra.mxu0 %v2489
    %2652 = vmatprep.subr.mxu0 %v2492
    %2653 = vmatpush1.msra.mxu0 %v2491
    %2654 = vmatprep.subr.mxu0 %v2494
    %2655 = vmatpush1.msra.mxu0 %v2493
    %2656 = vmatprep.subr.mxu0 %v2496
    %2657 = vmatpush1.msra.mxu0 %v2495
    %2658 = vmatprep.subr.mxu0 %v2498
    %2659 = vmatpush1.msra.mxu0 %v2497
    %2660 = vmatprep.subr.mxu0 %v2500
    %2661 = vmatpush1.msra.mxu0 %v2499
    %2662 = vmatprep.subr.mxu0 %v2502
    %2663 = vmatpush1.msra.mxu0 %v2501
    %2664 = vmatprep.subr.mxu0 %v2504
    %2665 = vmatpush1.msra.mxu0 %v2503
    %2666 = vmatprep.subr.mxu0 %v2506
    %2667 = vmatpush1.msra.mxu0 %v2505
    %2668 = vmatprep.subr.mxu0 %v2508
    %2669 = vmatpush1.msra.mxu0 %v2507
    %2670 = vmatprep.subr.mxu0 %v2510
    %2671 = vmatpush1.msra.mxu0 %v2509
    %2672 = vmatprep.subr.mxu0 %v2512
    %2673 = vmatpush1.msra.mxu0 %v2511
    %2674 = vmatprep.subr.mxu0 %v2514
    %2675 = vmatpush1.msra.mxu0 %v2513
    %2676 = vmatprep.subr.mxu0 %v2516
    %2677 = vmatpush1.msra.mxu0 %v2515
    %2678 = vmatprep.subr.mxu0 %v2518
    %2679 = vmatpush1.msra.mxu0 %v2517
    %2680 = vmatprep.subr.mxu0 %v2520
    %2681 = vmatpush1.msra.mxu0 %v2519
    %2682 = vmatprep.subr.mxu0 %v2522
    %2683 = vmatpush1.msra.mxu0 %v2521
    %2684 = vmatprep.subr.mxu0 %v2524
    %2685 = vmatpush1.msra.mxu0 %v2523
    %2686 = vmatprep.subr.mxu0 %v2526
    %2687 = vmatpush1.msra.mxu0 %v2525
    %2688 = vmatprep.subr.mxu0 %v2528
    %2689 = vmatpush1.msra.mxu0 %v2527
    %2690 = vmatprep.subr.mxu0 %v2530
    %2691 = vmatpush1.msra.mxu0 %v2529
    %2692 = vmatprep.subr.mxu0 %v2532
    %2693 = vmatpush1.msra.mxu0 %v2531
    %2694 = vmatprep.subr.mxu0 %v2534
    %2695 = vmatpush1.msra.mxu0 %v2533
    %2696 = vmatprep.subr.mxu0 %v2536
    %2697 = vmatpush1.msra.mxu0 %v2535
    %2698 = vmatprep.subr.mxu0 0.0
    %2699 = vmatpush1.msra.mxu0 0.0
    %2700 = vmatprep.subr.mxu0 0.0
    %2701 = vmatpush1.msra.mxu0 0.0
    %2702 = vmatprep.subr.mxu0 0.0
    %2703 = vmatpush1.msra.mxu0 0.0
    %2704 = vmatprep.subr.mxu0 0.0
    %2705 = vmatpush1.msra.mxu0 0.0
    %2706 = vmatprep.mubr.f32.mxu0 %v2634
    %2707 = vmatmul.mubr.f32.gmra.mrb[0].mxu0 %v2618
    %v2708 = vpop.f32.mrb[0].mxu0
    %v2709 = vadd.f32 0.0, %v2708
    %v2710 = vpop.f32.mrb[0].mxu0
    %v2711 = vadd.f32 0.0, %v2710
    %2712 = vmatprep.mubr.f32.mxu0 %v2636
    %2713 = vmatmul.mubr.f32.gmra.mrb[0].mxu0 %v2623
    %v2714 = vpop.f32.mrb[0].mxu0
    %v2715 = vadd.f32 0.0, %v2714
    %v2716 = vpop.f32.mrb[0].mxu0
    %v2717 = vadd.f32 0.0, %v2716
    %2718 = vmatprep.mubr.f32.mxu0 %v2638
    %2719 = vmatmul.mubr.f32.gmra.mrb[0].mxu0 %v2627
    %v2720 = vpop.f32.mrb[0].mxu0
    %v2721 = vadd.f32 0.0, %v2720
    %v2722 = vpop.f32.mrb[0].mxu0
    %v2723 = vadd.f32 0.0, %v2722
    %2724 = vmatprep.mubr.f32.mxu0 %v2640
    %2725 = vmatmul.mubr.f32.gmra.mrb[0].mxu0 %v2626
    %v2726 = vpop.f32.mrb[0].mxu0
    %v2727 = vadd.f32 0.0, %v2726
    %v2728 = vpop.f32.mrb[0].mxu0
    %v2729 = vadd.f32 0.0, %v2728
    %2730 = vdwg.mxu0
    %v2732 = vsel %vm777, %v2596, 0
    %v2734 = vsel %vm777, %v2598, 0
    %v2736 = vsel %vm777, %v2600, 0
    %v2739 = vsel %vm777, %v2602, 0
    %2741 = vmatprep.subr.mxu0 %v2426
    %2742 = vmatpush1.msra.mxu0 %v2425
    %2743 = vmatprep.subr.mxu0 %v2428
    %2744 = vmatpush1.msra.mxu0 %v2427
    %2745 = vmatprep.subr.mxu0 %v2430
    %2746 = vmatpush1.msra.mxu0 %v2429
    %2747 = vmatprep.subr.mxu0 %v2432
    %2748 = vmatpush1.msra.mxu0 %v2431
    %2749 = vmatprep.subr.mxu0 %v2434
    %2750 = vmatpush1.msra.mxu0 %v2433
    %2751 = vmatprep.subr.mxu0 %v2436
    %2752 = vmatpush1.msra.mxu0 %v2435
    %2753 = vmatprep.subr.mxu0 %v2438
    %2754 = vmatpush1.msra.mxu0 %v2437
    %2755 = vmatprep.subr.mxu0 %v2440
    %2756 = vmatpush1.msra.mxu0 %v2439
    %2757 = vmatprep.subr.mxu0 %v2442
    %2758 = vmatpush1.msra.mxu0 %v2441
    %2759 = vmatprep.subr.mxu0 %v2444
    %2760 = vmatpush1.msra.mxu0 %v2443
    %2761 = vmatprep.subr.mxu0 %v2446
    %2762 = vmatpush1.msra.mxu0 %v2445
    %2763 = vmatprep.subr.mxu0 %v2448
    %2764 = vmatpush1.msra.mxu0 %v2447
    %2765 = vmatprep.subr.mxu0 %v2450
    %2766 = vmatpush1.msra.mxu0 %v2449
    %2767 = vmatprep.subr.mxu0 %v2452
    %2768 = vmatpush1.msra.mxu0 %v2451
    %2769 = vmatprep.subr.mxu0 %v2454
    %2770 = vmatpush1.msra.mxu0 %v2453
    %2771 = vmatprep.subr.mxu0 %v2456
    %2772 = vmatpush1.msra.mxu0 %v2455
    %2773 = vmatprep.subr.mxu0 %v2458
    %2774 = vmatpush1.msra.mxu0 %v2457
    %2775 = vmatprep.subr.mxu0 %v2460
    %2776 = vmatpush1.msra.mxu0 %v2459
    %2777 = vmatprep.subr.mxu0 %v2462
    %2778 = vmatpush1.msra.mxu0 %v2461
    %2779 = vmatprep.subr.mxu0 %v2464
    %2780 = vmatpush1.msra.mxu0 %v2463
    %2781 = vmatprep.subr.mxu0 %v2466
    %2782 = vmatpush1.msra.mxu0 %v2465
    %2783 = vmatprep.subr.mxu0 %v2468
    %2784 = vmatpush1.msra.mxu0 %v2467
    %2785 = vmatprep.subr.mxu0 %v2470
    %2786 = vmatpush1.msra.mxu0 %v2469
    %2787 = vmatprep.subr.mxu0 %v2472
    %2788 = vmatpush1.msra.mxu0 %v2471
    %2789 = vmatprep.subr.mxu0 %v2474
    %2790 = vmatpush1.msra.mxu0 %v2473
    %2791 = vmatprep.subr.mxu0 %v2476
    %2792 = vmatpush1.msra.mxu0 %v2475
    %2793 = vmatprep.subr.mxu0 %v2478
    %2794 = vmatpush1.msra.mxu0 %v2477
    %2795 = vmatprep.subr.mxu0 %v2480
    %2796 = vmatpush1.msra.mxu0 %v2479
    %2797 = vmatprep.subr.mxu0 0.0
    %2798 = vmatpush1.msra.mxu0 0.0
    %2799 = vmatprep.subr.mxu0 0.0
    %2800 = vmatpush1.msra.mxu0 0.0
    %2801 = vmatprep.subr.mxu0 0.0
    %2802 = vmatpush1.msra.mxu0 0.0
    %2803 = vmatprep.subr.mxu0 0.0
    %2804 = vmatpush1.msra.mxu0 0.0
    %2805 = vmatprep.mubr.f32.mxu0 %v2732
    %2806 = vmatmul.mubr.f32.gmra.mrb[0].mxu0 %v2595
    %v2807 = vpop.f32.mrb[0].mxu0
    %v2808 = vadd.f32 %v2709, %v2807
    %v2809 = vpop.f32.mrb[0].mxu0
    %v2810 = vadd.f32 %v2711, %v2809
    %2811 = vmatprep.mubr.f32.mxu0 %v2734
    %2812 = vmatmul.mubr.f32.gmra.mrb[0].mxu0 %v2597
    %v2813 = vpop.f32.mrb[0].mxu0
    %v2814 = vadd.f32 %v2715, %v2813
    %v2815 = vpop.f32.mrb[0].mxu0
    %v2816 = vadd.f32 %v2717, %v2815
    %2817 = vmatprep.mubr.f32.mxu0 %v2736
    %2818 = vmatmul.mubr.f32.gmra.mrb[0].mxu0 %v2599
    %v2819 = vpop.f32.mrb[0].mxu0
    %v2820 = vadd.f32 %v2721, %v2819
    %v2821 = vpop.f32.mrb[0].mxu0
    %v2822 = vadd.f32 %v2723, %v2821
    %2823 = vmatprep.mubr.f32.mxu0 %v2739
    %2824 = vmatmul.mubr.f32.gmra.mrb[0].mxu0 %v2601
    %v2825 = vpop.f32.mrb[0].mxu0
    %v2826 = vadd.f32 %v2727, %v2825
    %v2827 = vpop.f32.mrb[0].mxu0
    %v2828 = vadd.f32 %v2729, %v2827
    %2829 = vdwg.mxu0
    %v2830 = vld [vmem:[#allocation5] sm:$0xfc]
    %v2831 = vld [vmem:[#allocation5 + $0x8] sm:$0xfc]
    %v2832 = vld [vmem:[#allocation5 + $0x30] sm:$0xff]
    %v2833 = vld [vmem:[#allocation5 + $0x38] sm:$0xff]
    %vm2838 = vcmask 1045504
    %v2839 = vrot.slane %v2830, 2
    %v2840 = vrot.slane %v2597, 2
    %v2841 = vsel %vm2838, %v2839, %v2840
    %v2842 = vrot.slane %v2831, 2
    %v2843 = vrot.slane %v2598, 2
    %v2844 = vsel %vm2838, %v2842, %v2843
    %v2845 = vrot.slane %v2599, 2
    %v2846 = vsel %vm2838, %v2840, %v2845
    %v2847 = vrot.slane %v2600, 2
    %v2848 = vsel %vm2838, %v2843, %v2847
    %v2849 = vrot.slane %v2832, 2
    %v2850 = vsel %vm2838, %v2845, %v2849
    %v2851 = vrot.slane %v2833, 2
    %v2852 = vsel %vm2838, %v2847, %v2851
    %v2857 = vsel %vm777, %v2844, 0
    %v2859 = vsel %vm777, %v2848, 0
    %v2861 = vsel %vm777, %v2852, 0
    %v2863 = vsel %vm777, %v2851, 0
    %2865 = vmatprep.subr.mxu0 %v2538
    %2866 = vmatpush1.msra.mxu0 %v2537
    %2867 = vmatprep.subr.mxu0 %v2540
    %2868 = vmatpush1.msra.mxu0 %v2539
    %2869 = vmatprep.subr.mxu0 %v2542
    %2870 = vmatpush1.msra.mxu0 %v2541
    %2871 = vmatprep.subr.mxu0 %v2544
    %2872 = vmatpush1.msra.mxu0 %v2543
    %2873 = vmatprep.subr.mxu0 %v2546
    %2874 = vmatpush1.msra.mxu0 %v2545
    %2875 = vmatprep.subr.mxu0 %v2548
    %2876 = vmatpush1.msra.mxu0 %v2547
    %2877 = vmatprep.subr.mxu0 %v2550
    %2878 = vmatpush1.msra.mxu0 %v2549
    %2879 = vmatprep.subr.mxu0 %v2552
    %2880 = vmatpush1.msra.mxu0 %v2551
    %2881 = vmatprep.subr.mxu0 %v2554
    %2882 = vmatpush1.msra.mxu0 %v2553
    %2883 = vmatprep.subr.mxu0 %v2556
    %2884 = vmatpush1.msra.mxu0 %v2555
    %2885 = vmatprep.subr.mxu0 %v2558
    %2886 = vmatpush1.msra.mxu0 %v2557
    %2887 = vmatprep.subr.mxu0 %v2560
    %2888 = vmatpush1.msra.mxu0 %v2559
    %2889 = vmatprep.subr.mxu0 %v2562
    %2890 = vmatpush1.msra.mxu0 %v2561
    %2891 = vmatprep.subr.mxu0 %v2564
    %2892 = vmatpush1.msra.mxu0 %v2563
    %2893 = vmatprep.subr.mxu0 %v2566
    %2894 = vmatpush1.msra.mxu0 %v2565
    %2895 = vmatprep.subr.mxu0 %v2568
    %2896 = vmatpush1.msra.mxu0 %v2567
    %2897 = vmatprep.subr.mxu0 %v2570
    %2898 = vmatpush1.msra.mxu0 %v2569
    %2899 = vmatprep.subr.mxu0 %v2572
    %2900 = vmatpush1.msra.mxu0 %v2571
    %2901 = vmatprep.subr.mxu0 %v2574
    %2902 = vmatpush1.msra.mxu0 %v2573
    %2903 = vmatprep.subr.mxu0 %v2576
    %2904 = vmatpush1.msra.mxu0 %v2575
    %2905 = vmatprep.subr.mxu0 %v2578
    %2906 = vmatpush1.msra.mxu0 %v2577
    %2907 = vmatprep.subr.mxu0 %v2580
    %2908 = vmatpush1.msra.mxu0 %v2579
    %2909 = vmatprep.subr.mxu0 %v2582
    %2910 = vmatpush1.msra.mxu0 %v2581
    %2911 = vmatprep.subr.mxu0 %v2584
    %2912 = vmatpush1.msra.mxu0 %v2583
    %2913 = vmatprep.subr.mxu0 %v2586
    %2914 = vmatpush1.msra.mxu0 %v2585
    %2915 = vmatprep.subr.mxu0 %v2588
    %2916 = vmatpush1.msra.mxu0 %v2587
    %2917 = vmatprep.subr.mxu0 %v2590
    %2918 = vmatpush1.msra.mxu0 %v2589
    %2919 = vmatprep.subr.mxu0 %v2592
    %2920 = vmatpush1.msra.mxu0 %v2591
    %2921 = vmatprep.subr.mxu0 0.0
    %2922 = vmatpush1.msra.mxu0 0.0
    %2923 = vmatprep.subr.mxu0 0.0
    %2924 = vmatpush1.msra.mxu0 0.0
    %2925 = vmatprep.subr.mxu0 0.0
    %2926 = vmatpush1.msra.mxu0 0.0
    %2927 = vmatprep.subr.mxu0 0.0
    %2928 = vmatpush1.msra.mxu0 0.0
    %2929 = vmatprep.mubr.f32.mxu0 %v2857
    %2930 = vmatmul.mubr.f32.gmra.mrb[0].mxu0 %v2841
    %v2931 = vpop.f32.mrb[0].mxu0
    %v2932 = vadd.f32 0.0, %v2931
    %v2933 = vpop.f32.mrb[0].mxu0
    %v2934 = vadd.f32 0.0, %v2933
    %2935 = vmatprep.mubr.f32.mxu0 %v2859
    %2936 = vmatmul.mubr.f32.gmra.mrb[0].mxu0 %v2846
    %v2937 = vpop.f32.mrb[0].mxu0
    %v2938 = vadd.f32 0.0, %v2937
    %v2939 = vpop.f32.mrb[0].mxu0
    %v2940 = vadd.f32 0.0, %v2939
    %2941 = vmatprep.mubr.f32.mxu0 %v2861
    %2942 = vmatmul.mubr.f32.gmra.mrb[0].mxu0 %v2850
    %v2943 = vpop.f32.mrb[0].mxu0
    %v2944 = vadd.f32 0.0, %v2943
    %v2945 = vpop.f32.mrb[0].mxu0
    %v2946 = vadd.f32 0.0, %v2945
    %2947 = vmatprep.mubr.f32.mxu0 %v2863
    %2948 = vmatmul.mubr.f32.gmra.mrb[0].mxu0 %v2849
    %v2949 = vpop.f32.mrb[0].mxu0
    %v2950 = vadd.f32 0.0, %v2949
    %v2951 = vpop.f32.mrb[0].mxu0
    %v2952 = vadd.f32 0.0, %v2951
    %2953 = vdwg.mxu0
    %v2954 = vadd.f32 %v2808, %v2932
    %v2955 = vadd.f32 %v2810, %v2934
    %v2956 = vadd.f32 %v2814, %v2938
    %v2957 = vadd.f32 %v2816, %v2940
    %v2958 = vadd.f32 %v2820, %v2944
    %v2959 = vadd.f32 %v2822, %v2946
    %v2960 = vadd.f32 %v2826, %v2950
    %v2961 = vadd.f32 %v2828, %v2952
    %v2962 = vmax.f32 %v2954, 0.0
    %v2963 = vmax.f32 %v2955, 0.0
    %v2964 = vmax.f32 %v2956, 0.0
    %v2965 = vmax.f32 %v2957, 0.0
    %v2966 = vmax.f32 %v2958, 0.0
    %v2967 = vmax.f32 %v2959, 0.0
    %v2968 = vmax.f32 %v2960, 0.0
    %v2969 = vmax.f32 %v2961, 0.0
    %v2971 = vlaneseq
    %v2972 = vshrl.u32 %v2971, 7
    %v2973 = vsub.s32 0, %v2972
    %v2974 = vrot.slane %v2593, %v2973
    %v2975 = vlaneseq
    %v2976 = vshrl.u32 %v2975, 7
    %v2977 = vsub.s32 1, %v2976
    %v2978 = vrot.slane %v2593, %v2977
    %v2981 = vmul.f32 %v2962, %v2974
    %v2982 = vmul.f32 %v2963, %v2978
    %v2983 = vmul.f32 %v2964, %v2974
    %v2984 = vmul.f32 %v2965, %v2978
    %v2985 = vmul.f32 %v2966, %v2974
    %v2986 = vmul.f32 %v2967, %v2978
    %v2987 = vmul.f32 %v2968, %v2974
    %v2988 = vmul.f32 %v2969, %v2978
    %v2990 = vlaneseq
    %v2991 = vshrl.u32 %v2990, 7
    %v2992 = vsub.s32 0, %v2991
    %v2993 = vrot.slane %v2594, %v2992
    %v2994 = vlaneseq
    %v2995 = vshrl.u32 %v2994, 7
    %v2996 = vsub.s32 1, %v2995
    %v2997 = vrot.slane %v2594, %v2996
    %v3000 = vadd.f32 %v2981, %v2993
    %v3001 = vadd.f32 %v2982, %v2997
    %v3002 = vadd.f32 %v2983, %v2993
    %v3003 = vadd.f32 %v2984, %v2997
    %v3004 = vadd.f32 %v2985, %v2993
    %v3005 = vadd.f32 %v2986, %v2997
    %v3006 = vadd.f32 %v2987, %v2993
    %v3007 = vadd.f32 %v2988, %v2997
    %v3012 = vrot.slane %v3000, 7
    %v3013 = vrot.slane %v3001, 7
    %v3014 = vrot.slane %v3002, 7
    %v3015 = vsel %vm2390, %v3012, %v3014
    %v3016 = vrot.slane %v3003, 7
    %v3017 = vsel %vm2390, %v3013, %v3016
    %3022 = vst [vmem:[#allocation6] sm:$0xfe] %v3012
    %3023 = vst.msk [vmem:[#allocation6 + $0x8] sm:$0xfe] %vm2402, %v3013
    %3024 = vst [vmem:[#allocation6 + $0x10] sm:$0x7f] %v3015
    %3025 = vst.msk [vmem:[#allocation6 + $0x18] sm:$0x7f] %vm2405, %v3017
    %v3030 = vrot.slane %v3004, 7
    %v3031 = vrot.slane %v3005, 7
    %v3032 = vrot.slane %v3006, 7
    %v3033 = vsel %vm2390, %v3030, %v3032
    %v3034 = vrot.slane %v3007, 7
    %v3035 = vsel %vm2390, %v3031, %v3034
    %3040 = vst [vmem:[#allocation6 + $0x20] sm:$0xfe] %v3030
    %3041 = vst.msk [vmem:[#allocation6 + $0x28] sm:$0xfe] %vm2402, %v3031
    %3042 = vst [vmem:[#allocation6 + $0x30] sm:$0x7f] %v3033
    %3043 = vst.msk [vmem:[#allocation6 + $0x38] sm:$0x7f] %vm2405, %v3035
    %v3044 = vld [vmem:[#allocation44] sm:$0xff]
    %v3045 = vld [vmem:[#allocation44 + $0x8] sm:$0xff]
    %v3046 = vld [vmem:[#allocation44 + $0x10] sm:$0xff]
    %v3047 = vld [vmem:[#allocation44 + $0x18] sm:$0xff]
    %v3048 = vld [vmem:[#allocation44 + $0x20] sm:$0xff]
    %v3049 = vld [vmem:[#allocation44 + $0x28] sm:$0xff]
    %v3050 = vld [vmem:[#allocation44 + $0x30] sm:$0xff]
    %v3051 = vld [vmem:[#allocation44 + $0x38] sm:$0xff]
    %v3052 = vld [vmem:[#allocation44 + $0x40] sm:$0xff]
    %v3053 = vld [vmem:[#allocation44 + $0x48] sm:$0xff]
    %v3054 = vld [vmem:[#allocation44 + $0x50] sm:$0xff]
    %v3055 = vld [vmem:[#allocation44 + $0x58] sm:$0xff]
    %v3056 = vld [vmem:[#allocation44 + $0x60] sm:$0xff]
    %v3057 = vld [vmem:[#allocation44 + $0x68] sm:$0xff]
    %v3058 = vld [vmem:[#allocation44 + $0x70] sm:$0xff]
    %v3059 = vld [vmem:[#allocation44 + $0x78] sm:$0xff]
    %v3060 = vld [vmem:[#allocation44 + $0x80] sm:$0xff]
    %v3061 = vld [vmem:[#allocation44 + $0x88] sm:$0xff]
    %v3062 = vld [vmem:[#allocation44 + $0x90] sm:$0xff]
    %v3063 = vld [vmem:[#allocation44 + $0x98] sm:$0xff]
    %v3064 = vld [vmem:[#allocation44 + $0xa0] sm:$0xff]
    %v3065 = vld [vmem:[#allocation44 + $0xa8] sm:$0xff]
    %v3066 = vld [vmem:[#allocation44 + $0xb0] sm:$0xff]
    %v3067 = vld [vmem:[#allocation44 + $0xb8] sm:$0xff]
    %v3068 = vld [vmem:[#allocation44 + $0xc0] sm:$0xff]
    %v3069 = vld [vmem:[#allocation44 + $0xc8] sm:$0xff]
    %v3070 = vld [vmem:[#allocation44 + $0xd0] sm:$0xff]
    %v3071 = vld [vmem:[#allocation44 + $0xd8] sm:$0xff]
    %v3072 = vld [vmem:[#allocation46] sm:$0xff]
    %v3073 = vld [vmem:[#allocation46 + $0x8] sm:$0xff]
    %v3074 = vld [vmem:[#allocation46 + $0x10] sm:$0xff]
    %v3075 = vld [vmem:[#allocation46 + $0x18] sm:$0xff]
    %v3076 = vld [vmem:[#allocation46 + $0x20] sm:$0xff]
    %v3077 = vld [vmem:[#allocation46 + $0x28] sm:$0xff]
    %v3078 = vld [vmem:[#allocation46 + $0x30] sm:$0xff]
    %v3079 = vld [vmem:[#allocation46 + $0x38] sm:$0xff]
    %v3080 = vld [vmem:[#allocation46 + $0x40] sm:$0xff]
    %v3081 = vld [vmem:[#allocation46 + $0x48] sm:$0xff]
    %v3082 = vld [vmem:[#allocation46 + $0x50] sm:$0xff]
    %v3083 = vld [vmem:[#allocation46 + $0x58] sm:$0xff]
    %v3084 = vld [vmem:[#allocation46 + $0x60] sm:$0xff]
    %v3085 = vld [vmem:[#allocation46 + $0x68] sm:$0xff]
    %v3086 = vld [vmem:[#allocation46 + $0x70] sm:$0xff]
    %v3087 = vld [vmem:[#allocation46 + $0x78] sm:$0xff]
    %v3088 = vld [vmem:[#allocation46 + $0x80] sm:$0xff]
    %v3089 = vld [vmem:[#allocation46 + $0x88] sm:$0xff]
    %v3090 = vld [vmem:[#allocation46 + $0x90] sm:$0xff]
    %v3091 = vld [vmem:[#allocation46 + $0x98] sm:$0xff]
    %v3092 = vld [vmem:[#allocation46 + $0xa0] sm:$0xff]
    %v3093 = vld [vmem:[#allocation46 + $0xa8] sm:$0xff]
    %v3094 = vld [vmem:[#allocation46 + $0xb0] sm:$0xff]
    %v3095 = vld [vmem:[#allocation46 + $0xb8] sm:$0xff]
    %v3096 = vld [vmem:[#allocation46 + $0xc0] sm:$0xff]
    %v3097 = vld [vmem:[#allocation46 + $0xc8] sm:$0xff]
    %v3098 = vld [vmem:[#allocation46 + $0xd0] sm:$0xff]
    %v3099 = vld [vmem:[#allocation46 + $0xd8] sm:$0xff]
    %v3100 = vld [vmem:[#allocation47] sm:$0xff]
    %v3101 = vld [vmem:[#allocation47 + $0x8] sm:$0xff]
    %v3102 = vld [vmem:[#allocation47 + $0x10] sm:$0xff]
    %v3103 = vld [vmem:[#allocation47 + $0x18] sm:$0xff]
    %v3104 = vld [vmem:[#allocation47 + $0x20] sm:$0xff]
    %v3105 = vld [vmem:[#allocation47 + $0x28] sm:$0xff]
    %v3106 = vld [vmem:[#allocation47 + $0x30] sm:$0xff]
    %v3107 = vld [vmem:[#allocation47 + $0x38] sm:$0xff]
    %v3108 = vld [vmem:[#allocation47 + $0x40] sm:$0xff]
    %v3109 = vld [vmem:[#allocation47 + $0x48] sm:$0xff]
    %v3110 = vld [vmem:[#allocation47 + $0x50] sm:$0xff]
    %v3111 = vld [vmem:[#allocation47 + $0x58] sm:$0xff]
    %v3112 = vld [vmem:[#allocation47 + $0x60] sm:$0xff]
    %v3113 = vld [vmem:[#allocation47 + $0x68] sm:$0xff]
    %v3114 = vld [vmem:[#allocation47 + $0x70] sm:$0xff]
    %v3115 = vld [vmem:[#allocation47 + $0x78] sm:$0xff]
    %v3116 = vld [vmem:[#allocation47 + $0x80] sm:$0xff]
    %v3117 = vld [vmem:[#allocation47 + $0x88] sm:$0xff]
    %v3118 = vld [vmem:[#allocation47 + $0x90] sm:$0xff]
    %v3119 = vld [vmem:[#allocation47 + $0x98] sm:$0xff]
    %v3120 = vld [vmem:[#allocation47 + $0xa0] sm:$0xff]
    %v3121 = vld [vmem:[#allocation47 + $0xa8] sm:$0xff]
    %v3122 = vld [vmem:[#allocation47 + $0xb0] sm:$0xff]
    %v3123 = vld [vmem:[#allocation47 + $0xb8] sm:$0xff]
    %v3124 = vld [vmem:[#allocation47 + $0xc0] sm:$0xff]
    %v3125 = vld [vmem:[#allocation47 + $0xc8] sm:$0xff]
    %v3126 = vld [vmem:[#allocation47 + $0xd0] sm:$0xff]
    %v3127 = vld [vmem:[#allocation47 + $0xd8] sm:$0xff]
    %v3128 = vld [vmem:[%s59] sm:$0x1]
    %v3129 = vld [vmem:[%s61] sm:$0x1]
    %v3130 = vld [vmem:[#allocation6] sm:$0xff]
    %v3131 = vld [vmem:[#allocation6 + $0x8] sm:$0xff]
    %v3132 = vld [vmem:[#allocation6 + $0x10] sm:$0xff]
    %v3133 = vld [vmem:[#allocation6 + $0x18] sm:$0xff]
    %v3134 = vld [vmem:[#allocation6 + $0x20] sm:$0xff]
    %v3135 = vld [vmem:[#allocation6 + $0x28] sm:$0xff]
    %v3136 = vld [vmem:[#allocation6 + $0x30] sm:$0x1f]
    %v3137 = vld [vmem:[#allocation6 + $0x38] sm:$0x1f]
    %v3138 = vld [vmem:[#allocation6] sm:$0xfe]
    %v3139 = vld [vmem:[#allocation6 + $0x8] sm:$0xfe]
    %v3140 = vld [vmem:[#allocation6 + $0x30] sm:$0x3f]
    %v3141 = vld [vmem:[#allocation6 + $0x38] sm:$0x3f]
    %v3150 = vrot.slane %v3138, 1
    %v3151 = vrot.slane %v3132, 1
    %v3152 = vsel %vm2615, %v3150, %v3151
    %v3153 = vrot.slane %v3139, 1
    %v3154 = vrot.slane %v3133, 1
    %v3155 = vsel %vm2615, %v3153, %v3154
    %v3156 = vrot.slane %v3134, 1
    %v3157 = vsel %vm2615, %v3151, %v3156
    %v3158 = vrot.slane %v3135, 1
    %v3159 = vsel %vm2615, %v3154, %v3158
    %v3160 = vrot.slane %v3140, 1
    %v3161 = vsel %vm2615, %v3156, %v3160
    %v3162 = vrot.slane %v3141, 1
    %v3163 = vsel %vm2615, %v3158, %v3162
    %v3168 = vsel %vm777, %v3155, 0
    %v3170 = vsel %vm777, %v3159, 0
    %v3172 = vsel %vm777, %v3163, 0
    %v3174 = vsel %vm777, %v3162, 0
    %3176 = vmatprep.subr.mxu0 0.0
    %3177 = vmatpush1.msra.mxu0 %v3072
    %3178 = vmatprep.subr.mxu0 0.0
    %3179 = vmatpush1.msra.mxu0 %v3073
    %3180 = vmatprep.subr.mxu0 0.0
    %3181 = vmatpush1.msra.mxu0 %v3074
    %3182 = vmatprep.subr.mxu0 0.0
    %3183 = vmatpush1.msra.mxu0 %v3075
    %3184 = vmatprep.subr.mxu0 0.0
    %3185 = vmatpush1.msra.mxu0 %v3076
    %3186 = vmatprep.subr.mxu0 0.0
    %3187 = vmatpush1.msra.mxu0 %v3077
    %3188 = vmatprep.subr.mxu0 0.0
    %3189 = vmatpush1.msra.mxu0 %v3078
    %3190 = vmatprep.subr.mxu0 0.0
    %3191 = vmatpush1.msra.mxu0 %v3079
    %3192 = vmatprep.subr.mxu0 0.0
    %3193 = vmatpush1.msra.mxu0 %v3080
    %3194 = vmatprep.subr.mxu0 0.0
    %3195 = vmatpush1.msra.mxu0 %v3081
    %3196 = vmatprep.subr.mxu0 0.0
    %3197 = vmatpush1.msra.mxu0 %v3082
    %3198 = vmatprep.subr.mxu0 0.0
    %3199 = vmatpush1.msra.mxu0 %v3083
    %3200 = vmatprep.subr.mxu0 0.0
    %3201 = vmatpush1.msra.mxu0 %v3084
    %3202 = vmatprep.subr.mxu0 0.0
    %3203 = vmatpush1.msra.mxu0 %v3085
    %3204 = vmatprep.subr.mxu0 0.0
    %3205 = vmatpush1.msra.mxu0 %v3086
    %3206 = vmatprep.subr.mxu0 0.0
    %3207 = vmatpush1.msra.mxu0 %v3087
    %3208 = vmatprep.subr.mxu0 0.0
    %3209 = vmatpush1.msra.mxu0 %v3088
    %3210 = vmatprep.subr.mxu0 0.0
    %3211 = vmatpush1.msra.mxu0 %v3089
    %3212 = vmatprep.subr.mxu0 0.0
    %3213 = vmatpush1.msra.mxu0 %v3090
    %3214 = vmatprep.subr.mxu0 0.0
    %3215 = vmatpush1.msra.mxu0 %v3091
    %3216 = vmatprep.subr.mxu0 0.0
    %3217 = vmatpush1.msra.mxu0 %v3092
    %3218 = vmatprep.subr.mxu0 0.0
    %3219 = vmatpush1.msra.mxu0 %v3093
    %3220 = vmatprep.subr.mxu0 0.0
    %3221 = vmatpush1.msra.mxu0 %v3094
    %3222 = vmatprep.subr.mxu0 0.0
    %3223 = vmatpush1.msra.mxu0 %v3095
    %3224 = vmatprep.subr.mxu0 0.0
    %3225 = vmatpush1.msra.mxu0 %v3096
    %3226 = vmatprep.subr.mxu0 0.0
    %3227 = vmatpush1.msra.mxu0 %v3097
    %3228 = vmatprep.subr.mxu0 0.0
    %3229 = vmatpush1.msra.mxu0 %v3098
    %3230 = vmatprep.subr.mxu0 0.0
    %3231 = vmatpush1.msra.mxu0 %v3099
    %3232 = vmatprep.subr.mxu0 0.0
    %3233 = vmatpush1.msra.mxu0 0.0
    %3234 = vmatprep.subr.mxu0 0.0
    %3235 = vmatpush1.msra.mxu0 0.0
    %3236 = vmatprep.subr.mxu0 0.0
    %3237 = vmatpush1.msra.mxu0 0.0
    %3238 = vmatprep.subr.mxu0 0.0
    %3239 = vmatpush1.msra.mxu0 0.0
    %3240 = vmatprep.mubr.f32.mxu0 %v3168
    %3241 = vmatmul.mubr.f32.gmra.mrb[0].mxu0 %v3152
    %v3242 = vpop.f32.mrb[0].mxu0
    %v3243 = vadd.f32 0.0, %v3242
    %v3244 = vpop.f32.mrb[0].mxu0
    %3245 = vmatprep.mubr.f32.mxu0 %v3170
    %3246 = vmatmul.mubr.f32.gmra.mrb[0].mxu0 %v3157
    %v3247 = vpop.f32.mrb[0].mxu0
    %v3248 = vadd.f32 0.0, %v3247
    %v3249 = vpop.f32.mrb[0].mxu0
    %3250 = vmatprep.mubr.f32.mxu0 %v3172
    %3251 = vmatmul.mubr.f32.gmra.mrb[0].mxu0 %v3161
    %v3252 = vpop.f32.mrb[0].mxu0
    %v3253 = vadd.f32 0.0, %v3252
    %v3254 = vpop.f32.mrb[0].mxu0
    %3255 = vmatprep.mubr.f32.mxu0 %v3174
    %3256 = vmatmul.mubr.f32.gmra.mrb[0].mxu0 %v3160
    %v3257 = vpop.f32.mrb[0].mxu0
    %v3258 = vadd.f32 0.0, %v3257
    %v3259 = vpop.f32.mrb[0].mxu0
    %3260 = vdwg.mxu0
    %v3262 = vsel %vm777, %v3131, 0
    %v3264 = vsel %vm777, %v3133, 0
    %v3266 = vsel %vm777, %v3135, 0
    %v3269 = vsel %vm777, %v3137, 0
    %3271 = vmatprep.subr.mxu0 0.0
    %3272 = vmatpush1.msra.mxu0 %v3044
    %3273 = vmatprep.subr.mxu0 0.0
    %3274 = vmatpush1.msra.mxu0 %v3045
    %3275 = vmatprep.subr.mxu0 0.0
    %3276 = vmatpush1.msra.mxu0 %v3046
    %3277 = vmatprep.subr.mxu0 0.0
    %3278 = vmatpush1.msra.mxu0 %v3047
    %3279 = vmatprep.subr.mxu0 0.0
    %3280 = vmatpush1.msra.mxu0 %v3048
    %3281 = vmatprep.subr.mxu0 0.0
    %3282 = vmatpush1.msra.mxu0 %v3049
    %3283 = vmatprep.subr.mxu0 0.0
    %3284 = vmatpush1.msra.mxu0 %v3050
    %3285 = vmatprep.subr.mxu0 0.0
    %3286 = vmatpush1.msra.mxu0 %v3051
    %3287 = vmatprep.subr.mxu0 0.0
    %3288 = vmatpush1.msra.mxu0 %v3052
    %3289 = vmatprep.subr.mxu0 0.0
    %3290 = vmatpush1.msra.mxu0 %v3053
    %3291 = vmatprep.subr.mxu0 0.0
    %3292 = vmatpush1.msra.mxu0 %v3054
    %3293 = vmatprep.subr.mxu0 0.0
    %3294 = vmatpush1.msra.mxu0 %v3055
    %3295 = vmatprep.subr.mxu0 0.0
    %3296 = vmatpush1.msra.mxu0 %v3056
    %3297 = vmatprep.subr.mxu0 0.0
    %3298 = vmatpush1.msra.mxu0 %v3057
    %3299 = vmatprep.subr.mxu0 0.0
    %3300 = vmatpush1.msra.mxu0 %v3058
    %3301 = vmatprep.subr.mxu0 0.0
    %3302 = vmatpush1.msra.mxu0 %v3059
    %3303 = vmatprep.subr.mxu0 0.0
    %3304 = vmatpush1.msra.mxu0 %v3060
    %3305 = vmatprep.subr.mxu0 0.0
    %3306 = vmatpush1.msra.mxu0 %v3061
    %3307 = vmatprep.subr.mxu0 0.0
    %3308 = vmatpush1.msra.mxu0 %v3062
    %3309 = vmatprep.subr.mxu0 0.0
    %3310 = vmatpush1.msra.mxu0 %v3063
    %3311 = vmatprep.subr.mxu0 0.0
    %3312 = vmatpush1.msra.mxu0 %v3064
    %3313 = vmatprep.subr.mxu0 0.0
    %3314 = vmatpush1.msra.mxu0 %v3065
    %3315 = vmatprep.subr.mxu0 0.0
    %3316 = vmatpush1.msra.mxu0 %v3066
    %3317 = vmatprep.subr.mxu0 0.0
    %3318 = vmatpush1.msra.mxu0 %v3067
    %3319 = vmatprep.subr.mxu0 0.0
    %3320 = vmatpush1.msra.mxu0 %v3068
    %3321 = vmatprep.subr.mxu0 0.0
    %3322 = vmatpush1.msra.mxu0 %v3069
    %3323 = vmatprep.subr.mxu0 0.0
    %3324 = vmatpush1.msra.mxu0 %v3070
    %3325 = vmatprep.subr.mxu0 0.0
    %3326 = vmatpush1.msra.mxu0 %v3071
    %3327 = vmatprep.subr.mxu0 0.0
    %3328 = vmatpush1.msra.mxu0 0.0
    %3329 = vmatprep.subr.mxu0 0.0
    %3330 = vmatpush1.msra.mxu0 0.0
    %3331 = vmatprep.subr.mxu0 0.0
    %3332 = vmatpush1.msra.mxu0 0.0
    %3333 = vmatprep.subr.mxu0 0.0
    %3334 = vmatpush1.msra.mxu0 0.0
    %3335 = vmatprep.mubr.f32.mxu0 %v3262
    %3336 = vmatmul.mubr.f32.gmra.mrb[0].mxu0 %v3130
    %v3337 = vpop.f32.mrb[0].mxu0
    %v3338 = vadd.f32 %v3243, %v3337
    %v3339 = vpop.f32.mrb[0].mxu0
    %3340 = vmatprep.mubr.f32.mxu0 %v3264
    %3341 = vmatmul.mubr.f32.gmra.mrb[0].mxu0 %v3132
    %v3342 = vpop.f32.mrb[0].mxu0
    %v3343 = vadd.f32 %v3248, %v3342
    %v3344 = vpop.f32.mrb[0].mxu0
    %3345 = vmatprep.mubr.f32.mxu0 %v3266
    %3346 = vmatmul.mubr.f32.gmra.mrb[0].mxu0 %v3134
    %v3347 = vpop.f32.mrb[0].mxu0
    %v3348 = vadd.f32 %v3253, %v3347
    %v3349 = vpop.f32.mrb[0].mxu0
    %3350 = vmatprep.mubr.f32.mxu0 %v3269
    %3351 = vmatmul.mubr.f32.gmra.mrb[0].mxu0 %v3136
    %v3352 = vpop.f32.mrb[0].mxu0
    %v3353 = vadd.f32 %v3258, %v3352
    %v3354 = vpop.f32.mrb[0].mxu0
    %3355 = vdwg.mxu0
    %v3356 = vld [vmem:[#allocation6] sm:$0xfc]
    %v3357 = vld [vmem:[#allocation6 + $0x8] sm:$0xfc]
    %v3358 = vld [vmem:[#allocation6 + $0x30] sm:$0x7f]
    %v3359 = vld [vmem:[#allocation6 + $0x38] sm:$0x7f]
    %v3364 = vrot.slane %v3356, 2
    %v3365 = vrot.slane %v3132, 2
    %v3366 = vsel %vm2838, %v3364, %v3365
    %v3367 = vrot.slane %v3357, 2
    %v3368 = vrot.slane %v3133, 2
    %v3369 = vsel %vm2838, %v3367, %v3368
    %v3370 = vrot.slane %v3134, 2
    %v3371 = vsel %vm2838, %v3365, %v3370
    %v3372 = vrot.slane %v3135, 2
    %v3373 = vsel %vm2838, %v3368, %v3372
    %v3374 = vrot.slane %v3358, 2
    %v3375 = vsel %vm2838, %v3370, %v3374
    %v3376 = vrot.slane %v3359, 2
    %v3377 = vsel %vm2838, %v3372, %v3376
    %v3382 = vsel %vm777, %v3369, 0
    %v3384 = vsel %vm777, %v3373, 0
    %v3386 = vsel %vm777, %v3377, 0
    %v3388 = vsel %vm777, %v3376, 0
    %3390 = vmatprep.subr.mxu0 0.0
    %3391 = vmatpush1.msra.mxu0 %v3100
    %3392 = vmatprep.subr.mxu0 0.0
    %3393 = vmatpush1.msra.mxu0 %v3101
    %3394 = vmatprep.subr.mxu0 0.0
    %3395 = vmatpush1.msra.mxu0 %v3102
    %3396 = vmatprep.subr.mxu0 0.0
    %3397 = vmatpush1.msra.mxu0 %v3103
    %3398 = vmatprep.subr.mxu0 0.0
    %3399 = vmatpush1.msra.mxu0 %v3104
    %3400 = vmatprep.subr.mxu0 0.0
    %3401 = vmatpush1.msra.mxu0 %v3105
    %3402 = vmatprep.subr.mxu0 0.0
    %3403 = vmatpush1.msra.mxu0 %v3106
    %3404 = vmatprep.subr.mxu0 0.0
    %3405 = vmatpush1.msra.mxu0 %v3107
    %3406 = vmatprep.subr.mxu0 0.0
    %3407 = vmatpush1.msra.mxu0 %v3108
    %3408 = vmatprep.subr.mxu0 0.0
    %3409 = vmatpush1.msra.mxu0 %v3109
    %3410 = vmatprep.subr.mxu0 0.0
    %3411 = vmatpush1.msra.mxu0 %v3110
    %3412 = vmatprep.subr.mxu0 0.0
    %3413 = vmatpush1.msra.mxu0 %v3111
    %3414 = vmatprep.subr.mxu0 0.0
    %3415 = vmatpush1.msra.mxu0 %v3112
    %3416 = vmatprep.subr.mxu0 0.0
    %3417 = vmatpush1.msra.mxu0 %v3113
    %3418 = vmatprep.subr.mxu0 0.0
    %3419 = vmatpush1.msra.mxu0 %v3114
    %3420 = vmatprep.subr.mxu0 0.0
    %3421 = vmatpush1.msra.mxu0 %v3115
    %3422 = vmatprep.subr.mxu0 0.0
    %3423 = vmatpush1.msra.mxu0 %v3116
    %3424 = vmatprep.subr.mxu0 0.0
    %3425 = vmatpush1.msra.mxu0 %v3117
    %3426 = vmatprep.subr.mxu0 0.0
    %3427 = vmatpush1.msra.mxu0 %v3118
    %3428 = vmatprep.subr.mxu0 0.0
    %3429 = vmatpush1.msra.mxu0 %v3119
    %3430 = vmatprep.subr.mxu0 0.0
    %3431 = vmatpush1.msra.mxu0 %v3120
    %3432 = vmatprep.subr.mxu0 0.0
    %3433 = vmatpush1.msra.mxu0 %v3121
    %3434 = vmatprep.subr.mxu0 0.0
    %3435 = vmatpush1.msra.mxu0 %v3122
    %3436 = vmatprep.subr.mxu0 0.0
    %3437 = vmatpush1.msra.mxu0 %v3123
    %3438 = vmatprep.subr.mxu0 0.0
    %3439 = vmatpush1.msra.mxu0 %v3124
    %3440 = vmatprep.subr.mxu0 0.0
    %3441 = vmatpush1.msra.mxu0 %v3125
    %3442 = vmatprep.subr.mxu0 0.0
    %3443 = vmatpush1.msra.mxu0 %v3126
    %3444 = vmatprep.subr.mxu0 0.0
    %3445 = vmatpush1.msra.mxu0 %v3127
    %3446 = vmatprep.subr.mxu0 0.0
    %3447 = vmatpush1.msra.mxu0 0.0
    %3448 = vmatprep.subr.mxu0 0.0
    %3449 = vmatpush1.msra.mxu0 0.0
    %3450 = vmatprep.subr.mxu0 0.0
    %3451 = vmatpush1.msra.mxu0 0.0
    %3452 = vmatprep.subr.mxu0 0.0
    %3453 = vmatpush1.msra.mxu0 0.0
    %3454 = vmatprep.mubr.f32.mxu0 %v3382
    %3455 = vmatmul.mubr.f32.gmra.mrb[0].mxu0 %v3366
    %v3456 = vpop.f32.mrb[0].mxu0
    %v3457 = vadd.f32 0.0, %v3456
    %v3458 = vpop.f32.mrb[0].mxu0
    %3459 = vmatprep.mubr.f32.mxu0 %v3384
    %3460 = vmatmul.mubr.f32.gmra.mrb[0].mxu0 %v3371
    %v3461 = vpop.f32.mrb[0].mxu0
    %v3462 = vadd.f32 0.0, %v3461
    %v3463 = vpop.f32.mrb[0].mxu0
    %3464 = vmatprep.mubr.f32.mxu0 %v3386
    %3465 = vmatmul.mubr.f32.gmra.mrb[0].mxu0 %v3375
    %v3466 = vpop.f32.mrb[0].mxu0
    %v3467 = vadd.f32 0.0, %v3466
    %v3468 = vpop.f32.mrb[0].mxu0
    %3469 = vmatprep.mubr.f32.mxu0 %v3388
    %3470 = vmatmul.mubr.f32.gmra.mrb[0].mxu0 %v3374
    %v3471 = vpop.f32.mrb[0].mxu0
    %v3472 = vadd.f32 0.0, %v3471
    %v3473 = vpop.f32.mrb[0].mxu0
    %3474 = vdwg.mxu0
    %v3475 = vadd.f32 %v3338, %v3457
    %v3476 = vadd.f32 %v3343, %v3462
    %v3477 = vadd.f32 %v3348, %v3467
    %v3478 = vadd.f32 %v3353, %v3472
    %v3479 = vmax.f32 %v3475, 0.0
    %v3480 = vmax.f32 %v3476, 0.0
    %v3481 = vmax.f32 %v3477, 0.0
    %v3482 = vmax.f32 %v3478, 0.0
    %v3484 = vlaneseq
    %v3485 = vshrl.u32 %v3484, 7
    %v3486 = vsub.s32 0, %v3485
    %v3487 = vrot.slane %v3128, %v3486
    %v3489 = vmul.f32 %v3479, %v3487
    %v3490 = vmul.f32 %v3480, %v3487
    %v3491 = vmul.f32 %v3481, %v3487
    %v3492 = vmul.f32 %v3482, %v3487
    %v3494 = vlaneseq
    %v3495 = vshrl.u32 %v3494, 7
    %v3496 = vsub.s32 0, %v3495
    %v3497 = vrot.slane %v3129, %v3496
    %v3499 = vadd.f32 %v3489, %v3497
    %v3500 = vadd.f32 %v3490, %v3497
    %v3501 = vadd.f32 %v3491, %v3497
    %v3502 = vadd.f32 %v3492, %v3497
    %v3504 = vrot.slane %v3499, 1
    %v3506 = vrot.slane %v3499, 2
    %v3508 = vrot.slane %v3499, 3
    %v3511 = vrot.slane %v3500, 4
    %v3513 = vrot.slane %v3500, 5
    %v3515 = vrot.slane %v3500, 6
    %v3517 = vsel %vm2390, %v3499, %v3504
    %vm3518 = vcmask 1041408
    %v3519 = vsel %vm3518, %v3517, %v3506
    %vm3520 = vcmask 1042432
    %v3521 = vsel %vm3520, %v3519, %v3508
    %vm3522 = vcmask 1043456
    %v3523 = vsel %vm3522, %v3521, %v3511
    %vm3524 = vcmask 1044480
    %v3525 = vsel %vm3524, %v3523, %v3513
    %v3526 = vsel %vm2838, %v3525, %v3515
    %vm3527 = vcmask 915456
    %3528 = vst.msk [vmem:[#allocation7 + $0x1] sm:$0x7f] %vm3527, %v3526
    %v3530 = vrot.slane %v3501, 1
    %v3532 = vrot.slane %v3501, 2
    %v3534 = vrot.slane %v3501, 3
    %v3537 = vrot.slane %v3502, 4
    %v3539 = vrot.slane %v3502, 5
    %v3541 = vrot.slane %v3502, 6
    %v3543 = vsel %vm2390, %v3501, %v3530
    %v3544 = vsel %vm3518, %v3543, %v3532
    %v3545 = vsel %vm3520, %v3544, %v3534
    %v3546 = vsel %vm3522, %v3545, %v3537
    %v3547 = vsel %vm3524, %v3546, %v3539
    %v3548 = vsel %vm2838, %v3547, %v3541
    %3549 = vst.msk [vmem:[#allocation7 + $0xa] sm:$0x7f] %vm3527, %v3548
    %v3550 = vld [vmem:[#allocation49] sm:$0xff]
    %v3551 = vld [vmem:[#allocation49 + $0x8] sm:$0xff]
    %v3552 = vld [vmem:[#allocation49 + $0x10] sm:$0xff]
    %v3553 = vld [vmem:[#allocation49 + $0x18] sm:$0xff]
    %v3554 = vld [vmem:[#allocation49 + $0x20] sm:$0xff]
    %v3555 = vld [vmem:[#allocation49 + $0x28] sm:$0xff]
    %v3556 = vld [vmem:[#allocation49 + $0x30] sm:$0xff]
    %v3557 = vld [vmem:[#allocation49 + $0x38] sm:$0xff]
    %v3558 = vld [vmem:[#allocation49 + $0x40] sm:$0xff]
    %v3559 = vld [vmem:[#allocation49 + $0x48] sm:$0xff]
    %v3560 = vld [vmem:[#allocation49 + $0x50] sm:$0xff]
    %v3561 = vld [vmem:[#allocation49 + $0x58] sm:$0xff]
    %v3562 = vld [vmem:[#allocation49 + $0x60] sm:$0xff]
    %v3563 = vld [vmem:[#allocation49 + $0x68] sm:$0xff]
    %v3564 = vld [vmem:[#allocation49 + $0x70] sm:$0xff]
    %v3565 = vld [vmem:[#allocation49 + $0x78] sm:$0xff]
    %v3566 = vld [vmem:[#allocation49 + $0x80] sm:$0xff]
    %v3567 = vld [vmem:[#allocation49 + $0x88] sm:$0xff]
    %v3568 = vld [vmem:[#allocation49 + $0x90] sm:$0xff]
    %v3569 = vld [vmem:[#allocation49 + $0x98] sm:$0xff]
    %v3570 = vld [vmem:[#allocation49 + $0xa0] sm:$0xff]
    %v3571 = vld [vmem:[#allocation49 + $0xa8] sm:$0xff]
    %v3572 = vld [vmem:[#allocation49 + $0xb0] sm:$0xff]
    %v3573 = vld [vmem:[#allocation49 + $0xb8] sm:$0xff]
    %v3574 = vld [vmem:[#allocation49 + $0xc0] sm:$0xff]
    %v3575 = vld [vmem:[#allocation49 + $0xc8] sm:$0xff]
    %v3576 = vld [vmem:[#allocation49 + $0xd0] sm:$0xff]
    %v3577 = vld [vmem:[#allocation49 + $0xd8] sm:$0xff]
    %v3578 = vld [vmem:[#allocation50] sm:$0xff]
    %v3579 = vld [vmem:[#allocation50 + $0x8] sm:$0xff]
    %v3580 = vld [vmem:[#allocation50 + $0x10] sm:$0xff]
    %v3581 = vld [vmem:[#allocation50 + $0x18] sm:$0xff]
    %v3582 = vld [vmem:[#allocation50 + $0x20] sm:$0xff]
    %v3583 = vld [vmem:[#allocation50 + $0x28] sm:$0xff]
    %v3584 = vld [vmem:[#allocation50 + $0x30] sm:$0xff]
    %v3585 = vld [vmem:[#allocation50 + $0x38] sm:$0xff]
    %v3586 = vld [vmem:[#allocation50 + $0x40] sm:$0xff]
    %v3587 = vld [vmem:[#allocation50 + $0x48] sm:$0xff]
    %v3588 = vld [vmem:[#allocation50 + $0x50] sm:$0xff]
    %v3589 = vld [vmem:[#allocation50 + $0x58] sm:$0xff]
    %v3590 = vld [vmem:[#allocation50 + $0x60] sm:$0xff]
    %v3591 = vld [vmem:[#allocation50 + $0x68] sm:$0xff]
    %v3592 = vld [vmem:[#allocation50 + $0x70] sm:$0xff]
    %v3593 = vld [vmem:[#allocation50 + $0x78] sm:$0xff]
    %v3594 = vld [vmem:[#allocation50 + $0x80] sm:$0xff]
    %v3595 = vld [vmem:[#allocation50 + $0x88] sm:$0xff]
    %v3596 = vld [vmem:[#allocation50 + $0x90] sm:$0xff]
    %v3597 = vld [vmem:[#allocation50 + $0x98] sm:$0xff]
    %v3598 = vld [vmem:[#allocation50 + $0xa0] sm:$0xff]
    %v3599 = vld [vmem:[#allocation50 + $0xa8] sm:$0xff]
    %v3600 = vld [vmem:[#allocation50 + $0xb0] sm:$0xff]
    %v3601 = vld [vmem:[#allocation50 + $0xb8] sm:$0xff]
    %v3602 = vld [vmem:[#allocation50 + $0xc0] sm:$0xff]
    %v3603 = vld [vmem:[#allocation50 + $0xc8] sm:$0xff]
    %v3604 = vld [vmem:[#allocation50 + $0xd0] sm:$0xff]
    %v3605 = vld [vmem:[#allocation50 + $0xd8] sm:$0xff]
    %v3606 = vld [vmem:[#allocation52] sm:$0xff]
    %v3607 = vld [vmem:[#allocation52 + $0x8] sm:$0xff]
    %v3608 = vld [vmem:[#allocation52 + $0x10] sm:$0xff]
    %v3609 = vld [vmem:[#allocation52 + $0x18] sm:$0xff]
    %v3610 = vld [vmem:[#allocation52 + $0x20] sm:$0xff]
    %v3611 = vld [vmem:[#allocation52 + $0x28] sm:$0xff]
    %v3612 = vld [vmem:[#allocation52 + $0x30] sm:$0xff]
    %v3613 = vld [vmem:[#allocation52 + $0x38] sm:$0xff]
    %v3614 = vld [vmem:[#allocation52 + $0x40] sm:$0xff]
    %v3615 = vld [vmem:[#allocation52 + $0x48] sm:$0xff]
    %v3616 = vld [vmem:[#allocation52 + $0x50] sm:$0xff]
    %v3617 = vld [vmem:[#allocation52 + $0x58] sm:$0xff]
    %v3618 = vld [vmem:[#allocation52 + $0x60] sm:$0xff]
    %v3619 = vld [vmem:[#allocation52 + $0x68] sm:$0xff]
    %v3620 = vld [vmem:[#allocation52 + $0x70] sm:$0xff]
    %v3621 = vld [vmem:[#allocation52 + $0x78] sm:$0xff]
    %v3622 = vld [vmem:[#allocation52 + $0x80] sm:$0xff]
    %v3623 = vld [vmem:[#allocation52 + $0x88] sm:$0xff]
    %v3624 = vld [vmem:[#allocation52 + $0x90] sm:$0xff]
    %v3625 = vld [vmem:[#allocation52 + $0x98] sm:$0xff]
    %v3626 = vld [vmem:[#allocation52 + $0xa0] sm:$0xff]
    %v3627 = vld [vmem:[#allocation52 + $0xa8] sm:$0xff]
    %v3628 = vld [vmem:[#allocation52 + $0xb0] sm:$0xff]
    %v3629 = vld [vmem:[#allocation52 + $0xb8] sm:$0xff]
    %v3630 = vld [vmem:[#allocation52 + $0xc0] sm:$0xff]
    %v3631 = vld [vmem:[#allocation52 + $0xc8] sm:$0xff]
    %v3632 = vld [vmem:[#allocation52 + $0xd0] sm:$0xff]
    %v3633 = vld [vmem:[#allocation52 + $0xd8] sm:$0xff]
    %v3634 = vld [vmem:[%s69] sm:$0x3]
    %v3635 = vld [vmem:[%s71] sm:$0x3]
    %v3636 = vld [vmem:[#allocation7] sm:$0xff]
    %v3637 = vld [vmem:[#allocation7 + $0x8] sm:$0xff]
    %v3638 = vld [vmem:[#allocation7 + $0x1] sm:$0xff]
    %v3639 = vld [vmem:[#allocation7 + $0x9] sm:$0xff]
    %v3641 = vsel %vm771, %v3638, 0
    %v3644 = vsel %vm771, %v3639, 0
    %3646 = vmatprep.subr.mxu0 %v3579
    %3647 = vmatpush1.msra.mxu0 %v3578
    %3648 = vmatprep.subr.mxu0 %v3581
    %3649 = vmatpush1.msra.mxu0 %v3580
    %3650 = vmatprep.subr.mxu0 %v3583
    %3651 = vmatpush1.msra.mxu0 %v3582
    %3652 = vmatprep.subr.mxu0 %v3585
    %3653 = vmatpush1.msra.mxu0 %v3584
    %3654 = vmatprep.subr.mxu0 %v3587
    %3655 = vmatpush1.msra.mxu0 %v3586
    %3656 = vmatprep.subr.mxu0 %v3589
    %3657 = vmatpush1.msra.mxu0 %v3588
    %3658 = vmatprep.subr.mxu0 %v3591
    %3659 = vmatpush1.msra.mxu0 %v3590
    %3660 = vmatprep.subr.mxu0 %v3593
    %3661 = vmatpush1.msra.mxu0 %v3592
    %3662 = vmatprep.subr.mxu0 %v3595
    %3663 = vmatpush1.msra.mxu0 %v3594
    %3664 = vmatprep.subr.mxu0 %v3597
    %3665 = vmatpush1.msra.mxu0 %v3596
    %3666 = vmatprep.subr.mxu0 %v3599
    %3667 = vmatpush1.msra.mxu0 %v3598
    %3668 = vmatprep.subr.mxu0 %v3601
    %3669 = vmatpush1.msra.mxu0 %v3600
    %3670 = vmatprep.subr.mxu0 %v3603
    %3671 = vmatpush1.msra.mxu0 %v3602
    %3672 = vmatprep.subr.mxu0 %v3605
    %3673 = vmatpush1.msra.mxu0 %v3604
    %3674 = vmatprep.subr.mxu0 0.0
    %3675 = vmatpush1.msra.mxu0 0.0
    %3676 = vmatprep.subr.mxu0 0.0
    %3677 = vmatpush1.msra.mxu0 0.0
    %3678 = vmatprep.subr.mxu0 0.0
    %3679 = vmatpush1.msra.mxu0 0.0
    %3680 = vmatprep.subr.mxu0 0.0
    %3681 = vmatpush1.msra.mxu0 0.0
    %3682 = vmatprep.subr.mxu0 0.0
    %3683 = vmatpush1.msra.mxu0 0.0
    %3684 = vmatprep.subr.mxu0 0.0
    %3685 = vmatpush1.msra.mxu0 0.0
    %3686 = vmatprep.subr.mxu0 0.0
    %3687 = vmatpush1.msra.mxu0 0.0
    %3688 = vmatprep.subr.mxu0 0.0
    %3689 = vmatpush1.msra.mxu0 0.0
    %3690 = vmatprep.subr.mxu0 0.0
    %3691 = vmatpush1.msra.mxu0 0.0
    %3692 = vmatprep.subr.mxu0 0.0
    %3693 = vmatpush1.msra.mxu0 0.0
    %3694 = vmatprep.subr.mxu0 0.0
    %3695 = vmatpush1.msra.mxu0 0.0
    %3696 = vmatprep.subr.mxu0 0.0
    %3697 = vmatpush1.msra.mxu0 0.0
    %3698 = vmatprep.subr.mxu0 0.0
    %3699 = vmatpush1.msra.mxu0 0.0
    %3700 = vmatprep.subr.mxu0 0.0
    %3701 = vmatpush1.msra.mxu0 0.0
    %3702 = vmatprep.subr.mxu0 0.0
    %3703 = vmatpush1.msra.mxu0 0.0
    %3704 = vmatprep.subr.mxu0 0.0
    %3705 = vmatpush1.msra.mxu0 0.0
    %3706 = vmatprep.subr.mxu0 0.0
    %3707 = vmatpush1.msra.mxu0 0.0
    %3708 = vmatprep.subr.mxu0 0.0
    %3709 = vmatpush1.msra.mxu0 0.0
    %3710 = vmatprep.mubr.f32.mxu0 0.0
    %3711 = vmatmul.mubr.f32.gmra.mrb[0].mxu0 %v3641
    %v3712 = vpop.f32.mrb[0].mxu0
    %v3713 = vadd.f32 0.0, %v3712
    %v3714 = vpop.f32.mrb[0].mxu0
    %v3715 = vadd.f32 0.0, %v3714
    %3716 = vmatprep.mubr.f32.mxu0 0.0
    %3717 = vmatmul.mubr.f32.gmra.mrb[0].mxu0 %v3644
    %v3718 = vpop.f32.mrb[0].mxu0
    %v3719 = vadd.f32 0.0, %v3718
    %v3720 = vpop.f32.mrb[0].mxu0
    %v3721 = vadd.f32 0.0, %v3720
    %3722 = vdwg.mxu0
    %v3724 = vsel %vm771, %v3636, 0
    %v3727 = vsel %vm771, %v3637, 0
    %3729 = vmatprep.subr.mxu0 %v3551
    %3730 = vmatpush1.msra.mxu0 %v3550
    %3731 = vmatprep.subr.mxu0 %v3553
    %3732 = vmatpush1.msra.mxu0 %v3552
    %3733 = vmatprep.subr.mxu0 %v3555
    %3734 = vmatpush1.msra.mxu0 %v3554
    %3735 = vmatprep.subr.mxu0 %v3557
    %3736 = vmatpush1.msra.mxu0 %v3556
    %3737 = vmatprep.subr.mxu0 %v3559
    %3738 = vmatpush1.msra.mxu0 %v3558
    %3739 = vmatprep.subr.mxu0 %v3561
    %3740 = vmatpush1.msra.mxu0 %v3560
    %3741 = vmatprep.subr.mxu0 %v3563
    %3742 = vmatpush1.msra.mxu0 %v3562
    %3743 = vmatprep.subr.mxu0 %v3565
    %3744 = vmatpush1.msra.mxu0 %v3564
    %3745 = vmatprep.subr.mxu0 %v3567
    %3746 = vmatpush1.msra.mxu0 %v3566
    %3747 = vmatprep.subr.mxu0 %v3569
    %3748 = vmatpush1.msra.mxu0 %v3568
    %3749 = vmatprep.subr.mxu0 %v3571
    %3750 = vmatpush1.msra.mxu0 %v3570
    %3751 = vmatprep.subr.mxu0 %v3573
    %3752 = vmatpush1.msra.mxu0 %v3572
    %3753 = vmatprep.subr.mxu0 %v3575
    %3754 = vmatpush1.msra.mxu0 %v3574
    %3755 = vmatprep.subr.mxu0 %v3577
    %3756 = vmatpush1.msra.mxu0 %v3576
    %3757 = vmatprep.subr.mxu0 0.0
    %3758 = vmatpush1.msra.mxu0 0.0
    %3759 = vmatprep.subr.mxu0 0.0
    %3760 = vmatpush1.msra.mxu0 0.0
    %3761 = vmatprep.subr.mxu0 0.0
    %3762 = vmatpush1.msra.mxu0 0.0
    %3763 = vmatprep.subr.mxu0 0.0
    %3764 = vmatpush1.msra.mxu0 0.0
    %3765 = vmatprep.subr.mxu0 0.0
    %3766 = vmatpush1.msra.mxu0 0.0
    %3767 = vmatprep.subr.mxu0 0.0
    %3768 = vmatpush1.msra.mxu0 0.0
    %3769 = vmatprep.subr.mxu0 0.0
    %3770 = vmatpush1.msra.mxu0 0.0
    %3771 = vmatprep.subr.mxu0 0.0
    %3772 = vmatpush1.msra.mxu0 0.0
    %3773 = vmatprep.subr.mxu0 0.0
    %3774 = vmatpush1.msra.mxu0 0.0
    %3775 = vmatprep.subr.mxu0 0.0
    %3776 = vmatpush1.msra.mxu0 0.0
    %3777 = vmatprep.subr.mxu0 0.0
    %3778 = vmatpush1.msra.mxu0 0.0
    %3779 = vmatprep.subr.mxu0 0.0
    %3780 = vmatpush1.msra.mxu0 0.0
    %3781 = vmatprep.subr.mxu0 0.0
    %3782 = vmatpush1.msra.mxu0 0.0
    %3783 = vmatprep.subr.mxu0 0.0
    %3784 = vmatpush1.msra.mxu0 0.0
    %3785 = vmatprep.subr.mxu0 0.0
    %3786 = vmatpush1.msra.mxu0 0.0
    %3787 = vmatprep.subr.mxu0 0.0
    %3788 = vmatpush1.msra.mxu0 0.0
    %3789 = vmatprep.subr.mxu0 0.0
    %3790 = vmatpush1.msra.mxu0 0.0
    %3791 = vmatprep.subr.mxu0 0.0
    %3792 = vmatpush1.msra.mxu0 0.0
    %3793 = vmatprep.mubr.f32.mxu0 0.0
    %3794 = vmatmul.mubr.f32.gmra.mrb[0].mxu0 %v3724
    %v3795 = vpop.f32.mrb[0].mxu0
    %v3796 = vadd.f32 %v3713, %v3795
    %v3797 = vpop.f32.mrb[0].mxu0
    %v3798 = vadd.f32 %v3715, %v3797
    %3799 = vmatprep.mubr.f32.mxu0 0.0
    %3800 = vmatmul.mubr.f32.gmra.mrb[0].mxu0 %v3727
    %v3801 = vpop.f32.mrb[0].mxu0
    %v3802 = vadd.f32 %v3719, %v3801
    %v3803 = vpop.f32.mrb[0].mxu0
    %v3804 = vadd.f32 %v3721, %v3803
    %3805 = vdwg.mxu0
    %v3806 = vld [vmem:[#allocation7 + $0x2] sm:$0xff]
    %v3807 = vld [vmem:[#allocation7 + $0xa] sm:$0xff]
    %v3809 = vsel %vm771, %v3806, 0
    %v3812 = vsel %vm771, %v3807, 0
    %3814 = vmatprep.subr.mxu0 %v3607
    %3815 = vmatpush1.msra.mxu0 %v3606
    %3816 = vmatprep.subr.mxu0 %v3609
    %3817 = vmatpush1.msra.mxu0 %v3608
    %3818 = vmatprep.subr.mxu0 %v3611
    %3819 = vmatpush1.msra.mxu0 %v3610
    %3820 = vmatprep.subr.mxu0 %v3613
    %3821 = vmatpush1.msra.mxu0 %v3612
    %3822 = vmatprep.subr.mxu0 %v3615
    %3823 = vmatpush1.msra.mxu0 %v3614
    %3824 = vmatprep.subr.mxu0 %v3617
    %3825 = vmatpush1.msra.mxu0 %v3616
    %3826 = vmatprep.subr.mxu0 %v3619
    %3827 = vmatpush1.msra.mxu0 %v3618
    %3828 = vmatprep.subr.mxu0 %v3621
    %3829 = vmatpush1.msra.mxu0 %v3620
    %3830 = vmatprep.subr.mxu0 %v3623
    %3831 = vmatpush1.msra.mxu0 %v3622
    %3832 = vmatprep.subr.mxu0 %v3625
    %3833 = vmatpush1.msra.mxu0 %v3624
    %3834 = vmatprep.subr.mxu0 %v3627
    %3835 = vmatpush1.msra.mxu0 %v3626
    %3836 = vmatprep.subr.mxu0 %v3629
    %3837 = vmatpush1.msra.mxu0 %v3628
    %3838 = vmatprep.subr.mxu0 %v3631
    %3839 = vmatpush1.msra.mxu0 %v3630
    %3840 = vmatprep.subr.mxu0 %v3633
    %3841 = vmatpush1.msra.mxu0 %v3632
    %3842 = vmatprep.subr.mxu0 0.0
    %3843 = vmatpush1.msra.mxu0 0.0
    %3844 = vmatprep.subr.mxu0 0.0
    %3845 = vmatpush1.msra.mxu0 0.0
    %3846 = vmatprep.subr.mxu0 0.0
    %3847 = vmatpush1.msra.mxu0 0.0
    %3848 = vmatprep.subr.mxu0 0.0
    %3849 = vmatpush1.msra.mxu0 0.0
    %3850 = vmatprep.subr.mxu0 0.0
    %3851 = vmatpush1.msra.mxu0 0.0
    %3852 = vmatprep.subr.mxu0 0.0
    %3853 = vmatpush1.msra.mxu0 0.0
    %3854 = vmatprep.subr.mxu0 0.0
    %3855 = vmatpush1.msra.mxu0 0.0
    %3856 = vmatprep.subr.mxu0 0.0
    %3857 = vmatpush1.msra.mxu0 0.0
    %3858 = vmatprep.subr.mxu0 0.0
    %3859 = vmatpush1.msra.mxu0 0.0
    %3860 = vmatprep.subr.mxu0 0.0
    %3861 = vmatpush1.msra.mxu0 0.0
    %3862 = vmatprep.subr.mxu0 0.0
    %3863 = vmatpush1.msra.mxu0 0.0
    %3864 = vmatprep.subr.mxu0 0.0
    %3865 = vmatpush1.msra.mxu0 0.0
    %3866 = vmatprep.subr.mxu0 0.0
    %3867 = vmatpush1.msra.mxu0 0.0
    %3868 = vmatprep.subr.mxu0 0.0
    %3869 = vmatpush1.msra.mxu0 0.0
    %3870 = vmatprep.subr.mxu0 0.0
    %3871 = vmatpush1.msra.mxu0 0.0
    %3872 = vmatprep.subr.mxu0 0.0
    %3873 = vmatpush1.msra.mxu0 0.0
    %3874 = vmatprep.subr.mxu0 0.0
    %3875 = vmatpush1.msra.mxu0 0.0
    %3876 = vmatprep.subr.mxu0 0.0
    %3877 = vmatpush1.msra.mxu0 0.0
    %3878 = vmatprep.mubr.f32.mxu0 0.0
    %3879 = vmatmul.mubr.f32.gmra.mrb[0].mxu0 %v3809
    %v3880 = vpop.f32.mrb[0].mxu0
    %v3881 = vadd.f32 0.0, %v3880
    %v3882 = vpop.f32.mrb[0].mxu0
    %v3883 = vadd.f32 0.0, %v3882
    %3884 = vmatprep.mubr.f32.mxu0 0.0
    %3885 = vmatmul.mubr.f32.gmra.mrb[0].mxu0 %v3812
    %v3886 = vpop.f32.mrb[0].mxu0
    %v3887 = vadd.f32 0.0, %v3886
    %v3888 = vpop.f32.mrb[0].mxu0
    %v3889 = vadd.f32 0.0, %v3888
    %3890 = vdwg.mxu0
    %v3891 = vadd.f32 %v3796, %v3881
    %v3892 = vadd.f32 %v3798, %v3883
    %v3893 = vadd.f32 %v3802, %v3887
    %v3894 = vadd.f32 %v3804, %v3889
    %v3895 = vmax.f32 %v3891, 0.0
    %v3896 = vmax.f32 %v3892, 0.0
    %v3897 = vmax.f32 %v3893, 0.0
    %v3898 = vmax.f32 %v3894, 0.0
    %v3900 = vlaneseq
    %v3901 = vshrl.u32 %v3900, 7
    %v3902 = vsub.s32 0, %v3901
    %v3903 = vrot.slane %v3634, %v3902
    %v3904 = vlaneseq
    %v3905 = vshrl.u32 %v3904, 7
    %v3906 = vsub.s32 1, %v3905
    %v3907 = vrot.slane %v3634, %v3906
    %v3910 = vmul.f32 %v3895, %v3903
    %v3911 = vmul.f32 %v3896, %v3907
    %v3912 = vmul.f32 %v3897, %v3903
    %v3913 = vmul.f32 %v3898, %v3907
    %v3915 = vlaneseq
    %v3916 = vshrl.u32 %v3915, 7
    %v3917 = vsub.s32 0, %v3916
    %v3918 = vrot.slane %v3635, %v3917
    %v3919 = vlaneseq
    %v3920 = vshrl.u32 %v3919, 7
    %v3921 = vsub.s32 1, %v3920
    %v3922 = vrot.slane %v3635, %v3921
    %v3925 = vadd.f32 %v3910, %v3918
    %v3926 = vadd.f32 %v3911, %v3922
    %v3927 = vadd.f32 %v3912, %v3918
    %v3928 = vadd.f32 %v3913, %v3922
    %v3931 = vrot.slane %v3925, 7
    %v3932 = vrot.slane %v3926, 7
    %3935 = vst [vmem:[#allocation8] sm:$0xfe] %v3931
    %3936 = vst.msk [vmem:[#allocation8 + $0x8] sm:$0xfe] %vm2402, %v3932
    %v3939 = vrot.slane %v3927, 7
    %v3940 = vrot.slane %v3928, 7
    %3943 = vst [vmem:[#allocation8 + $0x10] sm:$0xfc] %v3939
    %vm3944 = vcmask 785410
    %3945 = vst.msk [vmem:[#allocation8 + $0x18] sm:$0xfc] %vm3944, %v3940
    %3946 = vst [vmem:[#allocation8 + $0x20] sm:$0x1] %v3939
    %vm3947 = vcmask 778240
    %3948 = vst.msk [vmem:[#allocation8 + $0x28] sm:$0x1] %vm3947, %v3940
    %v3949 = vld [vmem:[#allocation53] sm:$0xff]
    %v3950 = vld [vmem:[#allocation53 + $0x8] sm:$0xff]
    %v3951 = vld [vmem:[#allocation53 + $0x10] sm:$0xff]
    %v3952 = vld [vmem:[#allocation53 + $0x18] sm:$0xff]
    %v3953 = vld [vmem:[#allocation53 + $0x20] sm:$0xff]
    %v3954 = vld [vmem:[#allocation53 + $0x28] sm:$0xff]
    %v3955 = vld [vmem:[#allocation53 + $0x30] sm:$0xff]
    %v3956 = vld [vmem:[#allocation53 + $0x38] sm:$0xff]
    %v3957 = vld [vmem:[#allocation53 + $0x40] sm:$0xff]
    %v3958 = vld [vmem:[#allocation53 + $0x48] sm:$0xff]
    %v3959 = vld [vmem:[#allocation53 + $0x50] sm:$0xff]
    %v3960 = vld [vmem:[#allocation53 + $0x58] sm:$0xff]
    %v3961 = vld [vmem:[#allocation53 + $0x60] sm:$0xff]
    %v3962 = vld [vmem:[#allocation53 + $0x68] sm:$0xff]
    %v3963 = vld [vmem:[#allocation53 + $0x70] sm:$0xff]
    %v3964 = vld [vmem:[#allocation53 + $0x78] sm:$0xff]
    %v3965 = vld [vmem:[#allocation53 + $0x80] sm:$0xff]
    %v3966 = vld [vmem:[#allocation53 + $0x88] sm:$0xff]
    %v3967 = vld [vmem:[#allocation53 + $0x90] sm:$0xff]
    %v3968 = vld [vmem:[#allocation53 + $0x98] sm:$0xff]
    %v3969 = vld [vmem:[#allocation53 + $0xa0] sm:$0xff]
    %v3970 = vld [vmem:[#allocation53 + $0xa8] sm:$0xff]
    %v3971 = vld [vmem:[#allocation53 + $0xb0] sm:$0xff]
    %v3972 = vld [vmem:[#allocation53 + $0xb8] sm:$0xff]
    %v3973 = vld [vmem:[#allocation53 + $0xc0] sm:$0xff]
    %v3974 = vld [vmem:[#allocation53 + $0xc8] sm:$0xff]
    %v3975 = vld [vmem:[#allocation53 + $0xd0] sm:$0xff]
    %v3976 = vld [vmem:[#allocation53 + $0xd8] sm:$0xff]
    %v3977 = vld [vmem:[#allocation53 + $0xe0] sm:$0xff]
    %v3978 = vld [vmem:[#allocation53 + $0xe8] sm:$0xff]
    %v3979 = vld [vmem:[#allocation53 + $0xf0] sm:$0xff]
    %v3980 = vld [vmem:[#allocation53 + $0xf8] sm:$0xff]
    %v3981 = vld [vmem:[#allocation53 + $0x100] sm:$0xff]
    %v3982 = vld [vmem:[#allocation53 + $0x108] sm:$0xff]
    %v3983 = vld [vmem:[#allocation53 + $0x110] sm:$0xff]
    %v3984 = vld [vmem:[#allocation53 + $0x118] sm:$0xff]
    %v3985 = vld [vmem:[#allocation53 + $0x120] sm:$0xff]
    %v3986 = vld [vmem:[#allocation53 + $0x128] sm:$0xff]
    %v3987 = vld [vmem:[#allocation53 + $0x130] sm:$0xff]
    %v3988 = vld [vmem:[#allocation53 + $0x138] sm:$0xff]
    %v3989 = vld [vmem:[#allocation53 + $0x140] sm:$0xff]
    %v3990 = vld [vmem:[#allocation53 + $0x148] sm:$0xff]
    %v3991 = vld [vmem:[#allocation53 + $0x150] sm:$0xff]
    %v3992 = vld [vmem:[#allocation53 + $0x158] sm:$0xff]
    %v3993 = vld [vmem:[#allocation53 + $0x160] sm:$0xff]
    %v3994 = vld [vmem:[#allocation53 + $0x168] sm:$0xff]
    %v3995 = vld [vmem:[#allocation53 + $0x170] sm:$0xff]
    %v3996 = vld [vmem:[#allocation53 + $0x178] sm:$0xff]
    %v3997 = vld [vmem:[#allocation53 + $0x180] sm:$0xff]
    %v3998 = vld [vmem:[#allocation53 + $0x188] sm:$0xff]
    %v3999 = vld [vmem:[#allocation53 + $0x190] sm:$0xff]
    %v4000 = vld [vmem:[#allocation53 + $0x198] sm:$0xff]
    %v4001 = vld [vmem:[#allocation53 + $0x1a0] sm:$0xff]
    %v4002 = vld [vmem:[#allocation53 + $0x1a8] sm:$0xff]
    %v4003 = vld [vmem:[#allocation53 + $0x1b0] sm:$0xff]
    %v4004 = vld [vmem:[#allocation53 + $0x1b8] sm:$0xff]
    %v4005 = vld [vmem:[#allocation55] sm:$0xff]
    %v4006 = vld [vmem:[#allocation55 + $0x8] sm:$0xff]
    %v4007 = vld [vmem:[#allocation55 + $0x10] sm:$0xff]
    %v4008 = vld [vmem:[#allocation55 + $0x18] sm:$0xff]
    %v4009 = vld [vmem:[#allocation55 + $0x20] sm:$0xff]
    %v4010 = vld [vmem:[#allocation55 + $0x28] sm:$0xff]
    %v4011 = vld [vmem:[#allocation55 + $0x30] sm:$0xff]
    %v4012 = vld [vmem:[#allocation55 + $0x38] sm:$0xff]
    %v4013 = vld [vmem:[#allocation55 + $0x40] sm:$0xff]
    %v4014 = vld [vmem:[#allocation55 + $0x48] sm:$0xff]
    %v4015 = vld [vmem:[#allocation55 + $0x50] sm:$0xff]
    %v4016 = vld [vmem:[#allocation55 + $0x58] sm:$0xff]
    %v4017 = vld [vmem:[#allocation55 + $0x60] sm:$0xff]
    %v4018 = vld [vmem:[#allocation55 + $0x68] sm:$0xff]
    %v4019 = vld [vmem:[#allocation55 + $0x70] sm:$0xff]
    %v4020 = vld [vmem:[#allocation55 + $0x78] sm:$0xff]
    %v4021 = vld [vmem:[#allocation55 + $0x80] sm:$0xff]
    %v4022 = vld [vmem:[#allocation55 + $0x88] sm:$0xff]
    %v4023 = vld [vmem:[#allocation55 + $0x90] sm:$0xff]
    %v4024 = vld [vmem:[#allocation55 + $0x98] sm:$0xff]
    %v4025 = vld [vmem:[#allocation55 + $0xa0] sm:$0xff]
    %v4026 = vld [vmem:[#allocation55 + $0xa8] sm:$0xff]
    %v4027 = vld [vmem:[#allocation55 + $0xb0] sm:$0xff]
    %v4028 = vld [vmem:[#allocation55 + $0xb8] sm:$0xff]
    %v4029 = vld [vmem:[#allocation55 + $0xc0] sm:$0xff]
    %v4030 = vld [vmem:[#allocation55 + $0xc8] sm:$0xff]
    %v4031 = vld [vmem:[#allocation55 + $0xd0] sm:$0xff]
    %v4032 = vld [vmem:[#allocation55 + $0xd8] sm:$0xff]
    %v4033 = vld [vmem:[#allocation55 + $0xe0] sm:$0xff]
    %v4034 = vld [vmem:[#allocation55 + $0xe8] sm:$0xff]
    %v4035 = vld [vmem:[#allocation55 + $0xf0] sm:$0xff]
    %v4036 = vld [vmem:[#allocation55 + $0xf8] sm:$0xff]
    %v4037 = vld [vmem:[#allocation55 + $0x100] sm:$0xff]
    %v4038 = vld [vmem:[#allocation55 + $0x108] sm:$0xff]
    %v4039 = vld [vmem:[#allocation55 + $0x110] sm:$0xff]
    %v4040 = vld [vmem:[#allocation55 + $0x118] sm:$0xff]
    %v4041 = vld [vmem:[#allocation55 + $0x120] sm:$0xff]
    %v4042 = vld [vmem:[#allocation55 + $0x128] sm:$0xff]
    %v4043 = vld [vmem:[#allocation55 + $0x130] sm:$0xff]
    %v4044 = vld [vmem:[#allocation55 + $0x138] sm:$0xff]
    %v4045 = vld [vmem:[#allocation55 + $0x140] sm:$0xff]
    %v4046 = vld [vmem:[#allocation55 + $0x148] sm:$0xff]
    %v4047 = vld [vmem:[#allocation55 + $0x150] sm:$0xff]
    %v4048 = vld [vmem:[#allocation55 + $0x158] sm:$0xff]
    %v4049 = vld [vmem:[#allocation55 + $0x160] sm:$0xff]
    %v4050 = vld [vmem:[#allocation55 + $0x168] sm:$0xff]
    %v4051 = vld [vmem:[#allocation55 + $0x170] sm:$0xff]
    %v4052 = vld [vmem:[#allocation55 + $0x178] sm:$0xff]
    %v4053 = vld [vmem:[#allocation55 + $0x180] sm:$0xff]
    %v4054 = vld [vmem:[#allocation55 + $0x188] sm:$0xff]
    %v4055 = vld [vmem:[#allocation55 + $0x190] sm:$0xff]
    %v4056 = vld [vmem:[#allocation55 + $0x198] sm:$0xff]
    %v4057 = vld [vmem:[#allocation55 + $0x1a0] sm:$0xff]
    %v4058 = vld [vmem:[#allocation55 + $0x1a8] sm:$0xff]
    %v4059 = vld [vmem:[#allocation55 + $0x1b0] sm:$0xff]
    %v4060 = vld [vmem:[#allocation55 + $0x1b8] sm:$0xff]
    %v4061 = vld [vmem:[#allocation56] sm:$0xff]
    %v4062 = vld [vmem:[#allocation56 + $0x8] sm:$0xff]
    %v4063 = vld [vmem:[#allocation56 + $0x10] sm:$0xff]
    %v4064 = vld [vmem:[#allocation56 + $0x18] sm:$0xff]
    %v4065 = vld [vmem:[#allocation56 + $0x20] sm:$0xff]
    %v4066 = vld [vmem:[#allocation56 + $0x28] sm:$0xff]
    %v4067 = vld [vmem:[#allocation56 + $0x30] sm:$0xff]
    %v4068 = vld [vmem:[#allocation56 + $0x38] sm:$0xff]
    %v4069 = vld [vmem:[#allocation56 + $0x40] sm:$0xff]
    %v4070 = vld [vmem:[#allocation56 + $0x48] sm:$0xff]
    %v4071 = vld [vmem:[#allocation56 + $0x50] sm:$0xff]
    %v4072 = vld [vmem:[#allocation56 + $0x58] sm:$0xff]
    %v4073 = vld [vmem:[#allocation56 + $0x60] sm:$0xff]
    %v4074 = vld [vmem:[#allocation56 + $0x68] sm:$0xff]
    %v4075 = vld [vmem:[#allocation56 + $0x70] sm:$0xff]
    %v4076 = vld [vmem:[#allocation56 + $0x78] sm:$0xff]
    %v4077 = vld [vmem:[#allocation56 + $0x80] sm:$0xff]
    %v4078 = vld [vmem:[#allocation56 + $0x88] sm:$0xff]
    %v4079 = vld [vmem:[#allocation56 + $0x90] sm:$0xff]
    %v4080 = vld [vmem:[#allocation56 + $0x98] sm:$0xff]
    %v4081 = vld [vmem:[#allocation56 + $0xa0] sm:$0xff]
    %v4082 = vld [vmem:[#allocation56 + $0xa8] sm:$0xff]
    %v4083 = vld [vmem:[#allocation56 + $0xb0] sm:$0xff]
    %v4084 = vld [vmem:[#allocation56 + $0xb8] sm:$0xff]
    %v4085 = vld [vmem:[#allocation56 + $0xc0] sm:$0xff]
    %v4086 = vld [vmem:[#allocation56 + $0xc8] sm:$0xff]
    %v4087 = vld [vmem:[#allocation56 + $0xd0] sm:$0xff]
    %v4088 = vld [vmem:[#allocation56 + $0xd8] sm:$0xff]
    %v4089 = vld [vmem:[#allocation56 + $0xe0] sm:$0xff]
    %v4090 = vld [vmem:[#allocation56 + $0xe8] sm:$0xff]
    %v4091 = vld [vmem:[#allocation56 + $0xf0] sm:$0xff]
    %v4092 = vld [vmem:[#allocation56 + $0xf8] sm:$0xff]
    %v4093 = vld [vmem:[#allocation56 + $0x100] sm:$0xff]
    %v4094 = vld [vmem:[#allocation56 + $0x108] sm:$0xff]
    %v4095 = vld [vmem:[#allocation56 + $0x110] sm:$0xff]
    %v4096 = vld [vmem:[#allocation56 + $0x118] sm:$0xff]
    %v4097 = vld [vmem:[#allocation56 + $0x120] sm:$0xff]
    %v4098 = vld [vmem:[#allocation56 + $0x128] sm:$0xff]
    %v4099 = vld [vmem:[#allocation56 + $0x130] sm:$0xff]
    %v4100 = vld [vmem:[#allocation56 + $0x138] sm:$0xff]
    %v4101 = vld [vmem:[#allocation56 + $0x140] sm:$0xff]
    %v4102 = vld [vmem:[#allocation56 + $0x148] sm:$0xff]
    %v4103 = vld [vmem:[#allocation56 + $0x150] sm:$0xff]
    %v4104 = vld [vmem:[#allocation56 + $0x158] sm:$0xff]
    %v4105 = vld [vmem:[#allocation56 + $0x160] sm:$0xff]
    %v4106 = vld [vmem:[#allocation56 + $0x168] sm:$0xff]
    %v4107 = vld [vmem:[#allocation56 + $0x170] sm:$0xff]
    %v4108 = vld [vmem:[#allocation56 + $0x178] sm:$0xff]
    %v4109 = vld [vmem:[#allocation56 + $0x180] sm:$0xff]
    %v4110 = vld [vmem:[#allocation56 + $0x188] sm:$0xff]
    %v4111 = vld [vmem:[#allocation56 + $0x190] sm:$0xff]
    %v4112 = vld [vmem:[#allocation56 + $0x198] sm:$0xff]
    %v4113 = vld [vmem:[#allocation56 + $0x1a0] sm:$0xff]
    %v4114 = vld [vmem:[#allocation56 + $0x1a8] sm:$0xff]
    %v4115 = vld [vmem:[#allocation56 + $0x1b0] sm:$0xff]
    %v4116 = vld [vmem:[#allocation56 + $0x1b8] sm:$0xff]
    %v4117 = vld [vmem:[%s79] sm:$0x3]
    %v4118 = vld [vmem:[%s81] sm:$0x3]
    %v4119 = vld [vmem:[#allocation8] sm:$0xff]
    %v4120 = vld [vmem:[#allocation8 + $0x8] sm:$0xff]
    %v4121 = vld [vmem:[#allocation8 + $0x10] sm:$0xff]
    %v4122 = vld [vmem:[#allocation8 + $0x18] sm:$0xff]
    %v4123 = vld [vmem:[#allocation8] sm:$0xfe]
    %v4124 = vld [vmem:[#allocation8 + $0x8] sm:$0xfe]
    %v4125 = vld [vmem:[#allocation8 + $0x20] sm:$0x1]
    %v4126 = vld [vmem:[#allocation8 + $0x28] sm:$0x1]
    %v4133 = vrot.slane %v4123, 1
    %v4134 = vrot.slane %v4121, 1
    %v4135 = vsel %vm2615, %v4133, %v4134
    %v4136 = vrot.slane %v4124, 1
    %v4137 = vrot.slane %v4122, 1
    %v4138 = vsel %vm2615, %v4136, %v4137
    %v4139 = vrot.slane %v4125, 1
    %v4140 = vsel %vm2615, %v4134, %v4139
    %v4141 = vrot.slane %v4126, 1
    %v4142 = vsel %vm2615, %v4137, %v4141
    %v4145 = vsel %vm777, %v4138, 0
    %v4147 = vsel %vm777, %v4142, 0
    %4149 = vmatprep.subr.mxu0 %v4006
    %4150 = vmatpush1.msra.mxu0 %v4005
    %4151 = vmatprep.subr.mxu0 %v4008
    %4152 = vmatpush1.msra.mxu0 %v4007
    %4153 = vmatprep.subr.mxu0 %v4010
    %4154 = vmatpush1.msra.mxu0 %v4009
    %4155 = vmatprep.subr.mxu0 %v4012
    %4156 = vmatpush1.msra.mxu0 %v4011
    %4157 = vmatprep.subr.mxu0 %v4014
    %4158 = vmatpush1.msra.mxu0 %v4013
    %4159 = vmatprep.subr.mxu0 %v4016
    %4160 = vmatpush1.msra.mxu0 %v4015
    %4161 = vmatprep.subr.mxu0 %v4018
    %4162 = vmatpush1.msra.mxu0 %v4017
    %4163 = vmatprep.subr.mxu0 %v4020
    %4164 = vmatpush1.msra.mxu0 %v4019
    %4165 = vmatprep.subr.mxu0 %v4022
    %4166 = vmatpush1.msra.mxu0 %v4021
    %4167 = vmatprep.subr.mxu0 %v4024
    %4168 = vmatpush1.msra.mxu0 %v4023
    %4169 = vmatprep.subr.mxu0 %v4026
    %4170 = vmatpush1.msra.mxu0 %v4025
    %4171 = vmatprep.subr.mxu0 %v4028
    %4172 = vmatpush1.msra.mxu0 %v4027
    %4173 = vmatprep.subr.mxu0 %v4030
    %4174 = vmatpush1.msra.mxu0 %v4029
    %4175 = vmatprep.subr.mxu0 %v4032
    %4176 = vmatpush1.msra.mxu0 %v4031
    %4177 = vmatprep.subr.mxu0 %v4034
    %4178 = vmatpush1.msra.mxu0 %v4033
    %4179 = vmatprep.subr.mxu0 %v4036
    %4180 = vmatpush1.msra.mxu0 %v4035
    %4181 = vmatprep.subr.mxu0 %v4038
    %4182 = vmatpush1.msra.mxu0 %v4037
    %4183 = vmatprep.subr.mxu0 %v4040
    %4184 = vmatpush1.msra.mxu0 %v4039
    %4185 = vmatprep.subr.mxu0 %v4042
    %4186 = vmatpush1.msra.mxu0 %v4041
    %4187 = vmatprep.subr.mxu0 %v4044
    %4188 = vmatpush1.msra.mxu0 %v4043
    %4189 = vmatprep.subr.mxu0 %v4046
    %4190 = vmatpush1.msra.mxu0 %v4045
    %4191 = vmatprep.subr.mxu0 %v4048
    %4192 = vmatpush1.msra.mxu0 %v4047
    %4193 = vmatprep.subr.mxu0 %v4050
    %4194 = vmatpush1.msra.mxu0 %v4049
    %4195 = vmatprep.subr.mxu0 %v4052
    %4196 = vmatpush1.msra.mxu0 %v4051
    %4197 = vmatprep.subr.mxu0 %v4054
    %4198 = vmatpush1.msra.mxu0 %v4053
    %4199 = vmatprep.subr.mxu0 %v4056
    %4200 = vmatpush1.msra.mxu0 %v4055
    %4201 = vmatprep.subr.mxu0 %v4058
    %4202 = vmatpush1.msra.mxu0 %v4057
    %4203 = vmatprep.subr.mxu0 %v4060
    %4204 = vmatpush1.msra.mxu0 %v4059
    %4205 = vmatprep.subr.mxu0 0.0
    %4206 = vmatpush1.msra.mxu0 0.0
    %4207 = vmatprep.subr.mxu0 0.0
    %4208 = vmatpush1.msra.mxu0 0.0
    %4209 = vmatprep.subr.mxu0 0.0
    %4210 = vmatpush1.msra.mxu0 0.0
    %4211 = vmatprep.subr.mxu0 0.0
    %4212 = vmatpush1.msra.mxu0 0.0
    %4213 = vmatprep.mubr.f32.mxu0 %v4145
    %4214 = vmatmul.mubr.f32.gmra.mrb[0].mxu0 %v4135
    %v4215 = vpop.f32.mrb[0].mxu0
    %v4216 = vadd.f32 0.0, %v4215
    %v4217 = vpop.f32.mrb[0].mxu0
    %v4218 = vadd.f32 0.0, %v4217
    %4219 = vmatprep.mubr.f32.mxu0 %v4147
    %4220 = vmatmul.mubr.f32.gmra.mrb[0].mxu0 %v4140
    %v4221 = vpop.f32.mrb[0].mxu0
    %v4222 = vadd.f32 0.0, %v4221
    %v4223 = vpop.f32.mrb[0].mxu0
    %v4224 = vadd.f32 0.0, %v4223
    %4225 = vdwg.mxu0
    %v4227 = vsel %vm777, %v4120, 0
    %v4229 = vsel %vm777, %v4122, 0
    %4231 = vmatprep.subr.mxu0 %v3950
    %4232 = vmatpush1.msra.mxu0 %v3949
    %4233 = vmatprep.subr.mxu0 %v3952
    %4234 = vmatpush1.msra.mxu0 %v3951
    %4235 = vmatprep.subr.mxu0 %v3954
    %4236 = vmatpush1.msra.mxu0 %v3953
    %4237 = vmatprep.subr.mxu0 %v3956
    %4238 = vmatpush1.msra.mxu0 %v3955
    %4239 = vmatprep.subr.mxu0 %v3958
    %4240 = vmatpush1.msra.mxu0 %v3957
    %4241 = vmatprep.subr.mxu0 %v3960
    %4242 = vmatpush1.msra.mxu0 %v3959
    %4243 = vmatprep.subr.mxu0 %v3962
    %4244 = vmatpush1.msra.mxu0 %v3961
    %4245 = vmatprep.subr.mxu0 %v3964
    %4246 = vmatpush1.msra.mxu0 %v3963
    %4247 = vmatprep.subr.mxu0 %v3966
    %4248 = vmatpush1.msra.mxu0 %v3965
    %4249 = vmatprep.subr.mxu0 %v3968
    %4250 = vmatpush1.msra.mxu0 %v3967
    %4251 = vmatprep.subr.mxu0 %v3970
    %4252 = vmatpush1.msra.mxu0 %v3969
    %4253 = vmatprep.subr.mxu0 %v3972
    %4254 = vmatpush1.msra.mxu0 %v3971
    %4255 = vmatprep.subr.mxu0 %v3974
    %4256 = vmatpush1.msra.mxu0 %v3973
    %4257 = vmatprep.subr.mxu0 %v3976
    %4258 = vmatpush1.msra.mxu0 %v3975
    %4259 = vmatprep.subr.mxu0 %v3978
    %4260 = vmatpush1.msra.mxu0 %v3977
    %4261 = vmatprep.subr.mxu0 %v3980
    %4262 = vmatpush1.msra.mxu0 %v3979
    %4263 = vmatprep.subr.mxu0 %v3982
    %4264 = vmatpush1.msra.mxu0 %v3981
    %4265 = vmatprep.subr.mxu0 %v3984
    %4266 = vmatpush1.msra.mxu0 %v3983
    %4267 = vmatprep.subr.mxu0 %v3986
    %4268 = vmatpush1.msra.mxu0 %v3985
    %4269 = vmatprep.subr.mxu0 %v3988
    %4270 = vmatpush1.msra.mxu0 %v3987
    %4271 = vmatprep.subr.mxu0 %v3990
    %4272 = vmatpush1.msra.mxu0 %v3989
    %4273 = vmatprep.subr.mxu0 %v3992
    %4274 = vmatpush1.msra.mxu0 %v3991
    %4275 = vmatprep.subr.mxu0 %v3994
    %4276 = vmatpush1.msra.mxu0 %v3993
    %4277 = vmatprep.subr.mxu0 %v3996
    %4278 = vmatpush1.msra.mxu0 %v3995
    %4279 = vmatprep.subr.mxu0 %v3998
    %4280 = vmatpush1.msra.mxu0 %v3997
    %4281 = vmatprep.subr.mxu0 %v4000
    %4282 = vmatpush1.msra.mxu0 %v3999
    %4283 = vmatprep.subr.mxu0 %v4002
    %4284 = vmatpush1.msra.mxu0 %v4001
    %4285 = vmatprep.subr.mxu0 %v4004
    %4286 = vmatpush1.msra.mxu0 %v4003
    %4287 = vmatprep.subr.mxu0 0.0
    %4288 = vmatpush1.msra.mxu0 0.0
    %4289 = vmatprep.subr.mxu0 0.0
    %4290 = vmatpush1.msra.mxu0 0.0
    %4291 = vmatprep.subr.mxu0 0.0
    %4292 = vmatpush1.msra.mxu0 0.0
    %4293 = vmatprep.subr.mxu0 0.0
    %4294 = vmatpush1.msra.mxu0 0.0
    %4295 = vmatprep.mubr.f32.mxu0 %v4227
    %4296 = vmatmul.mubr.f32.gmra.mrb[0].mxu0 %v4119
    %v4297 = vpop.f32.mrb[0].mxu0
    %v4298 = vadd.f32 %v4216, %v4297
    %v4299 = vpop.f32.mrb[0].mxu0
    %v4300 = vadd.f32 %v4218, %v4299
    %4301 = vmatprep.mubr.f32.mxu0 %v4229
    %4302 = vmatmul.mubr.f32.gmra.mrb[0].mxu0 %v4121
    %v4303 = vpop.f32.mrb[0].mxu0
    %v4304 = vadd.f32 %v4222, %v4303
    %v4305 = vpop.f32.mrb[0].mxu0
    %v4306 = vadd.f32 %v4224, %v4305
    %4307 = vdwg.mxu0
    %v4308 = vld [vmem:[#allocation8] sm:$0xfc]
    %v4309 = vld [vmem:[#allocation8 + $0x8] sm:$0xfc]
    %v4310 = vld [vmem:[#allocation8 + $0x20] sm:$0x3]
    %v4311 = vld [vmem:[#allocation8 + $0x28] sm:$0x3]
    %v4316 = vrot.slane %v4308, 2
    %v4317 = vrot.slane %v4121, 2
    %v4318 = vsel %vm2838, %v4316, %v4317
    %v4319 = vrot.slane %v4309, 2
    %v4320 = vrot.slane %v4122, 2
    %v4321 = vsel %vm2838, %v4319, %v4320
    %v4322 = vrot.slane %v4310, 2
    %v4323 = vsel %vm2838, %v4317, %v4322
    %v4324 = vrot.slane %v4311, 2
    %v4325 = vsel %vm2838, %v4320, %v4324
    %v4328 = vsel %vm777, %v4321, 0
    %v4330 = vsel %vm777, %v4325, 0
    %4332 = vmatprep.subr.mxu0 %v4062
    %4333 = vmatpush1.msra.mxu0 %v4061
    %4334 = vmatprep.subr.mxu0 %v4064
    %4335 = vmatpush1.msra.mxu0 %v4063
    %4336 = vmatprep.subr.mxu0 %v4066
    %4337 = vmatpush1.msra.mxu0 %v4065
    %4338 = vmatprep.subr.mxu0 %v4068
    %4339 = vmatpush1.msra.mxu0 %v4067
    %4340 = vmatprep.subr.mxu0 %v4070
    %4341 = vmatpush1.msra.mxu0 %v4069
    %4342 = vmatprep.subr.mxu0 %v4072
    %4343 = vmatpush1.msra.mxu0 %v4071
    %4344 = vmatprep.subr.mxu0 %v4074
    %4345 = vmatpush1.msra.mxu0 %v4073
    %4346 = vmatprep.subr.mxu0 %v4076
    %4347 = vmatpush1.msra.mxu0 %v4075
    %4348 = vmatprep.subr.mxu0 %v4078
    %4349 = vmatpush1.msra.mxu0 %v4077
    %4350 = vmatprep.subr.mxu0 %v4080
    %4351 = vmatpush1.msra.mxu0 %v4079
    %4352 = vmatprep.subr.mxu0 %v4082
    %4353 = vmatpush1.msra.mxu0 %v4081
    %4354 = vmatprep.subr.mxu0 %v4084
    %4355 = vmatpush1.msra.mxu0 %v4083
    %4356 = vmatprep.subr.mxu0 %v4086
    %4357 = vmatpush1.msra.mxu0 %v4085
    %4358 = vmatprep.subr.mxu0 %v4088
    %4359 = vmatpush1.msra.mxu0 %v4087
    %4360 = vmatprep.subr.mxu0 %v4090
    %4361 = vmatpush1.msra.mxu0 %v4089
    %4362 = vmatprep.subr.mxu0 %v4092
    %4363 = vmatpush1.msra.mxu0 %v4091
    %4364 = vmatprep.subr.mxu0 %v4094
    %4365 = vmatpush1.msra.mxu0 %v4093
    %4366 = vmatprep.subr.mxu0 %v4096
    %4367 = vmatpush1.msra.mxu0 %v4095
    %4368 = vmatprep.subr.mxu0 %v4098
    %4369 = vmatpush1.msra.mxu0 %v4097
    %4370 = vmatprep.subr.mxu0 %v4100
    %4371 = vmatpush1.msra.mxu0 %v4099
    %4372 = vmatprep.subr.mxu0 %v4102
    %4373 = vmatpush1.msra.mxu0 %v4101
    %4374 = vmatprep.subr.mxu0 %v4104
    %4375 = vmatpush1.msra.mxu0 %v4103
    %4376 = vmatprep.subr.mxu0 %v4106
    %4377 = vmatpush1.msra.mxu0 %v4105
    %4378 = vmatprep.subr.mxu0 %v4108
    %4379 = vmatpush1.msra.mxu0 %v4107
    %4380 = vmatprep.subr.mxu0 %v4110
    %4381 = vmatpush1.msra.mxu0 %v4109
    %4382 = vmatprep.subr.mxu0 %v4112
    %4383 = vmatpush1.msra.mxu0 %v4111
    %4384 = vmatprep.subr.mxu0 %v4114
    %4385 = vmatpush1.msra.mxu0 %v4113
    %4386 = vmatprep.subr.mxu0 %v4116
    %4387 = vmatpush1.msra.mxu0 %v4115
    %4388 = vmatprep.subr.mxu0 0.0
    %4389 = vmatpush1.msra.mxu0 0.0
    %4390 = vmatprep.subr.mxu0 0.0
    %4391 = vmatpush1.msra.mxu0 0.0
    %4392 = vmatprep.subr.mxu0 0.0
    %4393 = vmatpush1.msra.mxu0 0.0
    %4394 = vmatprep.subr.mxu0 0.0
    %4395 = vmatpush1.msra.mxu0 0.0
    %4396 = vmatprep.mubr.f32.mxu0 %v4328
    %4397 = vmatmul.mubr.f32.gmra.mrb[0].mxu0 %v4318
    %v4398 = vpop.f32.mrb[0].mxu0
    %v4399 = vadd.f32 0.0, %v4398
    %v4400 = vpop.f32.mrb[0].mxu0
    %v4401 = vadd.f32 0.0, %v4400
    %4402 = vmatprep.mubr.f32.mxu0 %v4330
    %4403 = vmatmul.mubr.f32.gmra.mrb[0].mxu0 %v4323
    %v4404 = vpop.f32.mrb[0].mxu0
    %v4405 = vadd.f32 0.0, %v4404
    %v4406 = vpop.f32.mrb[0].mxu0
    %v4407 = vadd.f32 0.0, %v4406
    %4408 = vdwg.mxu0
    %v4409 = vadd.f32 %v4298, %v4399
    %v4410 = vadd.f32 %v4300, %v4401
    %v4411 = vadd.f32 %v4304, %v4405
    %v4412 = vadd.f32 %v4306, %v4407
    %v4413 = vmax.f32 %v4409, 0.0
    %v4414 = vmax.f32 %v4410, 0.0
    %v4415 = vmax.f32 %v4411, 0.0
    %v4416 = vmax.f32 %v4412, 0.0
    %v4418 = vlaneseq
    %v4419 = vshrl.u32 %v4418, 7
    %v4420 = vsub.s32 0, %v4419
    %v4421 = vrot.slane %v4117, %v4420
    %v4422 = vlaneseq
    %v4423 = vshrl.u32 %v4422, 7
    %v4424 = vsub.s32 1, %v4423
    %v4425 = vrot.slane %v4117, %v4424
    %v4428 = vmul.f32 %v4413, %v4421
    %v4429 = vmul.f32 %v4414, %v4425
    %v4430 = vmul.f32 %v4415, %v4421
    %v4431 = vmul.f32 %v4416, %v4425
    %v4433 = vlaneseq
    %v4434 = vshrl.u32 %v4433, 7
    %v4435 = vsub.s32 0, %v4434
    %v4436 = vrot.slane %v4118, %v4435
    %v4437 = vlaneseq
    %v4438 = vshrl.u32 %v4437, 7
    %v4439 = vsub.s32 1, %v4438
    %v4440 = vrot.slane %v4118, %v4439
    %v4443 = vadd.f32 %v4428, %v4436
    %v4444 = vadd.f32 %v4429, %v4440
    %v4445 = vadd.f32 %v4430, %v4436
    %v4446 = vadd.f32 %v4431, %v4440
    %v4449 = vrot.slane %v4443, 7
    %v4450 = vrot.slane %v4444, 7
    %4453 = vst [vmem:[#allocation9] sm:$0xfe] %v4449
    %4454 = vst.msk [vmem:[#allocation9 + $0x8] sm:$0xfe] %vm2402, %v4450
    %v4457 = vrot.slane %v4445, 7
    %v4458 = vrot.slane %v4446, 7
    %4461 = vst [vmem:[#allocation9 + $0x10] sm:$0xfc] %v4457
    %4462 = vst.msk [vmem:[#allocation9 + $0x18] sm:$0xfc] %vm3944, %v4458
    %4463 = vst [vmem:[#allocation9 + $0x20] sm:$0x1] %v4457
    %4464 = vst.msk [vmem:[#allocation9 + $0x28] sm:$0x1] %vm3947, %v4458
    %v4465 = vld [vmem:[#allocation58] sm:$0xff]
    %v4466 = vld [vmem:[#allocation58 + $0x8] sm:$0xff]
    %v4467 = vld [vmem:[#allocation58 + $0x10] sm:$0xff]
    %v4468 = vld [vmem:[#allocation58 + $0x18] sm:$0xff]
    %v4469 = vld [vmem:[#allocation58 + $0x20] sm:$0xff]
    %v4470 = vld [vmem:[#allocation58 + $0x28] sm:$0xff]
    %v4471 = vld [vmem:[#allocation58 + $0x30] sm:$0xff]
    %v4472 = vld [vmem:[#allocation58 + $0x38] sm:$0xff]
    %v4473 = vld [vmem:[#allocation58 + $0x40] sm:$0xff]
    %v4474 = vld [vmem:[#allocation58 + $0x48] sm:$0xff]
    %v4475 = vld [vmem:[#allocation58 + $0x50] sm:$0xff]
    %v4476 = vld [vmem:[#allocation58 + $0x58] sm:$0xff]
    %v4477 = vld [vmem:[#allocation58 + $0x60] sm:$0xff]
    %v4478 = vld [vmem:[#allocation58 + $0x68] sm:$0xff]
    %v4479 = vld [vmem:[#allocation58 + $0x70] sm:$0xff]
    %v4480 = vld [vmem:[#allocation58 + $0x78] sm:$0xff]
    %v4481 = vld [vmem:[#allocation58 + $0x80] sm:$0xff]
    %v4482 = vld [vmem:[#allocation58 + $0x88] sm:$0xff]
    %v4483 = vld [vmem:[#allocation58 + $0x90] sm:$0xff]
    %v4484 = vld [vmem:[#allocation58 + $0x98] sm:$0xff]
    %v4485 = vld [vmem:[#allocation58 + $0xa0] sm:$0xff]
    %v4486 = vld [vmem:[#allocation58 + $0xa8] sm:$0xff]
    %v4487 = vld [vmem:[#allocation58 + $0xb0] sm:$0xff]
    %v4488 = vld [vmem:[#allocation58 + $0xb8] sm:$0xff]
    %v4489 = vld [vmem:[#allocation58 + $0xc0] sm:$0xff]
    %v4490 = vld [vmem:[#allocation58 + $0xc8] sm:$0xff]
    %v4491 = vld [vmem:[#allocation58 + $0xd0] sm:$0xff]
    %v4492 = vld [vmem:[#allocation58 + $0xd8] sm:$0xff]
    %v4493 = vld [vmem:[#allocation59] sm:$0xff]
    %v4494 = vld [vmem:[#allocation59 + $0x8] sm:$0xff]
    %v4495 = vld [vmem:[#allocation59 + $0x10] sm:$0xff]
    %v4496 = vld [vmem:[#allocation59 + $0x18] sm:$0xff]
    %v4497 = vld [vmem:[#allocation59 + $0x20] sm:$0xff]
    %v4498 = vld [vmem:[#allocation59 + $0x28] sm:$0xff]
    %v4499 = vld [vmem:[#allocation59 + $0x30] sm:$0xff]
    %v4500 = vld [vmem:[#allocation59 + $0x38] sm:$0xff]
    %v4501 = vld [vmem:[#allocation59 + $0x40] sm:$0xff]
    %v4502 = vld [vmem:[#allocation59 + $0x48] sm:$0xff]
    %v4503 = vld [vmem:[#allocation59 + $0x50] sm:$0xff]
    %v4504 = vld [vmem:[#allocation59 + $0x58] sm:$0xff]
    %v4505 = vld [vmem:[#allocation59 + $0x60] sm:$0xff]
    %v4506 = vld [vmem:[#allocation59 + $0x68] sm:$0xff]
    %v4507 = vld [vmem:[#allocation59 + $0x70] sm:$0xff]
    %v4508 = vld [vmem:[#allocation59 + $0x78] sm:$0xff]
    %v4509 = vld [vmem:[#allocation59 + $0x80] sm:$0xff]
    %v4510 = vld [vmem:[#allocation59 + $0x88] sm:$0xff]
    %v4511 = vld [vmem:[#allocation59 + $0x90] sm:$0xff]
    %v4512 = vld [vmem:[#allocation59 + $0x98] sm:$0xff]
    %v4513 = vld [vmem:[#allocation59 + $0xa0] sm:$0xff]
    %v4514 = vld [vmem:[#allocation59 + $0xa8] sm:$0xff]
    %v4515 = vld [vmem:[#allocation59 + $0xb0] sm:$0xff]
    %v4516 = vld [vmem:[#allocation59 + $0xb8] sm:$0xff]
    %v4517 = vld [vmem:[#allocation59 + $0xc0] sm:$0xff]
    %v4518 = vld [vmem:[#allocation59 + $0xc8] sm:$0xff]
    %v4519 = vld [vmem:[#allocation59 + $0xd0] sm:$0xff]
    %v4520 = vld [vmem:[#allocation59 + $0xd8] sm:$0xff]
    %v4521 = vld [vmem:[#allocation61] sm:$0xff]
    %v4522 = vld [vmem:[#allocation61 + $0x8] sm:$0xff]
    %v4523 = vld [vmem:[#allocation61 + $0x10] sm:$0xff]
    %v4524 = vld [vmem:[#allocation61 + $0x18] sm:$0xff]
    %v4525 = vld [vmem:[#allocation61 + $0x20] sm:$0xff]
    %v4526 = vld [vmem:[#allocation61 + $0x28] sm:$0xff]
    %v4527 = vld [vmem:[#allocation61 + $0x30] sm:$0xff]
    %v4528 = vld [vmem:[#allocation61 + $0x38] sm:$0xff]
    %v4529 = vld [vmem:[#allocation61 + $0x40] sm:$0xff]
    %v4530 = vld [vmem:[#allocation61 + $0x48] sm:$0xff]
    %v4531 = vld [vmem:[#allocation61 + $0x50] sm:$0xff]
    %v4532 = vld [vmem:[#allocation61 + $0x58] sm:$0xff]
    %v4533 = vld [vmem:[#allocation61 + $0x60] sm:$0xff]
    %v4534 = vld [vmem:[#allocation61 + $0x68] sm:$0xff]
    %v4535 = vld [vmem:[#allocation61 + $0x70] sm:$0xff]
    %v4536 = vld [vmem:[#allocation61 + $0x78] sm:$0xff]
    %v4537 = vld [vmem:[#allocation61 + $0x80] sm:$0xff]
    %v4538 = vld [vmem:[#allocation61 + $0x88] sm:$0xff]
    %v4539 = vld [vmem:[#allocation61 + $0x90] sm:$0xff]
    %v4540 = vld [vmem:[#allocation61 + $0x98] sm:$0xff]
    %v4541 = vld [vmem:[#allocation61 + $0xa0] sm:$0xff]
    %v4542 = vld [vmem:[#allocation61 + $0xa8] sm:$0xff]
    %v4543 = vld [vmem:[#allocation61 + $0xb0] sm:$0xff]
    %v4544 = vld [vmem:[#allocation61 + $0xb8] sm:$0xff]
    %v4545 = vld [vmem:[#allocation61 + $0xc0] sm:$0xff]
    %v4546 = vld [vmem:[#allocation61 + $0xc8] sm:$0xff]
    %v4547 = vld [vmem:[#allocation61 + $0xd0] sm:$0xff]
    %v4548 = vld [vmem:[#allocation61 + $0xd8] sm:$0xff]
    %v4549 = vld [vmem:[%s89] sm:$0x1]
    %v4550 = vld [vmem:[%s91] sm:$0x1]
    %v4551 = vld [vmem:[#allocation9] sm:$0xff]
    %v4552 = vld [vmem:[#allocation9 + $0x8] sm:$0xff]
    %v4553 = vld [vmem:[#allocation9 + $0x10] sm:$0xff]
    %v4554 = vld [vmem:[#allocation9 + $0x18] sm:$0xff]
    %v4555 = vld [vmem:[#allocation9] sm:$0xfe]
    %v4556 = vld [vmem:[#allocation9 + $0x8] sm:$0xfe]
    %v4557 = vld [vmem:[#allocation9 + $0x20] sm:$0x1]
    %v4558 = vld [vmem:[#allocation9 + $0x28] sm:$0x1]
    %v4565 = vrot.slane %v4555, 1
    %v4566 = vrot.slane %v4553, 1
    %v4567 = vsel %vm2615, %v4565, %v4566
    %v4568 = vrot.slane %v4556, 1
    %v4569 = vrot.slane %v4554, 1
    %v4570 = vsel %vm2615, %v4568, %v4569
    %v4571 = vrot.slane %v4557, 1
    %v4572 = vsel %vm2615, %v4566, %v4571
    %v4573 = vrot.slane %v4558, 1
    %v4574 = vsel %vm2615, %v4569, %v4573
    %v4577 = vsel %vm777, %v4570, 0
    %v4579 = vsel %vm777, %v4574, 0
    %4581 = vmatprep.subr.mxu0 0.0
    %4582 = vmatpush1.msra.mxu0 %v4493
    %4583 = vmatprep.subr.mxu0 0.0
    %4584 = vmatpush1.msra.mxu0 %v4494
    %4585 = vmatprep.subr.mxu0 0.0
    %4586 = vmatpush1.msra.mxu0 %v4495
    %4587 = vmatprep.subr.mxu0 0.0
    %4588 = vmatpush1.msra.mxu0 %v4496
    %4589 = vmatprep.subr.mxu0 0.0
    %4590 = vmatpush1.msra.mxu0 %v4497
    %4591 = vmatprep.subr.mxu0 0.0
    %4592 = vmatpush1.msra.mxu0 %v4498
    %4593 = vmatprep.subr.mxu0 0.0
    %4594 = vmatpush1.msra.mxu0 %v4499
    %4595 = vmatprep.subr.mxu0 0.0
    %4596 = vmatpush1.msra.mxu0 %v4500
    %4597 = vmatprep.subr.mxu0 0.0
    %4598 = vmatpush1.msra.mxu0 %v4501
    %4599 = vmatprep.subr.mxu0 0.0
    %4600 = vmatpush1.msra.mxu0 %v4502
    %4601 = vmatprep.subr.mxu0 0.0
    %4602 = vmatpush1.msra.mxu0 %v4503
    %4603 = vmatprep.subr.mxu0 0.0
    %4604 = vmatpush1.msra.mxu0 %v4504
    %4605 = vmatprep.subr.mxu0 0.0
    %4606 = vmatpush1.msra.mxu0 %v4505
    %4607 = vmatprep.subr.mxu0 0.0
    %4608 = vmatpush1.msra.mxu0 %v4506
    %4609 = vmatprep.subr.mxu0 0.0
    %4610 = vmatpush1.msra.mxu0 %v4507
    %4611 = vmatprep.subr.mxu0 0.0
    %4612 = vmatpush1.msra.mxu0 %v4508
    %4613 = vmatprep.subr.mxu0 0.0
    %4614 = vmatpush1.msra.mxu0 %v4509
    %4615 = vmatprep.subr.mxu0 0.0
    %4616 = vmatpush1.msra.mxu0 %v4510
    %4617 = vmatprep.subr.mxu0 0.0
    %4618 = vmatpush1.msra.mxu0 %v4511
    %4619 = vmatprep.subr.mxu0 0.0
    %4620 = vmatpush1.msra.mxu0 %v4512
    %4621 = vmatprep.subr.mxu0 0.0
    %4622 = vmatpush1.msra.mxu0 %v4513
    %4623 = vmatprep.subr.mxu0 0.0
    %4624 = vmatpush1.msra.mxu0 %v4514
    %4625 = vmatprep.subr.mxu0 0.0
    %4626 = vmatpush1.msra.mxu0 %v4515
    %4627 = vmatprep.subr.mxu0 0.0
    %4628 = vmatpush1.msra.mxu0 %v4516
    %4629 = vmatprep.subr.mxu0 0.0
    %4630 = vmatpush1.msra.mxu0 %v4517
    %4631 = vmatprep.subr.mxu0 0.0
    %4632 = vmatpush1.msra.mxu0 %v4518
    %4633 = vmatprep.subr.mxu0 0.0
    %4634 = vmatpush1.msra.mxu0 %v4519
    %4635 = vmatprep.subr.mxu0 0.0
    %4636 = vmatpush1.msra.mxu0 %v4520
    %4637 = vmatprep.subr.mxu0 0.0
    %4638 = vmatpush1.msra.mxu0 0.0
    %4639 = vmatprep.subr.mxu0 0.0
    %4640 = vmatpush1.msra.mxu0 0.0
    %4641 = vmatprep.subr.mxu0 0.0
    %4642 = vmatpush1.msra.mxu0 0.0
    %4643 = vmatprep.subr.mxu0 0.0
    %4644 = vmatpush1.msra.mxu0 0.0
    %4645 = vmatprep.mubr.f32.mxu0 %v4577
    %4646 = vmatmul.mubr.f32.gmra.mrb[0].mxu0 %v4567
    %v4647 = vpop.f32.mrb[0].mxu0
    %v4648 = vadd.f32 0.0, %v4647
    %v4649 = vpop.f32.mrb[0].mxu0
    %4650 = vmatprep.mubr.f32.mxu0 %v4579
    %4651 = vmatmul.mubr.f32.gmra.mrb[0].mxu0 %v4572
    %v4652 = vpop.f32.mrb[0].mxu0
    %v4653 = vadd.f32 0.0, %v4652
    %v4654 = vpop.f32.mrb[0].mxu0
    %4655 = vdwg.mxu0
    %v4657 = vsel %vm777, %v4552, 0
    %v4659 = vsel %vm777, %v4554, 0
    %4661 = vmatprep.subr.mxu0 0.0
    %4662 = vmatpush1.msra.mxu0 %v4465
    %4663 = vmatprep.subr.mxu0 0.0
    %4664 = vmatpush1.msra.mxu0 %v4466
    %4665 = vmatprep.subr.mxu0 0.0
    %4666 = vmatpush1.msra.mxu0 %v4467
    %4667 = vmatprep.subr.mxu0 0.0
    %4668 = vmatpush1.msra.mxu0 %v4468
    %4669 = vmatprep.subr.mxu0 0.0
    %4670 = vmatpush1.msra.mxu0 %v4469
    %4671 = vmatprep.subr.mxu0 0.0
    %4672 = vmatpush1.msra.mxu0 %v4470
    %4673 = vmatprep.subr.mxu0 0.0
    %4674 = vmatpush1.msra.mxu0 %v4471
    %4675 = vmatprep.subr.mxu0 0.0
    %4676 = vmatpush1.msra.mxu0 %v4472
    %4677 = vmatprep.subr.mxu0 0.0
    %4678 = vmatpush1.msra.mxu0 %v4473
    %4679 = vmatprep.subr.mxu0 0.0
    %4680 = vmatpush1.msra.mxu0 %v4474
    %4681 = vmatprep.subr.mxu0 0.0
    %4682 = vmatpush1.msra.mxu0 %v4475
    %4683 = vmatprep.subr.mxu0 0.0
    %4684 = vmatpush1.msra.mxu0 %v4476
    %4685 = vmatprep.subr.mxu0 0.0
    %4686 = vmatpush1.msra.mxu0 %v4477
    %4687 = vmatprep.subr.mxu0 0.0
    %4688 = vmatpush1.msra.mxu0 %v4478
    %4689 = vmatprep.subr.mxu0 0.0
    %4690 = vmatpush1.msra.mxu0 %v4479
    %4691 = vmatprep.subr.mxu0 0.0
    %4692 = vmatpush1.msra.mxu0 %v4480
    %4693 = vmatprep.subr.mxu0 0.0
    %4694 = vmatpush1.msra.mxu0 %v4481
    %4695 = vmatprep.subr.mxu0 0.0
    %4696 = vmatpush1.msra.mxu0 %v4482
    %4697 = vmatprep.subr.mxu0 0.0
    %4698 = vmatpush1.msra.mxu0 %v4483
    %4699 = vmatprep.subr.mxu0 0.0
    %4700 = vmatpush1.msra.mxu0 %v4484
    %4701 = vmatprep.subr.mxu0 0.0
    %4702 = vmatpush1.msra.mxu0 %v4485
    %4703 = vmatprep.subr.mxu0 0.0
    %4704 = vmatpush1.msra.mxu0 %v4486
    %4705 = vmatprep.subr.mxu0 0.0
    %4706 = vmatpush1.msra.mxu0 %v4487
    %4707 = vmatprep.subr.mxu0 0.0
    %4708 = vmatpush1.msra.mxu0 %v4488
    %4709 = vmatprep.subr.mxu0 0.0
    %4710 = vmatpush1.msra.mxu0 %v4489
    %4711 = vmatprep.subr.mxu0 0.0
    %4712 = vmatpush1.msra.mxu0 %v4490
    %4713 = vmatprep.subr.mxu0 0.0
    %4714 = vmatpush1.msra.mxu0 %v4491
    %4715 = vmatprep.subr.mxu0 0.0
    %4716 = vmatpush1.msra.mxu0 %v4492
    %4717 = vmatprep.subr.mxu0 0.0
    %4718 = vmatpush1.msra.mxu0 0.0
    %4719 = vmatprep.subr.mxu0 0.0
    %4720 = vmatpush1.msra.mxu0 0.0
    %4721 = vmatprep.subr.mxu0 0.0
    %4722 = vmatpush1.msra.mxu0 0.0
    %4723 = vmatprep.subr.mxu0 0.0
    %4724 = vmatpush1.msra.mxu0 0.0
    %4725 = vmatprep.mubr.f32.mxu0 %v4657
    %4726 = vmatmul.mubr.f32.gmra.mrb[0].mxu0 %v4551
    %v4727 = vpop.f32.mrb[0].mxu0
    %v4728 = vadd.f32 %v4648, %v4727
    %v4729 = vpop.f32.mrb[0].mxu0
    %4730 = vmatprep.mubr.f32.mxu0 %v4659
    %4731 = vmatmul.mubr.f32.gmra.mrb[0].mxu0 %v4553
    %v4732 = vpop.f32.mrb[0].mxu0
    %v4733 = vadd.f32 %v4653, %v4732
    %v4734 = vpop.f32.mrb[0].mxu0
    %4735 = vdwg.mxu0
    %v4736 = vld [vmem:[#allocation9] sm:$0xfc]
    %v4737 = vld [vmem:[#allocation9 + $0x8] sm:$0xfc]
    %v4738 = vld [vmem:[#allocation9 + $0x20] sm:$0x3]
    %v4739 = vld [vmem:[#allocation9 + $0x28] sm:$0x3]
    %v4744 = vrot.slane %v4736, 2
    %v4745 = vrot.slane %v4553, 2
    %v4746 = vsel %vm2838, %v4744, %v4745
    %v4747 = vrot.slane %v4737, 2
    %v4748 = vrot.slane %v4554, 2
    %v4749 = vsel %vm2838, %v4747, %v4748
    %v4750 = vrot.slane %v4738, 2
    %v4751 = vsel %vm2838, %v4745, %v4750
    %v4752 = vrot.slane %v4739, 2
    %v4753 = vsel %vm2838, %v4748, %v4752
    %v4756 = vsel %vm777, %v4749, 0
    %v4758 = vsel %vm777, %v4753, 0
    %4760 = vmatprep.subr.mxu0 0.0
    %4761 = vmatpush1.msra.mxu0 %v4521
    %4762 = vmatprep.subr.mxu0 0.0
    %4763 = vmatpush1.msra.mxu0 %v4522
    %4764 = vmatprep.subr.mxu0 0.0
    %4765 = vmatpush1.msra.mxu0 %v4523
    %4766 = vmatprep.subr.mxu0 0.0
    %4767 = vmatpush1.msra.mxu0 %v4524
    %4768 = vmatprep.subr.mxu0 0.0
    %4769 = vmatpush1.msra.mxu0 %v4525
    %4770 = vmatprep.subr.mxu0 0.0
    %4771 = vmatpush1.msra.mxu0 %v4526
    %4772 = vmatprep.subr.mxu0 0.0
    %4773 = vmatpush1.msra.mxu0 %v4527
    %4774 = vmatprep.subr.mxu0 0.0
    %4775 = vmatpush1.msra.mxu0 %v4528
    %4776 = vmatprep.subr.mxu0 0.0
    %4777 = vmatpush1.msra.mxu0 %v4529
    %4778 = vmatprep.subr.mxu0 0.0
    %4779 = vmatpush1.msra.mxu0 %v4530
    %4780 = vmatprep.subr.mxu0 0.0
    %4781 = vmatpush1.msra.mxu0 %v4531
    %4782 = vmatprep.subr.mxu0 0.0
    %4783 = vmatpush1.msra.mxu0 %v4532
    %4784 = vmatprep.subr.mxu0 0.0
    %4785 = vmatpush1.msra.mxu0 %v4533
    %4786 = vmatprep.subr.mxu0 0.0
    %4787 = vmatpush1.msra.mxu0 %v4534
    %4788 = vmatprep.subr.mxu0 0.0
    %4789 = vmatpush1.msra.mxu0 %v4535
    %4790 = vmatprep.subr.mxu0 0.0
    %4791 = vmatpush1.msra.mxu0 %v4536
    %4792 = vmatprep.subr.mxu0 0.0
    %4793 = vmatpush1.msra.mxu0 %v4537
    %4794 = vmatprep.subr.mxu0 0.0
    %4795 = vmatpush1.msra.mxu0 %v4538
    %4796 = vmatprep.subr.mxu0 0.0
    %4797 = vmatpush1.msra.mxu0 %v4539
    %4798 = vmatprep.subr.mxu0 0.0
    %4799 = vmatpush1.msra.mxu0 %v4540
    %4800 = vmatprep.subr.mxu0 0.0
    %4801 = vmatpush1.msra.mxu0 %v4541
    %4802 = vmatprep.subr.mxu0 0.0
    %4803 = vmatpush1.msra.mxu0 %v4542
    %4804 = vmatprep.subr.mxu0 0.0
    %4805 = vmatpush1.msra.mxu0 %v4543
    %4806 = vmatprep.subr.mxu0 0.0
    %4807 = vmatpush1.msra.mxu0 %v4544
    %4808 = vmatprep.subr.mxu0 0.0
    %4809 = vmatpush1.msra.mxu0 %v4545
    %4810 = vmatprep.subr.mxu0 0.0
    %4811 = vmatpush1.msra.mxu0 %v4546
    %4812 = vmatprep.subr.mxu0 0.0
    %4813 = vmatpush1.msra.mxu0 %v4547
    %4814 = vmatprep.subr.mxu0 0.0
    %4815 = vmatpush1.msra.mxu0 %v4548
    %4816 = vmatprep.subr.mxu0 0.0
    %4817 = vmatpush1.msra.mxu0 0.0
    %4818 = vmatprep.subr.mxu0 0.0
    %4819 = vmatpush1.msra.mxu0 0.0
    %4820 = vmatprep.subr.mxu0 0.0
    %4821 = vmatpush1.msra.mxu0 0.0
    %4822 = vmatprep.subr.mxu0 0.0
    %4823 = vmatpush1.msra.mxu0 0.0
    %4824 = vmatprep.mubr.f32.mxu0 %v4756
    %4825 = vmatmul.mubr.f32.gmra.mrb[0].mxu0 %v4746
    %v4826 = vpop.f32.mrb[0].mxu0
    %v4827 = vadd.f32 0.0, %v4826
    %v4828 = vpop.f32.mrb[0].mxu0
    %4829 = vmatprep.mubr.f32.mxu0 %v4758
    %4830 = vmatmul.mubr.f32.gmra.mrb[0].mxu0 %v4751
    %v4831 = vpop.f32.mrb[0].mxu0
    %v4832 = vadd.f32 0.0, %v4831
    %v4833 = vpop.f32.mrb[0].mxu0
    %4834 = vdwg.mxu0
    %v4835 = vadd.f32 %v4728, %v4827
    %v4836 = vadd.f32 %v4733, %v4832
    %v4837 = vmax.f32 %v4835, 0.0
    %v4838 = vmax.f32 %v4836, 0.0
    %v4840 = vlaneseq
    %v4841 = vshrl.u32 %v4840, 7
    %v4842 = vsub.s32 0, %v4841
    %v4843 = vrot.slane %v4549, %v4842
    %v4845 = vmul.f32 %v4837, %v4843
    %v4846 = vmul.f32 %v4838, %v4843
    %v4848 = vlaneseq
    %v4849 = vshrl.u32 %v4848, 7
    %v4850 = vsub.s32 0, %v4849
    %v4851 = vrot.slane %v4550, %v4850
    %v4853 = vadd.f32 %v4845, %v4851
    %v4854 = vadd.f32 %v4846, %v4851
    %v4856 = vrot.slane %v4853, 1
    %v4858 = vrot.slane %v4853, 2
    %v4860 = vrot.slane %v4853, 3
    %v4862 = vsel %vm2390, %v4853, %v4856
    %v4863 = vsel %vm3518, %v4862, %v4858
    %v4864 = vsel %vm3520, %v4863, %v4860
    %4865 = vst [vmem:[#allocation10 + $0x1] sm:$0xf] %v4864
    %v4867 = vrot.slane %v4854, 1
    %v4869 = vrot.slane %v4854, 2
    %v4871 = vrot.slane %v4854, 3
    %v4873 = vrot.slane %v4854, 4
    %v4875 = vsel %vm2390, %v4867, %v4869
    %v4876 = vsel %vm3518, %v4875, %v4871
    %v4877 = vsel %vm3520, %v4876, %v4873
    %4878 = vst [vmem:[#allocation10 + $0x7] sm:$0xf] %v4877
    %v4879 = vld [vmem:[#allocation62] sm:$0xff]
    %v4880 = vld [vmem:[#allocation62 + $0x8] sm:$0xff]
    %v4881 = vld [vmem:[#allocation62 + $0x10] sm:$0xff]
    %v4882 = vld [vmem:[#allocation62 + $0x18] sm:$0xff]
    %v4883 = vld [vmem:[#allocation62 + $0x20] sm:$0xff]
    %v4884 = vld [vmem:[#allocation62 + $0x28] sm:$0xff]
    %v4885 = vld [vmem:[#allocation62 + $0x30] sm:$0xff]
    %v4886 = vld [vmem:[#allocation62 + $0x38] sm:$0xff]
    %v4887 = vld [vmem:[#allocation62 + $0x40] sm:$0xff]
    %v4888 = vld [vmem:[#allocation62 + $0x48] sm:$0xff]
    %v4889 = vld [vmem:[#allocation62 + $0x50] sm:$0xff]
    %v4890 = vld [vmem:[#allocation62 + $0x58] sm:$0xff]
    %v4891 = vld [vmem:[#allocation62 + $0x60] sm:$0xff]
    %v4892 = vld [vmem:[#allocation62 + $0x68] sm:$0xff]
    %v4893 = vld [vmem:[#allocation62 + $0x70] sm:$0xff]
    %v4894 = vld [vmem:[#allocation62 + $0x78] sm:$0xff]
    %v4895 = vld [vmem:[#allocation62 + $0x80] sm:$0xff]
    %v4896 = vld [vmem:[#allocation62 + $0x88] sm:$0xff]
    %v4897 = vld [vmem:[#allocation62 + $0x90] sm:$0xff]
    %v4898 = vld [vmem:[#allocation62 + $0x98] sm:$0xff]
    %v4899 = vld [vmem:[#allocation62 + $0xa0] sm:$0xff]
    %v4900 = vld [vmem:[#allocation62 + $0xa8] sm:$0xff]
    %v4901 = vld [vmem:[#allocation62 + $0xb0] sm:$0xff]
    %v4902 = vld [vmem:[#allocation62 + $0xb8] sm:$0xff]
    %v4903 = vld [vmem:[#allocation62 + $0xc0] sm:$0xff]
    %v4904 = vld [vmem:[#allocation62 + $0xc8] sm:$0xff]
    %v4905 = vld [vmem:[#allocation62 + $0xd0] sm:$0xff]
    %v4906 = vld [vmem:[#allocation62 + $0xd8] sm:$0xff]
    %v4907 = vld [vmem:[#allocation62 + $0xe0] sm:$0xff]
    %v4908 = vld [vmem:[#allocation62 + $0xe8] sm:$0xff]
    %v4909 = vld [vmem:[#allocation62 + $0xf0] sm:$0xff]
    %v4910 = vld [vmem:[#allocation62 + $0xf8] sm:$0xff]
    %v4911 = vld [vmem:[#allocation64] sm:$0xff]
    %v4912 = vld [vmem:[#allocation64 + $0x8] sm:$0xff]
    %v4913 = vld [vmem:[#allocation64 + $0x10] sm:$0xff]
    %v4914 = vld [vmem:[#allocation64 + $0x18] sm:$0xff]
    %v4915 = vld [vmem:[#allocation64 + $0x20] sm:$0xff]
    %v4916 = vld [vmem:[#allocation64 + $0x28] sm:$0xff]
    %v4917 = vld [vmem:[#allocation64 + $0x30] sm:$0xff]
    %v4918 = vld [vmem:[#allocation64 + $0x38] sm:$0xff]
    %v4919 = vld [vmem:[#allocation64 + $0x40] sm:$0xff]
    %v4920 = vld [vmem:[#allocation64 + $0x48] sm:$0xff]
    %v4921 = vld [vmem:[#allocation64 + $0x50] sm:$0xff]
    %v4922 = vld [vmem:[#allocation64 + $0x58] sm:$0xff]
    %v4923 = vld [vmem:[#allocation64 + $0x60] sm:$0xff]
    %v4924 = vld [vmem:[#allocation64 + $0x68] sm:$0xff]
    %v4925 = vld [vmem:[#allocation64 + $0x70] sm:$0xff]
    %v4926 = vld [vmem:[#allocation64 + $0x78] sm:$0xff]
    %v4927 = vld [vmem:[#allocation64 + $0x80] sm:$0xff]
    %v4928 = vld [vmem:[#allocation64 + $0x88] sm:$0xff]
    %v4929 = vld [vmem:[#allocation64 + $0x90] sm:$0xff]
    %v4930 = vld [vmem:[#allocation64 + $0x98] sm:$0xff]
    %v4931 = vld [vmem:[#allocation64 + $0xa0] sm:$0xff]
    %v4932 = vld [vmem:[#allocation64 + $0xa8] sm:$0xff]
    %v4933 = vld [vmem:[#allocation64 + $0xb0] sm:$0xff]
    %v4934 = vld [vmem:[#allocation64 + $0xb8] sm:$0xff]
    %v4935 = vld [vmem:[#allocation64 + $0xc0] sm:$0xff]
    %v4936 = vld [vmem:[#allocation64 + $0xc8] sm:$0xff]
    %v4937 = vld [vmem:[#allocation64 + $0xd0] sm:$0xff]
    %v4938 = vld [vmem:[#allocation64 + $0xd8] sm:$0xff]
    %v4939 = vld [vmem:[#allocation64 + $0xe0] sm:$0xff]
    %v4940 = vld [vmem:[#allocation64 + $0xe8] sm:$0xff]
    %v4941 = vld [vmem:[#allocation64 + $0xf0] sm:$0xff]
    %v4942 = vld [vmem:[#allocation64 + $0xf8] sm:$0xff]
    %v4943 = vld [vmem:[#allocation65] sm:$0xff]
    %v4944 = vld [vmem:[#allocation65 + $0x8] sm:$0xff]
    %v4945 = vld [vmem:[#allocation65 + $0x10] sm:$0xff]
    %v4946 = vld [vmem:[#allocation65 + $0x18] sm:$0xff]
    %v4947 = vld [vmem:[#allocation65 + $0x20] sm:$0xff]
    %v4948 = vld [vmem:[#allocation65 + $0x28] sm:$0xff]
    %v4949 = vld [vmem:[#allocation65 + $0x30] sm:$0xff]
    %v4950 = vld [vmem:[#allocation65 + $0x38] sm:$0xff]
    %v4951 = vld [vmem:[#allocation65 + $0x40] sm:$0xff]
    %v4952 = vld [vmem:[#allocation65 + $0x48] sm:$0xff]
    %v4953 = vld [vmem:[#allocation65 + $0x50] sm:$0xff]
    %v4954 = vld [vmem:[#allocation65 + $0x58] sm:$0xff]
    %v4955 = vld [vmem:[#allocation65 + $0x60] sm:$0xff]
    %v4956 = vld [vmem:[#allocation65 + $0x68] sm:$0xff]
    %v4957 = vld [vmem:[#allocation65 + $0x70] sm:$0xff]
    %v4958 = vld [vmem:[#allocation65 + $0x78] sm:$0xff]
    %v4959 = vld [vmem:[#allocation65 + $0x80] sm:$0xff]
    %v4960 = vld [vmem:[#allocation65 + $0x88] sm:$0xff]
    %v4961 = vld [vmem:[#allocation65 + $0x90] sm:$0xff]
    %v4962 = vld [vmem:[#allocation65 + $0x98] sm:$0xff]
    %v4963 = vld [vmem:[#allocation65 + $0xa0] sm:$0xff]
    %v4964 = vld [vmem:[#allocation65 + $0xa8] sm:$0xff]
    %v4965 = vld [vmem:[#allocation65 + $0xb0] sm:$0xff]
    %v4966 = vld [vmem:[#allocation65 + $0xb8] sm:$0xff]
    %v4967 = vld [vmem:[#allocation65 + $0xc0] sm:$0xff]
    %v4968 = vld [vmem:[#allocation65 + $0xc8] sm:$0xff]
    %v4969 = vld [vmem:[#allocation65 + $0xd0] sm:$0xff]
    %v4970 = vld [vmem:[#allocation65 + $0xd8] sm:$0xff]
    %v4971 = vld [vmem:[#allocation65 + $0xe0] sm:$0xff]
    %v4972 = vld [vmem:[#allocation65 + $0xe8] sm:$0xff]
    %v4973 = vld [vmem:[#allocation65 + $0xf0] sm:$0xff]
    %v4974 = vld [vmem:[#allocation65 + $0xf8] sm:$0xff]
    %v4975 = vld [vmem:[%s99] sm:$0x3]
    %v4976 = vld [vmem:[%s101] sm:$0x3]
    %v4977 = vld [vmem:[#allocation10] sm:$0xff]
    %v4978 = vld [vmem:[#allocation10 + $0x8] sm:$0x3]
    %v4979 = vld [vmem:[#allocation10 + $0x1] sm:$0xff]
    %v4980 = vld [vmem:[#allocation10 + $0x9] sm:$0x3]
    %4981 = vmatprep.subr.mxu0 %v4912
    %4982 = vmatpush1.msra.mxu0 %v4911
    %4983 = vmatprep.subr.mxu0 %v4914
    %4984 = vmatpush1.msra.mxu0 %v4913
    %4985 = vmatprep.subr.mxu0 %v4916
    %4986 = vmatpush1.msra.mxu0 %v4915
    %4987 = vmatprep.subr.mxu0 %v4918
    %4988 = vmatpush1.msra.mxu0 %v4917
    %4989 = vmatprep.subr.mxu0 %v4920
    %4990 = vmatpush1.msra.mxu0 %v4919
    %4991 = vmatprep.subr.mxu0 %v4922
    %4992 = vmatpush1.msra.mxu0 %v4921
    %4993 = vmatprep.subr.mxu0 %v4924
    %4994 = vmatpush1.msra.mxu0 %v4923
    %4995 = vmatprep.subr.mxu0 %v4926
    %4996 = vmatpush1.msra.mxu0 %v4925
    %4997 = vmatprep.subr.mxu0 %v4928
    %4998 = vmatpush1.msra.mxu0 %v4927
    %4999 = vmatprep.subr.mxu0 %v4930
    %5000 = vmatpush1.msra.mxu0 %v4929
    %5001 = vmatprep.subr.mxu0 %v4932
    %5002 = vmatpush1.msra.mxu0 %v4931
    %5003 = vmatprep.subr.mxu0 %v4934
    %5004 = vmatpush1.msra.mxu0 %v4933
    %5005 = vmatprep.subr.mxu0 %v4936
    %5006 = vmatpush1.msra.mxu0 %v4935
    %5007 = vmatprep.subr.mxu0 %v4938
    %5008 = vmatpush1.msra.mxu0 %v4937
    %5009 = vmatprep.subr.mxu0 %v4940
    %5010 = vmatpush1.msra.mxu0 %v4939
    %5011 = vmatprep.subr.mxu0 %v4942
    %5012 = vmatpush1.msra.mxu0 %v4941
    %5013 = vmatprep.subr.mxu0 0.0
    %5014 = vmatpush1.msra.mxu0 0.0
    %5015 = vmatprep.subr.mxu0 0.0
    %5016 = vmatpush1.msra.mxu0 0.0
    %5017 = vmatprep.subr.mxu0 0.0
    %5018 = vmatpush1.msra.mxu0 0.0
    %5019 = vmatprep.subr.mxu0 0.0
    %5020 = vmatpush1.msra.mxu0 0.0
    %5021 = vmatprep.subr.mxu0 0.0
    %5022 = vmatpush1.msra.mxu0 0.0
    %5023 = vmatprep.subr.mxu0 0.0
    %5024 = vmatpush1.msra.mxu0 0.0
    %5025 = vmatprep.subr.mxu0 0.0
    %5026 = vmatpush1.msra.mxu0 0.0
    %5027 = vmatprep.subr.mxu0 0.0
    %5028 = vmatpush1.msra.mxu0 0.0
    %5029 = vmatprep.subr.mxu0 0.0
    %5030 = vmatpush1.msra.mxu0 0.0
    %5031 = vmatprep.subr.mxu0 0.0
    %5032 = vmatpush1.msra.mxu0 0.0
    %5033 = vmatprep.subr.mxu0 0.0
    %5034 = vmatpush1.msra.mxu0 0.0
    %5035 = vmatprep.subr.mxu0 0.0
    %5036 = vmatpush1.msra.mxu0 0.0
    %5037 = vmatprep.subr.mxu0 0.0
    %5038 = vmatpush1.msra.mxu0 0.0
    %5039 = vmatprep.subr.mxu0 0.0
    %5040 = vmatpush1.msra.mxu0 0.0
    %5041 = vmatprep.subr.mxu0 0.0
    %5042 = vmatpush1.msra.mxu0 0.0
    %5043 = vmatprep.subr.mxu0 0.0
    %5044 = vmatpush1.msra.mxu0 0.0
    %5045 = vmatprep.mubr.f32.mxu0 0.0
    %5046 = vmatmul.mubr.f32.gmra.mrb[0].mxu0 %v4979
    %v5047 = vpop.f32.mrb[0].mxu0
    %v5048 = vadd.f32 0.0, %v5047
    %v5049 = vpop.f32.mrb[0].mxu0
    %v5050 = vadd.f32 0.0, %v5049
    %5051 = vmatprep.mubr.f32.mxu0 0.0
    %5052 = vmatmul.mubr.f32.gmra.mrb[0].mxu0 %v4980
    %v5053 = vpop.f32.mrb[0].mxu0
    %v5054 = vadd.f32 0.0, %v5053
    %v5055 = vpop.f32.mrb[0].mxu0
    %v5056 = vadd.f32 0.0, %v5055
    %5057 = vdwg.mxu0
    %5058 = vmatprep.subr.mxu0 %v4880
    %5059 = vmatpush1.msra.mxu0 %v4879
    %5060 = vmatprep.subr.mxu0 %v4882
    %5061 = vmatpush1.msra.mxu0 %v4881
    %5062 = vmatprep.subr.mxu0 %v4884
    %5063 = vmatpush1.msra.mxu0 %v4883
    %5064 = vmatprep.subr.mxu0 %v4886
    %5065 = vmatpush1.msra.mxu0 %v4885
    %5066 = vmatprep.subr.mxu0 %v4888
    %5067 = vmatpush1.msra.mxu0 %v4887
    %5068 = vmatprep.subr.mxu0 %v4890
    %5069 = vmatpush1.msra.mxu0 %v4889
    %5070 = vmatprep.subr.mxu0 %v4892
    %5071 = vmatpush1.msra.mxu0 %v4891
    %5072 = vmatprep.subr.mxu0 %v4894
    %5073 = vmatpush1.msra.mxu0 %v4893
    %5074 = vmatprep.subr.mxu0 %v4896
    %5075 = vmatpush1.msra.mxu0 %v4895
    %5076 = vmatprep.subr.mxu0 %v4898
    %5077 = vmatpush1.msra.mxu0 %v4897
    %5078 = vmatprep.subr.mxu0 %v4900
    %5079 = vmatpush1.msra.mxu0 %v4899
    %5080 = vmatprep.subr.mxu0 %v4902
    %5081 = vmatpush1.msra.mxu0 %v4901
    %5082 = vmatprep.subr.mxu0 %v4904
    %5083 = vmatpush1.msra.mxu0 %v4903
    %5084 = vmatprep.subr.mxu0 %v4906
    %5085 = vmatpush1.msra.mxu0 %v4905
    %5086 = vmatprep.subr.mxu0 %v4908
    %5087 = vmatpush1.msra.mxu0 %v4907
    %5088 = vmatprep.subr.mxu0 %v4910
    %5089 = vmatpush1.msra.mxu0 %v4909
    %5090 = vmatprep.subr.mxu0 0.0
    %5091 = vmatpush1.msra.mxu0 0.0
    %5092 = vmatprep.subr.mxu0 0.0
    %5093 = vmatpush1.msra.mxu0 0.0
    %5094 = vmatprep.subr.mxu0 0.0
    %5095 = vmatpush1.msra.mxu0 0.0
    %5096 = vmatprep.subr.mxu0 0.0
    %5097 = vmatpush1.msra.mxu0 0.0
    %5098 = vmatprep.subr.mxu0 0.0
    %5099 = vmatpush1.msra.mxu0 0.0
    %5100 = vmatprep.subr.mxu0 0.0
    %5101 = vmatpush1.msra.mxu0 0.0
    %5102 = vmatprep.subr.mxu0 0.0
    %5103 = vmatpush1.msra.mxu0 0.0
    %5104 = vmatprep.subr.mxu0 0.0
    %5105 = vmatpush1.msra.mxu0 0.0
    %5106 = vmatprep.subr.mxu0 0.0
    %5107 = vmatpush1.msra.mxu0 0.0
    %5108 = vmatprep.subr.mxu0 0.0
    %5109 = vmatpush1.msra.mxu0 0.0
    %5110 = vmatprep.subr.mxu0 0.0
    %5111 = vmatpush1.msra.mxu0 0.0
    %5112 = vmatprep.subr.mxu0 0.0
    %5113 = vmatpush1.msra.mxu0 0.0
    %5114 = vmatprep.subr.mxu0 0.0
    %5115 = vmatpush1.msra.mxu0 0.0
    %5116 = vmatprep.subr.mxu0 0.0
    %5117 = vmatpush1.msra.mxu0 0.0
    %5118 = vmatprep.subr.mxu0 0.0
    %5119 = vmatpush1.msra.mxu0 0.0
    %5120 = vmatprep.subr.mxu0 0.0
    %5121 = vmatpush1.msra.mxu0 0.0
    %5122 = vmatprep.mubr.f32.mxu0 0.0
    %5123 = vmatmul.mubr.f32.gmra.mrb[0].mxu0 %v4977
    %v5124 = vpop.f32.mrb[0].mxu0
    %v5125 = vadd.f32 %v5048, %v5124
    %v5126 = vpop.f32.mrb[0].mxu0
    %v5127 = vadd.f32 %v5050, %v5126
    %5128 = vmatprep.mubr.f32.mxu0 0.0
    %5129 = vmatmul.mubr.f32.gmra.mrb[0].mxu0 %v4978
    %v5130 = vpop.f32.mrb[0].mxu0
    %v5131 = vadd.f32 %v5054, %v5130
    %v5132 = vpop.f32.mrb[0].mxu0
    %v5133 = vadd.f32 %v5056, %v5132
    %5134 = vdwg.mxu0
    %v5135 = vld [vmem:[#allocation10 + $0x2] sm:$0xff]
    %v5136 = vld [vmem:[#allocation10 + $0xa] sm:$0x3]
    %5137 = vmatprep.subr.mxu0 %v4944
    %5138 = vmatpush1.msra.mxu0 %v4943
    %5139 = vmatprep.subr.mxu0 %v4946
    %5140 = vmatpush1.msra.mxu0 %v4945
    %5141 = vmatprep.subr.mxu0 %v4948
    %5142 = vmatpush1.msra.mxu0 %v4947
    %5143 = vmatprep.subr.mxu0 %v4950
    %5144 = vmatpush1.msra.mxu0 %v4949
    %5145 = vmatprep.subr.mxu0 %v4952
    %5146 = vmatpush1.msra.mxu0 %v4951
    %5147 = vmatprep.subr.mxu0 %v4954
    %5148 = vmatpush1.msra.mxu0 %v4953
    %5149 = vmatprep.subr.mxu0 %v4956
    %5150 = vmatpush1.msra.mxu0 %v4955
    %5151 = vmatprep.subr.mxu0 %v4958
    %5152 = vmatpush1.msra.mxu0 %v4957
    %5153 = vmatprep.subr.mxu0 %v4960
    %5154 = vmatpush1.msra.mxu0 %v4959
    %5155 = vmatprep.subr.mxu0 %v4962
    %5156 = vmatpush1.msra.mxu0 %v4961
    %5157 = vmatprep.subr.mxu0 %v4964
    %5158 = vmatpush1.msra.mxu0 %v4963
    %5159 = vmatprep.subr.mxu0 %v4966
    %5160 = vmatpush1.msra.mxu0 %v4965
    %5161 = vmatprep.subr.mxu0 %v4968
    %5162 = vmatpush1.msra.mxu0 %v4967
    %5163 = vmatprep.subr.mxu0 %v4970
    %5164 = vmatpush1.msra.mxu0 %v4969
    %5165 = vmatprep.subr.mxu0 %v4972
    %5166 = vmatpush1.msra.mxu0 %v4971
    %5167 = vmatprep.subr.mxu0 %v4974
    %5168 = vmatpush1.msra.mxu0 %v4973
    %5169 = vmatprep.subr.mxu0 0.0
    %5170 = vmatpush1.msra.mxu0 0.0
    %5171 = vmatprep.subr.mxu0 0.0
    %5172 = vmatpush1.msra.mxu0 0.0
    %5173 = vmatprep.subr.mxu0 0.0
    %5174 = vmatpush1.msra.mxu0 0.0
    %5175 = vmatprep.subr.mxu0 0.0
    %5176 = vmatpush1.msra.mxu0 0.0
    %5177 = vmatprep.subr.mxu0 0.0
    %5178 = vmatpush1.msra.mxu0 0.0
    %5179 = vmatprep.subr.mxu0 0.0
    %5180 = vmatpush1.msra.mxu0 0.0
    %5181 = vmatprep.subr.mxu0 0.0
    %5182 = vmatpush1.msra.mxu0 0.0
    %5183 = vmatprep.subr.mxu0 0.0
    %5184 = vmatpush1.msra.mxu0 0.0
    %5185 = vmatprep.subr.mxu0 0.0
    %5186 = vmatpush1.msra.mxu0 0.0
    %5187 = vmatprep.subr.mxu0 0.0
    %5188 = vmatpush1.msra.mxu0 0.0
    %5189 = vmatprep.subr.mxu0 0.0
    %5190 = vmatpush1.msra.mxu0 0.0
    %5191 = vmatprep.subr.mxu0 0.0
    %5192 = vmatpush1.msra.mxu0 0.0
    %5193 = vmatprep.subr.mxu0 0.0
    %5194 = vmatpush1.msra.mxu0 0.0
    %5195 = vmatprep.subr.mxu0 0.0
    %5196 = vmatpush1.msra.mxu0 0.0
    %5197 = vmatprep.subr.mxu0 0.0
    %5198 = vmatpush1.msra.mxu0 0.0
    %5199 = vmatprep.subr.mxu0 0.0
    %5200 = vmatpush1.msra.mxu0 0.0
    %5201 = vmatprep.mubr.f32.mxu0 0.0
    %5202 = vmatmul.mubr.f32.gmra.mrb[0].mxu0 %v5135
    %v5203 = vpop.f32.mrb[0].mxu0
    %v5204 = vadd.f32 0.0, %v5203
    %v5205 = vpop.f32.mrb[0].mxu0
    %v5206 = vadd.f32 0.0, %v5205
    %5207 = vmatprep.mubr.f32.mxu0 0.0
    %5208 = vmatmul.mubr.f32.gmra.mrb[0].mxu0 %v5136
    %v5209 = vpop.f32.mrb[0].mxu0
    %v5210 = vadd.f32 0.0, %v5209
    %v5211 = vpop.f32.mrb[0].mxu0
    %v5212 = vadd.f32 0.0, %v5211
    %5213 = vdwg.mxu0
    %v5214 = vadd.f32 %v5125, %v5204
    %v5215 = vadd.f32 %v5127, %v5206
    %v5216 = vadd.f32 %v5131, %v5210
    %v5217 = vadd.f32 %v5133, %v5212
    %v5218 = vmax.f32 %v5214, 0.0
    %v5219 = vmax.f32 %v5215, 0.0
    %v5220 = vmax.f32 %v5216, 0.0
    %v5221 = vmax.f32 %v5217, 0.0
    %v5223 = vlaneseq
    %v5224 = vshrl.u32 %v5223, 7
    %v5225 = vsub.s32 0, %v5224
    %v5226 = vrot.slane %v4975, %v5225
    %v5227 = vlaneseq
    %v5228 = vshrl.u32 %v5227, 7
    %v5229 = vsub.s32 1, %v5228
    %v5230 = vrot.slane %v4975, %v5229
    %v5233 = vmul.f32 %v5218, %v5226
    %v5234 = vmul.f32 %v5219, %v5230
    %v5235 = vmul.f32 %v5220, %v5226
    %v5236 = vmul.f32 %v5221, %v5230
    %v5238 = vlaneseq
    %v5239 = vshrl.u32 %v5238, 7
    %v5240 = vsub.s32 0, %v5239
    %v5241 = vrot.slane %v4976, %v5240
    %v5242 = vlaneseq
    %v5243 = vshrl.u32 %v5242, 7
    %v5244 = vsub.s32 1, %v5243
    %v5245 = vrot.slane %v4976, %v5244
    %v5248 = vadd.f32 %v5233, %v5241
    %v5249 = vadd.f32 %v5234, %v5245
    %v5250 = vadd.f32 %v5235, %v5241
    %v5251 = vadd.f32 %v5236, %v5245
    %v5254 = vrot.slane %v5248, 7
    %v5255 = vrot.slane %v5249, 7
    %5258 = vst [vmem:[#allocation11] sm:$0x1e] %v5254
    %5259 = vst [vmem:[#allocation11 + $0x8] sm:$0x1e] %v5255
    %v5262 = vrot.slane %v5250, 7
    %v5263 = vsel %vm2390, %v5254, %v5262
    %v5264 = vrot.slane %v5251, 7
    %v5265 = vsel %vm2390, %v5255, %v5264
    %5268 = vst [vmem:[#allocation11] sm:$0x80] %v5254
    %5269 = vst [vmem:[#allocation11 + $0x8] sm:$0x80] %v5255
    %5270 = vst [vmem:[#allocation11 + $0x10] sm:$0x7] %v5263
    %5271 = vst [vmem:[#allocation11 + $0x18] sm:$0x7] %v5265
    %v5272 = vld [vmem:[%s103] sm:$0xff]
    %v5273 = vld [vmem:[%s103 + $0x8] sm:$0xff]
    %v5274 = vld [vmem:[%s103 + $0x10] sm:$0xff]
    %v5275 = vld [vmem:[%s103 + $0x18] sm:$0xff]
    %v5276 = vld [vmem:[%s103 + $0x20] sm:$0xff]
    %v5277 = vld [vmem:[%s103 + $0x28] sm:$0xff]
    %v5278 = vld [vmem:[%s103 + $0x30] sm:$0xff]
    %v5279 = vld [vmem:[%s103 + $0x38] sm:$0xff]
    %v5280 = vld [vmem:[%s103 + $0x40] sm:$0xff]
    %v5281 = vld [vmem:[%s103 + $0x48] sm:$0xff]
    %v5282 = vld [vmem:[%s103 + $0x50] sm:$0xff]
    %v5283 = vld [vmem:[%s103 + $0x58] sm:$0xff]
    %v5284 = vld [vmem:[%s103 + $0x60] sm:$0xff]
    %v5285 = vld [vmem:[%s103 + $0x68] sm:$0xff]
    %v5286 = vld [vmem:[%s103 + $0x70] sm:$0xff]
    %v5287 = vld [vmem:[%s103 + $0x78] sm:$0xff]
    %v5288 = vld [vmem:[%s103 + $0x80] sm:$0xff]
    %v5289 = vld [vmem:[%s103 + $0x88] sm:$0xff]
    %v5290 = vld [vmem:[%s103 + $0x90] sm:$0xff]
    %v5291 = vld [vmem:[%s103 + $0x98] sm:$0xff]
    %v5292 = vld [vmem:[%s103 + $0xa0] sm:$0xff]
    %v5293 = vld [vmem:[%s103 + $0xa8] sm:$0xff]
    %v5294 = vld [vmem:[%s103 + $0xb0] sm:$0xff]
    %v5295 = vld [vmem:[%s103 + $0xb8] sm:$0xff]
    %v5296 = vld [vmem:[%s103 + $0xc0] sm:$0xff]
    %v5297 = vld [vmem:[%s103 + $0xc8] sm:$0xff]
    %v5298 = vld [vmem:[%s103 + $0xd0] sm:$0xff]
    %v5299 = vld [vmem:[%s103 + $0xd8] sm:$0xff]
    %v5300 = vld [vmem:[%s103 + $0xe0] sm:$0xff]
    %v5301 = vld [vmem:[%s103 + $0xe8] sm:$0xff]
    %v5302 = vld [vmem:[%s103 + $0xf0] sm:$0xff]
    %v5303 = vld [vmem:[%s103 + $0xf8] sm:$0xff]
    %v5304 = vld [vmem:[%s103 + $0x100] sm:$0xff]
    %v5305 = vld [vmem:[%s103 + $0x108] sm:$0xff]
    %v5306 = vld [vmem:[%s103 + $0x110] sm:$0xff]
    %v5307 = vld [vmem:[%s103 + $0x118] sm:$0xff]
    %v5308 = vld [vmem:[%s103 + $0x120] sm:$0xff]
    %v5309 = vld [vmem:[%s103 + $0x128] sm:$0xff]
    %v5310 = vld [vmem:[%s103 + $0x130] sm:$0xff]
    %v5311 = vld [vmem:[%s103 + $0x138] sm:$0xff]
    %v5312 = vld [vmem:[%s103 + $0x140] sm:$0xff]
    %v5313 = vld [vmem:[%s103 + $0x148] sm:$0xff]
    %v5314 = vld [vmem:[%s103 + $0x150] sm:$0xff]
    %v5315 = vld [vmem:[%s103 + $0x158] sm:$0xff]
    %v5316 = vld [vmem:[%s103 + $0x160] sm:$0xff]
    %v5317 = vld [vmem:[%s103 + $0x168] sm:$0xff]
    %v5318 = vld [vmem:[%s103 + $0x170] sm:$0xff]
    %v5319 = vld [vmem:[%s103 + $0x178] sm:$0xff]
    %v5320 = vld [vmem:[%s103 + $0x180] sm:$0xff]
    %v5321 = vld [vmem:[%s103 + $0x188] sm:$0xff]
    %v5322 = vld [vmem:[%s103 + $0x190] sm:$0xff]
    %v5323 = vld [vmem:[%s103 + $0x198] sm:$0xff]
    %v5324 = vld [vmem:[%s103 + $0x1a0] sm:$0xff]
    %v5325 = vld [vmem:[%s103 + $0x1a8] sm:$0xff]
    %v5326 = vld [vmem:[%s103 + $0x1b0] sm:$0xff]
    %v5327 = vld [vmem:[%s103 + $0x1b8] sm:$0xff]
    %v5328 = vld [vmem:[%s103 + $0x1c0] sm:$0xff]
    %v5329 = vld [vmem:[%s103 + $0x1c8] sm:$0xff]
    %v5330 = vld [vmem:[%s103 + $0x1d0] sm:$0xff]
    %v5331 = vld [vmem:[%s103 + $0x1d8] sm:$0xff]
    %v5332 = vld [vmem:[%s103 + $0x1e0] sm:$0xff]
    %v5333 = vld [vmem:[%s103 + $0x1e8] sm:$0xff]
    %v5334 = vld [vmem:[%s103 + $0x1f0] sm:$0xff]
    %v5335 = vld [vmem:[%s103 + $0x1f8] sm:$0xff]
    %v5336 = vld [vmem:[%s105] sm:$0xff]
    %v5337 = vld [vmem:[%s105 + $0x8] sm:$0xff]
    %v5338 = vld [vmem:[%s105 + $0x10] sm:$0xff]
    %v5339 = vld [vmem:[%s105 + $0x18] sm:$0xff]
    %v5340 = vld [vmem:[%s105 + $0x20] sm:$0xff]
    %v5341 = vld [vmem:[%s105 + $0x28] sm:$0xff]
    %v5342 = vld [vmem:[%s105 + $0x30] sm:$0xff]
    %v5343 = vld [vmem:[%s105 + $0x38] sm:$0xff]
    %v5344 = vld [vmem:[%s105 + $0x40] sm:$0xff]
    %v5345 = vld [vmem:[%s105 + $0x48] sm:$0xff]
    %v5346 = vld [vmem:[%s105 + $0x50] sm:$0xff]
    %v5347 = vld [vmem:[%s105 + $0x58] sm:$0xff]
    %v5348 = vld [vmem:[%s105 + $0x60] sm:$0xff]
    %v5349 = vld [vmem:[%s105 + $0x68] sm:$0xff]
    %v5350 = vld [vmem:[%s105 + $0x70] sm:$0xff]
    %v5351 = vld [vmem:[%s105 + $0x78] sm:$0xff]
    %v5352 = vld [vmem:[%s105 + $0x80] sm:$0xff]
    %v5353 = vld [vmem:[%s105 + $0x88] sm:$0xff]
    %v5354 = vld [vmem:[%s105 + $0x90] sm:$0xff]
    %v5355 = vld [vmem:[%s105 + $0x98] sm:$0xff]
    %v5356 = vld [vmem:[%s105 + $0xa0] sm:$0xff]
    %v5357 = vld [vmem:[%s105 + $0xa8] sm:$0xff]
    %v5358 = vld [vmem:[%s105 + $0xb0] sm:$0xff]
    %v5359 = vld [vmem:[%s105 + $0xb8] sm:$0xff]
    %v5360 = vld [vmem:[%s105 + $0xc0] sm:$0xff]
    %v5361 = vld [vmem:[%s105 + $0xc8] sm:$0xff]
    %v5362 = vld [vmem:[%s105 + $0xd0] sm:$0xff]
    %v5363 = vld [vmem:[%s105 + $0xd8] sm:$0xff]
    %v5364 = vld [vmem:[%s105 + $0xe0] sm:$0xff]
    %v5365 = vld [vmem:[%s105 + $0xe8] sm:$0xff]
    %v5366 = vld [vmem:[%s105 + $0xf0] sm:$0xff]
    %v5367 = vld [vmem:[%s105 + $0xf8] sm:$0xff]
    %v5368 = vld [vmem:[%s105 + $0x100] sm:$0xff]
    %v5369 = vld [vmem:[%s105 + $0x108] sm:$0xff]
    %v5370 = vld [vmem:[%s105 + $0x110] sm:$0xff]
    %v5371 = vld [vmem:[%s105 + $0x118] sm:$0xff]
    %v5372 = vld [vmem:[%s105 + $0x120] sm:$0xff]
    %v5373 = vld [vmem:[%s105 + $0x128] sm:$0xff]
    %v5374 = vld [vmem:[%s105 + $0x130] sm:$0xff]
    %v5375 = vld [vmem:[%s105 + $0x138] sm:$0xff]
    %v5376 = vld [vmem:[%s105 + $0x140] sm:$0xff]
    %v5377 = vld [vmem:[%s105 + $0x148] sm:$0xff]
    %v5378 = vld [vmem:[%s105 + $0x150] sm:$0xff]
    %v5379 = vld [vmem:[%s105 + $0x158] sm:$0xff]
    %v5380 = vld [vmem:[%s105 + $0x160] sm:$0xff]
    %v5381 = vld [vmem:[%s105 + $0x168] sm:$0xff]
    %v5382 = vld [vmem:[%s105 + $0x170] sm:$0xff]
    %v5383 = vld [vmem:[%s105 + $0x178] sm:$0xff]
    %v5384 = vld [vmem:[%s105 + $0x180] sm:$0xff]
    %v5385 = vld [vmem:[%s105 + $0x188] sm:$0xff]
    %v5386 = vld [vmem:[%s105 + $0x190] sm:$0xff]
    %v5387 = vld [vmem:[%s105 + $0x198] sm:$0xff]
    %v5388 = vld [vmem:[%s105 + $0x1a0] sm:$0xff]
    %v5389 = vld [vmem:[%s105 + $0x1a8] sm:$0xff]
    %v5390 = vld [vmem:[%s105 + $0x1b0] sm:$0xff]
    %v5391 = vld [vmem:[%s105 + $0x1b8] sm:$0xff]
    %v5392 = vld [vmem:[%s105 + $0x1c0] sm:$0xff]
    %v5393 = vld [vmem:[%s105 + $0x1c8] sm:$0xff]
    %v5394 = vld [vmem:[%s105 + $0x1d0] sm:$0xff]
    %v5395 = vld [vmem:[%s105 + $0x1d8] sm:$0xff]
    %v5396 = vld [vmem:[%s105 + $0x1e0] sm:$0xff]
    %v5397 = vld [vmem:[%s105 + $0x1e8] sm:$0xff]
    %v5398 = vld [vmem:[%s105 + $0x1f0] sm:$0xff]
    %v5399 = vld [vmem:[%s105 + $0x1f8] sm:$0xff]
    %v5400 = vld [vmem:[#allocation67] sm:$0xff]
    %v5401 = vld [vmem:[#allocation67 + $0x8] sm:$0xff]
    %v5402 = vld [vmem:[#allocation67 + $0x10] sm:$0xff]
    %v5403 = vld [vmem:[#allocation67 + $0x18] sm:$0xff]
    %v5404 = vld [vmem:[#allocation67 + $0x20] sm:$0xff]
    %v5405 = vld [vmem:[#allocation67 + $0x28] sm:$0xff]
    %v5406 = vld [vmem:[#allocation67 + $0x30] sm:$0xff]
    %v5407 = vld [vmem:[#allocation67 + $0x38] sm:$0xff]
    %v5408 = vld [vmem:[#allocation67 + $0x40] sm:$0xff]
    %v5409 = vld [vmem:[#allocation67 + $0x48] sm:$0xff]
    %v5410 = vld [vmem:[#allocation67 + $0x50] sm:$0xff]
    %v5411 = vld [vmem:[#allocation67 + $0x58] sm:$0xff]
    %v5412 = vld [vmem:[#allocation67 + $0x60] sm:$0xff]
    %v5413 = vld [vmem:[#allocation67 + $0x68] sm:$0xff]
    %v5414 = vld [vmem:[#allocation67 + $0x70] sm:$0xff]
    %v5415 = vld [vmem:[#allocation67 + $0x78] sm:$0xff]
    %v5416 = vld [vmem:[#allocation67 + $0x80] sm:$0xff]
    %v5417 = vld [vmem:[#allocation67 + $0x88] sm:$0xff]
    %v5418 = vld [vmem:[#allocation67 + $0x90] sm:$0xff]
    %v5419 = vld [vmem:[#allocation67 + $0x98] sm:$0xff]
    %v5420 = vld [vmem:[#allocation67 + $0xa0] sm:$0xff]
    %v5421 = vld [vmem:[#allocation67 + $0xa8] sm:$0xff]
    %v5422 = vld [vmem:[#allocation67 + $0xb0] sm:$0xff]
    %v5423 = vld [vmem:[#allocation67 + $0xb8] sm:$0xff]
    %v5424 = vld [vmem:[#allocation67 + $0xc0] sm:$0xff]
    %v5425 = vld [vmem:[#allocation67 + $0xc8] sm:$0xff]
    %v5426 = vld [vmem:[#allocation67 + $0xd0] sm:$0xff]
    %v5427 = vld [vmem:[#allocation67 + $0xd8] sm:$0xff]
    %v5428 = vld [vmem:[#allocation67 + $0xe0] sm:$0xff]
    %v5429 = vld [vmem:[#allocation67 + $0xe8] sm:$0xff]
    %v5430 = vld [vmem:[#allocation67 + $0xf0] sm:$0xff]
    %v5431 = vld [vmem:[#allocation67 + $0xf8] sm:$0xff]
    %v5432 = vld [vmem:[#allocation67 + $0x100] sm:$0xff]
    %v5433 = vld [vmem:[#allocation67 + $0x108] sm:$0xff]
    %v5434 = vld [vmem:[#allocation67 + $0x110] sm:$0xff]
    %v5435 = vld [vmem:[#allocation67 + $0x118] sm:$0xff]
    %v5436 = vld [vmem:[#allocation67 + $0x120] sm:$0xff]
    %v5437 = vld [vmem:[#allocation67 + $0x128] sm:$0xff]
    %v5438 = vld [vmem:[#allocation67 + $0x130] sm:$0xff]
    %v5439 = vld [vmem:[#allocation67 + $0x138] sm:$0xff]
    %v5440 = vld [vmem:[#allocation67 + $0x140] sm:$0xff]
    %v5441 = vld [vmem:[#allocation67 + $0x148] sm:$0xff]
    %v5442 = vld [vmem:[#allocation67 + $0x150] sm:$0xff]
    %v5443 = vld [vmem:[#allocation67 + $0x158] sm:$0xff]
    %v5444 = vld [vmem:[#allocation67 + $0x160] sm:$0xff]
    %v5445 = vld [vmem:[#allocation67 + $0x168] sm:$0xff]
    %v5446 = vld [vmem:[#allocation67 + $0x170] sm:$0xff]
    %v5447 = vld [vmem:[#allocation67 + $0x178] sm:$0xff]
    %v5448 = vld [vmem:[#allocation67 + $0x180] sm:$0xff]
    %v5449 = vld [vmem:[#allocation67 + $0x188] sm:$0xff]
    %v5450 = vld [vmem:[#allocation67 + $0x190] sm:$0xff]
    %v5451 = vld [vmem:[#allocation67 + $0x198] sm:$0xff]
    %v5452 = vld [vmem:[#allocation67 + $0x1a0] sm:$0xff]
    %v5453 = vld [vmem:[#allocation67 + $0x1a8] sm:$0xff]
    %v5454 = vld [vmem:[#allocation67 + $0x1b0] sm:$0xff]
    %v5455 = vld [vmem:[#allocation67 + $0x1b8] sm:$0xff]
    %v5456 = vld [vmem:[#allocation67 + $0x1c0] sm:$0xff]
    %v5457 = vld [vmem:[#allocation67 + $0x1c8] sm:$0xff]
    %v5458 = vld [vmem:[#allocation67 + $0x1d0] sm:$0xff]
    %v5459 = vld [vmem:[#allocation67 + $0x1d8] sm:$0xff]
    %v5460 = vld [vmem:[#allocation67 + $0x1e0] sm:$0xff]
    %v5461 = vld [vmem:[#allocation67 + $0x1e8] sm:$0xff]
    %v5462 = vld [vmem:[#allocation67 + $0x1f0] sm:$0xff]
    %v5463 = vld [vmem:[#allocation67 + $0x1f8] sm:$0xff]
    %v5464 = vld [vmem:[%s109] sm:$0x3]
    %v5465 = vld [vmem:[%s111] sm:$0x3]
    %v5466 = vld [vmem:[#allocation11] sm:$0xff]
    %v5467 = vld [vmem:[#allocation11 + $0x8] sm:$0xff]
    %v5468 = vld [vmem:[#allocation11 + $0x10] sm:$0x3]
    %v5469 = vld [vmem:[#allocation11 + $0x18] sm:$0x3]
    %v5470 = vld [vmem:[#allocation11] sm:$0xfe]
    %v5471 = vld [vmem:[#allocation11 + $0x8] sm:$0xfe]
    %v5472 = vld [vmem:[#allocation11 + $0x10] sm:$0x7]
    %v5473 = vld [vmem:[#allocation11 + $0x18] sm:$0x7]
    %v5478 = vrot.slane %v5470, 1
    %v5479 = vrot.slane %v5472, 1
    %v5480 = vsel %vm2615, %v5478, %v5479
    %v5481 = vrot.slane %v5471, 1
    %v5482 = vrot.slane %v5473, 1
    %v5483 = vsel %vm2615, %v5481, %v5482
    %5488 = vmatprep.subr.mxu0 %v5337
    %5489 = vmatpush1.msra.mxu0 %v5336
    %5490 = vmatprep.subr.mxu0 %v5339
    %5491 = vmatpush1.msra.mxu0 %v5338
    %5492 = vmatprep.subr.mxu0 %v5341
    %5493 = vmatpush1.msra.mxu0 %v5340
    %5494 = vmatprep.subr.mxu0 %v5343
    %5495 = vmatpush1.msra.mxu0 %v5342
    %5496 = vmatprep.subr.mxu0 %v5345
    %5497 = vmatpush1.msra.mxu0 %v5344
    %5498 = vmatprep.subr.mxu0 %v5347
    %5499 = vmatpush1.msra.mxu0 %v5346
    %5500 = vmatprep.subr.mxu0 %v5349
    %5501 = vmatpush1.msra.mxu0 %v5348
    %5502 = vmatprep.subr.mxu0 %v5351
    %5503 = vmatpush1.msra.mxu0 %v5350
    %5504 = vmatprep.subr.mxu0 %v5353
    %5505 = vmatpush1.msra.mxu0 %v5352
    %5506 = vmatprep.subr.mxu0 %v5355
    %5507 = vmatpush1.msra.mxu0 %v5354
    %5508 = vmatprep.subr.mxu0 %v5357
    %5509 = vmatpush1.msra.mxu0 %v5356
    %5510 = vmatprep.subr.mxu0 %v5359
    %5511 = vmatpush1.msra.mxu0 %v5358
    %5512 = vmatprep.subr.mxu0 %v5361
    %5513 = vmatpush1.msra.mxu0 %v5360
    %5514 = vmatprep.subr.mxu0 %v5363
    %5515 = vmatpush1.msra.mxu0 %v5362
    %5516 = vmatprep.subr.mxu0 %v5365
    %5517 = vmatpush1.msra.mxu0 %v5364
    %5518 = vmatprep.subr.mxu0 %v5367
    %5519 = vmatpush1.msra.mxu0 %v5366
    %5520 = vmatprep.subr.mxu0 %v5369
    %5521 = vmatpush1.msra.mxu0 %v5368
    %5522 = vmatprep.subr.mxu0 %v5371
    %5523 = vmatpush1.msra.mxu0 %v5370
    %5524 = vmatprep.subr.mxu0 %v5373
    %5525 = vmatpush1.msra.mxu0 %v5372
    %5526 = vmatprep.subr.mxu0 %v5375
    %5527 = vmatpush1.msra.mxu0 %v5374
    %5528 = vmatprep.subr.mxu0 %v5377
    %5529 = vmatpush1.msra.mxu0 %v5376
    %5530 = vmatprep.subr.mxu0 %v5379
    %5531 = vmatpush1.msra.mxu0 %v5378
    %5532 = vmatprep.subr.mxu0 %v5381
    %5533 = vmatpush1.msra.mxu0 %v5380
    %5534 = vmatprep.subr.mxu0 %v5383
    %5535 = vmatpush1.msra.mxu0 %v5382
    %5536 = vmatprep.subr.mxu0 %v5385
    %5537 = vmatpush1.msra.mxu0 %v5384
    %5538 = vmatprep.subr.mxu0 %v5387
    %5539 = vmatpush1.msra.mxu0 %v5386
    %5540 = vmatprep.subr.mxu0 %v5389
    %5541 = vmatpush1.msra.mxu0 %v5388
    %5542 = vmatprep.subr.mxu0 %v5391
    %5543 = vmatpush1.msra.mxu0 %v5390
    %5544 = vmatprep.subr.mxu0 %v5393
    %5545 = vmatpush1.msra.mxu0 %v5392
    %5546 = vmatprep.subr.mxu0 %v5395
    %5547 = vmatpush1.msra.mxu0 %v5394
    %5548 = vmatprep.subr.mxu0 %v5397
    %5549 = vmatpush1.msra.mxu0 %v5396
    %5550 = vmatprep.subr.mxu0 %v5399
    %5551 = vmatpush1.msra.mxu0 %v5398
    %5552 = vmatprep.mubr.f32.mxu0 %v5483
    %5553 = vmatmul.mubr.f32.gmra.mrb[0].mxu0 %v5480
    %v5554 = vpop.f32.mrb[0].mxu0
    %v5555 = vadd.f32 0.0, %v5554
    %v5556 = vpop.f32.mrb[0].mxu0
    %v5557 = vadd.f32 0.0, %v5556
    %5558 = vmatprep.mubr.f32.mxu0 %v5482
    %5559 = vmatmul.mubr.f32.gmra.mrb[0].mxu0 %v5479
    %v5560 = vpop.f32.mrb[0].mxu0
    %v5561 = vadd.f32 0.0, %v5560
    %v5562 = vpop.f32.mrb[0].mxu0
    %v5563 = vadd.f32 0.0, %v5562
    %5564 = vdwg.mxu0
    %5565 = vmatprep.subr.mxu0 %v5273
    %5566 = vmatpush1.msra.mxu0 %v5272
    %5567 = vmatprep.subr.mxu0 %v5275
    %5568 = vmatpush1.msra.mxu0 %v5274
    %5569 = vmatprep.subr.mxu0 %v5277
    %5570 = vmatpush1.msra.mxu0 %v5276
    %5571 = vmatprep.subr.mxu0 %v5279
    %5572 = vmatpush1.msra.mxu0 %v5278
    %5573 = vmatprep.subr.mxu0 %v5281
    %5574 = vmatpush1.msra.mxu0 %v5280
    %5575 = vmatprep.subr.mxu0 %v5283
    %5576 = vmatpush1.msra.mxu0 %v5282
    %5577 = vmatprep.subr.mxu0 %v5285
    %5578 = vmatpush1.msra.mxu0 %v5284
    %5579 = vmatprep.subr.mxu0 %v5287
    %5580 = vmatpush1.msra.mxu0 %v5286
    %5581 = vmatprep.subr.mxu0 %v5289
    %5582 = vmatpush1.msra.mxu0 %v5288
    %5583 = vmatprep.subr.mxu0 %v5291
    %5584 = vmatpush1.msra.mxu0 %v5290
    %5585 = vmatprep.subr.mxu0 %v5293
    %5586 = vmatpush1.msra.mxu0 %v5292
    %5587 = vmatprep.subr.mxu0 %v5295
    %5588 = vmatpush1.msra.mxu0 %v5294
    %5589 = vmatprep.subr.mxu0 %v5297
    %5590 = vmatpush1.msra.mxu0 %v5296
    %5591 = vmatprep.subr.mxu0 %v5299
    %5592 = vmatpush1.msra.mxu0 %v5298
    %5593 = vmatprep.subr.mxu0 %v5301
    %5594 = vmatpush1.msra.mxu0 %v5300
    %5595 = vmatprep.subr.mxu0 %v5303
    %5596 = vmatpush1.msra.mxu0 %v5302
    %5597 = vmatprep.subr.mxu0 %v5305
    %5598 = vmatpush1.msra.mxu0 %v5304
    %5599 = vmatprep.subr.mxu0 %v5307
    %5600 = vmatpush1.msra.mxu0 %v5306
    %5601 = vmatprep.subr.mxu0 %v5309
    %5602 = vmatpush1.msra.mxu0 %v5308
    %5603 = vmatprep.subr.mxu0 %v5311
    %5604 = vmatpush1.msra.mxu0 %v5310
    %5605 = vmatprep.subr.mxu0 %v5313
    %5606 = vmatpush1.msra.mxu0 %v5312
    %5607 = vmatprep.subr.mxu0 %v5315
    %5608 = vmatpush1.msra.mxu0 %v5314
    %5609 = vmatprep.subr.mxu0 %v5317
    %5610 = vmatpush1.msra.mxu0 %v5316
    %5611 = vmatprep.subr.mxu0 %v5319
    %5612 = vmatpush1.msra.mxu0 %v5318
    %5613 = vmatprep.subr.mxu0 %v5321
    %5614 = vmatpush1.msra.mxu0 %v5320
    %5615 = vmatprep.subr.mxu0 %v5323
    %5616 = vmatpush1.msra.mxu0 %v5322
    %5617 = vmatprep.subr.mxu0 %v5325
    %5618 = vmatpush1.msra.mxu0 %v5324
    %5619 = vmatprep.subr.mxu0 %v5327
    %5620 = vmatpush1.msra.mxu0 %v5326
    %5621 = vmatprep.subr.mxu0 %v5329
    %5622 = vmatpush1.msra.mxu0 %v5328
    %5623 = vmatprep.subr.mxu0 %v5331
    %5624 = vmatpush1.msra.mxu0 %v5330
    %5625 = vmatprep.subr.mxu0 %v5333
    %5626 = vmatpush1.msra.mxu0 %v5332
    %5627 = vmatprep.subr.mxu0 %v5335
    %5628 = vmatpush1.msra.mxu0 %v5334
    %5629 = vmatprep.mubr.f32.mxu0 %v5467
    %5630 = vmatmul.mubr.f32.gmra.mrb[0].mxu0 %v5466
    %v5631 = vpop.f32.mrb[0].mxu0
    %v5632 = vadd.f32 %v5555, %v5631
    %v5633 = vpop.f32.mrb[0].mxu0
    %v5634 = vadd.f32 %v5557, %v5633
    %5635 = vmatprep.mubr.f32.mxu0 %v5469
    %5636 = vmatmul.mubr.f32.gmra.mrb[0].mxu0 %v5468
    %v5637 = vpop.f32.mrb[0].mxu0
    %v5638 = vadd.f32 %v5561, %v5637
    %v5639 = vpop.f32.mrb[0].mxu0
    %v5640 = vadd.f32 %v5563, %v5639
    %5641 = vdwg.mxu0
    %v5642 = vld [vmem:[#allocation11] sm:$0xfc]
    %v5643 = vld [vmem:[#allocation11 + $0x8] sm:$0xfc]
    %v5644 = vld [vmem:[#allocation11 + $0x10] sm:$0xf]
    %v5645 = vld [vmem:[#allocation11 + $0x18] sm:$0xf]
    %v5650 = vrot.slane %v5642, 2
    %v5651 = vrot.slane %v5644, 2
    %v5652 = vsel %vm2838, %v5650, %v5651
    %v5653 = vrot.slane %v5643, 2
    %v5654 = vrot.slane %v5645, 2
    %v5655 = vsel %vm2838, %v5653, %v5654
    %5660 = vmatprep.subr.mxu0 %v5401
    %5661 = vmatpush1.msra.mxu0 %v5400
    %5662 = vmatprep.subr.mxu0 %v5403
    %5663 = vmatpush1.msra.mxu0 %v5402
    %5664 = vmatprep.subr.mxu0 %v5405
    %5665 = vmatpush1.msra.mxu0 %v5404
    %5666 = vmatprep.subr.mxu0 %v5407
    %5667 = vmatpush1.msra.mxu0 %v5406
    %5668 = vmatprep.subr.mxu0 %v5409
    %5669 = vmatpush1.msra.mxu0 %v5408
    %5670 = vmatprep.subr.mxu0 %v5411
    %5671 = vmatpush1.msra.mxu0 %v5410
    %5672 = vmatprep.subr.mxu0 %v5413
    %5673 = vmatpush1.msra.mxu0 %v5412
    %5674 = vmatprep.subr.mxu0 %v5415
    %5675 = vmatpush1.msra.mxu0 %v5414
    %5676 = vmatprep.subr.mxu0 %v5417
    %5677 = vmatpush1.msra.mxu0 %v5416
    %5678 = vmatprep.subr.mxu0 %v5419
    %5679 = vmatpush1.msra.mxu0 %v5418
    %5680 = vmatprep.subr.mxu0 %v5421
    %5681 = vmatpush1.msra.mxu0 %v5420
    %5682 = vmatprep.subr.mxu0 %v5423
    %5683 = vmatpush1.msra.mxu0 %v5422
    %5684 = vmatprep.subr.mxu0 %v5425
    %5685 = vmatpush1.msra.mxu0 %v5424
    %5686 = vmatprep.subr.mxu0 %v5427
    %5687 = vmatpush1.msra.mxu0 %v5426
    %5688 = vmatprep.subr.mxu0 %v5429
    %5689 = vmatpush1.msra.mxu0 %v5428
    %5690 = vmatprep.subr.mxu0 %v5431
    %5691 = vmatpush1.msra.mxu0 %v5430
    %5692 = vmatprep.subr.mxu0 %v5433
    %5693 = vmatpush1.msra.mxu0 %v5432
    %5694 = vmatprep.subr.mxu0 %v5435
    %5695 = vmatpush1.msra.mxu0 %v5434
    %5696 = vmatprep.subr.mxu0 %v5437
    %5697 = vmatpush1.msra.mxu0 %v5436
    %5698 = vmatprep.subr.mxu0 %v5439
    %5699 = vmatpush1.msra.mxu0 %v5438
    %5700 = vmatprep.subr.mxu0 %v5441
    %5701 = vmatpush1.msra.mxu0 %v5440
    %5702 = vmatprep.subr.mxu0 %v5443
    %5703 = vmatpush1.msra.mxu0 %v5442
    %5704 = vmatprep.subr.mxu0 %v5445
    %5705 = vmatpush1.msra.mxu0 %v5444
    %5706 = vmatprep.subr.mxu0 %v5447
    %5707 = vmatpush1.msra.mxu0 %v5446
    %5708 = vmatprep.subr.mxu0 %v5449
    %5709 = vmatpush1.msra.mxu0 %v5448
    %5710 = vmatprep.subr.mxu0 %v5451
    %5711 = vmatpush1.msra.mxu0 %v5450
    %5712 = vmatprep.subr.mxu0 %v5453
    %5713 = vmatpush1.msra.mxu0 %v5452
    %5714 = vmatprep.subr.mxu0 %v5455
    %5715 = vmatpush1.msra.mxu0 %v5454
    %5716 = vmatprep.subr.mxu0 %v5457
    %5717 = vmatpush1.msra.mxu0 %v5456
    %5718 = vmatprep.subr.mxu0 %v5459
    %5719 = vmatpush1.msra.mxu0 %v5458
    %5720 = vmatprep.subr.mxu0 %v5461
    %5721 = vmatpush1.msra.mxu0 %v5460
    %5722 = vmatprep.subr.mxu0 %v5463
    %5723 = vmatpush1.msra.mxu0 %v5462
    %5724 = vmatprep.mubr.f32.mxu0 %v5655
    %5725 = vmatmul.mubr.f32.gmra.mrb[0].mxu0 %v5652
    %v5726 = vpop.f32.mrb[0].mxu0
    %v5727 = vadd.f32 0.0, %v5726
    %v5728 = vpop.f32.mrb[0].mxu0
    %v5729 = vadd.f32 0.0, %v5728
    %5730 = vmatprep.mubr.f32.mxu0 %v5654
    %5731 = vmatmul.mubr.f32.gmra.mrb[0].mxu0 %v5651
    %v5732 = vpop.f32.mrb[0].mxu0
    %v5733 = vadd.f32 0.0, %v5732
    %v5734 = vpop.f32.mrb[0].mxu0
    %v5735 = vadd.f32 0.0, %v5734
    %5736 = vdwg.mxu0
    %v5737 = vadd.f32 %v5632, %v5727
    %v5738 = vadd.f32 %v5634, %v5729
    %v5739 = vadd.f32 %v5638, %v5733
    %v5740 = vadd.f32 %v5640, %v5735
    %v5741 = vmax.f32 %v5737, 0.0
    %v5742 = vmax.f32 %v5738, 0.0
    %v5743 = vmax.f32 %v5739, 0.0
    %v5744 = vmax.f32 %v5740, 0.0
    %v5746 = vlaneseq
    %v5747 = vshrl.u32 %v5746, 7
    %v5748 = vsub.s32 0, %v5747
    %v5749 = vrot.slane %v5464, %v5748
    %v5750 = vlaneseq
    %v5751 = vshrl.u32 %v5750, 7
    %v5752 = vsub.s32 1, %v5751
    %v5753 = vrot.slane %v5464, %v5752
    %v5756 = vmul.f32 %v5741, %v5749
    %v5757 = vmul.f32 %v5742, %v5753
    %v5758 = vmul.f32 %v5743, %v5749
    %v5759 = vmul.f32 %v5744, %v5753
    %v5761 = vlaneseq
    %v5762 = vshrl.u32 %v5761, 7
    %v5763 = vsub.s32 0, %v5762
    %v5764 = vrot.slane %v5465, %v5763
    %v5765 = vlaneseq
    %v5766 = vshrl.u32 %v5765, 7
    %v5767 = vsub.s32 1, %v5766
    %v5768 = vrot.slane %v5465, %v5767
    %v5771 = vadd.f32 %v5756, %v5764
    %v5772 = vadd.f32 %v5757, %v5768
    %v5773 = vadd.f32 %v5758, %v5764
    %v5774 = vadd.f32 %v5759, %v5768
    %v5777 = vrot.slane %v5771, 7
    %v5778 = vrot.slane %v5772, 7
    %5781 = vst [vmem:[#allocation12] sm:$0x1e] %v5777
    %5782 = vst [vmem:[#allocation12 + $0x8] sm:$0x1e] %v5778
    %v5785 = vrot.slane %v5773, 7
    %v5786 = vsel %vm2390, %v5777, %v5785
    %v5787 = vrot.slane %v5774, 7
    %v5788 = vsel %vm2390, %v5778, %v5787
    %5791 = vst [vmem:[#allocation12] sm:$0x80] %v5777
    %5792 = vst [vmem:[#allocation12 + $0x8] sm:$0x80] %v5778
    %5793 = vst [vmem:[#allocation12 + $0x10] sm:$0x7] %v5786
    %5794 = vst [vmem:[#allocation12 + $0x18] sm:$0x7] %v5788
    %v5795 = vld [vmem:[#allocation68] sm:$0xff]
    %v5796 = vld [vmem:[#allocation68 + $0x8] sm:$0xff]
    %v5797 = vld [vmem:[#allocation68 + $0x10] sm:$0xff]
    %v5798 = vld [vmem:[#allocation68 + $0x18] sm:$0xff]
    %v5799 = vld [vmem:[#allocation68 + $0x20] sm:$0xff]
    %v5800 = vld [vmem:[#allocation68 + $0x28] sm:$0xff]
    %v5801 = vld [vmem:[#allocation68 + $0x30] sm:$0xff]
    %v5802 = vld [vmem:[#allocation68 + $0x38] sm:$0xff]
    %v5803 = vld [vmem:[#allocation68 + $0x40] sm:$0xff]
    %v5804 = vld [vmem:[#allocation68 + $0x48] sm:$0xff]
    %v5805 = vld [vmem:[#allocation68 + $0x50] sm:$0xff]
    %v5806 = vld [vmem:[#allocation68 + $0x58] sm:$0xff]
    %v5807 = vld [vmem:[#allocation68 + $0x60] sm:$0xff]
    %v5808 = vld [vmem:[#allocation68 + $0x68] sm:$0xff]
    %v5809 = vld [vmem:[#allocation68 + $0x70] sm:$0xff]
    %v5810 = vld [vmem:[#allocation68 + $0x78] sm:$0xff]
    %v5811 = vld [vmem:[#allocation68 + $0x80] sm:$0xff]
    %v5812 = vld [vmem:[#allocation68 + $0x88] sm:$0xff]
    %v5813 = vld [vmem:[#allocation68 + $0x90] sm:$0xff]
    %v5814 = vld [vmem:[#allocation68 + $0x98] sm:$0xff]
    %v5815 = vld [vmem:[#allocation68 + $0xa0] sm:$0xff]
    %v5816 = vld [vmem:[#allocation68 + $0xa8] sm:$0xff]
    %v5817 = vld [vmem:[#allocation68 + $0xb0] sm:$0xff]
    %v5818 = vld [vmem:[#allocation68 + $0xb8] sm:$0xff]
    %v5819 = vld [vmem:[#allocation68 + $0xc0] sm:$0xff]
    %v5820 = vld [vmem:[#allocation68 + $0xc8] sm:$0xff]
    %v5821 = vld [vmem:[#allocation68 + $0xd0] sm:$0xff]
    %v5822 = vld [vmem:[#allocation68 + $0xd8] sm:$0xff]
    %v5823 = vld [vmem:[#allocation68 + $0xe0] sm:$0xff]
    %v5824 = vld [vmem:[#allocation68 + $0xe8] sm:$0xff]
    %v5825 = vld [vmem:[#allocation68 + $0xf0] sm:$0xff]
    %v5826 = vld [vmem:[#allocation68 + $0xf8] sm:$0xff]
    %v5827 = vld [vmem:[#allocation68 + $0x100] sm:$0xff]
    %v5828 = vld [vmem:[#allocation68 + $0x108] sm:$0xff]
    %v5829 = vld [vmem:[#allocation68 + $0x110] sm:$0xff]
    %v5830 = vld [vmem:[#allocation68 + $0x118] sm:$0xff]
    %v5831 = vld [vmem:[#allocation68 + $0x120] sm:$0xff]
    %v5832 = vld [vmem:[#allocation68 + $0x128] sm:$0xff]
    %v5833 = vld [vmem:[#allocation68 + $0x130] sm:$0xff]
    %v5834 = vld [vmem:[#allocation68 + $0x138] sm:$0xff]
    %v5835 = vld [vmem:[#allocation68 + $0x140] sm:$0xff]
    %v5836 = vld [vmem:[#allocation68 + $0x148] sm:$0xff]
    %v5837 = vld [vmem:[#allocation68 + $0x150] sm:$0xff]
    %v5838 = vld [vmem:[#allocation68 + $0x158] sm:$0xff]
    %v5839 = vld [vmem:[#allocation68 + $0x160] sm:$0xff]
    %v5840 = vld [vmem:[#allocation68 + $0x168] sm:$0xff]
    %v5841 = vld [vmem:[#allocation68 + $0x170] sm:$0xff]
    %v5842 = vld [vmem:[#allocation68 + $0x178] sm:$0xff]
    %v5843 = vld [vmem:[#allocation68 + $0x180] sm:$0xff]
    %v5844 = vld [vmem:[#allocation68 + $0x188] sm:$0xff]
    %v5845 = vld [vmem:[#allocation68 + $0x190] sm:$0xff]
    %v5846 = vld [vmem:[#allocation68 + $0x198] sm:$0xff]
    %v5847 = vld [vmem:[#allocation68 + $0x1a0] sm:$0xff]
    %v5848 = vld [vmem:[#allocation68 + $0x1a8] sm:$0xff]
    %v5849 = vld [vmem:[#allocation68 + $0x1b0] sm:$0xff]
    %v5850 = vld [vmem:[#allocation68 + $0x1b8] sm:$0xff]
    %v5851 = vld [vmem:[#allocation68 + $0x1c0] sm:$0xff]
    %v5852 = vld [vmem:[#allocation68 + $0x1c8] sm:$0xff]
    %v5853 = vld [vmem:[#allocation68 + $0x1d0] sm:$0xff]
    %v5854 = vld [vmem:[#allocation68 + $0x1d8] sm:$0xff]
    %v5855 = vld [vmem:[#allocation68 + $0x1e0] sm:$0xff]
    %v5856 = vld [vmem:[#allocation68 + $0x1e8] sm:$0xff]
    %v5857 = vld [vmem:[#allocation68 + $0x1f0] sm:$0xff]
    %v5858 = vld [vmem:[#allocation68 + $0x1f8] sm:$0xff]
    %v5859 = vld [vmem:[#allocation70] sm:$0xff]
    %v5860 = vld [vmem:[#allocation70 + $0x8] sm:$0xff]
    %v5861 = vld [vmem:[#allocation70 + $0x10] sm:$0xff]
    %v5862 = vld [vmem:[#allocation70 + $0x18] sm:$0xff]
    %v5863 = vld [vmem:[#allocation70 + $0x20] sm:$0xff]
    %v5864 = vld [vmem:[#allocation70 + $0x28] sm:$0xff]
    %v5865 = vld [vmem:[#allocation70 + $0x30] sm:$0xff]
    %v5866 = vld [vmem:[#allocation70 + $0x38] sm:$0xff]
    %v5867 = vld [vmem:[#allocation70 + $0x40] sm:$0xff]
    %v5868 = vld [vmem:[#allocation70 + $0x48] sm:$0xff]
    %v5869 = vld [vmem:[#allocation70 + $0x50] sm:$0xff]
    %v5870 = vld [vmem:[#allocation70 + $0x58] sm:$0xff]
    %v5871 = vld [vmem:[#allocation70 + $0x60] sm:$0xff]
    %v5872 = vld [vmem:[#allocation70 + $0x68] sm:$0xff]
    %v5873 = vld [vmem:[#allocation70 + $0x70] sm:$0xff]
    %v5874 = vld [vmem:[#allocation70 + $0x78] sm:$0xff]
    %v5875 = vld [vmem:[#allocation70 + $0x80] sm:$0xff]
    %v5876 = vld [vmem:[#allocation70 + $0x88] sm:$0xff]
    %v5877 = vld [vmem:[#allocation70 + $0x90] sm:$0xff]
    %v5878 = vld [vmem:[#allocation70 + $0x98] sm:$0xff]
    %v5879 = vld [vmem:[#allocation70 + $0xa0] sm:$0xff]
    %v5880 = vld [vmem:[#allocation70 + $0xa8] sm:$0xff]
    %v5881 = vld [vmem:[#allocation70 + $0xb0] sm:$0xff]
    %v5882 = vld [vmem:[#allocation70 + $0xb8] sm:$0xff]
    %v5883 = vld [vmem:[#allocation70 + $0xc0] sm:$0xff]
    %v5884 = vld [vmem:[#allocation70 + $0xc8] sm:$0xff]
    %v5885 = vld [vmem:[#allocation70 + $0xd0] sm:$0xff]
    %v5886 = vld [vmem:[#allocation70 + $0xd8] sm:$0xff]
    %v5887 = vld [vmem:[#allocation70 + $0xe0] sm:$0xff]
    %v5888 = vld [vmem:[#allocation70 + $0xe8] sm:$0xff]
    %v5889 = vld [vmem:[#allocation70 + $0xf0] sm:$0xff]
    %v5890 = vld [vmem:[#allocation70 + $0xf8] sm:$0xff]
    %v5891 = vld [vmem:[#allocation70 + $0x100] sm:$0xff]
    %v5892 = vld [vmem:[#allocation70 + $0x108] sm:$0xff]
    %v5893 = vld [vmem:[#allocation70 + $0x110] sm:$0xff]
    %v5894 = vld [vmem:[#allocation70 + $0x118] sm:$0xff]
    %v5895 = vld [vmem:[#allocation70 + $0x120] sm:$0xff]
    %v5896 = vld [vmem:[#allocation70 + $0x128] sm:$0xff]
    %v5897 = vld [vmem:[#allocation70 + $0x130] sm:$0xff]
    %v5898 = vld [vmem:[#allocation70 + $0x138] sm:$0xff]
    %v5899 = vld [vmem:[#allocation70 + $0x140] sm:$0xff]
    %v5900 = vld [vmem:[#allocation70 + $0x148] sm:$0xff]
    %v5901 = vld [vmem:[#allocation70 + $0x150] sm:$0xff]
    %v5902 = vld [vmem:[#allocation70 + $0x158] sm:$0xff]
    %v5903 = vld [vmem:[#allocation70 + $0x160] sm:$0xff]
    %v5904 = vld [vmem:[#allocation70 + $0x168] sm:$0xff]
    %v5905 = vld [vmem:[#allocation70 + $0x170] sm:$0xff]
    %v5906 = vld [vmem:[#allocation70 + $0x178] sm:$0xff]
    %v5907 = vld [vmem:[#allocation70 + $0x180] sm:$0xff]
    %v5908 = vld [vmem:[#allocation70 + $0x188] sm:$0xff]
    %v5909 = vld [vmem:[#allocation70 + $0x190] sm:$0xff]
    %v5910 = vld [vmem:[#allocation70 + $0x198] sm:$0xff]
    %v5911 = vld [vmem:[#allocation70 + $0x1a0] sm:$0xff]
    %v5912 = vld [vmem:[#allocation70 + $0x1a8] sm:$0xff]
    %v5913 = vld [vmem:[#allocation70 + $0x1b0] sm:$0xff]
    %v5914 = vld [vmem:[#allocation70 + $0x1b8] sm:$0xff]
    %v5915 = vld [vmem:[#allocation70 + $0x1c0] sm:$0xff]
    %v5916 = vld [vmem:[#allocation70 + $0x1c8] sm:$0xff]
    %v5917 = vld [vmem:[#allocation70 + $0x1d0] sm:$0xff]
    %v5918 = vld [vmem:[#allocation70 + $0x1d8] sm:$0xff]
    %v5919 = vld [vmem:[#allocation70 + $0x1e0] sm:$0xff]
    %v5920 = vld [vmem:[#allocation70 + $0x1e8] sm:$0xff]
    %v5921 = vld [vmem:[#allocation70 + $0x1f0] sm:$0xff]
    %v5922 = vld [vmem:[#allocation70 + $0x1f8] sm:$0xff]
    %v5923 = vld [vmem:[#allocation71] sm:$0xff]
    %v5924 = vld [vmem:[#allocation71 + $0x8] sm:$0xff]
    %v5925 = vld [vmem:[#allocation71 + $0x10] sm:$0xff]
    %v5926 = vld [vmem:[#allocation71 + $0x18] sm:$0xff]
    %v5927 = vld [vmem:[#allocation71 + $0x20] sm:$0xff]
    %v5928 = vld [vmem:[#allocation71 + $0x28] sm:$0xff]
    %v5929 = vld [vmem:[#allocation71 + $0x30] sm:$0xff]
    %v5930 = vld [vmem:[#allocation71 + $0x38] sm:$0xff]
    %v5931 = vld [vmem:[#allocation71 + $0x40] sm:$0xff]
    %v5932 = vld [vmem:[#allocation71 + $0x48] sm:$0xff]
    %v5933 = vld [vmem:[#allocation71 + $0x50] sm:$0xff]
    %v5934 = vld [vmem:[#allocation71 + $0x58] sm:$0xff]
    %v5935 = vld [vmem:[#allocation71 + $0x60] sm:$0xff]
    %v5936 = vld [vmem:[#allocation71 + $0x68] sm:$0xff]
    %v5937 = vld [vmem:[#allocation71 + $0x70] sm:$0xff]
    %v5938 = vld [vmem:[#allocation71 + $0x78] sm:$0xff]
    %v5939 = vld [vmem:[#allocation71 + $0x80] sm:$0xff]
    %v5940 = vld [vmem:[#allocation71 + $0x88] sm:$0xff]
    %v5941 = vld [vmem:[#allocation71 + $0x90] sm:$0xff]
    %v5942 = vld [vmem:[#allocation71 + $0x98] sm:$0xff]
    %v5943 = vld [vmem:[#allocation71 + $0xa0] sm:$0xff]
    %v5944 = vld [vmem:[#allocation71 + $0xa8] sm:$0xff]
    %v5945 = vld [vmem:[#allocation71 + $0xb0] sm:$0xff]
    %v5946 = vld [vmem:[#allocation71 + $0xb8] sm:$0xff]
    %v5947 = vld [vmem:[#allocation71 + $0xc0] sm:$0xff]
    %v5948 = vld [vmem:[#allocation71 + $0xc8] sm:$0xff]
    %v5949 = vld [vmem:[#allocation71 + $0xd0] sm:$0xff]
    %v5950 = vld [vmem:[#allocation71 + $0xd8] sm:$0xff]
    %v5951 = vld [vmem:[#allocation71 + $0xe0] sm:$0xff]
    %v5952 = vld [vmem:[#allocation71 + $0xe8] sm:$0xff]
    %v5953 = vld [vmem:[#allocation71 + $0xf0] sm:$0xff]
    %v5954 = vld [vmem:[#allocation71 + $0xf8] sm:$0xff]
    %v5955 = vld [vmem:[#allocation71 + $0x100] sm:$0xff]
    %v5956 = vld [vmem:[#allocation71 + $0x108] sm:$0xff]
    %v5957 = vld [vmem:[#allocation71 + $0x110] sm:$0xff]
    %v5958 = vld [vmem:[#allocation71 + $0x118] sm:$0xff]
    %v5959 = vld [vmem:[#allocation71 + $0x120] sm:$0xff]
    %v5960 = vld [vmem:[#allocation71 + $0x128] sm:$0xff]
    %v5961 = vld [vmem:[#allocation71 + $0x130] sm:$0xff]
    %v5962 = vld [vmem:[#allocation71 + $0x138] sm:$0xff]
    %v5963 = vld [vmem:[#allocation71 + $0x140] sm:$0xff]
    %v5964 = vld [vmem:[#allocation71 + $0x148] sm:$0xff]
    %v5965 = vld [vmem:[#allocation71 + $0x150] sm:$0xff]
    %v5966 = vld [vmem:[#allocation71 + $0x158] sm:$0xff]
    %v5967 = vld [vmem:[#allocation71 + $0x160] sm:$0xff]
    %v5968 = vld [vmem:[#allocation71 + $0x168] sm:$0xff]
    %v5969 = vld [vmem:[#allocation71 + $0x170] sm:$0xff]
    %v5970 = vld [vmem:[#allocation71 + $0x178] sm:$0xff]
    %v5971 = vld [vmem:[#allocation71 + $0x180] sm:$0xff]
    %v5972 = vld [vmem:[#allocation71 + $0x188] sm:$0xff]
    %v5973 = vld [vmem:[#allocation71 + $0x190] sm:$0xff]
    %v5974 = vld [vmem:[#allocation71 + $0x198] sm:$0xff]
    %v5975 = vld [vmem:[#allocation71 + $0x1a0] sm:$0xff]
    %v5976 = vld [vmem:[#allocation71 + $0x1a8] sm:$0xff]
    %v5977 = vld [vmem:[#allocation71 + $0x1b0] sm:$0xff]
    %v5978 = vld [vmem:[#allocation71 + $0x1b8] sm:$0xff]
    %v5979 = vld [vmem:[#allocation71 + $0x1c0] sm:$0xff]
    %v5980 = vld [vmem:[#allocation71 + $0x1c8] sm:$0xff]
    %v5981 = vld [vmem:[#allocation71 + $0x1d0] sm:$0xff]
    %v5982 = vld [vmem:[#allocation71 + $0x1d8] sm:$0xff]
    %v5983 = vld [vmem:[#allocation71 + $0x1e0] sm:$0xff]
    %v5984 = vld [vmem:[#allocation71 + $0x1e8] sm:$0xff]
    %v5985 = vld [vmem:[#allocation71 + $0x1f0] sm:$0xff]
    %v5986 = vld [vmem:[#allocation71 + $0x1f8] sm:$0xff]
    %v5987 = vld [vmem:[%s119] sm:$0x3]
    %v5988 = vld [vmem:[%s121] sm:$0x3]
    %v5989 = vld [vmem:[#allocation12] sm:$0xff]
    %v5990 = vld [vmem:[#allocation12 + $0x8] sm:$0xff]
    %v5991 = vld [vmem:[#allocation12 + $0x10] sm:$0x3]
    %v5992 = vld [vmem:[#allocation12 + $0x18] sm:$0x3]
    %v5993 = vld [vmem:[#allocation12] sm:$0xfe]
    %v5994 = vld [vmem:[#allocation12 + $0x8] sm:$0xfe]
    %v5995 = vld [vmem:[#allocation12 + $0x10] sm:$0x7]
    %v5996 = vld [vmem:[#allocation12 + $0x18] sm:$0x7]
    %v6001 = vrot.slane %v5993, 1
    %v6002 = vrot.slane %v5995, 1
    %v6003 = vsel %vm2615, %v6001, %v6002
    %v6004 = vrot.slane %v5994, 1
    %v6005 = vrot.slane %v5996, 1
    %v6006 = vsel %vm2615, %v6004, %v6005
    %6011 = vmatprep.subr.mxu0 %v5860
    %6012 = vmatpush1.msra.mxu0 %v5859
    %6013 = vmatprep.subr.mxu0 %v5862
    %6014 = vmatpush1.msra.mxu0 %v5861
    %6015 = vmatprep.subr.mxu0 %v5864
    %6016 = vmatpush1.msra.mxu0 %v5863
    %6017 = vmatprep.subr.mxu0 %v5866
    %6018 = vmatpush1.msra.mxu0 %v5865
    %6019 = vmatprep.subr.mxu0 %v5868
    %6020 = vmatpush1.msra.mxu0 %v5867
    %6021 = vmatprep.subr.mxu0 %v5870
    %6022 = vmatpush1.msra.mxu0 %v5869
    %6023 = vmatprep.subr.mxu0 %v5872
    %6024 = vmatpush1.msra.mxu0 %v5871
    %6025 = vmatprep.subr.mxu0 %v5874
    %6026 = vmatpush1.msra.mxu0 %v5873
    %6027 = vmatprep.subr.mxu0 %v5876
    %6028 = vmatpush1.msra.mxu0 %v5875
    %6029 = vmatprep.subr.mxu0 %v5878
    %6030 = vmatpush1.msra.mxu0 %v5877
    %6031 = vmatprep.subr.mxu0 %v5880
    %6032 = vmatpush1.msra.mxu0 %v5879
    %6033 = vmatprep.subr.mxu0 %v5882
    %6034 = vmatpush1.msra.mxu0 %v5881
    %6035 = vmatprep.subr.mxu0 %v5884
    %6036 = vmatpush1.msra.mxu0 %v5883
    %6037 = vmatprep.subr.mxu0 %v5886
    %6038 = vmatpush1.msra.mxu0 %v5885
    %6039 = vmatprep.subr.mxu0 %v5888
    %6040 = vmatpush1.msra.mxu0 %v5887
    %6041 = vmatprep.subr.mxu0 %v5890
    %6042 = vmatpush1.msra.mxu0 %v5889
    %6043 = vmatprep.subr.mxu0 %v5892
    %6044 = vmatpush1.msra.mxu0 %v5891
    %6045 = vmatprep.subr.mxu0 %v5894
    %6046 = vmatpush1.msra.mxu0 %v5893
    %6047 = vmatprep.subr.mxu0 %v5896
    %6048 = vmatpush1.msra.mxu0 %v5895
    %6049 = vmatprep.subr.mxu0 %v5898
    %6050 = vmatpush1.msra.mxu0 %v5897
    %6051 = vmatprep.subr.mxu0 %v5900
    %6052 = vmatpush1.msra.mxu0 %v5899
    %6053 = vmatprep.subr.mxu0 %v5902
    %6054 = vmatpush1.msra.mxu0 %v5901
    %6055 = vmatprep.subr.mxu0 %v5904
    %6056 = vmatpush1.msra.mxu0 %v5903
    %6057 = vmatprep.subr.mxu0 %v5906
    %6058 = vmatpush1.msra.mxu0 %v5905
    %6059 = vmatprep.subr.mxu0 %v5908
    %6060 = vmatpush1.msra.mxu0 %v5907
    %6061 = vmatprep.subr.mxu0 %v5910
    %6062 = vmatpush1.msra.mxu0 %v5909
    %6063 = vmatprep.subr.mxu0 %v5912
    %6064 = vmatpush1.msra.mxu0 %v5911
    %6065 = vmatprep.subr.mxu0 %v5914
    %6066 = vmatpush1.msra.mxu0 %v5913
    %6067 = vmatprep.subr.mxu0 %v5916
    %6068 = vmatpush1.msra.mxu0 %v5915
    %6069 = vmatprep.subr.mxu0 %v5918
    %6070 = vmatpush1.msra.mxu0 %v5917
    %6071 = vmatprep.subr.mxu0 %v5920
    %6072 = vmatpush1.msra.mxu0 %v5919
    %6073 = vmatprep.subr.mxu0 %v5922
    %6074 = vmatpush1.msra.mxu0 %v5921
    %6075 = vmatprep.mubr.f32.mxu0 %v6006
    %6076 = vmatmul.mubr.f32.gmra.mrb[0].mxu0 %v6003
    %v6077 = vpop.f32.mrb[0].mxu0
    %v6078 = vadd.f32 0.0, %v6077
    %v6079 = vpop.f32.mrb[0].mxu0
    %v6080 = vadd.f32 0.0, %v6079
    %6081 = vmatprep.mubr.f32.mxu0 %v6005
    %6082 = vmatmul.mubr.f32.gmra.mrb[0].mxu0 %v6002
    %v6083 = vpop.f32.mrb[0].mxu0
    %v6084 = vadd.f32 0.0, %v6083
    %v6085 = vpop.f32.mrb[0].mxu0
    %v6086 = vadd.f32 0.0, %v6085
    %6087 = vdwg.mxu0
    %6088 = vmatprep.subr.mxu0 %v5796
    %6089 = vmatpush1.msra.mxu0 %v5795
    %6090 = vmatprep.subr.mxu0 %v5798
    %6091 = vmatpush1.msra.mxu0 %v5797
    %6092 = vmatprep.subr.mxu0 %v5800
    %6093 = vmatpush1.msra.mxu0 %v5799
    %6094 = vmatprep.subr.mxu0 %v5802
    %6095 = vmatpush1.msra.mxu0 %v5801
    %6096 = vmatprep.subr.mxu0 %v5804
    %6097 = vmatpush1.msra.mxu0 %v5803
    %6098 = vmatprep.subr.mxu0 %v5806
    %6099 = vmatpush1.msra.mxu0 %v5805
    %6100 = vmatprep.subr.mxu0 %v5808
    %6101 = vmatpush1.msra.mxu0 %v5807
    %6102 = vmatprep.subr.mxu0 %v5810
    %6103 = vmatpush1.msra.mxu0 %v5809
    %6104 = vmatprep.subr.mxu0 %v5812
    %6105 = vmatpush1.msra.mxu0 %v5811
    %6106 = vmatprep.subr.mxu0 %v5814
    %6107 = vmatpush1.msra.mxu0 %v5813
    %6108 = vmatprep.subr.mxu0 %v5816
    %6109 = vmatpush1.msra.mxu0 %v5815
    %6110 = vmatprep.subr.mxu0 %v5818
    %6111 = vmatpush1.msra.mxu0 %v5817
    %6112 = vmatprep.subr.mxu0 %v5820
    %6113 = vmatpush1.msra.mxu0 %v5819
    %6114 = vmatprep.subr.mxu0 %v5822
    %6115 = vmatpush1.msra.mxu0 %v5821
    %6116 = vmatprep.subr.mxu0 %v5824
    %6117 = vmatpush1.msra.mxu0 %v5823
    %6118 = vmatprep.subr.mxu0 %v5826
    %6119 = vmatpush1.msra.mxu0 %v5825
    %6120 = vmatprep.subr.mxu0 %v5828
    %6121 = vmatpush1.msra.mxu0 %v5827
    %6122 = vmatprep.subr.mxu0 %v5830
    %6123 = vmatpush1.msra.mxu0 %v5829
    %6124 = vmatprep.subr.mxu0 %v5832
    %6125 = vmatpush1.msra.mxu0 %v5831
    %6126 = vmatprep.subr.mxu0 %v5834
    %6127 = vmatpush1.msra.mxu0 %v5833
    %6128 = vmatprep.subr.mxu0 %v5836
    %6129 = vmatpush1.msra.mxu0 %v5835
    %6130 = vmatprep.subr.mxu0 %v5838
    %6131 = vmatpush1.msra.mxu0 %v5837
    %6132 = vmatprep.subr.mxu0 %v5840
    %6133 = vmatpush1.msra.mxu0 %v5839
    %6134 = vmatprep.subr.mxu0 %v5842
    %6135 = vmatpush1.msra.mxu0 %v5841
    %6136 = vmatprep.subr.mxu0 %v5844
    %6137 = vmatpush1.msra.mxu0 %v5843
    %6138 = vmatprep.subr.mxu0 %v5846
    %6139 = vmatpush1.msra.mxu0 %v5845
    %6140 = vmatprep.subr.mxu0 %v5848
    %6141 = vmatpush1.msra.mxu0 %v5847
    %6142 = vmatprep.subr.mxu0 %v5850
    %6143 = vmatpush1.msra.mxu0 %v5849
    %6144 = vmatprep.subr.mxu0 %v5852
    %6145 = vmatpush1.msra.mxu0 %v5851
    %6146 = vmatprep.subr.mxu0 %v5854
    %6147 = vmatpush1.msra.mxu0 %v5853
    %6148 = vmatprep.subr.mxu0 %v5856
    %6149 = vmatpush1.msra.mxu0 %v5855
    %6150 = vmatprep.subr.mxu0 %v5858
    %6151 = vmatpush1.msra.mxu0 %v5857
    %6152 = vmatprep.mubr.f32.mxu0 %v5990
    %6153 = vmatmul.mubr.f32.gmra.mrb[0].mxu0 %v5989
    %v6154 = vpop.f32.mrb[0].mxu0
    %v6155 = vadd.f32 %v6078, %v6154
    %v6156 = vpop.f32.mrb[0].mxu0
    %v6157 = vadd.f32 %v6080, %v6156
    %6158 = vmatprep.mubr.f32.mxu0 %v5992
    %6159 = vmatmul.mubr.f32.gmra.mrb[0].mxu0 %v5991
    %v6160 = vpop.f32.mrb[0].mxu0
    %v6161 = vadd.f32 %v6084, %v6160
    %v6162 = vpop.f32.mrb[0].mxu0
    %v6163 = vadd.f32 %v6086, %v6162
    %6164 = vdwg.mxu0
    %v6165 = vld [vmem:[#allocation12] sm:$0xfc]
    %v6166 = vld [vmem:[#allocation12 + $0x8] sm:$0xfc]
    %v6167 = vld [vmem:[#allocation12 + $0x10] sm:$0xf]
    %v6168 = vld [vmem:[#allocation12 + $0x18] sm:$0xf]
    %v6173 = vrot.slane %v6165, 2
    %v6174 = vrot.slane %v6167, 2
    %v6175 = vsel %vm2838, %v6173, %v6174
    %v6176 = vrot.slane %v6166, 2
    %v6177 = vrot.slane %v6168, 2
    %v6178 = vsel %vm2838, %v6176, %v6177
    %6183 = vmatprep.subr.mxu0 %v5924
    %6184 = vmatpush1.msra.mxu0 %v5923
    %6185 = vmatprep.subr.mxu0 %v5926
    %6186 = vmatpush1.msra.mxu0 %v5925
    %6187 = vmatprep.subr.mxu0 %v5928
    %6188 = vmatpush1.msra.mxu0 %v5927
    %6189 = vmatprep.subr.mxu0 %v5930
    %6190 = vmatpush1.msra.mxu0 %v5929
    %6191 = vmatprep.subr.mxu0 %v5932
    %6192 = vmatpush1.msra.mxu0 %v5931
    %6193 = vmatprep.subr.mxu0 %v5934
    %6194 = vmatpush1.msra.mxu0 %v5933
    %6195 = vmatprep.subr.mxu0 %v5936
    %6196 = vmatpush1.msra.mxu0 %v5935
    %6197 = vmatprep.subr.mxu0 %v5938
    %6198 = vmatpush1.msra.mxu0 %v5937
    %6199 = vmatprep.subr.mxu0 %v5940
    %6200 = vmatpush1.msra.mxu0 %v5939
    %6201 = vmatprep.subr.mxu0 %v5942
    %6202 = vmatpush1.msra.mxu0 %v5941
    %6203 = vmatprep.subr.mxu0 %v5944
    %6204 = vmatpush1.msra.mxu0 %v5943
    %6205 = vmatprep.subr.mxu0 %v5946
    %6206 = vmatpush1.msra.mxu0 %v5945
    %6207 = vmatprep.subr.mxu0 %v5948
    %6208 = vmatpush1.msra.mxu0 %v5947
    %6209 = vmatprep.subr.mxu0 %v5950
    %6210 = vmatpush1.msra.mxu0 %v5949
    %6211 = vmatprep.subr.mxu0 %v5952
    %6212 = vmatpush1.msra.mxu0 %v5951
    %6213 = vmatprep.subr.mxu0 %v5954
    %6214 = vmatpush1.msra.mxu0 %v5953
    %6215 = vmatprep.subr.mxu0 %v5956
    %6216 = vmatpush1.msra.mxu0 %v5955
    %6217 = vmatprep.subr.mxu0 %v5958
    %6218 = vmatpush1.msra.mxu0 %v5957
    %6219 = vmatprep.subr.mxu0 %v5960
    %6220 = vmatpush1.msra.mxu0 %v5959
    %6221 = vmatprep.subr.mxu0 %v5962
    %6222 = vmatpush1.msra.mxu0 %v5961
    %6223 = vmatprep.subr.mxu0 %v5964
    %6224 = vmatpush1.msra.mxu0 %v5963
    %6225 = vmatprep.subr.mxu0 %v5966
    %6226 = vmatpush1.msra.mxu0 %v5965
    %6227 = vmatprep.subr.mxu0 %v5968
    %6228 = vmatpush1.msra.mxu0 %v5967
    %6229 = vmatprep.subr.mxu0 %v5970
    %6230 = vmatpush1.msra.mxu0 %v5969
    %6231 = vmatprep.subr.mxu0 %v5972
    %6232 = vmatpush1.msra.mxu0 %v5971
    %6233 = vmatprep.subr.mxu0 %v5974
    %6234 = vmatpush1.msra.mxu0 %v5973
    %6235 = vmatprep.subr.mxu0 %v5976
    %6236 = vmatpush1.msra.mxu0 %v5975
    %6237 = vmatprep.subr.mxu0 %v5978
    %6238 = vmatpush1.msra.mxu0 %v5977
    %6239 = vmatprep.subr.mxu0 %v5980
    %6240 = vmatpush1.msra.mxu0 %v5979
    %6241 = vmatprep.subr.mxu0 %v5982
    %6242 = vmatpush1.msra.mxu0 %v5981
    %6243 = vmatprep.subr.mxu0 %v5984
    %6244 = vmatpush1.msra.mxu0 %v5983
    %6245 = vmatprep.subr.mxu0 %v5986
    %6246 = vmatpush1.msra.mxu0 %v5985
    %6247 = vmatprep.mubr.f32.mxu0 %v6178
    %6248 = vmatmul.mubr.f32.gmra.mrb[0].mxu0 %v6175
    %v6249 = vpop.f32.mrb[0].mxu0
    %v6250 = vadd.f32 0.0, %v6249
    %v6251 = vpop.f32.mrb[0].mxu0
    %v6252 = vadd.f32 0.0, %v6251
    %6253 = vmatprep.mubr.f32.mxu0 %v6177
    %6254 = vmatmul.mubr.f32.gmra.mrb[0].mxu0 %v6174
    %v6255 = vpop.f32.mrb[0].mxu0
    %v6256 = vadd.f32 0.0, %v6255
    %v6257 = vpop.f32.mrb[0].mxu0
    %v6258 = vadd.f32 0.0, %v6257
    %6259 = vdwg.mxu0
    %v6260 = vadd.f32 %v6155, %v6250
    %v6261 = vadd.f32 %v6157, %v6252
    %v6262 = vadd.f32 %v6161, %v6256
    %v6263 = vadd.f32 %v6163, %v6258
    %v6264 = vmax.f32 %v6260, 0.0
    %v6265 = vmax.f32 %v6261, 0.0
    %v6266 = vmax.f32 %v6262, 0.0
    %v6267 = vmax.f32 %v6263, 0.0
    %v6269 = vlaneseq
    %v6270 = vshrl.u32 %v6269, 7
    %v6271 = vsub.s32 0, %v6270
    %v6272 = vrot.slane %v5987, %v6271
    %v6273 = vlaneseq
    %v6274 = vshrl.u32 %v6273, 7
    %v6275 = vsub.s32 1, %v6274
    %v6276 = vrot.slane %v5987, %v6275
    %v6279 = vmul.f32 %v6264, %v6272
    %v6280 = vmul.f32 %v6265, %v6276
    %v6281 = vmul.f32 %v6266, %v6272
    %v6282 = vmul.f32 %v6267, %v6276
    %v6284 = vlaneseq
    %v6285 = vshrl.u32 %v6284, 7
    %v6286 = vsub.s32 0, %v6285
    %v6287 = vrot.slane %v5988, %v6286
    %v6288 = vlaneseq
    %v6289 = vshrl.u32 %v6288, 7
    %v6290 = vsub.s32 1, %v6289
    %v6291 = vrot.slane %v5988, %v6290
    %v6294 = vadd.f32 %v6279, %v6287
    %v6295 = vadd.f32 %v6280, %v6291
    %v6296 = vadd.f32 %v6281, %v6287
    %v6297 = vadd.f32 %v6282, %v6291
    %6298 = vst [vmem:[#allocation13] sm:$0xf] %v6294
    %6299 = vst [vmem:[#allocation13 + $0x8] sm:$0xf] %v6295
    %v6304 = vrot.slane %v6294, 2
    %v6305 = vrot.slane %v6296, 2
    %v6306 = vsel %vm2838, %v6304, %v6305
    %v6307 = vrot.slane %v6295, 2
    %v6308 = vrot.slane %v6297, 2
    %v6309 = vsel %vm2838, %v6307, %v6308
    %6312 = vst [vmem:[#allocation13] sm:$0xf0] %v6306
    %6313 = vst [vmem:[#allocation13 + $0x8] sm:$0xf0] %v6309
    %v6314 = vld [vmem:[%s123] sm:$0xff]
    %v6315 = vld [vmem:[%s123 + $0x8] sm:$0xff]
    %v6316 = vld [vmem:[%s123 + $0x10] sm:$0xff]
    %v6317 = vld [vmem:[%s123 + $0x18] sm:$0xff]
    %v6318 = vld [vmem:[%s123 + $0x20] sm:$0xff]
    %v6319 = vld [vmem:[%s123 + $0x28] sm:$0xff]
    %v6320 = vld [vmem:[%s123 + $0x30] sm:$0xff]
    %v6321 = vld [vmem:[%s123 + $0x38] sm:$0xff]
    %v6322 = vld [vmem:[%s123 + $0x40] sm:$0xff]
    %v6323 = vld [vmem:[%s123 + $0x48] sm:$0xff]
    %v6324 = vld [vmem:[%s123 + $0x50] sm:$0xff]
    %v6325 = vld [vmem:[%s123 + $0x58] sm:$0xff]
    %v6326 = vld [vmem:[%s123 + $0x60] sm:$0xff]
    %v6327 = vld [vmem:[%s123 + $0x68] sm:$0xff]
    %v6328 = vld [vmem:[%s123 + $0x70] sm:$0xff]
    %v6329 = vld [vmem:[%s123 + $0x78] sm:$0xff]
    %v6330 = vld [vmem:[%s123 + $0x80] sm:$0xff]
    %v6331 = vld [vmem:[%s123 + $0x88] sm:$0xff]
    %v6332 = vld [vmem:[%s123 + $0x90] sm:$0xff]
    %v6333 = vld [vmem:[%s123 + $0x98] sm:$0xff]
    %v6334 = vld [vmem:[%s123 + $0xa0] sm:$0xff]
    %v6335 = vld [vmem:[%s123 + $0xa8] sm:$0xff]
    %v6336 = vld [vmem:[%s123 + $0xb0] sm:$0xff]
    %v6337 = vld [vmem:[%s123 + $0xb8] sm:$0xff]
    %v6338 = vld [vmem:[%s123 + $0xc0] sm:$0xff]
    %v6339 = vld [vmem:[%s123 + $0xc8] sm:$0xff]
    %v6340 = vld [vmem:[%s123 + $0xd0] sm:$0xff]
    %v6341 = vld [vmem:[%s123 + $0xd8] sm:$0xff]
    %v6342 = vld [vmem:[%s123 + $0xe0] sm:$0xff]
    %v6343 = vld [vmem:[%s123 + $0xe8] sm:$0xff]
    %v6344 = vld [vmem:[%s123 + $0xf0] sm:$0xff]
    %v6345 = vld [vmem:[%s123 + $0xf8] sm:$0xff]
    %v6346 = vld [vmem:[%s125] sm:$0x1]
    %v6347 = vld [vmem:[#allocation13] sm:$0xf]
    %v6348 = vld [vmem:[#allocation13 + $0x8] sm:$0xf]
    %v6349 = vsel %vm3522, %v6347, 0.0
    %v6350 = vrot.slane %v6349, 4
    %v6351 = vadd.f32 %v6349, %v6350
    %v6352 = vrot.slane %v6351, 2
    %v6353 = vadd.f32 %v6351, %v6352
    %v6354 = vrot.slane %v6353, 1
    %v6355 = vadd.f32 %v6353, %v6354
    %v6356 = vsel %vm3522, %v6348, 0.0
    %v6357 = vrot.slane %v6356, 4
    %v6358 = vadd.f32 %v6356, %v6357
    %v6359 = vrot.slane %v6358, 2
    %v6360 = vadd.f32 %v6358, %v6359
    %v6361 = vrot.slane %v6360, 1
    %v6362 = vadd.f32 %v6360, %v6361
    %v6363 = vld [vmem:[#allocation13] sm:$0xf0]
    %v6364 = vld [vmem:[#allocation13 + $0x8] sm:$0xf0]
    %v6367 = vrot.slane %v6363, 4
    %v6368 = vrot.slane %v6364, 4
    %v6371 = vsel %vm3522, %v6367, 0.0
    %v6372 = vrot.slane %v6371, 4
    %v6373 = vadd.f32 %v6371, %v6372
    %v6374 = vrot.slane %v6373, 2
    %v6375 = vadd.f32 %v6373, %v6374
    %v6376 = vrot.slane %v6375, 1
    %v6377 = vadd.f32 %v6375, %v6376
    %v6378 = vsel %vm3522, %v6368, 0.0
    %v6379 = vrot.slane %v6378, 4
    %v6380 = vadd.f32 %v6378, %v6379
    %v6381 = vrot.slane %v6380, 2
    %v6382 = vadd.f32 %v6380, %v6381
    %v6383 = vrot.slane %v6382, 1
    %v6384 = vadd.f32 %v6382, %v6383
    %v6385 = vsel %vm2390, %v6355, %v6377
    %v6386 = vsel %vm2390, %v6362, %v6384
    %v6388 = vlaneseq
    %v6389 = vshrl.u32 %v6388, 7
    %v6390 = vsub.s32 0, %v6389
    %v6391 = vrot.slane %v6346, %v6390
    %6393 = vmatprep.subr.mxu0 0.0
    %6394 = vmatpush1.msra.mxu0 %v6314
    %6395 = vmatprep.subr.mxu0 0.0
    %6396 = vmatpush1.msra.mxu0 %v6315
    %6397 = vmatprep.subr.mxu0 0.0
    %6398 = vmatpush1.msra.mxu0 %v6316
    %6399 = vmatprep.subr.mxu0 0.0
    %6400 = vmatpush1.msra.mxu0 %v6317
    %6401 = vmatprep.subr.mxu0 0.0
    %6402 = vmatpush1.msra.mxu0 %v6318
    %6403 = vmatprep.subr.mxu0 0.0
    %6404 = vmatpush1.msra.mxu0 %v6319
    %6405 = vmatprep.subr.mxu0 0.0
    %6406 = vmatpush1.msra.mxu0 %v6320
    %6407 = vmatprep.subr.mxu0 0.0
    %6408 = vmatpush1.msra.mxu0 %v6321
    %6409 = vmatprep.subr.mxu0 0.0
    %6410 = vmatpush1.msra.mxu0 %v6322
    %6411 = vmatprep.subr.mxu0 0.0
    %6412 = vmatpush1.msra.mxu0 %v6323
    %6413 = vmatprep.subr.mxu0 0.0
    %6414 = vmatpush1.msra.mxu0 %v6324
    %6415 = vmatprep.subr.mxu0 0.0
    %6416 = vmatpush1.msra.mxu0 %v6325
    %6417 = vmatprep.subr.mxu0 0.0
    %6418 = vmatpush1.msra.mxu0 %v6326
    %6419 = vmatprep.subr.mxu0 0.0
    %6420 = vmatpush1.msra.mxu0 %v6327
    %6421 = vmatprep.subr.mxu0 0.0
    %6422 = vmatpush1.msra.mxu0 %v6328
    %6423 = vmatprep.subr.mxu0 0.0
    %6424 = vmatpush1.msra.mxu0 %v6329
    %6425 = vmatprep.subr.mxu0 0.0
    %6426 = vmatpush1.msra.mxu0 %v6330
    %6427 = vmatprep.subr.mxu0 0.0
    %6428 = vmatpush1.msra.mxu0 %v6331
    %6429 = vmatprep.subr.mxu0 0.0
    %6430 = vmatpush1.msra.mxu0 %v6332
    %6431 = vmatprep.subr.mxu0 0.0
    %6432 = vmatpush1.msra.mxu0 %v6333
    %6433 = vmatprep.subr.mxu0 0.0
    %6434 = vmatpush1.msra.mxu0 %v6334
    %6435 = vmatprep.subr.mxu0 0.0
    %6436 = vmatpush1.msra.mxu0 %v6335
    %6437 = vmatprep.subr.mxu0 0.0
    %6438 = vmatpush1.msra.mxu0 %v6336
    %6439 = vmatprep.subr.mxu0 0.0
    %6440 = vmatpush1.msra.mxu0 %v6337
    %6441 = vmatprep.subr.mxu0 0.0
    %6442 = vmatpush1.msra.mxu0 %v6338
    %6443 = vmatprep.subr.mxu0 0.0
    %6444 = vmatpush1.msra.mxu0 %v6339
    %6445 = vmatprep.subr.mxu0 0.0
    %6446 = vmatpush1.msra.mxu0 %v6340
    %6447 = vmatprep.subr.mxu0 0.0
    %6448 = vmatpush1.msra.mxu0 %v6341
    %6449 = vmatprep.subr.mxu0 0.0
    %6450 = vmatpush1.msra.mxu0 %v6342
    %6451 = vmatprep.subr.mxu0 0.0
    %6452 = vmatpush1.msra.mxu0 %v6343
    %6453 = vmatprep.subr.mxu0 0.0
    %6454 = vmatpush1.msra.mxu0 %v6344
    %6455 = vmatprep.subr.mxu0 0.0
    %6456 = vmatpush1.msra.mxu0 %v6345
    %6457 = vmatprep.mubr.f32.mxu0 %v6386
    %6458 = vmatmul.mubr.f32.gmra.mrb[0].mxu0 %v6385
    %v6459 = vpop.f32.mrb[0].mxu0
    %v6460 = vadd.f32 %v6391, %v6459
    %v6461 = vpop.f32.mrb[0].mxu0
    %6462 = vdwg.mxu0
    %vm6463 = vcmask 74752
    %v6464 = vsel %vm6463, %v6460, -inf
    %6465 = vmax.xlane.f32.xlu0 %v6464
    %v6466 = vpop.xlane.xlu0 %6465
    %v6467 = vsub.f32 %v6460, %v6466
    %v6468 = vmul.f32 %v6467, 1.442695
    %v6469 = vpow.pop %v6468
    %v6470 = vsel %vm6463, %v6469, 0.0
    %6471 = vadd.xlane.f32.xlu0 %v6470
    %v6472 = vpop.xlane.xlu0 %6471
    %v6473 = vlog2.pop %v6472
    %v6474 = vmul.f32 %v6473, 0.6931472
    %v6475 = vsub.f32 %v6467, %v6474
    %6476 = vst.msk [vmem:[#allocation73] sm:$0x3] %vm6463, %v6475
    // Predicated region
    $region406: #{tpu_custom_call.1} parent=1 // pred_check
      _
    $region407: #{tpu_custom_call.1} parent=1 // pred_check_branch
      %6478 = sbr.rel (0) target = $region409
    $region408: #{tpu_custom_call.1} parent=1 // pred_region
      %s6480 = ssub.s32 32, 32
      %6481 = vsyncadd [#allocation16], %s6480
      %s6483 = sshll.u32 [#allocation73], 4
      %s6484 = int_to_ptr.vmem [resolvable:$true] %s6483
      %6486 = dma.vmem_to_hbm [thread:$0]  %s6484, 32, %s127, [#allocation16]
    $region409: #{tpu_custom_call.1} parent=1 // pred_fallthru
      _
    // Predicated region
    $region410: #{tpu_custom_call.1} parent=1 // pred_check
      _
    $region411: #{tpu_custom_call.1} parent=1 // pred_check_branch
      %6488 = sbr.rel (0) target = $region413
    $region412: #{tpu_custom_call.1} parent=1 // pred_region
      %6489 = dma.done [#allocation16], 32
    $region413: #{tpu_custom_call.1} parent=1 // pred_fallthru
      _
    %6490 = vsyncpa [#allocation15], 1
    %6491 = vsyncpa [#allocation18], 1
    %6492 = vsyncpa [#allocation21], 1
    %6493 = vsyncpa [#allocation24], 1
    %6494 = vsyncpa [#allocation27], 1
    %6495 = vsyncpa [#allocation30], 1
    %6496 = vsyncpa [#allocation33], 1
    %6497 = vsyncpa [#allocation36], 1
    %6498 = vsyncpa [#allocation39], 1
    %6499 = vsyncpa [#allocation42], 1
    %6500 = vsyncpa [#allocation45], 1
    %6501 = vsyncpa [#allocation48], 1
    %6502 = vsyncpa [#allocation51], 1
    %6503 = vsyncpa [#allocation54], 1
    %6504 = vsyncpa [#allocation57], 1
    %6505 = vsyncpa [#allocation60], 1
    %6506 = vsyncpa [#allocation63], 1
    %6507 = vsyncpa [#allocation66], 1
    %6508 = vsyncpa [#allocation69], 1
    %6509 = vsyncpa [#allocation72], 1
    %6510 = vsyncpa [#allocation16], 1

</llo_original>
